<compile_context>
chip_gen: v7x
topology: tpu7x:2x2x1
jax: 0.10.0
libtpu: 0.0.40
codegen_flags: <defaults>
</compile_context>

<pallas_src>
import jax
import jax.numpy as jnp
import numpy as np
from jax import lax
from jax.experimental import pallas as pl
from jax.experimental.pallas import tpu as pltpu

HIDDEN = 200        # logical hidden width (PyTorch module)
HIDDEN_PAD = 256    # lane-aligned padded width (2 x 128 lanes)
BN_EPS = 1e-5


def _linear_block(h_bf16, w_bf16, b_f32, gamma, beta):
    """Linear -> ReLU -> BatchNorm1d (training-mode batch stats), fused scale/shift.

    h_bf16: (B, K) bf16, w_bf16: (K, H) bf16, b/gamma/beta: (1, H) f32. Returns f32.
    """
    z = jnp.dot(h_bf16, w_bf16, preferred_element_type=jnp.float32) + b_f32
    a = jnp.maximum(z, 0.0)
    mean = jnp.mean(a, axis=0, keepdims=True)
    var = jnp.maximum(jnp.mean(a * a, axis=0, keepdims=True) - mean * mean, 0.0)
    scale = gamma * lax.rsqrt(var + BN_EPS)        # (1, H)
    shift = beta - mean * scale                    # (1, H)
    return a * scale + shift                       # one FMA per element


def vae_kernel(
    # inputs
    x_ref, eps_ref,
    # encoder params
    we0_ref, be0_ref, wem_ref, bem_ref, ge_ref, bte_ref,
    wemu_ref, bemu_ref, welv_ref, belv_ref,
    # decoder params
    wd0_ref, bd0_ref, wdm_ref, bdm_ref, gd_ref, btd_ref, wdo_ref, bdo_ref,
    # outputs
    dec_ref, mu_ref, lv_ref,
):
    # ---------------- encoder ----------------
    h = _linear_block(x_ref[...].astype(jnp.bfloat16), we0_ref[...], be0_ref[...],
                      ge_ref[0:1, :], bte_ref[0:1, :])
    for i in range(4):  # 4 more (padded) 256->256 LinearBlocks, static unroll
        h = _linear_block(h.astype(jnp.bfloat16), wem_ref[i], bem_ref[i:i + 1, :],
                          ge_ref[i + 1:i + 2, :], bte_ref[i + 1:i + 2, :])

    hb = h.astype(jnp.bfloat16)
    mu = jnp.dot(hb, wemu_ref[...], preferred_element_type=jnp.float32) + bemu_ref[...]
    log_var = jnp.dot(hb, welv_ref[...], preferred_element_type=jnp.float32) + belv_ref[...]

    # ---------------- reparameterization ----------------
    std = jnp.exp(0.5 * log_var)
    sample = mu + eps_ref[...] * std

    # ---------------- decoder ----------------
    h = _linear_block(sample.astype(jnp.bfloat16), wd0_ref[...], bd0_ref[...],
                      gd_ref[0:1, :], btd_ref[0:1, :])
    for i in range(4):
        h = _linear_block(h.astype(jnp.bfloat16), wdm_ref[i], bdm_ref[i:i + 1, :],
                          gd_ref[i + 1:i + 2, :], btd_ref[i + 1:i + 2, :])
    decoded = (jnp.dot(h.astype(jnp.bfloat16), wdo_ref[...],
                       preferred_element_type=jnp.float32) + bdo_ref[...])

    dec_ref[...] = decoded
    mu_ref[...] = mu
    lv_ref[...] = log_var


def init_vae_params(key, in_features, dim_red):
    """PyTorch-style init (U(+-1/sqrt(fan_in)) for Linear, gamma=1/beta=0 for BN),
    generated at logical sizes then zero-padded to HIDDEN_PAD. Weights stored bf16."""
    H, HP = HIDDEN, HIDDEN_PAD

    def linear(k, fan_in, fan_out, pad_in=0, pad_out=0):
        k1, k2 = jax.random.split(k)
        bound = 1.0 / float(np.sqrt(fan_in))
        w = jax.random.uniform(k1, (fan_in, fan_out), jnp.float32, -bound, bound)
        b = jax.random.uniform(k2, (fan_out,), jnp.float32, -bound, bound)
        w = jnp.pad(w, ((0, pad_in), (0, pad_out))).astype(jnp.bfloat16)
        b = jnp.pad(b, ((0, pad_out),)).reshape(1, -1)          # f32 (added to f32 acc)
        return w, b

    keys = jax.random.split(key, 12)

    # ---- encoder ----
    we0, be0 = linear(keys[0], in_features, H, pad_out=HP - H)
    mids = [linear(keys[1 + i], H, H, pad_in=HP - H, pad_out=HP - H) for i in range(4)]
    wem = jnp.stack([w for w, _ in mids])                        # (4, HP, HP) bf16
    bem = jnp.concatenate([b for _, b in mids], axis=0)          # (4, HP) f32
    # head: one logical (H, 2*dim_red) Linear, split into mu / log_var columns
    k1, k2 = jax.random.split(keys[5])
    bound = 1.0 / float(np.sqrt(H))
    weo = jax.random.uniform(k1, (H, 2 * dim_red), jnp.float32, -bound, bound)
    beo = jax.random.uniform(k2, (2 * dim_red,), jnp.float32, -bound, bound)
    wemu = jnp.pad(weo[:, :dim_red], ((0, HP - H), (0, 0))).astype(jnp.bfloat16)
    welv = jnp.pad(weo[:, dim_red:], ((0, HP - H), (0, 0))).astype(jnp.bfloat16)
    bemu = beo[:dim_red].reshape(1, -1)
    belv = beo[dim_red:].reshape(1, -1)
    ge = jnp.pad(jnp.ones((5, H), jnp.float32), ((0, 0), (0, HP - H)))   # gamma=0 in pad
    bte = jnp.zeros((5, HP), jnp.float32)                                # beta=0 in pad

    # ---- decoder ----
    wd0, bd0 = linear(keys[6], dim_red, H, pad_out=HP - H)
    mids = [linear(keys[7 + i], H, H, pad_in=HP - H, pad_out=HP - H) for i in range(4)]
    wdm = jnp.stack([w for w, _ in mids])
    bdm = jnp.concatenate([b for _, b in mids], axis=0)
    wdo, bdo = linear(keys[11], H, in_features, pad_in=HP - H)
    gd = jnp.pad(jnp.ones((5, H), jnp.float32), ((0, 0), (0, HP - H)))
    btd = jnp.zeros((5, HP), jnp.float32)

    return (we0, be0, wem, bem, ge, bte, wemu, bemu, welv, belv,
            wd0, bd0, wdm, bdm, gd, btd, wdo, bdo)


@jax.jit
def vae_forward(x, eps, params):
    B, in_features = x.shape
    dim_red = eps.shape[1]
    n_inputs = 2 + len(params)
    vmem = pl.BlockSpec(memory_space=pltpu.MemorySpace.VMEM)
    out_shapes = (
        jax.ShapeDtypeStruct((B, in_features), jnp.float32),  # decoded
        jax.ShapeDtypeStruct((B, dim_red), jnp.float32),      # mu
        jax.ShapeDtypeStruct((B, dim_red), jnp.float32),      # log_var
    )
    return pl.pallas_call(
        vae_kernel,
        out_shape=out_shapes,
        in_specs=[vmem] * n_inputs,
        out_specs=(vmem, vmem, vmem),
    )(x, eps, *params)


if __name__ == "__main__":
    # Batch raised to 128 (still tiny: ~16 KiB input) so the MXU sees full sublane rows.
    B, IN_FEATURES, DIM_RED = 128, 32, 8

    key = jax.random.PRNGKey(0)
    kx, keps, kparam = jax.random.split(key, 3)

    x = jax.random.normal(kx, (B, IN_FEATURES), jnp.float32)
    eps = jax.random.normal(keps, (B, DIM_RED), jnp.float32)   # randn_like(std) equivalent
    params = init_vae_params(kparam, IN_FEATURES, DIM_RED)

    decoded, mu, log_var = vae_forward(x, eps, params)
    jax.block_until_ready((decoded, mu, log_var))

    assert decoded.shape == (B, IN_FEATURES)
    assert mu.shape == (B, DIM_RED)
    assert log_var.shape == (B, DIM_RED)
    assert bool(jnp.all(jnp.isfinite(decoded)))
    print("KERNEL_OK")
</pallas_src>

<mosaic_0001>
module attributes {stable_mosaic.version = 11 : i64} {
  func.func @vae_kernel(%arg0: memref<128x32xf32, #tpu.memory_space<vmem>>, %arg1: memref<128x8xf32, #tpu.memory_space<vmem>>, %arg2: memref<32x256xbf16, #tpu.memory_space<vmem>>, %arg3: memref<1x256xf32, #tpu.memory_space<vmem>>, %arg4: memref<4x256x256xbf16, #tpu.memory_space<vmem>>, %arg5: memref<4x256xf32, #tpu.memory_space<vmem>>, %arg6: memref<5x256xf32, #tpu.memory_space<vmem>>, %arg7: memref<5x256xf32, #tpu.memory_space<vmem>>, %arg8: memref<256x8xbf16, #tpu.memory_space<vmem>>, %arg9: memref<1x8xf32, #tpu.memory_space<vmem>>, %arg10: memref<256x8xbf16, #tpu.memory_space<vmem>>, %arg11: memref<1x8xf32, #tpu.memory_space<vmem>>, %arg12: memref<8x256xbf16, #tpu.memory_space<vmem>>, %arg13: memref<1x256xf32, #tpu.memory_space<vmem>>, %arg14: memref<4x256x256xbf16, #tpu.memory_space<vmem>>, %arg15: memref<4x256xf32, #tpu.memory_space<vmem>>, %arg16: memref<5x256xf32, #tpu.memory_space<vmem>>, %arg17: memref<5x256xf32, #tpu.memory_space<vmem>>, %arg18: memref<256x32xbf16, #tpu.memory_space<vmem>>, %arg19: memref<1x32xf32, #tpu.memory_space<vmem>>, %arg20: memref<128x32xf32, #tpu.memory_space<vmem>>, %arg21: memref<128x8xf32, #tpu.memory_space<vmem>>, %arg22: memref<128x8xf32, #tpu.memory_space<vmem>>) attributes {dimension_semantics = [], scalar_prefetch = 0 : i64, scratch_operands = 0 : i64, tpu.core_type = #tpu.core_type<tc>} {
    %c0 = arith.constant 0 : index
    %c0_0 = arith.constant 0 : index
    %0 = vector.load %arg0[%c0, %c0_0] : memref<128x32xf32, #tpu.memory_space<vmem>>, vector<128x32xf32>
    %1 = arith.truncf %0 : vector<128x32xf32> to vector<128x32xbf16>
    %c0_1 = arith.constant 0 : index
    %c0_2 = arith.constant 0 : index
    %2 = vector.load %arg2[%c0_1, %c0_2] : memref<32x256xbf16, #tpu.memory_space<vmem>>, vector<32x256xbf16>
    %c0_3 = arith.constant 0 : index
    %c0_4 = arith.constant 0 : index
    %3 = vector.load %arg3[%c0_3, %c0_4] : memref<1x256xf32, #tpu.memory_space<vmem>>, vector<1x256xf32>
    %c0_5 = arith.constant 0 : index
    %c0_6 = arith.constant 0 : index
    %4 = vector.load %arg6[%c0_5, %c0_6] : memref<5x256xf32, #tpu.memory_space<vmem>>, vector<1x256xf32>
    %c0_7 = arith.constant 0 : index
    %c0_8 = arith.constant 0 : index
    %5 = vector.load %arg7[%c0_7, %c0_8] : memref<5x256xf32, #tpu.memory_space<vmem>>, vector<1x256xf32>
    %cst = arith.constant dense<0.000000e+00> : vector<128x256xf32>
    %6 = tpu.matmul %1, %2, %cst {dimension_numbers = #tpu.dot_dimension_numbers<[1], [0], [0], [1], [0, 0, 1, 1], [], []>} : vector<128x32xbf16>, vector<32x256xbf16>, vector<128x256xf32> -> vector<128x256xf32>
    %7 = vector.broadcast %3 : vector<1x256xf32> to vector<128x256xf32>
    %8 = arith.addf %6, %7 : vector<128x256xf32>
    %cst_9 = arith.constant 0.000000e+00 : f32
    %9 = vector.broadcast %cst_9 : f32 to vector<128x256xf32>
    %10 = arith.maximumf %8, %9 : vector<128x256xf32>
    %cst_10 = arith.constant dense<0.000000e+00> : vector<256xf32>
    %11 = vector.multi_reduction <add>, %10, %cst_10 [0] : vector<128x256xf32> to vector<256xf32>
    %12 = vector.shape_cast %11 : vector<256xf32> to vector<1x256xf32>
    %cst_11 = arith.constant 1.280000e+02 : f32
    %13 = vector.broadcast %cst_11 : f32 to vector<1x256xf32>
    %14 = arith.divf %12, %13 : vector<1x256xf32>
    %15 = arith.mulf %10, %10 : vector<128x256xf32>
    %cst_12 = arith.constant dense<0.000000e+00> : vector<256xf32>
    %16 = vector.multi_reduction <add>, %15, %cst_12 [0] : vector<128x256xf32> to vector<256xf32>
    %17 = vector.shape_cast %16 : vector<256xf32> to vector<1x256xf32>
    %cst_13 = arith.constant 1.280000e+02 : f32
    %18 = vector.broadcast %cst_13 : f32 to vector<1x256xf32>
    %19 = arith.divf %17, %18 : vector<1x256xf32>
    %20 = arith.mulf %14, %14 : vector<1x256xf32>
    %21 = arith.subf %19, %20 : vector<1x256xf32>
    %cst_14 = arith.constant 0.000000e+00 : f32
    %22 = vector.broadcast %cst_14 : f32 to vector<1x256xf32>
    %23 = arith.maximumf %21, %22 : vector<1x256xf32>
    %cst_15 = arith.constant 9.99999974E-6 : f32
    %24 = vector.broadcast %cst_15 : f32 to vector<1x256xf32>
    %25 = arith.addf %23, %24 : vector<1x256xf32>
    %26 = math.rsqrt %25 : vector<1x256xf32>
    %27 = arith.mulf %4, %26 : vector<1x256xf32>
    %28 = arith.mulf %14, %27 : vector<1x256xf32>
    %29 = arith.subf %5, %28 : vector<1x256xf32>
    %30 = vector.broadcast %27 : vector<1x256xf32> to vector<128x256xf32>
    %31 = arith.mulf %10, %30 : vector<128x256xf32>
    %32 = vector.broadcast %29 : vector<1x256xf32> to vector<128x256xf32>
    %33 = arith.addf %31, %32 : vector<128x256xf32>
    %34 = arith.truncf %33 : vector<128x256xf32> to vector<128x256xbf16>
    %c0_16 = arith.constant 0 : index
    %c0_17 = arith.constant 0 : index
    %c0_18 = arith.constant 0 : index
    %35 = vector.load %arg4[%c0_16, %c0_17, %c0_18] : memref<4x256x256xbf16, #tpu.memory_space<vmem>>, vector<1x256x256xbf16>
    %36 = vector.shape_cast %35 : vector<1x256x256xbf16> to vector<256x256xbf16>
    %c0_19 = arith.constant 0 : index
    %c0_20 = arith.constant 0 : index
    %37 = vector.load %arg5[%c0_19, %c0_20] : memref<4x256xf32, #tpu.memory_space<vmem>>, vector<1x256xf32>
    %c1 = arith.constant 1 : index
    %c0_21 = arith.constant 0 : index
    %38 = vector.load %arg6[%c1, %c0_21] : memref<5x256xf32, #tpu.memory_space<vmem>>, vector<1x256xf32>
    %c1_22 = arith.constant 1 : index
    %c0_23 = arith.constant 0 : index
    %39 = vector.load %arg7[%c1_22, %c0_23] : memref<5x256xf32, #tpu.memory_space<vmem>>, vector<1x256xf32>
    %cst_24 = arith.constant dense<0.000000e+00> : vector<128x256xf32>
    %40 = tpu.matmul %34, %36, %cst_24 {dimension_numbers = #tpu.dot_dimension_numbers<[1], [0], [0], [1], [0, 0, 1, 1], [], []>} : vector<128x256xbf16>, vector<256x256xbf16>, vector<128x256xf32> -> vector<128x256xf32>
    %41 = vector.broadcast %37 : vector<1x256xf32> to vector<128x256xf32>
    %42 = arith.addf %40, %41 : vector<128x256xf32>
    %cst_25 = arith.constant 0.000000e+00 : f32
    %43 = vector.broadcast %cst_25 : f32 to vector<128x256xf32>
    %44 = arith.maximumf %42, %43 : vector<128x256xf32>
    %cst_26 = arith.constant dense<0.000000e+00> : vector<256xf32>
    %45 = vector.multi_reduction <add>, %44, %cst_26 [0] : vector<128x256xf32> to vector<256xf32>
    %46 = vector.shape_cast %45 : vector<256xf32> to vector<1x256xf32>
    %cst_27 = arith.constant 1.280000e+02 : f32
    %47 = vector.broadcast %cst_27 : f32 to vector<1x256xf32>
    %48 = arith.divf %46, %47 : vector<1x256xf32>
    %49 = arith.mulf %44, %44 : vector<128x256xf32>
    %cst_28 = arith.constant dense<0.000000e+00> : vector<256xf32>
    %50 = vector.multi_reduction <add>, %49, %cst_28 [0] : vector<128x256xf32> to vector<256xf32>
    %51 = vector.shape_cast %50 : vector<256xf32> to vector<1x256xf32>
    %cst_29 = arith.constant 1.280000e+02 : f32
    %52 = vector.broadcast %cst_29 : f32 to vector<1x256xf32>
    %53 = arith.divf %51, %52 : vector<1x256xf32>
    %54 = arith.mulf %48, %48 : vector<1x256xf32>
    %55 = arith.subf %53, %54 : vector<1x256xf32>
    %cst_30 = arith.constant 0.000000e+00 : f32
    %56 = vector.broadcast %cst_30 : f32 to vector<1x256xf32>
    %57 = arith.maximumf %55, %56 : vector<1x256xf32>
    %cst_31 = arith.constant 9.99999974E-6 : f32
    %58 = vector.broadcast %cst_31 : f32 to vector<1x256xf32>
    %59 = arith.addf %57, %58 : vector<1x256xf32>
    %60 = math.rsqrt %59 : vector<1x256xf32>
    %61 = arith.mulf %38, %60 : vector<1x256xf32>
    %62 = arith.mulf %48, %61 : vector<1x256xf32>
    %63 = arith.subf %39, %62 : vector<1x256xf32>
    %64 = vector.broadcast %61 : vector<1x256xf32> to vector<128x256xf32>
    %65 = arith.mulf %44, %64 : vector<128x256xf32>
    %66 = vector.broadcast %63 : vector<1x256xf32> to vector<128x256xf32>
    %67 = arith.addf %65, %66 : vector<128x256xf32>
    %68 = arith.truncf %67 : vector<128x256xf32> to vector<128x256xbf16>
    %c1_32 = arith.constant 1 : index
    %c0_33 = arith.constant 0 : index
    %c0_34 = arith.constant 0 : index
    %69 = vector.load %arg4[%c1_32, %c0_33, %c0_34] : memref<4x256x256xbf16, #tpu.memory_space<vmem>>, vector<1x256x256xbf16>
    %70 = vector.shape_cast %69 : vector<1x256x256xbf16> to vector<256x256xbf16>
    %c1_35 = arith.constant 1 : index
    %c0_36 = arith.constant 0 : index
    %71 = vector.load %arg5[%c1_35, %c0_36] : memref<4x256xf32, #tpu.memory_space<vmem>>, vector<1x256xf32>
    %c2 = arith.constant 2 : index
    %c0_37 = arith.constant 0 : index
    %72 = vector.load %arg6[%c2, %c0_37] : memref<5x256xf32, #tpu.memory_space<vmem>>, vector<1x256xf32>
    %c2_38 = arith.constant 2 : index
    %c0_39 = arith.constant 0 : index
    %73 = vector.load %arg7[%c2_38, %c0_39] : memref<5x256xf32, #tpu.memory_space<vmem>>, vector<1x256xf32>
    %cst_40 = arith.constant dense<0.000000e+00> : vector<128x256xf32>
    %74 = tpu.matmul %68, %70, %cst_40 {dimension_numbers = #tpu.dot_dimension_numbers<[1], [0], [0], [1], [0, 0, 1, 1], [], []>} : vector<128x256xbf16>, vector<256x256xbf16>, vector<128x256xf32> -> vector<128x256xf32>
    %75 = vector.broadcast %71 : vector<1x256xf32> to vector<128x256xf32>
    %76 = arith.addf %74, %75 : vector<128x256xf32>
    %cst_41 = arith.constant 0.000000e+00 : f32
    %77 = vector.broadcast %cst_41 : f32 to vector<128x256xf32>
    %78 = arith.maximumf %76, %77 : vector<128x256xf32>
    %cst_42 = arith.constant dense<0.000000e+00> : vector<256xf32>
    %79 = vector.multi_reduction <add>, %78, %cst_42 [0] : vector<128x256xf32> to vector<256xf32>
    %80 = vector.shape_cast %79 : vector<256xf32> to vector<1x256xf32>
    %cst_43 = arith.constant 1.280000e+02 : f32
    %81 = vector.broadcast %cst_43 : f32 to vector<1x256xf32>
    %82 = arith.divf %80, %81 : vector<1x256xf32>
    %83 = arith.mulf %78, %78 : vector<128x256xf32>
    %cst_44 = arith.constant dense<0.000000e+00> : vector<256xf32>
    %84 = vector.multi_reduction <add>, %83, %cst_44 [0] : vector<128x256xf32> to vector<256xf32>
    %85 = vector.shape_cast %84 : vector<256xf32> to vector<1x256xf32>
    %cst_45 = arith.constant 1.280000e+02 : f32
    %86 = vector.broadcast %cst_45 : f32 to vector<1x256xf32>
    %87 = arith.divf %85, %86 : vector<1x256xf32>
    %88 = arith.mulf %82, %82 : vector<1x256xf32>
    %89 = arith.subf %87, %88 : vector<1x256xf32>
    %cst_46 = arith.constant 0.000000e+00 : f32
    %90 = vector.broadcast %cst_46 : f32 to vector<1x256xf32>
    %91 = arith.maximumf %89, %90 : vector<1x256xf32>
    %cst_47 = arith.constant 9.99999974E-6 : f32
    %92 = vector.broadcast %cst_47 : f32 to vector<1x256xf32>
    %93 = arith.addf %91, %92 : vector<1x256xf32>
    %94 = math.rsqrt %93 : vector<1x256xf32>
    %95 = arith.mulf %72, %94 : vector<1x256xf32>
    %96 = arith.mulf %82, %95 : vector<1x256xf32>
    %97 = arith.subf %73, %96 : vector<1x256xf32>
    %98 = vector.broadcast %95 : vector<1x256xf32> to vector<128x256xf32>
    %99 = arith.mulf %78, %98 : vector<128x256xf32>
    %100 = vector.broadcast %97 : vector<1x256xf32> to vector<128x256xf32>
    %101 = arith.addf %99, %100 : vector<128x256xf32>
    %102 = arith.truncf %101 : vector<128x256xf32> to vector<128x256xbf16>
    %c2_48 = arith.constant 2 : index
    %c0_49 = arith.constant 0 : index
    %c0_50 = arith.constant 0 : index
    %103 = vector.load %arg4[%c2_48, %c0_49, %c0_50] : memref<4x256x256xbf16, #tpu.memory_space<vmem>>, vector<1x256x256xbf16>
    %104 = vector.shape_cast %103 : vector<1x256x256xbf16> to vector<256x256xbf16>
    %c2_51 = arith.constant 2 : index
    %c0_52 = arith.constant 0 : index
    %105 = vector.load %arg5[%c2_51, %c0_52] : memref<4x256xf32, #tpu.memory_space<vmem>>, vector<1x256xf32>
    %c3 = arith.constant 3 : index
    %c0_53 = arith.constant 0 : index
    %106 = vector.load %arg6[%c3, %c0_53] : memref<5x256xf32, #tpu.memory_space<vmem>>, vector<1x256xf32>
    %c3_54 = arith.constant 3 : index
    %c0_55 = arith.constant 0 : index
    %107 = vector.load %arg7[%c3_54, %c0_55] : memref<5x256xf32, #tpu.memory_space<vmem>>, vector<1x256xf32>
    %cst_56 = arith.constant dense<0.000000e+00> : vector<128x256xf32>
    %108 = tpu.matmul %102, %104, %cst_56 {dimension_numbers = #tpu.dot_dimension_numbers<[1], [0], [0], [1], [0, 0, 1, 1], [], []>} : vector<128x256xbf16>, vector<256x256xbf16>, vector<128x256xf32> -> vector<128x256xf32>
    %109 = vector.broadcast %105 : vector<1x256xf32> to vector<128x256xf32>
    %110 = arith.addf %108, %109 : vector<128x256xf32>
    %cst_57 = arith.constant 0.000000e+00 : f32
    %111 = vector.broadcast %cst_57 : f32 to vector<128x256xf32>
    %112 = arith.maximumf %110, %111 : vector<128x256xf32>
    %cst_58 = arith.constant dense<0.000000e+00> : vector<256xf32>
    %113 = vector.multi_reduction <add>, %112, %cst_58 [0] : vector<128x256xf32> to vector<256xf32>
    %114 = vector.shape_cast %113 : vector<256xf32> to vector<1x256xf32>
    %cst_59 = arith.constant 1.280000e+02 : f32
    %115 = vector.broadcast %cst_59 : f32 to vector<1x256xf32>
    %116 = arith.divf %114, %115 : vector<1x256xf32>
    %117 = arith.mulf %112, %112 : vector<128x256xf32>
    %cst_60 = arith.constant dense<0.000000e+00> : vector<256xf32>
    %118 = vector.multi_reduction <add>, %117, %cst_60 [0] : vector<128x256xf32> to vector<256xf32>
    %119 = vector.shape_cast %118 : vector<256xf32> to vector<1x256xf32>
    %cst_61 = arith.constant 1.280000e+02 : f32
    %120 = vector.broadcast %cst_61 : f32 to vector<1x256xf32>
    %121 = arith.divf %119, %120 : vector<1x256xf32>
    %122 = arith.mulf %116, %116 : vector<1x256xf32>
    %123 = arith.subf %121, %122 : vector<1x256xf32>
    %cst_62 = arith.constant 0.000000e+00 : f32
    %124 = vector.broadcast %cst_62 : f32 to vector<1x256xf32>
    %125 = arith.maximumf %123, %124 : vector<1x256xf32>
    %cst_63 = arith.constant 9.99999974E-6 : f32
    %126 = vector.broadcast %cst_63 : f32 to vector<1x256xf32>
    %127 = arith.addf %125, %126 : vector<1x256xf32>
    %128 = math.rsqrt %127 : vector<1x256xf32>
    %129 = arith.mulf %106, %128 : vector<1x256xf32>
    %130 = arith.mulf %116, %129 : vector<1x256xf32>
    %131 = arith.subf %107, %130 : vector<1x256xf32>
    %132 = vector.broadcast %129 : vector<1x256xf32> to vector<128x256xf32>
    %133 = arith.mulf %112, %132 : vector<128x256xf32>
    %134 = vector.broadcast %131 : vector<1x256xf32> to vector<128x256xf32>
    %135 = arith.addf %133, %134 : vector<128x256xf32>
    %136 = arith.truncf %135 : vector<128x256xf32> to vector<128x256xbf16>
    %c3_64 = arith.constant 3 : index
    %c0_65 = arith.constant 0 : index
    %c0_66 = arith.constant 0 : index
    %137 = vector.load %arg4[%c3_64, %c0_65, %c0_66] : memref<4x256x256xbf16, #tpu.memory_space<vmem>>, vector<1x256x256xbf16>
    %138 = vector.shape_cast %137 : vector<1x256x256xbf16> to vector<256x256xbf16>
    %c3_67 = arith.constant 3 : index
    %c0_68 = arith.constant 0 : index
    %139 = vector.load %arg5[%c3_67, %c0_68] : memref<4x256xf32, #tpu.memory_space<vmem>>, vector<1x256xf32>
    %c4 = arith.constant 4 : index
    %c0_69 = arith.constant 0 : index
    %140 = vector.load %arg6[%c4, %c0_69] : memref<5x256xf32, #tpu.memory_space<vmem>>, vector<1x256xf32>
    %c4_70 = arith.constant 4 : index
    %c0_71 = arith.constant 0 : index
    %141 = vector.load %arg7[%c4_70, %c0_71] : memref<5x256xf32, #tpu.memory_space<vmem>>, vector<1x256xf32>
    %cst_72 = arith.constant dense<0.000000e+00> : vector<128x256xf32>
    %142 = tpu.matmul %136, %138, %cst_72 {dimension_numbers = #tpu.dot_dimension_numbers<[1], [0], [0], [1], [0, 0, 1, 1], [], []>} : vector<128x256xbf16>, vector<256x256xbf16>, vector<128x256xf32> -> vector<128x256xf32>
    %143 = vector.broadcast %139 : vector<1x256xf32> to vector<128x256xf32>
    %144 = arith.addf %142, %143 : vector<128x256xf32>
    %cst_73 = arith.constant 0.000000e+00 : f32
    %145 = vector.broadcast %cst_73 : f32 to vector<128x256xf32>
    %146 = arith.maximumf %144, %145 : vector<128x256xf32>
    %cst_74 = arith.constant dense<0.000000e+00> : vector<256xf32>
    %147 = vector.multi_reduction <add>, %146, %cst_74 [0] : vector<128x256xf32> to vector<256xf32>
    %148 = vector.shape_cast %147 : vector<256xf32> to vector<1x256xf32>
    %cst_75 = arith.constant 1.280000e+02 : f32
    %149 = vector.broadcast %cst_75 : f32 to vector<1x256xf32>
    %150 = arith.divf %148, %149 : vector<1x256xf32>
    %151 = arith.mulf %146, %146 : vector<128x256xf32>
    %cst_76 = arith.constant dense<0.000000e+00> : vector<256xf32>
    %152 = vector.multi_reduction <add>, %151, %cst_76 [0] : vector<128x256xf32> to vector<256xf32>
    %153 = vector.shape_cast %152 : vector<256xf32> to vector<1x256xf32>
    %cst_77 = arith.constant 1.280000e+02 : f32
    %154 = vector.broadcast %cst_77 : f32 to vector<1x256xf32>
    %155 = arith.divf %153, %154 : vector<1x256xf32>
    %156 = arith.mulf %150, %150 : vector<1x256xf32>
    %157 = arith.subf %155, %156 : vector<1x256xf32>
    %cst_78 = arith.constant 0.000000e+00 : f32
    %158 = vector.broadcast %cst_78 : f32 to vector<1x256xf32>
    %159 = arith.maximumf %157, %158 : vector<1x256xf32>
    %cst_79 = arith.constant 9.99999974E-6 : f32
    %160 = vector.broadcast %cst_79 : f32 to vector<1x256xf32>
    %161 = arith.addf %159, %160 : vector<1x256xf32>
    %162 = math.rsqrt %161 : vector<1x256xf32>
    %163 = arith.mulf %140, %162 : vector<1x256xf32>
    %164 = arith.mulf %150, %163 : vector<1x256xf32>
    %165 = arith.subf %141, %164 : vector<1x256xf32>
    %166 = vector.broadcast %163 : vector<1x256xf32> to vector<128x256xf32>
    %167 = arith.mulf %146, %166 : vector<128x256xf32>
    %168 = vector.broadcast %165 : vector<1x256xf32> to vector<128x256xf32>
    %169 = arith.addf %167, %168 : vector<128x256xf32>
    %170 = arith.truncf %169 : vector<128x256xf32> to vector<128x256xbf16>
    %c0_80 = arith.constant 0 : index
    %c0_81 = arith.constant 0 : index
    %171 = vector.load %arg8[%c0_80, %c0_81] : memref<256x8xbf16, #tpu.memory_space<vmem>>, vector<256x8xbf16>
    %cst_82 = arith.constant dense<0.000000e+00> : vector<128x8xf32>
    %172 = tpu.matmul %170, %171, %cst_82 {dimension_numbers = #tpu.dot_dimension_numbers<[1], [0], [0], [1], [0, 0, 1, 1], [], []>} : vector<128x256xbf16>, vector<256x8xbf16>, vector<128x8xf32> -> vector<128x8xf32>
    %c0_83 = arith.constant 0 : index
    %c0_84 = arith.constant 0 : index
    %173 = vector.load %arg9[%c0_83, %c0_84] : memref<1x8xf32, #tpu.memory_space<vmem>>, vector<1x8xf32>
    %174 = vector.broadcast %173 : vector<1x8xf32> to vector<128x8xf32>
    %175 = arith.addf %172, %174 : vector<128x8xf32>
    %c0_85 = arith.constant 0 : index
    %c0_86 = arith.constant 0 : index
    %176 = vector.load %arg10[%c0_85, %c0_86] : memref<256x8xbf16, #tpu.memory_space<vmem>>, vector<256x8xbf16>
    %cst_87 = arith.constant dense<0.000000e+00> : vector<128x8xf32>
    %177 = tpu.matmul %170, %176, %cst_87 {dimension_numbers = #tpu.dot_dimension_numbers<[1], [0], [0], [1], [0, 0, 1, 1], [], []>} : vector<128x256xbf16>, vector<256x8xbf16>, vector<128x8xf32> -> vector<128x8xf32>
    %c0_88 = arith.constant 0 : index
    %c0_89 = arith.constant 0 : index
    %178 = vector.load %arg11[%c0_88, %c0_89] : memref<1x8xf32, #tpu.memory_space<vmem>>, vector<1x8xf32>
    %179 = vector.broadcast %178 : vector<1x8xf32> to vector<128x8xf32>
    %180 = arith.addf %177, %179 : vector<128x8xf32>
    %cst_90 = arith.constant 5.000000e-01 : f32
    %181 = vector.broadcast %cst_90 : f32 to vector<128x8xf32>
    %182 = arith.mulf %181, %180 : vector<128x8xf32>
    %183 = math.exp %182 : vector<128x8xf32>
    %c0_91 = arith.constant 0 : index
    %c0_92 = arith.constant 0 : index
    %184 = vector.load %arg1[%c0_91, %c0_92] : memref<128x8xf32, #tpu.memory_space<vmem>>, vector<128x8xf32>
    %185 = arith.mulf %184, %183 : vector<128x8xf32>
    %186 = arith.addf %175, %185 : vector<128x8xf32>
    %187 = arith.truncf %186 : vector<128x8xf32> to vector<128x8xbf16>
    %c0_93 = arith.constant 0 : index
    %c0_94 = arith.constant 0 : index
    %188 = vector.load %arg12[%c0_93, %c0_94] : memref<8x256xbf16, #tpu.memory_space<vmem>>, vector<8x256xbf16>
    %c0_95 = arith.constant 0 : index
    %c0_96 = arith.constant 0 : index
    %189 = vector.load %arg13[%c0_95, %c0_96] : memref<1x256xf32, #tpu.memory_space<vmem>>, vector<1x256xf32>
    %c0_97 = arith.constant 0 : index
    %c0_98 = arith.constant 0 : index
    %190 = vector.load %arg16[%c0_97, %c0_98] : memref<5x256xf32, #tpu.memory_space<vmem>>, vector<1x256xf32>
    %c0_99 = arith.constant 0 : index
    %c0_100 = arith.constant 0 : index
    %191 = vector.load %arg17[%c0_99, %c0_100] : memref<5x256xf32, #tpu.memory_space<vmem>>, vector<1x256xf32>
    %cst_101 = arith.constant dense<0.000000e+00> : vector<128x256xf32>
    %192 = tpu.matmul %187, %188, %cst_101 {dimension_numbers = #tpu.dot_dimension_numbers<[1], [0], [0], [1], [0, 0, 1, 1], [], []>} : vector<128x8xbf16>, vector<8x256xbf16>, vector<128x256xf32> -> vector<128x256xf32>
    %193 = vector.broadcast %189 : vector<1x256xf32> to vector<128x256xf32>
    %194 = arith.addf %192, %193 : vector<128x256xf32>
    %cst_102 = arith.constant 0.000000e+00 : f32
    %195 = vector.broadcast %cst_102 : f32 to vector<128x256xf32>
    %196 = arith.maximumf %194, %195 : vector<128x256xf32>
    %cst_103 = arith.constant dense<0.000000e+00> : vector<256xf32>
    %197 = vector.multi_reduction <add>, %196, %cst_103 [0] : vector<128x256xf32> to vector<256xf32>
    %198 = vector.shape_cast %197 : vector<256xf32> to vector<1x256xf32>
    %cst_104 = arith.constant 1.280000e+02 : f32
    %199 = vector.broadcast %cst_104 : f32 to vector<1x256xf32>
    %200 = arith.divf %198, %199 : vector<1x256xf32>
    %201 = arith.mulf %196, %196 : vector<128x256xf32>
    %cst_105 = arith.constant dense<0.000000e+00> : vector<256xf32>
    %202 = vector.multi_reduction <add>, %201, %cst_105 [0] : vector<128x256xf32> to vector<256xf32>
    %203 = vector.shape_cast %202 : vector<256xf32> to vector<1x256xf32>
    %cst_106 = arith.constant 1.280000e+02 : f32
    %204 = vector.broadcast %cst_106 : f32 to vector<1x256xf32>
    %205 = arith.divf %203, %204 : vector<1x256xf32>
    %206 = arith.mulf %200, %200 : vector<1x256xf32>
    %207 = arith.subf %205, %206 : vector<1x256xf32>
    %cst_107 = arith.constant 0.000000e+00 : f32
    %208 = vector.broadcast %cst_107 : f32 to vector<1x256xf32>
    %209 = arith.maximumf %207, %208 : vector<1x256xf32>
    %cst_108 = arith.constant 9.99999974E-6 : f32
    %210 = vector.broadcast %cst_108 : f32 to vector<1x256xf32>
    %211 = arith.addf %209, %210 : vector<1x256xf32>
    %212 = math.rsqrt %211 : vector<1x256xf32>
    %213 = arith.mulf %190, %212 : vector<1x256xf32>
    %214 = arith.mulf %200, %213 : vector<1x256xf32>
    %215 = arith.subf %191, %214 : vector<1x256xf32>
    %216 = vector.broadcast %213 : vector<1x256xf32> to vector<128x256xf32>
    %217 = arith.mulf %196, %216 : vector<128x256xf32>
    %218 = vector.broadcast %215 : vector<1x256xf32> to vector<128x256xf32>
    %219 = arith.addf %217, %218 : vector<128x256xf32>
    %220 = arith.truncf %219 : vector<128x256xf32> to vector<128x256xbf16>
    %c0_109 = arith.constant 0 : index
    %c0_110 = arith.constant 0 : index
    %c0_111 = arith.constant 0 : index
    %221 = vector.load %arg14[%c0_109, %c0_110, %c0_111] : memref<4x256x256xbf16, #tpu.memory_space<vmem>>, vector<1x256x256xbf16>
    %222 = vector.shape_cast %221 : vector<1x256x256xbf16> to vector<256x256xbf16>
    %c0_112 = arith.constant 0 : index
    %c0_113 = arith.constant 0 : index
    %223 = vector.load %arg15[%c0_112, %c0_113] : memref<4x256xf32, #tpu.memory_space<vmem>>, vector<1x256xf32>
    %c1_114 = arith.constant 1 : index
    %c0_115 = arith.constant 0 : index
    %224 = vector.load %arg16[%c1_114, %c0_115] : memref<5x256xf32, #tpu.memory_space<vmem>>, vector<1x256xf32>
    %c1_116 = arith.constant 1 : index
    %c0_117 = arith.constant 0 : index
    %225 = vector.load %arg17[%c1_116, %c0_117] : memref<5x256xf32, #tpu.memory_space<vmem>>, vector<1x256xf32>
    %cst_118 = arith.constant dense<0.000000e+00> : vector<128x256xf32>
    %226 = tpu.matmul %220, %222, %cst_118 {dimension_numbers = #tpu.dot_dimension_numbers<[1], [0], [0], [1], [0, 0, 1, 1], [], []>} : vector<128x256xbf16>, vector<256x256xbf16>, vector<128x256xf32> -> vector<128x256xf32>
    %227 = vector.broadcast %223 : vector<1x256xf32> to vector<128x256xf32>
    %228 = arith.addf %226, %227 : vector<128x256xf32>
    %cst_119 = arith.constant 0.000000e+00 : f32
    %229 = vector.broadcast %cst_119 : f32 to vector<128x256xf32>
    %230 = arith.maximumf %228, %229 : vector<128x256xf32>
    %cst_120 = arith.constant dense<0.000000e+00> : vector<256xf32>
    %231 = vector.multi_reduction <add>, %230, %cst_120 [0] : vector<128x256xf32> to vector<256xf32>
    %232 = vector.shape_cast %231 : vector<256xf32> to vector<1x256xf32>
    %cst_121 = arith.constant 1.280000e+02 : f32
    %233 = vector.broadcast %cst_121 : f32 to vector<1x256xf32>
    %234 = arith.divf %232, %233 : vector<1x256xf32>
    %235 = arith.mulf %230, %230 : vector<128x256xf32>
    %cst_122 = arith.constant dense<0.000000e+00> : vector<256xf32>
    %236 = vector.multi_reduction <add>, %235, %cst_122 [0] : vector<128x256xf32> to vector<256xf32>
    %237 = vector.shape_cast %236 : vector<256xf32> to vector<1x256xf32>
    %cst_123 = arith.constant 1.280000e+02 : f32
    %238 = vector.broadcast %cst_123 : f32 to vector<1x256xf32>
    %239 = arith.divf %237, %238 : vector<1x256xf32>
    %240 = arith.mulf %234, %234 : vector<1x256xf32>
    %241 = arith.subf %239, %240 : vector<1x256xf32>
    %cst_124 = arith.constant 0.000000e+00 : f32
    %242 = vector.broadcast %cst_124 : f32 to vector<1x256xf32>
    %243 = arith.maximumf %241, %242 : vector<1x256xf32>
    %cst_125 = arith.constant 9.99999974E-6 : f32
    %244 = vector.broadcast %cst_125 : f32 to vector<1x256xf32>
    %245 = arith.addf %243, %244 : vector<1x256xf32>
    %246 = math.rsqrt %245 : vector<1x256xf32>
    %247 = arith.mulf %224, %246 : vector<1x256xf32>
    %248 = arith.mulf %234, %247 : vector<1x256xf32>
    %249 = arith.subf %225, %248 : vector<1x256xf32>
    %250 = vector.broadcast %247 : vector<1x256xf32> to vector<128x256xf32>
    %251 = arith.mulf %230, %250 : vector<128x256xf32>
    %252 = vector.broadcast %249 : vector<1x256xf32> to vector<128x256xf32>
    %253 = arith.addf %251, %252 : vector<128x256xf32>
    %254 = arith.truncf %253 : vector<128x256xf32> to vector<128x256xbf16>
    %c1_126 = arith.constant 1 : index
    %c0_127 = arith.constant 0 : index
    %c0_128 = arith.constant 0 : index
    %255 = vector.load %arg14[%c1_126, %c0_127, %c0_128] : memref<4x256x256xbf16, #tpu.memory_space<vmem>>, vector<1x256x256xbf16>
    %256 = vector.shape_cast %255 : vector<1x256x256xbf16> to vector<256x256xbf16>
    %c1_129 = arith.constant 1 : index
    %c0_130 = arith.constant 0 : index
    %257 = vector.load %arg15[%c1_129, %c0_130] : memref<4x256xf32, #tpu.memory_space<vmem>>, vector<1x256xf32>
    %c2_131 = arith.constant 2 : index
    %c0_132 = arith.constant 0 : index
    %258 = vector.load %arg16[%c2_131, %c0_132] : memref<5x256xf32, #tpu.memory_space<vmem>>, vector<1x256xf32>
    %c2_133 = arith.constant 2 : index
    %c0_134 = arith.constant 0 : index
    %259 = vector.load %arg17[%c2_133, %c0_134] : memref<5x256xf32, #tpu.memory_space<vmem>>, vector<1x256xf32>
    %cst_135 = arith.constant dense<0.000000e+00> : vector<128x256xf32>
    %260 = tpu.matmul %254, %256, %cst_135 {dimension_numbers = #tpu.dot_dimension_numbers<[1], [0], [0], [1], [0, 0, 1, 1], [], []>} : vector<128x256xbf16>, vector<256x256xbf16>, vector<128x256xf32> -> vector<128x256xf32>
    %261 = vector.broadcast %257 : vector<1x256xf32> to vector<128x256xf32>
    %262 = arith.addf %260, %261 : vector<128x256xf32>
    %cst_136 = arith.constant 0.000000e+00 : f32
    %263 = vector.broadcast %cst_136 : f32 to vector<128x256xf32>
    %264 = arith.maximumf %262, %263 : vector<128x256xf32>
    %cst_137 = arith.constant dense<0.000000e+00> : vector<256xf32>
    %265 = vector.multi_reduction <add>, %264, %cst_137 [0] : vector<128x256xf32> to vector<256xf32>
    %266 = vector.shape_cast %265 : vector<256xf32> to vector<1x256xf32>
    %cst_138 = arith.constant 1.280000e+02 : f32
    %267 = vector.broadcast %cst_138 : f32 to vector<1x256xf32>
    %268 = arith.divf %266, %267 : vector<1x256xf32>
    %269 = arith.mulf %264, %264 : vector<128x256xf32>
    %cst_139 = arith.constant dense<0.000000e+00> : vector<256xf32>
    %270 = vector.multi_reduction <add>, %269, %cst_139 [0] : vector<128x256xf32> to vector<256xf32>
    %271 = vector.shape_cast %270 : vector<256xf32> to vector<1x256xf32>
    %cst_140 = arith.constant 1.280000e+02 : f32
    %272 = vector.broadcast %cst_140 : f32 to vector<1x256xf32>
    %273 = arith.divf %271, %272 : vector<1x256xf32>
    %274 = arith.mulf %268, %268 : vector<1x256xf32>
    %275 = arith.subf %273, %274 : vector<1x256xf32>
    %cst_141 = arith.constant 0.000000e+00 : f32
    %276 = vector.broadcast %cst_141 : f32 to vector<1x256xf32>
    %277 = arith.maximumf %275, %276 : vector<1x256xf32>
    %cst_142 = arith.constant 9.99999974E-6 : f32
    %278 = vector.broadcast %cst_142 : f32 to vector<1x256xf32>
    %279 = arith.addf %277, %278 : vector<1x256xf32>
    %280 = math.rsqrt %279 : vector<1x256xf32>
    %281 = arith.mulf %258, %280 : vector<1x256xf32>
    %282 = arith.mulf %268, %281 : vector<1x256xf32>
    %283 = arith.subf %259, %282 : vector<1x256xf32>
    %284 = vector.broadcast %281 : vector<1x256xf32> to vector<128x256xf32>
    %285 = arith.mulf %264, %284 : vector<128x256xf32>
    %286 = vector.broadcast %283 : vector<1x256xf32> to vector<128x256xf32>
    %287 = arith.addf %285, %286 : vector<128x256xf32>
    %288 = arith.truncf %287 : vector<128x256xf32> to vector<128x256xbf16>
    %c2_143 = arith.constant 2 : index
    %c0_144 = arith.constant 0 : index
    %c0_145 = arith.constant 0 : index
    %289 = vector.load %arg14[%c2_143, %c0_144, %c0_145] : memref<4x256x256xbf16, #tpu.memory_space<vmem>>, vector<1x256x256xbf16>
    %290 = vector.shape_cast %289 : vector<1x256x256xbf16> to vector<256x256xbf16>
    %c2_146 = arith.constant 2 : index
    %c0_147 = arith.constant 0 : index
    %291 = vector.load %arg15[%c2_146, %c0_147] : memref<4x256xf32, #tpu.memory_space<vmem>>, vector<1x256xf32>
    %c3_148 = arith.constant 3 : index
    %c0_149 = arith.constant 0 : index
    %292 = vector.load %arg16[%c3_148, %c0_149] : memref<5x256xf32, #tpu.memory_space<vmem>>, vector<1x256xf32>
    %c3_150 = arith.constant 3 : index
    %c0_151 = arith.constant 0 : index
    %293 = vector.load %arg17[%c3_150, %c0_151] : memref<5x256xf32, #tpu.memory_space<vmem>>, vector<1x256xf32>
    %cst_152 = arith.constant dense<0.000000e+00> : vector<128x256xf32>
    %294 = tpu.matmul %288, %290, %cst_152 {dimension_numbers = #tpu.dot_dimension_numbers<[1], [0], [0], [1], [0, 0, 1, 1], [], []>} : vector<128x256xbf16>, vector<256x256xbf16>, vector<128x256xf32> -> vector<128x256xf32>
    %295 = vector.broadcast %291 : vector<1x256xf32> to vector<128x256xf32>
    %296 = arith.addf %294, %295 : vector<128x256xf32>
    %cst_153 = arith.constant 0.000000e+00 : f32
    %297 = vector.broadcast %cst_153 : f32 to vector<128x256xf32>
    %298 = arith.maximumf %296, %297 : vector<128x256xf32>
    %cst_154 = arith.constant dense<0.000000e+00> : vector<256xf32>
    %299 = vector.multi_reduction <add>, %298, %cst_154 [0] : vector<128x256xf32> to vector<256xf32>
    %300 = vector.shape_cast %299 : vector<256xf32> to vector<1x256xf32>
    %cst_155 = arith.constant 1.280000e+02 : f32
    %301 = vector.broadcast %cst_155 : f32 to vector<1x256xf32>
    %302 = arith.divf %300, %301 : vector<1x256xf32>
    %303 = arith.mulf %298, %298 : vector<128x256xf32>
    %cst_156 = arith.constant dense<0.000000e+00> : vector<256xf32>
    %304 = vector.multi_reduction <add>, %303, %cst_156 [0] : vector<128x256xf32> to vector<256xf32>
    %305 = vector.shape_cast %304 : vector<256xf32> to vector<1x256xf32>
    %cst_157 = arith.constant 1.280000e+02 : f32
    %306 = vector.broadcast %cst_157 : f32 to vector<1x256xf32>
    %307 = arith.divf %305, %306 : vector<1x256xf32>
    %308 = arith.mulf %302, %302 : vector<1x256xf32>
    %309 = arith.subf %307, %308 : vector<1x256xf32>
    %cst_158 = arith.constant 0.000000e+00 : f32
    %310 = vector.broadcast %cst_158 : f32 to vector<1x256xf32>
    %311 = arith.maximumf %309, %310 : vector<1x256xf32>
    %cst_159 = arith.constant 9.99999974E-6 : f32
    %312 = vector.broadcast %cst_159 : f32 to vector<1x256xf32>
    %313 = arith.addf %311, %312 : vector<1x256xf32>
    %314 = math.rsqrt %313 : vector<1x256xf32>
    %315 = arith.mulf %292, %314 : vector<1x256xf32>
    %316 = arith.mulf %302, %315 : vector<1x256xf32>
    %317 = arith.subf %293, %316 : vector<1x256xf32>
    %318 = vector.broadcast %315 : vector<1x256xf32> to vector<128x256xf32>
    %319 = arith.mulf %298, %318 : vector<128x256xf32>
    %320 = vector.broadcast %317 : vector<1x256xf32> to vector<128x256xf32>
    %321 = arith.addf %319, %320 : vector<128x256xf32>
    %322 = arith.truncf %321 : vector<128x256xf32> to vector<128x256xbf16>
    %c3_160 = arith.constant 3 : index
    %c0_161 = arith.constant 0 : index
    %c0_162 = arith.constant 0 : index
    %323 = vector.load %arg14[%c3_160, %c0_161, %c0_162] : memref<4x256x256xbf16, #tpu.memory_space<vmem>>, vector<1x256x256xbf16>
    %324 = vector.shape_cast %323 : vector<1x256x256xbf16> to vector<256x256xbf16>
    %c3_163 = arith.constant 3 : index
    %c0_164 = arith.constant 0 : index
    %325 = vector.load %arg15[%c3_163, %c0_164] : memref<4x256xf32, #tpu.memory_space<vmem>>, vector<1x256xf32>
    %c4_165 = arith.constant 4 : index
    %c0_166 = arith.constant 0 : index
    %326 = vector.load %arg16[%c4_165, %c0_166] : memref<5x256xf32, #tpu.memory_space<vmem>>, vector<1x256xf32>
    %c4_167 = arith.constant 4 : index
    %c0_168 = arith.constant 0 : index
    %327 = vector.load %arg17[%c4_167, %c0_168] : memref<5x256xf32, #tpu.memory_space<vmem>>, vector<1x256xf32>
    %cst_169 = arith.constant dense<0.000000e+00> : vector<128x256xf32>
    %328 = tpu.matmul %322, %324, %cst_169 {dimension_numbers = #tpu.dot_dimension_numbers<[1], [0], [0], [1], [0, 0, 1, 1], [], []>} : vector<128x256xbf16>, vector<256x256xbf16>, vector<128x256xf32> -> vector<128x256xf32>
    %329 = vector.broadcast %325 : vector<1x256xf32> to vector<128x256xf32>
    %330 = arith.addf %328, %329 : vector<128x256xf32>
    %cst_170 = arith.constant 0.000000e+00 : f32
    %331 = vector.broadcast %cst_170 : f32 to vector<128x256xf32>
    %332 = arith.maximumf %330, %331 : vector<128x256xf32>
    %cst_171 = arith.constant dense<0.000000e+00> : vector<256xf32>
    %333 = vector.multi_reduction <add>, %332, %cst_171 [0] : vector<128x256xf32> to vector<256xf32>
    %334 = vector.shape_cast %333 : vector<256xf32> to vector<1x256xf32>
    %cst_172 = arith.constant 1.280000e+02 : f32
    %335 = vector.broadcast %cst_172 : f32 to vector<1x256xf32>
    %336 = arith.divf %334, %335 : vector<1x256xf32>
    %337 = arith.mulf %332, %332 : vector<128x256xf32>
    %cst_173 = arith.constant dense<0.000000e+00> : vector<256xf32>
    %338 = vector.multi_reduction <add>, %337, %cst_173 [0] : vector<128x256xf32> to vector<256xf32>
    %339 = vector.shape_cast %338 : vector<256xf32> to vector<1x256xf32>
    %cst_174 = arith.constant 1.280000e+02 : f32
    %340 = vector.broadcast %cst_174 : f32 to vector<1x256xf32>
    %341 = arith.divf %339, %340 : vector<1x256xf32>
    %342 = arith.mulf %336, %336 : vector<1x256xf32>
    %343 = arith.subf %341, %342 : vector<1x256xf32>
    %cst_175 = arith.constant 0.000000e+00 : f32
    %344 = vector.broadcast %cst_175 : f32 to vector<1x256xf32>
    %345 = arith.maximumf %343, %344 : vector<1x256xf32>
    %cst_176 = arith.constant 9.99999974E-6 : f32
    %346 = vector.broadcast %cst_176 : f32 to vector<1x256xf32>
    %347 = arith.addf %345, %346 : vector<1x256xf32>
    %348 = math.rsqrt %347 : vector<1x256xf32>
    %349 = arith.mulf %326, %348 : vector<1x256xf32>
    %350 = arith.mulf %336, %349 : vector<1x256xf32>
    %351 = arith.subf %327, %350 : vector<1x256xf32>
    %352 = vector.broadcast %349 : vector<1x256xf32> to vector<128x256xf32>
    %353 = arith.mulf %332, %352 : vector<128x256xf32>
    %354 = vector.broadcast %351 : vector<1x256xf32> to vector<128x256xf32>
    %355 = arith.addf %353, %354 : vector<128x256xf32>
    %356 = arith.truncf %355 : vector<128x256xf32> to vector<128x256xbf16>
    %c0_177 = arith.constant 0 : index
    %c0_178 = arith.constant 0 : index
    %357 = vector.load %arg18[%c0_177, %c0_178] : memref<256x32xbf16, #tpu.memory_space<vmem>>, vector<256x32xbf16>
    %cst_179 = arith.constant dense<0.000000e+00> : vector<128x32xf32>
    %358 = tpu.matmul %356, %357, %cst_179 {dimension_numbers = #tpu.dot_dimension_numbers<[1], [0], [0], [1], [0, 0, 1, 1], [], []>} : vector<128x256xbf16>, vector<256x32xbf16>, vector<128x32xf32> -> vector<128x32xf32>
    %c0_180 = arith.constant 0 : index
    %c0_181 = arith.constant 0 : index
    %359 = vector.load %arg19[%c0_180, %c0_181] : memref<1x32xf32, #tpu.memory_space<vmem>>, vector<1x32xf32>
    %360 = vector.broadcast %359 : vector<1x32xf32> to vector<128x32xf32>
    %361 = arith.addf %358, %360 : vector<128x32xf32>
    %c0_182 = arith.constant 0 : index
    %c0_183 = arith.constant 0 : index
    %362 = vector.load %arg20[%c0_182, %c0_183] : memref<128x32xf32, #tpu.memory_space<vmem>>, vector<128x32xf32>
    tpu.vector_store %arg20[%c0_182, %c0_183], %361 {strides = array<i32>} : memref<128x32xf32, #tpu.memory_space<vmem>>, vector<128x32xf32>,
    %c0_184 = arith.constant 0 : index
    %c0_185 = arith.constant 0 : index
    %363 = vector.load %arg21[%c0_184, %c0_185] : memref<128x8xf32, #tpu.memory_space<vmem>>, vector<128x8xf32>
    tpu.vector_store %arg21[%c0_184, %c0_185], %175 {strides = array<i32>} : memref<128x8xf32, #tpu.memory_space<vmem>>, vector<128x8xf32>,
    %c0_186 = arith.constant 0 : index
    %c0_187 = arith.constant 0 : index
    %364 = vector.load %arg22[%c0_186, %c0_187] : memref<128x8xf32, #tpu.memory_space<vmem>>, vector<128x8xf32>
    tpu.vector_store %arg22[%c0_186, %c0_187], %180 {strides = array<i32>} : memref<128x8xf32, #tpu.memory_space<vmem>>, vector<128x8xf32>,
    return
  }
}

</mosaic_0001>

<llo_original>
// kernel: vae_forward.1
$region0: #{vae_forward.1}
  #allocation0 [shape = 'u32[]', space=smem, size = 0x4, offset = 0x4, fixed_abs, tag = 'smem constant byte address 0x4 - core index']
  #allocation1 [shape = 'u32[144,128]{1,0:T(1,128)}', space=vmem, size = 0x12000, scoped, tag = 'internal scratch']
  %s0 = inlined_call_operand.vmem [shape: f32[128,32], index: 0, kind: input, shape index: {}]
  %s1 = inlined_call_operand.vmem [shape: f32[128,8], index: 1, kind: input, shape index: {}]
  %s2 = inlined_call_operand.vmem [shape: bf16[32,256], index: 2, kind: input, shape index: {}]
  %s3 = inlined_call_operand.vmem [shape: f32[1,256], index: 3, kind: input, shape index: {}]
  %s4 = inlined_call_operand.hbm [shape: bf16[4,256,256], index: 4, kind: input, shape index: {}]
  %s5 = inlined_call_operand.vmem [shape: f32[4,256], index: 5, kind: input, shape index: {}]
  %s6 = inlined_call_operand.vmem [shape: f32[5,256], index: 6, kind: input, shape index: {}]
  %s7 = inlined_call_operand.vmem [shape: f32[5,256], index: 7, kind: input, shape index: {}]
  %s8 = inlined_call_operand.vmem [shape: bf16[256,8], index: 8, kind: input, shape index: {}]
  %s9 = inlined_call_operand.vmem [shape: f32[1,8], index: 9, kind: input, shape index: {}]
  %s10 = inlined_call_operand.vmem [shape: bf16[256,8], index: 10, kind: input, shape index: {}]
  %s11 = inlined_call_operand.vmem [shape: f32[1,8], index: 11, kind: input, shape index: {}]
  %s12 = inlined_call_operand.vmem [shape: bf16[8,256], index: 12, kind: input, shape index: {}]
  %s13 = inlined_call_operand.vmem [shape: f32[1,256], index: 13, kind: input, shape index: {}]
  %s14 = inlined_call_operand.hbm [shape: bf16[4,256,256], index: 14, kind: input, shape index: {}]
  %s15 = inlined_call_operand.vmem [shape: f32[4,256], index: 15, kind: input, shape index: {}]
  %s16 = inlined_call_operand.vmem [shape: f32[5,256], index: 16, kind: input, shape index: {}]
  %s17 = inlined_call_operand.vmem [shape: f32[5,256], index: 17, kind: input, shape index: {}]
  %s18 = inlined_call_operand.vmem [shape: bf16[256,32], index: 18, kind: input, shape index: {}]
  %s19 = inlined_call_operand.vmem [shape: f32[1,32], index: 19, kind: input, shape index: {}]
  %s20 = inlined_call_operand.vmem [shape: f32[128,32], index: 20, kind: output, shape index: {0}]
  %s21 = inlined_call_operand.vmem [shape: f32[128,8], index: 21, kind: output, shape index: {1}]
  %s22 = inlined_call_operand.vmem [shape: f32[128,8], index: 22, kind: output, shape index: {2}]
  %23 = xla_tuple %s20, %s21, %s22
  %s24 = sld [smem:[#allocation0]]
  $region114: #{vae_forward.1} parent=0
    _
  %s26 = ssub.s32 1, %s24
  %s27 = scalar_select 0, %s26, %s24
  $region1: #{vae_forward.1} parent=0
    #allocation2 [shape = 'u8[524288]{0}', space=vmem, size = 0x80000, scoped, tag = 'input window, operand 4, single buffered']
    #allocation3 [shape = 's32[1]{0}', space=sflag, size = 0x4, scoped, tag = 'scoped memory for vae_forward.1']
    #allocation4 [shape = 'u8[524288]{0}', space=vmem, size = 0x80000, scoped, tag = 'input window, operand 14, single buffered']
    #allocation5 [shape = 's32[1]{0}', space=sflag, size = 0x4, scoped, tag = 'scoped memory for vae_forward.1']
    %28 = vsyncpa [#allocation3], 0
    %29 = vsyncpa [#allocation5], 0
    // Predicated region
    $region2: #{vae_forward.1} parent=1 // pred_check
      _
    $region3: #{vae_forward.1} parent=1 // pred_check_branch
      %31 = sbr.rel (0) target = $region5
    $region4: #{vae_forward.1} parent=1 // pred_region
      _
    $region5: #{vae_forward.1} parent=1 // pred_fallthru
      _
    // Predicated region
    $region6: #{vae_forward.1} parent=1 // pred_check
      _
    $region7: #{vae_forward.1} parent=1 // pred_check_branch
      %33 = sbr.rel (0) target = $region9
    $region8: #{vae_forward.1} parent=1 // pred_region
      _
    $region9: #{vae_forward.1} parent=1 // pred_fallthru
      _
    // Predicated region
    $region10: #{vae_forward.1} parent=1 // pred_check
      _
    $region11: #{vae_forward.1} parent=1 // pred_check_branch
      %35 = sbr.rel (0) target = $region13
    $region12: #{vae_forward.1} parent=1 // pred_region
      _
    $region13: #{vae_forward.1} parent=1 // pred_fallthru
      _
    // Predicated region
    $region14: #{vae_forward.1} parent=1 // pred_check
      _
    $region15: #{vae_forward.1} parent=1 // pred_check_branch
      %37 = sbr.rel (0) target = $region17
    $region16: #{vae_forward.1} parent=1 // pred_region
      _
    $region17: #{vae_forward.1} parent=1 // pred_fallthru
      _
    // Predicated region
    $region18: #{vae_forward.1} parent=1 // pred_check
      _
    $region19: #{vae_forward.1} parent=1 // pred_check_branch
      %39 = sbr.rel (0) target = $region21
    $region20: #{vae_forward.1} parent=1 // pred_region
      %s41 = ssub.s32 16384, 16384
      %42 = vsyncadd [#allocation3], %s41
      %s43 = sshll.u32 [#allocation2], 4
      %s44 = int_to_ptr.vmem [resolvable:$true] %s43
      %49 = dma.hbm_to_vmem [thread:$0]  %s4, 16384, %s44, [#allocation3], 128, 128, 8
    $region21: #{vae_forward.1} parent=1 // pred_fallthru
      _
    // Predicated region
    $region22: #{vae_forward.1} parent=1 // pred_check
      _
    $region23: #{vae_forward.1} parent=1 // pred_check_branch
      %51 = sbr.rel (0) target = $region25
    $region24: #{vae_forward.1} parent=1 // pred_region
      _
    $region25: #{vae_forward.1} parent=1 // pred_fallthru
      _
    // Predicated region
    $region26: #{vae_forward.1} parent=1 // pred_check
      _
    $region27: #{vae_forward.1} parent=1 // pred_check_branch
      %53 = sbr.rel (0) target = $region29
    $region28: #{vae_forward.1} parent=1 // pred_region
      _
    $region29: #{vae_forward.1} parent=1 // pred_fallthru
      _
    // Predicated region
    $region30: #{vae_forward.1} parent=1 // pred_check
      _
    $region31: #{vae_forward.1} parent=1 // pred_check_branch
      %55 = sbr.rel (0) target = $region33
    $region32: #{vae_forward.1} parent=1 // pred_region
      _
    $region33: #{vae_forward.1} parent=1 // pred_fallthru
      _
    // Predicated region
    $region34: #{vae_forward.1} parent=1 // pred_check
      _
    $region35: #{vae_forward.1} parent=1 // pred_check_branch
      %57 = sbr.rel (0) target = $region37
    $region36: #{vae_forward.1} parent=1 // pred_region
      _
    $region37: #{vae_forward.1} parent=1 // pred_fallthru
      _
    // Predicated region
    $region38: #{vae_forward.1} parent=1 // pred_check
      _
    $region39: #{vae_forward.1} parent=1 // pred_check_branch
      %59 = sbr.rel (0) target = $region41
    $region40: #{vae_forward.1} parent=1 // pred_region
      _
    $region41: #{vae_forward.1} parent=1 // pred_fallthru
      _
    // Predicated region
    $region42: #{vae_forward.1} parent=1 // pred_check
      _
    $region43: #{vae_forward.1} parent=1 // pred_check_branch
      %61 = sbr.rel (0) target = $region45
    $region44: #{vae_forward.1} parent=1 // pred_region
      _
    $region45: #{vae_forward.1} parent=1 // pred_fallthru
      _
    // Predicated region
    $region46: #{vae_forward.1} parent=1 // pred_check
      _
    $region47: #{vae_forward.1} parent=1 // pred_check_branch
      %63 = sbr.rel (0) target = $region49
    $region48: #{vae_forward.1} parent=1 // pred_region
      _
    $region49: #{vae_forward.1} parent=1 // pred_fallthru
      _
    // Predicated region
    $region50: #{vae_forward.1} parent=1 // pred_check
      _
    $region51: #{vae_forward.1} parent=1 // pred_check_branch
      %65 = sbr.rel (0) target = $region53
    $region52: #{vae_forward.1} parent=1 // pred_region
      _
    $region53: #{vae_forward.1} parent=1 // pred_fallthru
      _
    // Predicated region
    $region54: #{vae_forward.1} parent=1 // pred_check
      _
    $region55: #{vae_forward.1} parent=1 // pred_check_branch
      %67 = sbr.rel (0) target = $region57
    $region56: #{vae_forward.1} parent=1 // pred_region
      _
    $region57: #{vae_forward.1} parent=1 // pred_fallthru
      _
    // Predicated region
    $region58: #{vae_forward.1} parent=1 // pred_check
      _
    $region59: #{vae_forward.1} parent=1 // pred_check_branch
      %69 = sbr.rel (0) target = $region61
    $region60: #{vae_forward.1} parent=1 // pred_region
      %s71 = ssub.s32 16384, 16384
      %72 = vsyncadd [#allocation5], %s71
      %s73 = sshll.u32 [#allocation4], 4
      %s74 = int_to_ptr.vmem [resolvable:$true] %s73
      %79 = dma.hbm_to_vmem [thread:$0]  %s14, 16384, %s74, [#allocation5], 128, 128, 8
    $region61: #{vae_forward.1} parent=1 // pred_fallthru
      _
    // Predicated region
    $region62: #{vae_forward.1} parent=1 // pred_check
      _
    $region63: #{vae_forward.1} parent=1 // pred_check_branch
      %81 = sbr.rel (0) target = $region65
    $region64: #{vae_forward.1} parent=1 // pred_region
      _
    $region65: #{vae_forward.1} parent=1 // pred_fallthru
      _
    // Predicated region
    $region66: #{vae_forward.1} parent=1 // pred_check
      _
    $region67: #{vae_forward.1} parent=1 // pred_check_branch
      %83 = sbr.rel (0) target = $region69
    $region68: #{vae_forward.1} parent=1 // pred_region
      _
    $region69: #{vae_forward.1} parent=1 // pred_fallthru
      _
    // Predicated region
    $region70: #{vae_forward.1} parent=1 // pred_check
      _
    $region71: #{vae_forward.1} parent=1 // pred_check_branch
      %85 = sbr.rel (0) target = $region73
    $region72: #{vae_forward.1} parent=1 // pred_region
      _
    $region73: #{vae_forward.1} parent=1 // pred_fallthru
      _
    // Predicated region
    $region74: #{vae_forward.1} parent=1 // pred_check
      _
    $region75: #{vae_forward.1} parent=1 // pred_check_branch
      %87 = sbr.rel (0) target = $region77
    $region76: #{vae_forward.1} parent=1 // pred_region
      _
    $region77: #{vae_forward.1} parent=1 // pred_fallthru
      _
    // Predicated region
    $region78: #{vae_forward.1} parent=1 // pred_check
      _
    $region79: #{vae_forward.1} parent=1 // pred_check_branch
      %89 = sbr.rel (0) target = $region81
    $region80: #{vae_forward.1} parent=1 // pred_region
      _
    $region81: #{vae_forward.1} parent=1 // pred_fallthru
      _
    // Predicated region
    $region82: #{vae_forward.1} parent=1 // pred_check
      _
    $region83: #{vae_forward.1} parent=1 // pred_check_branch
      %91 = sbr.rel (0) target = $region85
    $region84: #{vae_forward.1} parent=1 // pred_region
      %92 = dma.done [#allocation3], 16384
    $region85: #{vae_forward.1} parent=1 // pred_fallthru
      _
    // Predicated region
    $region86: #{vae_forward.1} parent=1 // pred_check
      _
    $region87: #{vae_forward.1} parent=1 // pred_check_branch
      %94 = sbr.rel (0) target = $region89
    $region88: #{vae_forward.1} parent=1 // pred_region
      %95 = dma.done [#allocation5], 16384
    $region89: #{vae_forward.1} parent=1 // pred_fallthru
      _
    %v97 = vld [vmem:[%s0] sm:$0xff]
    %v98 = vld [vmem:[%s0 + $0x8] sm:$0xff]
    %v99 = vld [vmem:[%s0 + $0x10] sm:$0xff]
    %v100 = vld [vmem:[%s0 + $0x18] sm:$0xff]
    %v101 = vld [vmem:[%s0 + $0x20] sm:$0xff]
    %v102 = vld [vmem:[%s0 + $0x28] sm:$0xff]
    %v103 = vld [vmem:[%s0 + $0x30] sm:$0xff]
    %v104 = vld [vmem:[%s0 + $0x38] sm:$0xff]
    %v105 = vld [vmem:[%s0 + $0x40] sm:$0xff]
    %v106 = vld [vmem:[%s0 + $0x48] sm:$0xff]
    %v107 = vld [vmem:[%s0 + $0x50] sm:$0xff]
    %v108 = vld [vmem:[%s0 + $0x58] sm:$0xff]
    %v109 = vld [vmem:[%s0 + $0x60] sm:$0xff]
    %v110 = vld [vmem:[%s0 + $0x68] sm:$0xff]
    %v111 = vld [vmem:[%s0 + $0x70] sm:$0xff]
    %v112 = vld [vmem:[%s0 + $0x78] sm:$0xff]
    %v113 = vpack.c.bf16 %v98, %v97
    %v114 = vpack.c.bf16 %v100, %v99
    %v115 = vpack.c.bf16 %v102, %v101
    %v116 = vpack.c.bf16 %v104, %v103
    %v117 = vpack.c.bf16 %v106, %v105
    %v118 = vpack.c.bf16 %v108, %v107
    %v119 = vpack.c.bf16 %v110, %v109
    %v120 = vpack.c.bf16 %v112, %v111
    %v121 = vld [vmem:[%s2] sm:$0xff]
    %v122 = vld [vmem:[%s2 + $0x8] sm:$0xff]
    %v123 = vld [vmem:[%s2 + $0x10] sm:$0xff]
    %v124 = vld [vmem:[%s2 + $0x18] sm:$0xff]
    %v125 = vld [vmem:[%s3] sm:$0x3]
    %v126 = vld [vmem:[%s6] ss:$8 sm:$0x3]
    %v127 = vld [vmem:[%s7] ss:$8 sm:$0x3]
    %v129 = vlaneseq
    %v130 = vshrl.u32 %v129, 7
    %v131 = vsub.s32 0, %v130
    %v132 = vrot.slane %v125, %v131
    %v133 = vlaneseq
    %v134 = vshrl.u32 %v133, 7
    %v135 = vsub.s32 1, %v134
    %v136 = vrot.slane %v125, %v135
    %v143 = vunpack.c.l.b16 %v121
    %v144 = vunpack.c.h.b16 %v121
    %v145 = vunpack.c.l.b16 %v122
    %v146 = vunpack.c.h.b16 %v122
    %v147 = vunpack.c.l.b16 %v123
    %v148 = vunpack.c.h.b16 %v123
    %v149 = vunpack.c.l.b16 %v124
    %v150 = vunpack.c.h.b16 %v124
    %v151 = vpack.c.b16 %v145, %v143
    %v152 = vpack.c.b16 %v146, %v144
    %v153 = vpack.c.b16 %v149, %v147
    %v154 = vpack.c.b16 %v150, %v148
    %vm159 = vcmask 261120
    %v161 = vsel %vm159, %v113, 0
    %v164 = vsel %vm159, %v114, 0
    %v167 = vsel %vm159, %v115, 0
    %v170 = vsel %vm159, %v116, 0
    %v173 = vsel %vm159, %v117, 0
    %v176 = vsel %vm159, %v118, 0
    %v179 = vsel %vm159, %v119, 0
    %v182 = vsel %vm159, %v120, 0
    %184 = vmatprep.subr.bf16.mxu0 %v152
    %185 = vmatpush1.bf16.msra.mxu0 %v151
    %186 = vmatprep.subr.bf16.mxu0 %v154
    %187 = vmatpush1.bf16.msra.mxu0 %v153
    %188 = vmatprep.subr.bf16.mxu0 0
    %189 = vmatpush1.bf16.msra.mxu0 0
    %190 = vmatprep.subr.bf16.mxu0 0
    %191 = vmatpush1.bf16.msra.mxu0 0
    %192 = vmatprep.subr.bf16.mxu0 0
    %193 = vmatpush1.bf16.msra.mxu0 0
    %194 = vmatprep.subr.bf16.mxu0 0
    %195 = vmatpush1.bf16.msra.mxu0 0
    %196 = vmatprep.subr.bf16.mxu0 0
    %197 = vmatpush1.bf16.msra.mxu0 0
    %198 = vmatprep.subr.bf16.mxu0 0
    %199 = vmatpush1.bf16.msra.mxu0 0
    %200 = vmatprep.subr.bf16.mxu0 0
    %201 = vmatpush1.bf16.msra.mxu0 0
    %202 = vmatprep.subr.bf16.mxu0 0
    %203 = vmatpush1.bf16.msra.mxu0 0
    %204 = vmatprep.subr.bf16.mxu0 0
    %205 = vmatpush1.bf16.msra.mxu0 0
    %206 = vmatprep.subr.bf16.mxu0 0
    %207 = vmatpush1.bf16.msra.mxu0 0
    %208 = vmatprep.subr.bf16.mxu0 0
    %209 = vmatpush1.bf16.msra.mxu0 0
    %210 = vmatprep.subr.bf16.mxu0 0
    %211 = vmatpush1.bf16.msra.mxu0 0
    %212 = vmatprep.subr.bf16.mxu0 0
    %213 = vmatpush1.bf16.msra.mxu0 0
    %214 = vmatprep.subr.bf16.mxu0 0
    %215 = vmatpush1.bf16.msra.mxu0 0
    %216 = vmatprep.mubr.bf16.mxu0 0
    %217 = vmatmul.mubr.bf16.gmra.mrb[0].mxu0 %v161
    %v218 = vpop.f32.mrb[0].mxu0
    %v219 = vadd.f32 %v132, %v218
    %v220 = vpop.f32.mrb[0].mxu0
    %v221 = vadd.f32 %v136, %v220
    %v222 = vpop.f32.mrb[0].mxu0
    %v223 = vadd.f32 %v132, %v222
    %v224 = vpop.f32.mrb[0].mxu0
    %v225 = vadd.f32 %v136, %v224
    %226 = vmatprep.mubr.bf16.mxu0 0
    %227 = vmatmul.mubr.bf16.gmra.mrb[0].mxu0 %v164
    %v228 = vpop.f32.mrb[0].mxu0
    %v229 = vadd.f32 %v132, %v228
    %v230 = vpop.f32.mrb[0].mxu0
    %v231 = vadd.f32 %v136, %v230
    %v232 = vpop.f32.mrb[0].mxu0
    %v233 = vadd.f32 %v132, %v232
    %v234 = vpop.f32.mrb[0].mxu0
    %v235 = vadd.f32 %v136, %v234
    %236 = vmatprep.mubr.bf16.mxu0 0
    %237 = vmatmul.mubr.bf16.gmra.mrb[0].mxu0 %v167
    %v238 = vpop.f32.mrb[0].mxu0
    %v239 = vadd.f32 %v132, %v238
    %v240 = vpop.f32.mrb[0].mxu0
    %v241 = vadd.f32 %v136, %v240
    %v242 = vpop.f32.mrb[0].mxu0
    %v243 = vadd.f32 %v132, %v242
    %v244 = vpop.f32.mrb[0].mxu0
    %v245 = vadd.f32 %v136, %v244
    %246 = vmatprep.mubr.bf16.mxu0 0
    %247 = vmatmul.mubr.bf16.gmra.mrb[0].mxu0 %v170
    %v248 = vpop.f32.mrb[0].mxu0
    %v249 = vadd.f32 %v132, %v248
    %v250 = vpop.f32.mrb[0].mxu0
    %v251 = vadd.f32 %v136, %v250
    %v252 = vpop.f32.mrb[0].mxu0
    %v253 = vadd.f32 %v132, %v252
    %v254 = vpop.f32.mrb[0].mxu0
    %v255 = vadd.f32 %v136, %v254
    %256 = vmatprep.mubr.bf16.mxu0 0
    %257 = vmatmul.mubr.bf16.gmra.mrb[0].mxu0 %v173
    %v258 = vpop.f32.mrb[0].mxu0
    %v259 = vadd.f32 %v132, %v258
    %v260 = vpop.f32.mrb[0].mxu0
    %v261 = vadd.f32 %v136, %v260
    %v262 = vpop.f32.mrb[0].mxu0
    %v263 = vadd.f32 %v132, %v262
    %v264 = vpop.f32.mrb[0].mxu0
    %v265 = vadd.f32 %v136, %v264
    %266 = vmatprep.mubr.bf16.mxu0 0
    %267 = vmatmul.mubr.bf16.gmra.mrb[0].mxu0 %v176
    %v268 = vpop.f32.mrb[0].mxu0
    %v269 = vadd.f32 %v132, %v268
    %v270 = vpop.f32.mrb[0].mxu0
    %v271 = vadd.f32 %v136, %v270
    %v272 = vpop.f32.mrb[0].mxu0
    %v273 = vadd.f32 %v132, %v272
    %v274 = vpop.f32.mrb[0].mxu0
    %v275 = vadd.f32 %v136, %v274
    %276 = vmatprep.mubr.bf16.mxu0 0
    %277 = vmatmul.mubr.bf16.gmra.mrb[0].mxu0 %v179
    %v278 = vpop.f32.mrb[0].mxu0
    %v279 = vadd.f32 %v132, %v278
    %v280 = vpop.f32.mrb[0].mxu0
    %v281 = vadd.f32 %v136, %v280
    %v282 = vpop.f32.mrb[0].mxu0
    %v283 = vadd.f32 %v132, %v282
    %v284 = vpop.f32.mrb[0].mxu0
    %v285 = vadd.f32 %v136, %v284
    %286 = vmatprep.mubr.bf16.mxu0 0
    %287 = vmatmul.mubr.bf16.gmra.mrb[0].mxu0 %v182
    %v288 = vpop.f32.mrb[0].mxu0
    %v289 = vadd.f32 %v132, %v288
    %v290 = vpop.f32.mrb[0].mxu0
    %v291 = vadd.f32 %v136, %v290
    %v292 = vpop.f32.mrb[0].mxu0
    %v293 = vadd.f32 %v132, %v292
    %v294 = vpop.f32.mrb[0].mxu0
    %v295 = vadd.f32 %v136, %v294
    %296 = vdwg.mxu0
    %v297 = vmax.f32 %v219, 0.0
    %v298 = vmax.f32 %v221, 0.0
    %v299 = vmax.f32 %v223, 0.0
    %v300 = vmax.f32 %v225, 0.0
    %v301 = vmax.f32 %v229, 0.0
    %v302 = vmax.f32 %v231, 0.0
    %v303 = vmax.f32 %v233, 0.0
    %v304 = vmax.f32 %v235, 0.0
    %v305 = vmax.f32 %v239, 0.0
    %v306 = vmax.f32 %v241, 0.0
    %v307 = vmax.f32 %v243, 0.0
    %v308 = vmax.f32 %v245, 0.0
    %v309 = vmax.f32 %v249, 0.0
    %v310 = vmax.f32 %v251, 0.0
    %v311 = vmax.f32 %v253, 0.0
    %v312 = vmax.f32 %v255, 0.0
    %v313 = vmax.f32 %v259, 0.0
    %v314 = vmax.f32 %v261, 0.0
    %v315 = vmax.f32 %v263, 0.0
    %v316 = vmax.f32 %v265, 0.0
    %v317 = vmax.f32 %v269, 0.0
    %v318 = vmax.f32 %v271, 0.0
    %v319 = vmax.f32 %v273, 0.0
    %v320 = vmax.f32 %v275, 0.0
    %v321 = vmax.f32 %v279, 0.0
    %v322 = vmax.f32 %v281, 0.0
    %v323 = vmax.f32 %v283, 0.0
    %v324 = vmax.f32 %v285, 0.0
    %v325 = vmax.f32 %v289, 0.0
    %v326 = vmax.f32 %v291, 0.0
    %v327 = vmax.f32 %v293, 0.0
    %v328 = vmax.f32 %v295, 0.0
    %v329 = vadd.f32 %v297, %v299
    %v330 = vadd.f32 %v329, %v301
    %v331 = vadd.f32 %v330, %v303
    %v332 = vadd.f32 %v331, %v305
    %v333 = vadd.f32 %v332, %v307
    %v334 = vadd.f32 %v333, %v309
    %v335 = vadd.f32 %v334, %v311
    %v336 = vadd.f32 %v335, %v313
    %v337 = vadd.f32 %v336, %v315
    %v338 = vadd.f32 %v337, %v317
    %v339 = vadd.f32 %v338, %v319
    %v340 = vadd.f32 %v339, %v321
    %v341 = vadd.f32 %v340, %v323
    %v342 = vadd.f32 %v341, %v325
    %v343 = vadd.f32 %v342, %v327
    %v344 = vrot.slane %v343, 4
    %v345 = vadd.f32 %v343, %v344
    %v346 = vrot.slane %v345, 2
    %v347 = vadd.f32 %v345, %v346
    %v348 = vrot.slane %v347, 1
    %v349 = vadd.f32 %v347, %v348
    %v350 = vadd.f32 %v298, %v300
    %v351 = vadd.f32 %v350, %v302
    %v352 = vadd.f32 %v351, %v304
    %v353 = vadd.f32 %v352, %v306
    %v354 = vadd.f32 %v353, %v308
    %v355 = vadd.f32 %v354, %v310
    %v356 = vadd.f32 %v355, %v312
    %v357 = vadd.f32 %v356, %v314
    %v358 = vadd.f32 %v357, %v316
    %v359 = vadd.f32 %v358, %v318
    %v360 = vadd.f32 %v359, %v320
    %v361 = vadd.f32 %v360, %v322
    %v362 = vadd.f32 %v361, %v324
    %v363 = vadd.f32 %v362, %v326
    %v364 = vadd.f32 %v363, %v328
    %v365 = vrot.slane %v364, 4
    %v366 = vadd.f32 %v364, %v365
    %v367 = vrot.slane %v366, 2
    %v368 = vadd.f32 %v366, %v367
    %v369 = vrot.slane %v368, 1
    %v370 = vadd.f32 %v368, %v369
    %v371 = vrcp.pop 128.0
    %v372 = vmul.f32 %v349, %v371
    %v373 = vmul.f32 %v370, %v371
    %v374 = vmul.f32 %v297, %v297
    %v375 = vmul.f32 %v298, %v298
    %v376 = vmul.f32 %v299, %v299
    %v377 = vmul.f32 %v300, %v300
    %v378 = vmul.f32 %v301, %v301
    %v379 = vmul.f32 %v302, %v302
    %v380 = vmul.f32 %v303, %v303
    %v381 = vmul.f32 %v304, %v304
    %v382 = vmul.f32 %v305, %v305
    %v383 = vmul.f32 %v306, %v306
    %v384 = vmul.f32 %v307, %v307
    %v385 = vmul.f32 %v308, %v308
    %v386 = vmul.f32 %v309, %v309
    %v387 = vmul.f32 %v310, %v310
    %v388 = vmul.f32 %v311, %v311
    %v389 = vmul.f32 %v312, %v312
    %v390 = vmul.f32 %v313, %v313
    %v391 = vmul.f32 %v314, %v314
    %v392 = vmul.f32 %v315, %v315
    %v393 = vmul.f32 %v316, %v316
    %v394 = vmul.f32 %v317, %v317
    %v395 = vmul.f32 %v318, %v318
    %v396 = vmul.f32 %v319, %v319
    %v397 = vmul.f32 %v320, %v320
    %v398 = vmul.f32 %v321, %v321
    %v399 = vmul.f32 %v322, %v322
    %v400 = vmul.f32 %v323, %v323
    %v401 = vmul.f32 %v324, %v324
    %v402 = vmul.f32 %v325, %v325
    %v403 = vmul.f32 %v326, %v326
    %v404 = vmul.f32 %v327, %v327
    %v405 = vmul.f32 %v328, %v328
    %v406 = vadd.f32 %v374, %v376
    %v407 = vadd.f32 %v406, %v378
    %v408 = vadd.f32 %v407, %v380
    %v409 = vadd.f32 %v408, %v382
    %v410 = vadd.f32 %v409, %v384
    %v411 = vadd.f32 %v410, %v386
    %v412 = vadd.f32 %v411, %v388
    %v413 = vadd.f32 %v412, %v390
    %v414 = vadd.f32 %v413, %v392
    %v415 = vadd.f32 %v414, %v394
    %v416 = vadd.f32 %v415, %v396
    %v417 = vadd.f32 %v416, %v398
    %v418 = vadd.f32 %v417, %v400
    %v419 = vadd.f32 %v418, %v402
    %v420 = vadd.f32 %v419, %v404
    %v421 = vrot.slane %v420, 4
    %v422 = vadd.f32 %v420, %v421
    %v423 = vrot.slane %v422, 2
    %v424 = vadd.f32 %v422, %v423
    %v425 = vrot.slane %v424, 1
    %v426 = vadd.f32 %v424, %v425
    %v427 = vadd.f32 %v375, %v377
    %v428 = vadd.f32 %v427, %v379
    %v429 = vadd.f32 %v428, %v381
    %v430 = vadd.f32 %v429, %v383
    %v431 = vadd.f32 %v430, %v385
    %v432 = vadd.f32 %v431, %v387
    %v433 = vadd.f32 %v432, %v389
    %v434 = vadd.f32 %v433, %v391
    %v435 = vadd.f32 %v434, %v393
    %v436 = vadd.f32 %v435, %v395
    %v437 = vadd.f32 %v436, %v397
    %v438 = vadd.f32 %v437, %v399
    %v439 = vadd.f32 %v438, %v401
    %v440 = vadd.f32 %v439, %v403
    %v441 = vadd.f32 %v440, %v405
    %v442 = vrot.slane %v441, 4
    %v443 = vadd.f32 %v441, %v442
    %v444 = vrot.slane %v443, 2
    %v445 = vadd.f32 %v443, %v444
    %v446 = vrot.slane %v445, 1
    %v447 = vadd.f32 %v445, %v446
    %v448 = vmul.f32 %v426, %v371
    %v449 = vmul.f32 %v447, %v371
    %v450 = vmul.f32 %v372, %v372
    %v451 = vmul.f32 %v373, %v373
    %v452 = vsub.f32 %v448, %v450
    %v453 = vsub.f32 %v449, %v451
    %v454 = vmax.f32 %v452, 0.0
    %v455 = vmax.f32 %v453, 0.0
    %v456 = vadd.f32 %v454, 1e-05
    %v457 = vadd.f32 %v455, 1e-05
    %v458 = vrsqrt.pop %v456
    %v459 = vrsqrt.pop %v457
    %v462 = vcombine.low %v458, %v459
    %v464 = vunpack.c.l.s4 1966171168
    %v465 = vunpack.c.0.s8 %v464
    %v466 = vlaneseq
    %v467 = vshrl.u32 %v466, 7
    %v468 = vsub.s32 %v465, %v467
    %v469 = vrot.slane %v462, %v468
    %v471 = vunpack.c.l.s4 1966171168
    %v472 = vunpack.c.0.s8 %v471
    %v473 = vlaneseq
    %v474 = vshrl.u32 %v473, 7
    %v475 = vsub.s32 %v472, %v474
    %v476 = vrot.slane %v469, %v475
    %v478 = vmul.f32 %v126, %v476
    %v480 = vlaneseq
    %v481 = vshrl.u32 %v480, 7
    %v482 = vsub.s32 0, %v481
    %v483 = vrot.slane %v478, %v482
    %v484 = vlaneseq
    %v485 = vshrl.u32 %v484, 7
    %v486 = vsub.s32 1, %v485
    %v487 = vrot.slane %v478, %v486
    %v490 = vmul.f32 %v372, %v483
    %v491 = vmul.f32 %v373, %v487
    %v494 = vcombine.low %v490, %v491
    %v496 = vunpack.c.l.s4 1966171168
    %v497 = vunpack.c.0.s8 %v496
    %v498 = vlaneseq
    %v499 = vshrl.u32 %v498, 7
    %v500 = vsub.s32 %v497, %v499
    %v501 = vrot.slane %v494, %v500
    %v503 = vunpack.c.l.s4 1966171168
    %v504 = vunpack.c.0.s8 %v503
    %v505 = vlaneseq
    %v506 = vshrl.u32 %v505, 7
    %v507 = vsub.s32 %v504, %v506
    %v508 = vrot.slane %v501, %v507
    %v510 = vsub.f32 %v127, %v508
    %v511 = vmul.f32 %v297, %v483
    %v512 = vmul.f32 %v298, %v487
    %v513 = vmul.f32 %v299, %v483
    %v514 = vmul.f32 %v300, %v487
    %v515 = vmul.f32 %v301, %v483
    %v516 = vmul.f32 %v302, %v487
    %v517 = vmul.f32 %v303, %v483
    %v518 = vmul.f32 %v304, %v487
    %v519 = vmul.f32 %v305, %v483
    %v520 = vmul.f32 %v306, %v487
    %v521 = vmul.f32 %v307, %v483
    %v522 = vmul.f32 %v308, %v487
    %v523 = vmul.f32 %v309, %v483
    %v524 = vmul.f32 %v310, %v487
    %v525 = vmul.f32 %v311, %v483
    %v526 = vmul.f32 %v312, %v487
    %v527 = vmul.f32 %v313, %v483
    %v528 = vmul.f32 %v314, %v487
    %v529 = vmul.f32 %v315, %v483
    %v530 = vmul.f32 %v316, %v487
    %v531 = vmul.f32 %v317, %v483
    %v532 = vmul.f32 %v318, %v487
    %v533 = vmul.f32 %v319, %v483
    %v534 = vmul.f32 %v320, %v487
    %v535 = vmul.f32 %v321, %v483
    %v536 = vmul.f32 %v322, %v487
    %v537 = vmul.f32 %v323, %v483
    %v538 = vmul.f32 %v324, %v487
    %v539 = vmul.f32 %v325, %v483
    %v540 = vmul.f32 %v326, %v487
    %v541 = vmul.f32 %v327, %v483
    %v542 = vmul.f32 %v328, %v487
    %v544 = vlaneseq
    %v545 = vshrl.u32 %v544, 7
    %v546 = vsub.s32 0, %v545
    %v547 = vrot.slane %v510, %v546
    %v548 = vlaneseq
    %v549 = vshrl.u32 %v548, 7
    %v550 = vsub.s32 1, %v549
    %v551 = vrot.slane %v510, %v550
    %v554 = vadd.f32 %v511, %v547
    %v555 = vadd.f32 %v512, %v551
    %v556 = vadd.f32 %v513, %v547
    %v557 = vadd.f32 %v514, %v551
    %v558 = vadd.f32 %v515, %v547
    %v559 = vadd.f32 %v516, %v551
    %v560 = vadd.f32 %v517, %v547
    %v561 = vadd.f32 %v518, %v551
    %v562 = vadd.f32 %v519, %v547
    %v563 = vadd.f32 %v520, %v551
    %v564 = vadd.f32 %v521, %v547
    %v565 = vadd.f32 %v522, %v551
    %v566 = vadd.f32 %v523, %v547
    %v567 = vadd.f32 %v524, %v551
    %v568 = vadd.f32 %v525, %v547
    %v569 = vadd.f32 %v526, %v551
    %v570 = vadd.f32 %v527, %v547
    %v571 = vadd.f32 %v528, %v551
    %v572 = vadd.f32 %v529, %v547
    %v573 = vadd.f32 %v530, %v551
    %v574 = vadd.f32 %v531, %v547
    %v575 = vadd.f32 %v532, %v551
    %v576 = vadd.f32 %v533, %v547
    %v577 = vadd.f32 %v534, %v551
    %v578 = vadd.f32 %v535, %v547
    %v579 = vadd.f32 %v536, %v551
    %v580 = vadd.f32 %v537, %v547
    %v581 = vadd.f32 %v538, %v551
    %v582 = vadd.f32 %v539, %v547
    %v583 = vadd.f32 %v540, %v551
    %v584 = vadd.f32 %v541, %v547
    %v585 = vadd.f32 %v542, %v551
    %v586 = vpack.c.bf16 %v556, %v554
    %v587 = vpack.c.bf16 %v557, %v555
    %v588 = vpack.c.bf16 %v560, %v558
    %v589 = vpack.c.bf16 %v561, %v559
    %v590 = vpack.c.bf16 %v564, %v562
    %v591 = vpack.c.bf16 %v565, %v563
    %v592 = vpack.c.bf16 %v568, %v566
    %v593 = vpack.c.bf16 %v569, %v567
    %v594 = vpack.c.bf16 %v572, %v570
    %v595 = vpack.c.bf16 %v573, %v571
    %v596 = vpack.c.bf16 %v576, %v574
    %v597 = vpack.c.bf16 %v577, %v575
    %v598 = vpack.c.bf16 %v580, %v578
    %v599 = vpack.c.bf16 %v581, %v579
    %v600 = vpack.c.bf16 %v584, %v582
    %v601 = vpack.c.bf16 %v585, %v583
    %v602 = vld [vmem:[#allocation2] sm:$0xff]
    %v603 = vld [vmem:[#allocation2 + $0x8] sm:$0xff]
    %v604 = vld [vmem:[#allocation2 + $0x10] sm:$0xff]
    %v605 = vld [vmem:[#allocation2 + $0x18] sm:$0xff]
    %v606 = vld [vmem:[#allocation2 + $0x20] sm:$0xff]
    %v607 = vld [vmem:[#allocation2 + $0x28] sm:$0xff]
    %v608 = vld [vmem:[#allocation2 + $0x30] sm:$0xff]
    %v609 = vld [vmem:[#allocation2 + $0x38] sm:$0xff]
    %v610 = vld [vmem:[#allocation2 + $0x40] sm:$0xff]
    %v611 = vld [vmem:[#allocation2 + $0x48] sm:$0xff]
    %v612 = vld [vmem:[#allocation2 + $0x50] sm:$0xff]
    %v613 = vld [vmem:[#allocation2 + $0x58] sm:$0xff]
    %v614 = vld [vmem:[#allocation2 + $0x60] sm:$0xff]
    %v615 = vld [vmem:[#allocation2 + $0x68] sm:$0xff]
    %v616 = vld [vmem:[#allocation2 + $0x70] sm:$0xff]
    %v617 = vld [vmem:[#allocation2 + $0x78] sm:$0xff]
    %v618 = vld [vmem:[#allocation2 + $0x80] sm:$0xff]
    %v619 = vld [vmem:[#allocation2 + $0x88] sm:$0xff]
    %v620 = vld [vmem:[#allocation2 + $0x90] sm:$0xff]
    %v621 = vld [vmem:[#allocation2 + $0x98] sm:$0xff]
    %v622 = vld [vmem:[#allocation2 + $0xa0] sm:$0xff]
    %v623 = vld [vmem:[#allocation2 + $0xa8] sm:$0xff]
    %v624 = vld [vmem:[#allocation2 + $0xb0] sm:$0xff]
    %v625 = vld [vmem:[#allocation2 + $0xb8] sm:$0xff]
    %v626 = vld [vmem:[#allocation2 + $0xc0] sm:$0xff]
    %v627 = vld [vmem:[#allocation2 + $0xc8] sm:$0xff]
    %v628 = vld [vmem:[#allocation2 + $0xd0] sm:$0xff]
    %v629 = vld [vmem:[#allocation2 + $0xd8] sm:$0xff]
    %v630 = vld [vmem:[#allocation2 + $0xe0] sm:$0xff]
    %v631 = vld [vmem:[#allocation2 + $0xe8] sm:$0xff]
    %v632 = vld [vmem:[#allocation2 + $0xf0] sm:$0xff]
    %v633 = vld [vmem:[#allocation2 + $0xf8] sm:$0xff]
    %v634 = vld [vmem:[%s5] ss:$4 sm:$0x3]
    %s635 = scalar_lea.vmem %s6, 1
    %v636 = vld [vmem:[%s635] ss:$8 sm:$0x3]
    %s637 = scalar_lea.vmem %s7, 1
    %v638 = vld [vmem:[%s637] ss:$8 sm:$0x3]
    %v640 = vlaneseq
    %v641 = vshrl.u32 %v640, 7
    %v642 = vsub.s32 0, %v641
    %v643 = vrot.slane %v634, %v642
    %v644 = vlaneseq
    %v645 = vshrl.u32 %v644, 7
    %v646 = vsub.s32 1, %v645
    %v647 = vrot.slane %v634, %v646
    %v682 = vunpack.c.l.b16 %v602
    %v683 = vunpack.c.h.b16 %v602
    %v684 = vunpack.c.l.b16 %v603
    %v685 = vunpack.c.h.b16 %v603
    %v686 = vunpack.c.l.b16 %v604
    %v687 = vunpack.c.h.b16 %v604
    %v688 = vunpack.c.l.b16 %v605
    %v689 = vunpack.c.h.b16 %v605
    %v690 = vunpack.c.l.b16 %v606
    %v691 = vunpack.c.h.b16 %v606
    %v692 = vunpack.c.l.b16 %v607
    %v693 = vunpack.c.h.b16 %v607
    %v694 = vunpack.c.l.b16 %v608
    %v695 = vunpack.c.h.b16 %v608
    %v696 = vunpack.c.l.b16 %v609
    %v697 = vunpack.c.h.b16 %v609
    %v698 = vunpack.c.l.b16 %v610
    %v699 = vunpack.c.h.b16 %v610
    %v700 = vunpack.c.l.b16 %v611
    %v701 = vunpack.c.h.b16 %v611
    %v702 = vunpack.c.l.b16 %v612
    %v703 = vunpack.c.h.b16 %v612
    %v704 = vunpack.c.l.b16 %v613
    %v705 = vunpack.c.h.b16 %v613
    %v706 = vunpack.c.l.b16 %v614
    %v707 = vunpack.c.h.b16 %v614
    %v708 = vunpack.c.l.b16 %v615
    %v709 = vunpack.c.h.b16 %v615
    %v710 = vunpack.c.l.b16 %v616
    %v711 = vunpack.c.h.b16 %v616
    %v712 = vunpack.c.l.b16 %v617
    %v713 = vunpack.c.h.b16 %v617
    %v714 = vunpack.c.l.b16 %v618
    %v715 = vunpack.c.h.b16 %v618
    %v716 = vunpack.c.l.b16 %v619
    %v717 = vunpack.c.h.b16 %v619
    %v718 = vunpack.c.l.b16 %v620
    %v719 = vunpack.c.h.b16 %v620
    %v720 = vunpack.c.l.b16 %v621
    %v721 = vunpack.c.h.b16 %v621
    %v722 = vunpack.c.l.b16 %v622
    %v723 = vunpack.c.h.b16 %v622
    %v724 = vunpack.c.l.b16 %v623
    %v725 = vunpack.c.h.b16 %v623
    %v726 = vunpack.c.l.b16 %v624
    %v727 = vunpack.c.h.b16 %v624
    %v728 = vunpack.c.l.b16 %v625
    %v729 = vunpack.c.h.b16 %v625
    %v730 = vunpack.c.l.b16 %v626
    %v731 = vunpack.c.h.b16 %v626
    %v732 = vunpack.c.l.b16 %v627
    %v733 = vunpack.c.h.b16 %v627
    %v734 = vunpack.c.l.b16 %v628
    %v735 = vunpack.c.h.b16 %v628
    %v736 = vunpack.c.l.b16 %v629
    %v737 = vunpack.c.h.b16 %v629
    %v738 = vunpack.c.l.b16 %v630
    %v739 = vunpack.c.h.b16 %v630
    %v740 = vunpack.c.l.b16 %v631
    %v741 = vunpack.c.h.b16 %v631
    %v742 = vunpack.c.l.b16 %v632
    %v743 = vunpack.c.h.b16 %v632
    %v744 = vunpack.c.l.b16 %v633
    %v745 = vunpack.c.h.b16 %v633
    %v746 = vpack.c.b16 %v684, %v682
    %v747 = vpack.c.b16 %v685, %v683
    %v748 = vpack.c.b16 %v688, %v686
    %v749 = vpack.c.b16 %v689, %v687
    %v750 = vpack.c.b16 %v692, %v690
    %v751 = vpack.c.b16 %v693, %v691
    %v752 = vpack.c.b16 %v696, %v694
    %v753 = vpack.c.b16 %v697, %v695
    %v754 = vpack.c.b16 %v700, %v698
    %v755 = vpack.c.b16 %v701, %v699
    %v756 = vpack.c.b16 %v704, %v702
    %v757 = vpack.c.b16 %v705, %v703
    %v758 = vpack.c.b16 %v708, %v706
    %v759 = vpack.c.b16 %v709, %v707
    %v760 = vpack.c.b16 %v712, %v710
    %v761 = vpack.c.b16 %v713, %v711
    %v762 = vpack.c.b16 %v716, %v714
    %v763 = vpack.c.b16 %v717, %v715
    %v764 = vpack.c.b16 %v720, %v718
    %v765 = vpack.c.b16 %v721, %v719
    %v766 = vpack.c.b16 %v724, %v722
    %v767 = vpack.c.b16 %v725, %v723
    %v768 = vpack.c.b16 %v728, %v726
    %v769 = vpack.c.b16 %v729, %v727
    %v770 = vpack.c.b16 %v732, %v730
    %v771 = vpack.c.b16 %v733, %v731
    %v772 = vpack.c.b16 %v736, %v734
    %v773 = vpack.c.b16 %v737, %v735
    %v774 = vpack.c.b16 %v740, %v738
    %v775 = vpack.c.b16 %v741, %v739
    %v776 = vpack.c.b16 %v744, %v742
    %v777 = vpack.c.b16 %v745, %v743
    %810 = vmatprep.subr.bf16.mxu0 %v747
    %811 = vmatpush1.bf16.msra.mxu0 %v746
    %812 = vmatprep.subr.bf16.mxu0 %v749
    %813 = vmatpush1.bf16.msra.mxu0 %v748
    %814 = vmatprep.subr.bf16.mxu0 %v751
    %815 = vmatpush1.bf16.msra.mxu0 %v750
    %816 = vmatprep.subr.bf16.mxu0 %v753
    %817 = vmatpush1.bf16.msra.mxu0 %v752
    %818 = vmatprep.subr.bf16.mxu0 %v755
    %819 = vmatpush1.bf16.msra.mxu0 %v754
    %820 = vmatprep.subr.bf16.mxu0 %v757
    %821 = vmatpush1.bf16.msra.mxu0 %v756
    %822 = vmatprep.subr.bf16.mxu0 %v759
    %823 = vmatpush1.bf16.msra.mxu0 %v758
    %824 = vmatprep.subr.bf16.mxu0 %v761
    %825 = vmatpush1.bf16.msra.mxu0 %v760
    %826 = vmatprep.subr.bf16.mxu0 %v763
    %827 = vmatpush1.bf16.msra.mxu0 %v762
    %828 = vmatprep.subr.bf16.mxu0 %v765
    %829 = vmatpush1.bf16.msra.mxu0 %v764
    %830 = vmatprep.subr.bf16.mxu0 %v767
    %831 = vmatpush1.bf16.msra.mxu0 %v766
    %832 = vmatprep.subr.bf16.mxu0 %v769
    %833 = vmatpush1.bf16.msra.mxu0 %v768
    %834 = vmatprep.subr.bf16.mxu0 %v771
    %835 = vmatpush1.bf16.msra.mxu0 %v770
    %836 = vmatprep.subr.bf16.mxu0 %v773
    %837 = vmatpush1.bf16.msra.mxu0 %v772
    %838 = vmatprep.subr.bf16.mxu0 %v775
    %839 = vmatpush1.bf16.msra.mxu0 %v774
    %840 = vmatprep.subr.bf16.mxu0 %v777
    %841 = vmatpush1.bf16.msra.mxu0 %v776
    %842 = vmatprep.mubr.bf16.mxu0 %v587
    %843 = vmatmul.mubr.bf16.gmra.mrb[0].mxu0 %v586
    %v844 = vpop.f32.mrb[0].mxu0
    %v845 = vadd.f32 %v643, %v844
    %v846 = vpop.f32.mrb[0].mxu0
    %v847 = vadd.f32 %v647, %v846
    %v848 = vpop.f32.mrb[0].mxu0
    %v849 = vadd.f32 %v643, %v848
    %v850 = vpop.f32.mrb[0].mxu0
    %v851 = vadd.f32 %v647, %v850
    %852 = vmatprep.mubr.bf16.mxu0 %v589
    %853 = vmatmul.mubr.bf16.gmra.mrb[0].mxu0 %v588
    %v854 = vpop.f32.mrb[0].mxu0
    %v855 = vadd.f32 %v643, %v854
    %v856 = vpop.f32.mrb[0].mxu0
    %v857 = vadd.f32 %v647, %v856
    %v858 = vpop.f32.mrb[0].mxu0
    %v859 = vadd.f32 %v643, %v858
    %v860 = vpop.f32.mrb[0].mxu0
    %v861 = vadd.f32 %v647, %v860
    %862 = vmatprep.mubr.bf16.mxu0 %v591
    %863 = vmatmul.mubr.bf16.gmra.mrb[0].mxu0 %v590
    %v864 = vpop.f32.mrb[0].mxu0
    %v865 = vadd.f32 %v643, %v864
    %v866 = vpop.f32.mrb[0].mxu0
    %v867 = vadd.f32 %v647, %v866
    %v868 = vpop.f32.mrb[0].mxu0
    %v869 = vadd.f32 %v643, %v868
    %v870 = vpop.f32.mrb[0].mxu0
    %v871 = vadd.f32 %v647, %v870
    %872 = vmatprep.mubr.bf16.mxu0 %v593
    %873 = vmatmul.mubr.bf16.gmra.mrb[0].mxu0 %v592
    %v874 = vpop.f32.mrb[0].mxu0
    %v875 = vadd.f32 %v643, %v874
    %v876 = vpop.f32.mrb[0].mxu0
    %v877 = vadd.f32 %v647, %v876
    %v878 = vpop.f32.mrb[0].mxu0
    %v879 = vadd.f32 %v643, %v878
    %v880 = vpop.f32.mrb[0].mxu0
    %v881 = vadd.f32 %v647, %v880
    %882 = vmatprep.mubr.bf16.mxu0 %v595
    %883 = vmatmul.mubr.bf16.gmra.mrb[0].mxu0 %v594
    %v884 = vpop.f32.mrb[0].mxu0
    %v885 = vadd.f32 %v643, %v884
    %v886 = vpop.f32.mrb[0].mxu0
    %v887 = vadd.f32 %v647, %v886
    %v888 = vpop.f32.mrb[0].mxu0
    %v889 = vadd.f32 %v643, %v888
    %v890 = vpop.f32.mrb[0].mxu0
    %v891 = vadd.f32 %v647, %v890
    %892 = vmatprep.mubr.bf16.mxu0 %v597
    %893 = vmatmul.mubr.bf16.gmra.mrb[0].mxu0 %v596
    %v894 = vpop.f32.mrb[0].mxu0
    %v895 = vadd.f32 %v643, %v894
    %v896 = vpop.f32.mrb[0].mxu0
    %v897 = vadd.f32 %v647, %v896
    %v898 = vpop.f32.mrb[0].mxu0
    %v899 = vadd.f32 %v643, %v898
    %v900 = vpop.f32.mrb[0].mxu0
    %v901 = vadd.f32 %v647, %v900
    %902 = vmatprep.mubr.bf16.mxu0 %v599
    %903 = vmatmul.mubr.bf16.gmra.mrb[0].mxu0 %v598
    %v904 = vpop.f32.mrb[0].mxu0
    %v905 = vadd.f32 %v643, %v904
    %v906 = vpop.f32.mrb[0].mxu0
    %v907 = vadd.f32 %v647, %v906
    %v908 = vpop.f32.mrb[0].mxu0
    %v909 = vadd.f32 %v643, %v908
    %v910 = vpop.f32.mrb[0].mxu0
    %v911 = vadd.f32 %v647, %v910
    %912 = vmatprep.mubr.bf16.mxu0 %v601
    %913 = vmatmul.mubr.bf16.gmra.mrb[0].mxu0 %v600
    %v914 = vpop.f32.mrb[0].mxu0
    %v915 = vadd.f32 %v643, %v914
    %v916 = vpop.f32.mrb[0].mxu0
    %v917 = vadd.f32 %v647, %v916
    %v918 = vpop.f32.mrb[0].mxu0
    %v919 = vadd.f32 %v643, %v918
    %v920 = vpop.f32.mrb[0].mxu0
    %v921 = vadd.f32 %v647, %v920
    %922 = vdwg.mxu0
    %v923 = vmax.f32 %v845, 0.0
    %v924 = vmax.f32 %v847, 0.0
    %v925 = vmax.f32 %v849, 0.0
    %v926 = vmax.f32 %v851, 0.0
    %v927 = vmax.f32 %v855, 0.0
    %v928 = vmax.f32 %v857, 0.0
    %v929 = vmax.f32 %v859, 0.0
    %v930 = vmax.f32 %v861, 0.0
    %v931 = vmax.f32 %v865, 0.0
    %v932 = vmax.f32 %v867, 0.0
    %v933 = vmax.f32 %v869, 0.0
    %v934 = vmax.f32 %v871, 0.0
    %v935 = vmax.f32 %v875, 0.0
    %v936 = vmax.f32 %v877, 0.0
    %v937 = vmax.f32 %v879, 0.0
    %v938 = vmax.f32 %v881, 0.0
    %v939 = vmax.f32 %v885, 0.0
    %v940 = vmax.f32 %v887, 0.0
    %v941 = vmax.f32 %v889, 0.0
    %v942 = vmax.f32 %v891, 0.0
    %v943 = vmax.f32 %v895, 0.0
    %v944 = vmax.f32 %v897, 0.0
    %v945 = vmax.f32 %v899, 0.0
    %v946 = vmax.f32 %v901, 0.0
    %v947 = vmax.f32 %v905, 0.0
    %v948 = vmax.f32 %v907, 0.0
    %v949 = vmax.f32 %v909, 0.0
    %v950 = vmax.f32 %v911, 0.0
    %v951 = vmax.f32 %v915, 0.0
    %v952 = vmax.f32 %v917, 0.0
    %v953 = vmax.f32 %v919, 0.0
    %v954 = vmax.f32 %v921, 0.0
    %v955 = vadd.f32 %v923, %v925
    %v956 = vadd.f32 %v955, %v927
    %v957 = vadd.f32 %v956, %v929
    %v958 = vadd.f32 %v957, %v931
    %v959 = vadd.f32 %v958, %v933
    %v960 = vadd.f32 %v959, %v935
    %v961 = vadd.f32 %v960, %v937
    %v962 = vadd.f32 %v961, %v939
    %v963 = vadd.f32 %v962, %v941
    %v964 = vadd.f32 %v963, %v943
    %v965 = vadd.f32 %v964, %v945
    %v966 = vadd.f32 %v965, %v947
    %v967 = vadd.f32 %v966, %v949
    %v968 = vadd.f32 %v967, %v951
    %v969 = vadd.f32 %v968, %v953
    %v970 = vrot.slane %v969, 4
    %v971 = vadd.f32 %v969, %v970
    %v972 = vrot.slane %v971, 2
    %v973 = vadd.f32 %v971, %v972
    %v974 = vrot.slane %v973, 1
    %v975 = vadd.f32 %v973, %v974
    %v976 = vadd.f32 %v924, %v926
    %v977 = vadd.f32 %v976, %v928
    %v978 = vadd.f32 %v977, %v930
    %v979 = vadd.f32 %v978, %v932
    %v980 = vadd.f32 %v979, %v934
    %v981 = vadd.f32 %v980, %v936
    %v982 = vadd.f32 %v981, %v938
    %v983 = vadd.f32 %v982, %v940
    %v984 = vadd.f32 %v983, %v942
    %v985 = vadd.f32 %v984, %v944
    %v986 = vadd.f32 %v985, %v946
    %v987 = vadd.f32 %v986, %v948
    %v988 = vadd.f32 %v987, %v950
    %v989 = vadd.f32 %v988, %v952
    %v990 = vadd.f32 %v989, %v954
    %v991 = vrot.slane %v990, 4
    %v992 = vadd.f32 %v990, %v991
    %v993 = vrot.slane %v992, 2
    %v994 = vadd.f32 %v992, %v993
    %v995 = vrot.slane %v994, 1
    %v996 = vadd.f32 %v994, %v995
    %v997 = vmul.f32 %v975, %v371
    %v998 = vmul.f32 %v996, %v371
    %v999 = vmul.f32 %v923, %v923
    %v1000 = vmul.f32 %v924, %v924
    %v1001 = vmul.f32 %v925, %v925
    %v1002 = vmul.f32 %v926, %v926
    %v1003 = vmul.f32 %v927, %v927
    %v1004 = vmul.f32 %v928, %v928
    %v1005 = vmul.f32 %v929, %v929
    %v1006 = vmul.f32 %v930, %v930
    %v1007 = vmul.f32 %v931, %v931
    %v1008 = vmul.f32 %v932, %v932
    %v1009 = vmul.f32 %v933, %v933
    %v1010 = vmul.f32 %v934, %v934
    %v1011 = vmul.f32 %v935, %v935
    %v1012 = vmul.f32 %v936, %v936
    %v1013 = vmul.f32 %v937, %v937
    %v1014 = vmul.f32 %v938, %v938
    %v1015 = vmul.f32 %v939, %v939
    %v1016 = vmul.f32 %v940, %v940
    %v1017 = vmul.f32 %v941, %v941
    %v1018 = vmul.f32 %v942, %v942
    %v1019 = vmul.f32 %v943, %v943
    %v1020 = vmul.f32 %v944, %v944
    %v1021 = vmul.f32 %v945, %v945
    %v1022 = vmul.f32 %v946, %v946
    %v1023 = vmul.f32 %v947, %v947
    %v1024 = vmul.f32 %v948, %v948
    %v1025 = vmul.f32 %v949, %v949
    %v1026 = vmul.f32 %v950, %v950
    %v1027 = vmul.f32 %v951, %v951
    %v1028 = vmul.f32 %v952, %v952
    %v1029 = vmul.f32 %v953, %v953
    %v1030 = vmul.f32 %v954, %v954
    %v1031 = vadd.f32 %v999, %v1001
    %v1032 = vadd.f32 %v1031, %v1003
    %v1033 = vadd.f32 %v1032, %v1005
    %v1034 = vadd.f32 %v1033, %v1007
    %v1035 = vadd.f32 %v1034, %v1009
    %v1036 = vadd.f32 %v1035, %v1011
    %v1037 = vadd.f32 %v1036, %v1013
    %v1038 = vadd.f32 %v1037, %v1015
    %v1039 = vadd.f32 %v1038, %v1017
    %v1040 = vadd.f32 %v1039, %v1019
    %v1041 = vadd.f32 %v1040, %v1021
    %v1042 = vadd.f32 %v1041, %v1023
    %v1043 = vadd.f32 %v1042, %v1025
    %v1044 = vadd.f32 %v1043, %v1027
    %v1045 = vadd.f32 %v1044, %v1029
    %v1046 = vrot.slane %v1045, 4
    %v1047 = vadd.f32 %v1045, %v1046
    %v1048 = vrot.slane %v1047, 2
    %v1049 = vadd.f32 %v1047, %v1048
    %v1050 = vrot.slane %v1049, 1
    %v1051 = vadd.f32 %v1049, %v1050
    %v1052 = vadd.f32 %v1000, %v1002
    %v1053 = vadd.f32 %v1052, %v1004
    %v1054 = vadd.f32 %v1053, %v1006
    %v1055 = vadd.f32 %v1054, %v1008
    %v1056 = vadd.f32 %v1055, %v1010
    %v1057 = vadd.f32 %v1056, %v1012
    %v1058 = vadd.f32 %v1057, %v1014
    %v1059 = vadd.f32 %v1058, %v1016
    %v1060 = vadd.f32 %v1059, %v1018
    %v1061 = vadd.f32 %v1060, %v1020
    %v1062 = vadd.f32 %v1061, %v1022
    %v1063 = vadd.f32 %v1062, %v1024
    %v1064 = vadd.f32 %v1063, %v1026
    %v1065 = vadd.f32 %v1064, %v1028
    %v1066 = vadd.f32 %v1065, %v1030
    %v1067 = vrot.slane %v1066, 4
    %v1068 = vadd.f32 %v1066, %v1067
    %v1069 = vrot.slane %v1068, 2
    %v1070 = vadd.f32 %v1068, %v1069
    %v1071 = vrot.slane %v1070, 1
    %v1072 = vadd.f32 %v1070, %v1071
    %v1073 = vmul.f32 %v1051, %v371
    %v1074 = vmul.f32 %v1072, %v371
    %v1075 = vmul.f32 %v997, %v997
    %v1076 = vmul.f32 %v998, %v998
    %v1077 = vsub.f32 %v1073, %v1075
    %v1078 = vsub.f32 %v1074, %v1076
    %v1079 = vmax.f32 %v1077, 0.0
    %v1080 = vmax.f32 %v1078, 0.0
    %v1081 = vadd.f32 %v1079, 1e-05
    %v1082 = vadd.f32 %v1080, 1e-05
    %v1083 = vrsqrt.pop %v1081
    %v1084 = vrsqrt.pop %v1082
    %v1087 = vcombine.low %v1083, %v1084
    %v1089 = vunpack.c.l.s4 1966171168
    %v1090 = vunpack.c.0.s8 %v1089
    %v1091 = vlaneseq
    %v1092 = vshrl.u32 %v1091, 7
    %v1093 = vsub.s32 %v1090, %v1092
    %v1094 = vrot.slane %v1087, %v1093
    %v1096 = vunpack.c.l.s4 1966171168
    %v1097 = vunpack.c.0.s8 %v1096
    %v1098 = vlaneseq
    %v1099 = vshrl.u32 %v1098, 7
    %v1100 = vsub.s32 %v1097, %v1099
    %v1101 = vrot.slane %v1094, %v1100
    %v1103 = vmul.f32 %v636, %v1101
    %v1105 = vlaneseq
    %v1106 = vshrl.u32 %v1105, 7
    %v1107 = vsub.s32 0, %v1106
    %v1108 = vrot.slane %v1103, %v1107
    %v1109 = vlaneseq
    %v1110 = vshrl.u32 %v1109, 7
    %v1111 = vsub.s32 1, %v1110
    %v1112 = vrot.slane %v1103, %v1111
    %v1115 = vmul.f32 %v997, %v1108
    %v1116 = vmul.f32 %v998, %v1112
    %v1119 = vcombine.low %v1115, %v1116
    %v1121 = vunpack.c.l.s4 1966171168
    %v1122 = vunpack.c.0.s8 %v1121
    %v1123 = vlaneseq
    %v1124 = vshrl.u32 %v1123, 7
    %v1125 = vsub.s32 %v1122, %v1124
    %v1126 = vrot.slane %v1119, %v1125
    %v1128 = vunpack.c.l.s4 1966171168
    %v1129 = vunpack.c.0.s8 %v1128
    %v1130 = vlaneseq
    %v1131 = vshrl.u32 %v1130, 7
    %v1132 = vsub.s32 %v1129, %v1131
    %v1133 = vrot.slane %v1126, %v1132
    %v1135 = vsub.f32 %v638, %v1133
    %v1136 = vmul.f32 %v923, %v1108
    %v1137 = vmul.f32 %v924, %v1112
    %v1138 = vmul.f32 %v925, %v1108
    %v1139 = vmul.f32 %v926, %v1112
    %v1140 = vmul.f32 %v927, %v1108
    %v1141 = vmul.f32 %v928, %v1112
    %v1142 = vmul.f32 %v929, %v1108
    %v1143 = vmul.f32 %v930, %v1112
    %v1144 = vmul.f32 %v931, %v1108
    %v1145 = vmul.f32 %v932, %v1112
    %v1146 = vmul.f32 %v933, %v1108
    %v1147 = vmul.f32 %v934, %v1112
    %v1148 = vmul.f32 %v935, %v1108
    %v1149 = vmul.f32 %v936, %v1112
    %v1150 = vmul.f32 %v937, %v1108
    %v1151 = vmul.f32 %v938, %v1112
    %v1152 = vmul.f32 %v939, %v1108
    %v1153 = vmul.f32 %v940, %v1112
    %v1154 = vmul.f32 %v941, %v1108
    %v1155 = vmul.f32 %v942, %v1112
    %v1156 = vmul.f32 %v943, %v1108
    %v1157 = vmul.f32 %v944, %v1112
    %v1158 = vmul.f32 %v945, %v1108
    %v1159 = vmul.f32 %v946, %v1112
    %v1160 = vmul.f32 %v947, %v1108
    %v1161 = vmul.f32 %v948, %v1112
    %v1162 = vmul.f32 %v949, %v1108
    %v1163 = vmul.f32 %v950, %v1112
    %v1164 = vmul.f32 %v951, %v1108
    %v1165 = vmul.f32 %v952, %v1112
    %v1166 = vmul.f32 %v953, %v1108
    %v1167 = vmul.f32 %v954, %v1112
    %v1169 = vlaneseq
    %v1170 = vshrl.u32 %v1169, 7
    %v1171 = vsub.s32 0, %v1170
    %v1172 = vrot.slane %v1135, %v1171
    %v1173 = vlaneseq
    %v1174 = vshrl.u32 %v1173, 7
    %v1175 = vsub.s32 1, %v1174
    %v1176 = vrot.slane %v1135, %v1175
    %v1179 = vadd.f32 %v1136, %v1172
    %v1180 = vadd.f32 %v1137, %v1176
    %v1181 = vadd.f32 %v1138, %v1172
    %v1182 = vadd.f32 %v1139, %v1176
    %v1183 = vadd.f32 %v1140, %v1172
    %v1184 = vadd.f32 %v1141, %v1176
    %v1185 = vadd.f32 %v1142, %v1172
    %v1186 = vadd.f32 %v1143, %v1176
    %v1187 = vadd.f32 %v1144, %v1172
    %v1188 = vadd.f32 %v1145, %v1176
    %v1189 = vadd.f32 %v1146, %v1172
    %v1190 = vadd.f32 %v1147, %v1176
    %v1191 = vadd.f32 %v1148, %v1172
    %v1192 = vadd.f32 %v1149, %v1176
    %v1193 = vadd.f32 %v1150, %v1172
    %v1194 = vadd.f32 %v1151, %v1176
    %v1195 = vadd.f32 %v1152, %v1172
    %v1196 = vadd.f32 %v1153, %v1176
    %v1197 = vadd.f32 %v1154, %v1172
    %v1198 = vadd.f32 %v1155, %v1176
    %v1199 = vadd.f32 %v1156, %v1172
    %v1200 = vadd.f32 %v1157, %v1176
    %v1201 = vadd.f32 %v1158, %v1172
    %v1202 = vadd.f32 %v1159, %v1176
    %v1203 = vadd.f32 %v1160, %v1172
    %v1204 = vadd.f32 %v1161, %v1176
    %v1205 = vadd.f32 %v1162, %v1172
    %v1206 = vadd.f32 %v1163, %v1176
    %v1207 = vadd.f32 %v1164, %v1172
    %v1208 = vadd.f32 %v1165, %v1176
    %v1209 = vadd.f32 %v1166, %v1172
    %v1210 = vadd.f32 %v1167, %v1176
    %v1211 = vpack.c.bf16 %v1181, %v1179
    %v1212 = vpack.c.bf16 %v1182, %v1180
    %v1213 = vpack.c.bf16 %v1185, %v1183
    %v1214 = vpack.c.bf16 %v1186, %v1184
    %v1215 = vpack.c.bf16 %v1189, %v1187
    %v1216 = vpack.c.bf16 %v1190, %v1188
    %v1217 = vpack.c.bf16 %v1193, %v1191
    %v1218 = vpack.c.bf16 %v1194, %v1192
    %v1219 = vpack.c.bf16 %v1197, %v1195
    %v1220 = vpack.c.bf16 %v1198, %v1196
    %v1221 = vpack.c.bf16 %v1201, %v1199
    %v1222 = vpack.c.bf16 %v1202, %v1200
    %v1223 = vpack.c.bf16 %v1205, %v1203
    %v1224 = vpack.c.bf16 %v1206, %v1204
    %v1225 = vpack.c.bf16 %v1209, %v1207
    %v1226 = vpack.c.bf16 %v1210, %v1208
    %s1227 = scalar_lea.vmem [#allocation2], 256
    %v1228 = vld [vmem:[%s1227] sm:$0xff]
    %v1229 = vld [vmem:[%s1227 + $0x8] sm:$0xff]
    %v1230 = vld [vmem:[%s1227 + $0x10] sm:$0xff]
    %v1231 = vld [vmem:[%s1227 + $0x18] sm:$0xff]
    %v1232 = vld [vmem:[%s1227 + $0x20] sm:$0xff]
    %v1233 = vld [vmem:[%s1227 + $0x28] sm:$0xff]
    %v1234 = vld [vmem:[%s1227 + $0x30] sm:$0xff]
    %v1235 = vld [vmem:[%s1227 + $0x38] sm:$0xff]
    %v1236 = vld [vmem:[%s1227 + $0x40] sm:$0xff]
    %v1237 = vld [vmem:[%s1227 + $0x48] sm:$0xff]
    %v1238 = vld [vmem:[%s1227 + $0x50] sm:$0xff]
    %v1239 = vld [vmem:[%s1227 + $0x58] sm:$0xff]
    %v1240 = vld [vmem:[%s1227 + $0x60] sm:$0xff]
    %v1241 = vld [vmem:[%s1227 + $0x68] sm:$0xff]
    %v1242 = vld [vmem:[%s1227 + $0x70] sm:$0xff]
    %v1243 = vld [vmem:[%s1227 + $0x78] sm:$0xff]
    %v1244 = vld [vmem:[%s1227 + $0x80] sm:$0xff]
    %v1245 = vld [vmem:[%s1227 + $0x88] sm:$0xff]
    %v1246 = vld [vmem:[%s1227 + $0x90] sm:$0xff]
    %v1247 = vld [vmem:[%s1227 + $0x98] sm:$0xff]
    %v1248 = vld [vmem:[%s1227 + $0xa0] sm:$0xff]
    %v1249 = vld [vmem:[%s1227 + $0xa8] sm:$0xff]
    %v1250 = vld [vmem:[%s1227 + $0xb0] sm:$0xff]
    %v1251 = vld [vmem:[%s1227 + $0xb8] sm:$0xff]
    %v1252 = vld [vmem:[%s1227 + $0xc0] sm:$0xff]
    %v1253 = vld [vmem:[%s1227 + $0xc8] sm:$0xff]
    %v1254 = vld [vmem:[%s1227 + $0xd0] sm:$0xff]
    %v1255 = vld [vmem:[%s1227 + $0xd8] sm:$0xff]
    %v1256 = vld [vmem:[%s1227 + $0xe0] sm:$0xff]
    %v1257 = vld [vmem:[%s1227 + $0xe8] sm:$0xff]
    %v1258 = vld [vmem:[%s1227 + $0xf0] sm:$0xff]
    %v1259 = vld [vmem:[%s1227 + $0xf8] sm:$0xff]
    %s1260 = scalar_lea.vmem %s5, 1
    %v1261 = vld [vmem:[%s1260] ss:$4 sm:$0x3]
    %s1262 = scalar_lea.vmem %s6, 2
    %v1263 = vld [vmem:[%s1262] ss:$8 sm:$0x3]
    %s1264 = scalar_lea.vmem %s7, 2
    %v1265 = vld [vmem:[%s1264] ss:$8 sm:$0x3]
    %v1267 = vlaneseq
    %v1268 = vshrl.u32 %v1267, 7
    %v1269 = vsub.s32 0, %v1268
    %v1270 = vrot.slane %v1261, %v1269
    %v1271 = vlaneseq
    %v1272 = vshrl.u32 %v1271, 7
    %v1273 = vsub.s32 1, %v1272
    %v1274 = vrot.slane %v1261, %v1273
    %v1309 = vunpack.c.l.b16 %v1228
    %v1310 = vunpack.c.h.b16 %v1228
    %v1311 = vunpack.c.l.b16 %v1229
    %v1312 = vunpack.c.h.b16 %v1229
    %v1313 = vunpack.c.l.b16 %v1230
    %v1314 = vunpack.c.h.b16 %v1230
    %v1315 = vunpack.c.l.b16 %v1231
    %v1316 = vunpack.c.h.b16 %v1231
    %v1317 = vunpack.c.l.b16 %v1232
    %v1318 = vunpack.c.h.b16 %v1232
    %v1319 = vunpack.c.l.b16 %v1233
    %v1320 = vunpack.c.h.b16 %v1233
    %v1321 = vunpack.c.l.b16 %v1234
    %v1322 = vunpack.c.h.b16 %v1234
    %v1323 = vunpack.c.l.b16 %v1235
    %v1324 = vunpack.c.h.b16 %v1235
    %v1325 = vunpack.c.l.b16 %v1236
    %v1326 = vunpack.c.h.b16 %v1236
    %v1327 = vunpack.c.l.b16 %v1237
    %v1328 = vunpack.c.h.b16 %v1237
    %v1329 = vunpack.c.l.b16 %v1238
    %v1330 = vunpack.c.h.b16 %v1238
    %v1331 = vunpack.c.l.b16 %v1239
    %v1332 = vunpack.c.h.b16 %v1239
    %v1333 = vunpack.c.l.b16 %v1240
    %v1334 = vunpack.c.h.b16 %v1240
    %v1335 = vunpack.c.l.b16 %v1241
    %v1336 = vunpack.c.h.b16 %v1241
    %v1337 = vunpack.c.l.b16 %v1242
    %v1338 = vunpack.c.h.b16 %v1242
    %v1339 = vunpack.c.l.b16 %v1243
    %v1340 = vunpack.c.h.b16 %v1243
    %v1341 = vunpack.c.l.b16 %v1244
    %v1342 = vunpack.c.h.b16 %v1244
    %v1343 = vunpack.c.l.b16 %v1245
    %v1344 = vunpack.c.h.b16 %v1245
    %v1345 = vunpack.c.l.b16 %v1246
    %v1346 = vunpack.c.h.b16 %v1246
    %v1347 = vunpack.c.l.b16 %v1247
    %v1348 = vunpack.c.h.b16 %v1247
    %v1349 = vunpack.c.l.b16 %v1248
    %v1350 = vunpack.c.h.b16 %v1248
    %v1351 = vunpack.c.l.b16 %v1249
    %v1352 = vunpack.c.h.b16 %v1249
    %v1353 = vunpack.c.l.b16 %v1250
    %v1354 = vunpack.c.h.b16 %v1250
    %v1355 = vunpack.c.l.b16 %v1251
    %v1356 = vunpack.c.h.b16 %v1251
    %v1357 = vunpack.c.l.b16 %v1252
    %v1358 = vunpack.c.h.b16 %v1252
    %v1359 = vunpack.c.l.b16 %v1253
    %v1360 = vunpack.c.h.b16 %v1253
    %v1361 = vunpack.c.l.b16 %v1254
    %v1362 = vunpack.c.h.b16 %v1254
    %v1363 = vunpack.c.l.b16 %v1255
    %v1364 = vunpack.c.h.b16 %v1255
    %v1365 = vunpack.c.l.b16 %v1256
    %v1366 = vunpack.c.h.b16 %v1256
    %v1367 = vunpack.c.l.b16 %v1257
    %v1368 = vunpack.c.h.b16 %v1257
    %v1369 = vunpack.c.l.b16 %v1258
    %v1370 = vunpack.c.h.b16 %v1258
    %v1371 = vunpack.c.l.b16 %v1259
    %v1372 = vunpack.c.h.b16 %v1259
    %v1373 = vpack.c.b16 %v1311, %v1309
    %v1374 = vpack.c.b16 %v1312, %v1310
    %v1375 = vpack.c.b16 %v1315, %v1313
    %v1376 = vpack.c.b16 %v1316, %v1314
    %v1377 = vpack.c.b16 %v1319, %v1317
    %v1378 = vpack.c.b16 %v1320, %v1318
    %v1379 = vpack.c.b16 %v1323, %v1321
    %v1380 = vpack.c.b16 %v1324, %v1322
    %v1381 = vpack.c.b16 %v1327, %v1325
    %v1382 = vpack.c.b16 %v1328, %v1326
    %v1383 = vpack.c.b16 %v1331, %v1329
    %v1384 = vpack.c.b16 %v1332, %v1330
    %v1385 = vpack.c.b16 %v1335, %v1333
    %v1386 = vpack.c.b16 %v1336, %v1334
    %v1387 = vpack.c.b16 %v1339, %v1337
    %v1388 = vpack.c.b16 %v1340, %v1338
    %v1389 = vpack.c.b16 %v1343, %v1341
    %v1390 = vpack.c.b16 %v1344, %v1342
    %v1391 = vpack.c.b16 %v1347, %v1345
    %v1392 = vpack.c.b16 %v1348, %v1346
    %v1393 = vpack.c.b16 %v1351, %v1349
    %v1394 = vpack.c.b16 %v1352, %v1350
    %v1395 = vpack.c.b16 %v1355, %v1353
    %v1396 = vpack.c.b16 %v1356, %v1354
    %v1397 = vpack.c.b16 %v1359, %v1357
    %v1398 = vpack.c.b16 %v1360, %v1358
    %v1399 = vpack.c.b16 %v1363, %v1361
    %v1400 = vpack.c.b16 %v1364, %v1362
    %v1401 = vpack.c.b16 %v1367, %v1365
    %v1402 = vpack.c.b16 %v1368, %v1366
    %v1403 = vpack.c.b16 %v1371, %v1369
    %v1404 = vpack.c.b16 %v1372, %v1370
    %1437 = vmatprep.subr.bf16.mxu0 %v1374
    %1438 = vmatpush1.bf16.msra.mxu0 %v1373
    %1439 = vmatprep.subr.bf16.mxu0 %v1376
    %1440 = vmatpush1.bf16.msra.mxu0 %v1375
    %1441 = vmatprep.subr.bf16.mxu0 %v1378
    %1442 = vmatpush1.bf16.msra.mxu0 %v1377
    %1443 = vmatprep.subr.bf16.mxu0 %v1380
    %1444 = vmatpush1.bf16.msra.mxu0 %v1379
    %1445 = vmatprep.subr.bf16.mxu0 %v1382
    %1446 = vmatpush1.bf16.msra.mxu0 %v1381
    %1447 = vmatprep.subr.bf16.mxu0 %v1384
    %1448 = vmatpush1.bf16.msra.mxu0 %v1383
    %1449 = vmatprep.subr.bf16.mxu0 %v1386
    %1450 = vmatpush1.bf16.msra.mxu0 %v1385
    %1451 = vmatprep.subr.bf16.mxu0 %v1388
    %1452 = vmatpush1.bf16.msra.mxu0 %v1387
    %1453 = vmatprep.subr.bf16.mxu0 %v1390
    %1454 = vmatpush1.bf16.msra.mxu0 %v1389
    %1455 = vmatprep.subr.bf16.mxu0 %v1392
    %1456 = vmatpush1.bf16.msra.mxu0 %v1391
    %1457 = vmatprep.subr.bf16.mxu0 %v1394
    %1458 = vmatpush1.bf16.msra.mxu0 %v1393
    %1459 = vmatprep.subr.bf16.mxu0 %v1396
    %1460 = vmatpush1.bf16.msra.mxu0 %v1395
    %1461 = vmatprep.subr.bf16.mxu0 %v1398
    %1462 = vmatpush1.bf16.msra.mxu0 %v1397
    %1463 = vmatprep.subr.bf16.mxu0 %v1400
    %1464 = vmatpush1.bf16.msra.mxu0 %v1399
    %1465 = vmatprep.subr.bf16.mxu0 %v1402
    %1466 = vmatpush1.bf16.msra.mxu0 %v1401
    %1467 = vmatprep.subr.bf16.mxu0 %v1404
    %1468 = vmatpush1.bf16.msra.mxu0 %v1403
    %1469 = vmatprep.mubr.bf16.mxu0 %v1212
    %1470 = vmatmul.mubr.bf16.gmra.mrb[0].mxu0 %v1211
    %v1471 = vpop.f32.mrb[0].mxu0
    %v1472 = vadd.f32 %v1270, %v1471
    %v1473 = vpop.f32.mrb[0].mxu0
    %v1474 = vadd.f32 %v1274, %v1473
    %v1475 = vpop.f32.mrb[0].mxu0
    %v1476 = vadd.f32 %v1270, %v1475
    %v1477 = vpop.f32.mrb[0].mxu0
    %v1478 = vadd.f32 %v1274, %v1477
    %1479 = vmatprep.mubr.bf16.mxu0 %v1214
    %1480 = vmatmul.mubr.bf16.gmra.mrb[0].mxu0 %v1213
    %v1481 = vpop.f32.mrb[0].mxu0
    %v1482 = vadd.f32 %v1270, %v1481
    %v1483 = vpop.f32.mrb[0].mxu0
    %v1484 = vadd.f32 %v1274, %v1483
    %v1485 = vpop.f32.mrb[0].mxu0
    %v1486 = vadd.f32 %v1270, %v1485
    %v1487 = vpop.f32.mrb[0].mxu0
    %v1488 = vadd.f32 %v1274, %v1487
    %1489 = vmatprep.mubr.bf16.mxu0 %v1216
    %1490 = vmatmul.mubr.bf16.gmra.mrb[0].mxu0 %v1215
    %v1491 = vpop.f32.mrb[0].mxu0
    %v1492 = vadd.f32 %v1270, %v1491
    %v1493 = vpop.f32.mrb[0].mxu0
    %v1494 = vadd.f32 %v1274, %v1493
    %v1495 = vpop.f32.mrb[0].mxu0
    %v1496 = vadd.f32 %v1270, %v1495
    %v1497 = vpop.f32.mrb[0].mxu0
    %v1498 = vadd.f32 %v1274, %v1497
    %1499 = vmatprep.mubr.bf16.mxu0 %v1218
    %1500 = vmatmul.mubr.bf16.gmra.mrb[0].mxu0 %v1217
    %v1501 = vpop.f32.mrb[0].mxu0
    %v1502 = vadd.f32 %v1270, %v1501
    %v1503 = vpop.f32.mrb[0].mxu0
    %v1504 = vadd.f32 %v1274, %v1503
    %v1505 = vpop.f32.mrb[0].mxu0
    %v1506 = vadd.f32 %v1270, %v1505
    %v1507 = vpop.f32.mrb[0].mxu0
    %v1508 = vadd.f32 %v1274, %v1507
    %1509 = vmatprep.mubr.bf16.mxu0 %v1220
    %1510 = vmatmul.mubr.bf16.gmra.mrb[0].mxu0 %v1219
    %v1511 = vpop.f32.mrb[0].mxu0
    %v1512 = vadd.f32 %v1270, %v1511
    %v1513 = vpop.f32.mrb[0].mxu0
    %v1514 = vadd.f32 %v1274, %v1513
    %v1515 = vpop.f32.mrb[0].mxu0
    %v1516 = vadd.f32 %v1270, %v1515
    %v1517 = vpop.f32.mrb[0].mxu0
    %v1518 = vadd.f32 %v1274, %v1517
    %1519 = vmatprep.mubr.bf16.mxu0 %v1222
    %1520 = vmatmul.mubr.bf16.gmra.mrb[0].mxu0 %v1221
    %v1521 = vpop.f32.mrb[0].mxu0
    %v1522 = vadd.f32 %v1270, %v1521
    %v1523 = vpop.f32.mrb[0].mxu0
    %v1524 = vadd.f32 %v1274, %v1523
    %v1525 = vpop.f32.mrb[0].mxu0
    %v1526 = vadd.f32 %v1270, %v1525
    %v1527 = vpop.f32.mrb[0].mxu0
    %v1528 = vadd.f32 %v1274, %v1527
    %1529 = vmatprep.mubr.bf16.mxu0 %v1224
    %1530 = vmatmul.mubr.bf16.gmra.mrb[0].mxu0 %v1223
    %v1531 = vpop.f32.mrb[0].mxu0
    %v1532 = vadd.f32 %v1270, %v1531
    %v1533 = vpop.f32.mrb[0].mxu0
    %v1534 = vadd.f32 %v1274, %v1533
    %v1535 = vpop.f32.mrb[0].mxu0
    %v1536 = vadd.f32 %v1270, %v1535
    %v1537 = vpop.f32.mrb[0].mxu0
    %v1538 = vadd.f32 %v1274, %v1537
    %1539 = vmatprep.mubr.bf16.mxu0 %v1226
    %1540 = vmatmul.mubr.bf16.gmra.mrb[0].mxu0 %v1225
    %v1541 = vpop.f32.mrb[0].mxu0
    %v1542 = vadd.f32 %v1270, %v1541
    %v1543 = vpop.f32.mrb[0].mxu0
    %v1544 = vadd.f32 %v1274, %v1543
    %v1545 = vpop.f32.mrb[0].mxu0
    %v1546 = vadd.f32 %v1270, %v1545
    %v1547 = vpop.f32.mrb[0].mxu0
    %v1548 = vadd.f32 %v1274, %v1547
    %1549 = vdwg.mxu0
    %v1550 = vmax.f32 %v1472, 0.0
    %v1551 = vmax.f32 %v1474, 0.0
    %v1552 = vmax.f32 %v1476, 0.0
    %v1553 = vmax.f32 %v1478, 0.0
    %v1554 = vmax.f32 %v1482, 0.0
    %v1555 = vmax.f32 %v1484, 0.0
    %v1556 = vmax.f32 %v1486, 0.0
    %v1557 = vmax.f32 %v1488, 0.0
    %v1558 = vmax.f32 %v1492, 0.0
    %v1559 = vmax.f32 %v1494, 0.0
    %v1560 = vmax.f32 %v1496, 0.0
    %v1561 = vmax.f32 %v1498, 0.0
    %v1562 = vmax.f32 %v1502, 0.0
    %v1563 = vmax.f32 %v1504, 0.0
    %v1564 = vmax.f32 %v1506, 0.0
    %v1565 = vmax.f32 %v1508, 0.0
    %v1566 = vmax.f32 %v1512, 0.0
    %v1567 = vmax.f32 %v1514, 0.0
    %v1568 = vmax.f32 %v1516, 0.0
    %v1569 = vmax.f32 %v1518, 0.0
    %v1570 = vmax.f32 %v1522, 0.0
    %v1571 = vmax.f32 %v1524, 0.0
    %v1572 = vmax.f32 %v1526, 0.0
    %v1573 = vmax.f32 %v1528, 0.0
    %v1574 = vmax.f32 %v1532, 0.0
    %v1575 = vmax.f32 %v1534, 0.0
    %v1576 = vmax.f32 %v1536, 0.0
    %v1577 = vmax.f32 %v1538, 0.0
    %v1578 = vmax.f32 %v1542, 0.0
    %v1579 = vmax.f32 %v1544, 0.0
    %v1580 = vmax.f32 %v1546, 0.0
    %v1581 = vmax.f32 %v1548, 0.0
    %v1582 = vadd.f32 %v1550, %v1552
    %v1583 = vadd.f32 %v1582, %v1554
    %v1584 = vadd.f32 %v1583, %v1556
    %v1585 = vadd.f32 %v1584, %v1558
    %v1586 = vadd.f32 %v1585, %v1560
    %v1587 = vadd.f32 %v1586, %v1562
    %v1588 = vadd.f32 %v1587, %v1564
    %v1589 = vadd.f32 %v1588, %v1566
    %v1590 = vadd.f32 %v1589, %v1568
    %v1591 = vadd.f32 %v1590, %v1570
    %v1592 = vadd.f32 %v1591, %v1572
    %v1593 = vadd.f32 %v1592, %v1574
    %v1594 = vadd.f32 %v1593, %v1576
    %v1595 = vadd.f32 %v1594, %v1578
    %v1596 = vadd.f32 %v1595, %v1580
    %v1597 = vrot.slane %v1596, 4
    %v1598 = vadd.f32 %v1596, %v1597
    %v1599 = vrot.slane %v1598, 2
    %v1600 = vadd.f32 %v1598, %v1599
    %v1601 = vrot.slane %v1600, 1
    %v1602 = vadd.f32 %v1600, %v1601
    %v1603 = vadd.f32 %v1551, %v1553
    %v1604 = vadd.f32 %v1603, %v1555
    %v1605 = vadd.f32 %v1604, %v1557
    %v1606 = vadd.f32 %v1605, %v1559
    %v1607 = vadd.f32 %v1606, %v1561
    %v1608 = vadd.f32 %v1607, %v1563
    %v1609 = vadd.f32 %v1608, %v1565
    %v1610 = vadd.f32 %v1609, %v1567
    %v1611 = vadd.f32 %v1610, %v1569
    %v1612 = vadd.f32 %v1611, %v1571
    %v1613 = vadd.f32 %v1612, %v1573
    %v1614 = vadd.f32 %v1613, %v1575
    %v1615 = vadd.f32 %v1614, %v1577
    %v1616 = vadd.f32 %v1615, %v1579
    %v1617 = vadd.f32 %v1616, %v1581
    %v1618 = vrot.slane %v1617, 4
    %v1619 = vadd.f32 %v1617, %v1618
    %v1620 = vrot.slane %v1619, 2
    %v1621 = vadd.f32 %v1619, %v1620
    %v1622 = vrot.slane %v1621, 1
    %v1623 = vadd.f32 %v1621, %v1622
    %v1624 = vmul.f32 %v1602, %v371
    %v1625 = vmul.f32 %v1623, %v371
    %v1626 = vmul.f32 %v1550, %v1550
    %v1627 = vmul.f32 %v1551, %v1551
    %v1628 = vmul.f32 %v1552, %v1552
    %v1629 = vmul.f32 %v1553, %v1553
    %v1630 = vmul.f32 %v1554, %v1554
    %v1631 = vmul.f32 %v1555, %v1555
    %v1632 = vmul.f32 %v1556, %v1556
    %v1633 = vmul.f32 %v1557, %v1557
    %v1634 = vmul.f32 %v1558, %v1558
    %v1635 = vmul.f32 %v1559, %v1559
    %v1636 = vmul.f32 %v1560, %v1560
    %v1637 = vmul.f32 %v1561, %v1561
    %v1638 = vmul.f32 %v1562, %v1562
    %v1639 = vmul.f32 %v1563, %v1563
    %v1640 = vmul.f32 %v1564, %v1564
    %v1641 = vmul.f32 %v1565, %v1565
    %v1642 = vmul.f32 %v1566, %v1566
    %v1643 = vmul.f32 %v1567, %v1567
    %v1644 = vmul.f32 %v1568, %v1568
    %v1645 = vmul.f32 %v1569, %v1569
    %v1646 = vmul.f32 %v1570, %v1570
    %v1647 = vmul.f32 %v1571, %v1571
    %v1648 = vmul.f32 %v1572, %v1572
    %v1649 = vmul.f32 %v1573, %v1573
    %v1650 = vmul.f32 %v1574, %v1574
    %v1651 = vmul.f32 %v1575, %v1575
    %v1652 = vmul.f32 %v1576, %v1576
    %v1653 = vmul.f32 %v1577, %v1577
    %v1654 = vmul.f32 %v1578, %v1578
    %v1655 = vmul.f32 %v1579, %v1579
    %v1656 = vmul.f32 %v1580, %v1580
    %v1657 = vmul.f32 %v1581, %v1581
    %v1658 = vadd.f32 %v1626, %v1628
    %v1659 = vadd.f32 %v1658, %v1630
    %v1660 = vadd.f32 %v1659, %v1632
    %v1661 = vadd.f32 %v1660, %v1634
    %v1662 = vadd.f32 %v1661, %v1636
    %v1663 = vadd.f32 %v1662, %v1638
    %v1664 = vadd.f32 %v1663, %v1640
    %v1665 = vadd.f32 %v1664, %v1642
    %v1666 = vadd.f32 %v1665, %v1644
    %v1667 = vadd.f32 %v1666, %v1646
    %v1668 = vadd.f32 %v1667, %v1648
    %v1669 = vadd.f32 %v1668, %v1650
    %v1670 = vadd.f32 %v1669, %v1652
    %v1671 = vadd.f32 %v1670, %v1654
    %v1672 = vadd.f32 %v1671, %v1656
    %v1673 = vrot.slane %v1672, 4
    %v1674 = vadd.f32 %v1672, %v1673
    %v1675 = vrot.slane %v1674, 2
    %v1676 = vadd.f32 %v1674, %v1675
    %v1677 = vrot.slane %v1676, 1
    %v1678 = vadd.f32 %v1676, %v1677
    %v1679 = vadd.f32 %v1627, %v1629
    %v1680 = vadd.f32 %v1679, %v1631
    %v1681 = vadd.f32 %v1680, %v1633
    %v1682 = vadd.f32 %v1681, %v1635
    %v1683 = vadd.f32 %v1682, %v1637
    %v1684 = vadd.f32 %v1683, %v1639
    %v1685 = vadd.f32 %v1684, %v1641
    %v1686 = vadd.f32 %v1685, %v1643
    %v1687 = vadd.f32 %v1686, %v1645
    %v1688 = vadd.f32 %v1687, %v1647
    %v1689 = vadd.f32 %v1688, %v1649
    %v1690 = vadd.f32 %v1689, %v1651
    %v1691 = vadd.f32 %v1690, %v1653
    %v1692 = vadd.f32 %v1691, %v1655
    %v1693 = vadd.f32 %v1692, %v1657
    %v1694 = vrot.slane %v1693, 4
    %v1695 = vadd.f32 %v1693, %v1694
    %v1696 = vrot.slane %v1695, 2
    %v1697 = vadd.f32 %v1695, %v1696
    %v1698 = vrot.slane %v1697, 1
    %v1699 = vadd.f32 %v1697, %v1698
    %v1700 = vmul.f32 %v1678, %v371
    %v1701 = vmul.f32 %v1699, %v371
    %v1702 = vmul.f32 %v1624, %v1624
    %v1703 = vmul.f32 %v1625, %v1625
    %v1704 = vsub.f32 %v1700, %v1702
    %v1705 = vsub.f32 %v1701, %v1703
    %v1706 = vmax.f32 %v1704, 0.0
    %v1707 = vmax.f32 %v1705, 0.0
    %v1708 = vadd.f32 %v1706, 1e-05
    %v1709 = vadd.f32 %v1707, 1e-05
    %v1710 = vrsqrt.pop %v1708
    %v1711 = vrsqrt.pop %v1709
    %v1714 = vcombine.low %v1710, %v1711
    %v1716 = vunpack.c.l.s4 1966171168
    %v1717 = vunpack.c.0.s8 %v1716
    %v1718 = vlaneseq
    %v1719 = vshrl.u32 %v1718, 7
    %v1720 = vsub.s32 %v1717, %v1719
    %v1721 = vrot.slane %v1714, %v1720
    %v1723 = vunpack.c.l.s4 1966171168
    %v1724 = vunpack.c.0.s8 %v1723
    %v1725 = vlaneseq
    %v1726 = vshrl.u32 %v1725, 7
    %v1727 = vsub.s32 %v1724, %v1726
    %v1728 = vrot.slane %v1721, %v1727
    %v1730 = vmul.f32 %v1263, %v1728
    %v1732 = vlaneseq
    %v1733 = vshrl.u32 %v1732, 7
    %v1734 = vsub.s32 0, %v1733
    %v1735 = vrot.slane %v1730, %v1734
    %v1736 = vlaneseq
    %v1737 = vshrl.u32 %v1736, 7
    %v1738 = vsub.s32 1, %v1737
    %v1739 = vrot.slane %v1730, %v1738
    %v1742 = vmul.f32 %v1624, %v1735
    %v1743 = vmul.f32 %v1625, %v1739
    %v1746 = vcombine.low %v1742, %v1743
    %v1748 = vunpack.c.l.s4 1966171168
    %v1749 = vunpack.c.0.s8 %v1748
    %v1750 = vlaneseq
    %v1751 = vshrl.u32 %v1750, 7
    %v1752 = vsub.s32 %v1749, %v1751
    %v1753 = vrot.slane %v1746, %v1752
    %v1755 = vunpack.c.l.s4 1966171168
    %v1756 = vunpack.c.0.s8 %v1755
    %v1757 = vlaneseq
    %v1758 = vshrl.u32 %v1757, 7
    %v1759 = vsub.s32 %v1756, %v1758
    %v1760 = vrot.slane %v1753, %v1759
    %v1762 = vsub.f32 %v1265, %v1760
    %v1763 = vmul.f32 %v1550, %v1735
    %v1764 = vmul.f32 %v1551, %v1739
    %v1765 = vmul.f32 %v1552, %v1735
    %v1766 = vmul.f32 %v1553, %v1739
    %v1767 = vmul.f32 %v1554, %v1735
    %v1768 = vmul.f32 %v1555, %v1739
    %v1769 = vmul.f32 %v1556, %v1735
    %v1770 = vmul.f32 %v1557, %v1739
    %v1771 = vmul.f32 %v1558, %v1735
    %v1772 = vmul.f32 %v1559, %v1739
    %v1773 = vmul.f32 %v1560, %v1735
    %v1774 = vmul.f32 %v1561, %v1739
    %v1775 = vmul.f32 %v1562, %v1735
    %v1776 = vmul.f32 %v1563, %v1739
    %v1777 = vmul.f32 %v1564, %v1735
    %v1778 = vmul.f32 %v1565, %v1739
    %v1779 = vmul.f32 %v1566, %v1735
    %v1780 = vmul.f32 %v1567, %v1739
    %v1781 = vmul.f32 %v1568, %v1735
    %v1782 = vmul.f32 %v1569, %v1739
    %v1783 = vmul.f32 %v1570, %v1735
    %v1784 = vmul.f32 %v1571, %v1739
    %v1785 = vmul.f32 %v1572, %v1735
    %v1786 = vmul.f32 %v1573, %v1739
    %v1787 = vmul.f32 %v1574, %v1735
    %v1788 = vmul.f32 %v1575, %v1739
    %v1789 = vmul.f32 %v1576, %v1735
    %v1790 = vmul.f32 %v1577, %v1739
    %v1791 = vmul.f32 %v1578, %v1735
    %v1792 = vmul.f32 %v1579, %v1739
    %v1793 = vmul.f32 %v1580, %v1735
    %v1794 = vmul.f32 %v1581, %v1739
    %v1796 = vlaneseq
    %v1797 = vshrl.u32 %v1796, 7
    %v1798 = vsub.s32 0, %v1797
    %v1799 = vrot.slane %v1762, %v1798
    %v1800 = vlaneseq
    %v1801 = vshrl.u32 %v1800, 7
    %v1802 = vsub.s32 1, %v1801
    %v1803 = vrot.slane %v1762, %v1802
    %v1806 = vadd.f32 %v1763, %v1799
    %v1807 = vadd.f32 %v1764, %v1803
    %v1808 = vadd.f32 %v1765, %v1799
    %v1809 = vadd.f32 %v1766, %v1803
    %v1810 = vadd.f32 %v1767, %v1799
    %v1811 = vadd.f32 %v1768, %v1803
    %v1812 = vadd.f32 %v1769, %v1799
    %v1813 = vadd.f32 %v1770, %v1803
    %v1814 = vadd.f32 %v1771, %v1799
    %v1815 = vadd.f32 %v1772, %v1803
    %v1816 = vadd.f32 %v1773, %v1799
    %v1817 = vadd.f32 %v1774, %v1803
    %v1818 = vadd.f32 %v1775, %v1799
    %v1819 = vadd.f32 %v1776, %v1803
    %v1820 = vadd.f32 %v1777, %v1799
    %v1821 = vadd.f32 %v1778, %v1803
    %v1822 = vadd.f32 %v1779, %v1799
    %v1823 = vadd.f32 %v1780, %v1803
    %v1824 = vadd.f32 %v1781, %v1799
    %v1825 = vadd.f32 %v1782, %v1803
    %v1826 = vadd.f32 %v1783, %v1799
    %v1827 = vadd.f32 %v1784, %v1803
    %v1828 = vadd.f32 %v1785, %v1799
    %v1829 = vadd.f32 %v1786, %v1803
    %v1830 = vadd.f32 %v1787, %v1799
    %v1831 = vadd.f32 %v1788, %v1803
    %v1832 = vadd.f32 %v1789, %v1799
    %v1833 = vadd.f32 %v1790, %v1803
    %v1834 = vadd.f32 %v1791, %v1799
    %v1835 = vadd.f32 %v1792, %v1803
    %v1836 = vadd.f32 %v1793, %v1799
    %v1837 = vadd.f32 %v1794, %v1803
    %v1838 = vpack.c.bf16 %v1808, %v1806
    %v1839 = vpack.c.bf16 %v1809, %v1807
    %v1840 = vpack.c.bf16 %v1812, %v1810
    %v1841 = vpack.c.bf16 %v1813, %v1811
    %v1842 = vpack.c.bf16 %v1816, %v1814
    %v1843 = vpack.c.bf16 %v1817, %v1815
    %v1844 = vpack.c.bf16 %v1820, %v1818
    %v1845 = vpack.c.bf16 %v1821, %v1819
    %v1846 = vpack.c.bf16 %v1824, %v1822
    %v1847 = vpack.c.bf16 %v1825, %v1823
    %v1848 = vpack.c.bf16 %v1828, %v1826
    %v1849 = vpack.c.bf16 %v1829, %v1827
    %v1850 = vpack.c.bf16 %v1832, %v1830
    %v1851 = vpack.c.bf16 %v1833, %v1831
    %v1852 = vpack.c.bf16 %v1836, %v1834
    %v1853 = vpack.c.bf16 %v1837, %v1835
    %s1854 = scalar_lea.vmem [#allocation2], 512
    %v1855 = vld [vmem:[%s1854] sm:$0xff]
    %v1856 = vld [vmem:[%s1854 + $0x8] sm:$0xff]
    %v1857 = vld [vmem:[%s1854 + $0x10] sm:$0xff]
    %v1858 = vld [vmem:[%s1854 + $0x18] sm:$0xff]
    %v1859 = vld [vmem:[%s1854 + $0x20] sm:$0xff]
    %v1860 = vld [vmem:[%s1854 + $0x28] sm:$0xff]
    %v1861 = vld [vmem:[%s1854 + $0x30] sm:$0xff]
    %v1862 = vld [vmem:[%s1854 + $0x38] sm:$0xff]
    %v1863 = vld [vmem:[%s1854 + $0x40] sm:$0xff]
    %v1864 = vld [vmem:[%s1854 + $0x48] sm:$0xff]
    %v1865 = vld [vmem:[%s1854 + $0x50] sm:$0xff]
    %v1866 = vld [vmem:[%s1854 + $0x58] sm:$0xff]
    %v1867 = vld [vmem:[%s1854 + $0x60] sm:$0xff]
    %v1868 = vld [vmem:[%s1854 + $0x68] sm:$0xff]
    %v1869 = vld [vmem:[%s1854 + $0x70] sm:$0xff]
    %v1870 = vld [vmem:[%s1854 + $0x78] sm:$0xff]
    %v1871 = vld [vmem:[%s1854 + $0x80] sm:$0xff]
    %v1872 = vld [vmem:[%s1854 + $0x88] sm:$0xff]
    %v1873 = vld [vmem:[%s1854 + $0x90] sm:$0xff]
    %v1874 = vld [vmem:[%s1854 + $0x98] sm:$0xff]
    %v1875 = vld [vmem:[%s1854 + $0xa0] sm:$0xff]
    %v1876 = vld [vmem:[%s1854 + $0xa8] sm:$0xff]
    %v1877 = vld [vmem:[%s1854 + $0xb0] sm:$0xff]
    %v1878 = vld [vmem:[%s1854 + $0xb8] sm:$0xff]
    %v1879 = vld [vmem:[%s1854 + $0xc0] sm:$0xff]
    %v1880 = vld [vmem:[%s1854 + $0xc8] sm:$0xff]
    %v1881 = vld [vmem:[%s1854 + $0xd0] sm:$0xff]
    %v1882 = vld [vmem:[%s1854 + $0xd8] sm:$0xff]
    %v1883 = vld [vmem:[%s1854 + $0xe0] sm:$0xff]
    %v1884 = vld [vmem:[%s1854 + $0xe8] sm:$0xff]
    %v1885 = vld [vmem:[%s1854 + $0xf0] sm:$0xff]
    %v1886 = vld [vmem:[%s1854 + $0xf8] sm:$0xff]
    %s1887 = scalar_lea.vmem %s5, 2
    %v1888 = vld [vmem:[%s1887] ss:$4 sm:$0x3]
    %s1889 = scalar_lea.vmem %s6, 3
    %v1890 = vld [vmem:[%s1889] ss:$8 sm:$0x3]
    %s1891 = scalar_lea.vmem %s7, 3
    %v1892 = vld [vmem:[%s1891] ss:$8 sm:$0x3]
    %v1894 = vlaneseq
    %v1895 = vshrl.u32 %v1894, 7
    %v1896 = vsub.s32 0, %v1895
    %v1897 = vrot.slane %v1888, %v1896
    %v1898 = vlaneseq
    %v1899 = vshrl.u32 %v1898, 7
    %v1900 = vsub.s32 1, %v1899
    %v1901 = vrot.slane %v1888, %v1900
    %v1936 = vunpack.c.l.b16 %v1855
    %v1937 = vunpack.c.h.b16 %v1855
    %v1938 = vunpack.c.l.b16 %v1856
    %v1939 = vunpack.c.h.b16 %v1856
    %v1940 = vunpack.c.l.b16 %v1857
    %v1941 = vunpack.c.h.b16 %v1857
    %v1942 = vunpack.c.l.b16 %v1858
    %v1943 = vunpack.c.h.b16 %v1858
    %v1944 = vunpack.c.l.b16 %v1859
    %v1945 = vunpack.c.h.b16 %v1859
    %v1946 = vunpack.c.l.b16 %v1860
    %v1947 = vunpack.c.h.b16 %v1860
    %v1948 = vunpack.c.l.b16 %v1861
    %v1949 = vunpack.c.h.b16 %v1861
    %v1950 = vunpack.c.l.b16 %v1862
    %v1951 = vunpack.c.h.b16 %v1862
    %v1952 = vunpack.c.l.b16 %v1863
    %v1953 = vunpack.c.h.b16 %v1863
    %v1954 = vunpack.c.l.b16 %v1864
    %v1955 = vunpack.c.h.b16 %v1864
    %v1956 = vunpack.c.l.b16 %v1865
    %v1957 = vunpack.c.h.b16 %v1865
    %v1958 = vunpack.c.l.b16 %v1866
    %v1959 = vunpack.c.h.b16 %v1866
    %v1960 = vunpack.c.l.b16 %v1867
    %v1961 = vunpack.c.h.b16 %v1867
    %v1962 = vunpack.c.l.b16 %v1868
    %v1963 = vunpack.c.h.b16 %v1868
    %v1964 = vunpack.c.l.b16 %v1869
    %v1965 = vunpack.c.h.b16 %v1869
    %v1966 = vunpack.c.l.b16 %v1870
    %v1967 = vunpack.c.h.b16 %v1870
    %v1968 = vunpack.c.l.b16 %v1871
    %v1969 = vunpack.c.h.b16 %v1871
    %v1970 = vunpack.c.l.b16 %v1872
    %v1971 = vunpack.c.h.b16 %v1872
    %v1972 = vunpack.c.l.b16 %v1873
    %v1973 = vunpack.c.h.b16 %v1873
    %v1974 = vunpack.c.l.b16 %v1874
    %v1975 = vunpack.c.h.b16 %v1874
    %v1976 = vunpack.c.l.b16 %v1875
    %v1977 = vunpack.c.h.b16 %v1875
    %v1978 = vunpack.c.l.b16 %v1876
    %v1979 = vunpack.c.h.b16 %v1876
    %v1980 = vunpack.c.l.b16 %v1877
    %v1981 = vunpack.c.h.b16 %v1877
    %v1982 = vunpack.c.l.b16 %v1878
    %v1983 = vunpack.c.h.b16 %v1878
    %v1984 = vunpack.c.l.b16 %v1879
    %v1985 = vunpack.c.h.b16 %v1879
    %v1986 = vunpack.c.l.b16 %v1880
    %v1987 = vunpack.c.h.b16 %v1880
    %v1988 = vunpack.c.l.b16 %v1881
    %v1989 = vunpack.c.h.b16 %v1881
    %v1990 = vunpack.c.l.b16 %v1882
    %v1991 = vunpack.c.h.b16 %v1882
    %v1992 = vunpack.c.l.b16 %v1883
    %v1993 = vunpack.c.h.b16 %v1883
    %v1994 = vunpack.c.l.b16 %v1884
    %v1995 = vunpack.c.h.b16 %v1884
    %v1996 = vunpack.c.l.b16 %v1885
    %v1997 = vunpack.c.h.b16 %v1885
    %v1998 = vunpack.c.l.b16 %v1886
    %v1999 = vunpack.c.h.b16 %v1886
    %v2000 = vpack.c.b16 %v1938, %v1936
    %v2001 = vpack.c.b16 %v1939, %v1937
    %v2002 = vpack.c.b16 %v1942, %v1940
    %v2003 = vpack.c.b16 %v1943, %v1941
    %v2004 = vpack.c.b16 %v1946, %v1944
    %v2005 = vpack.c.b16 %v1947, %v1945
    %v2006 = vpack.c.b16 %v1950, %v1948
    %v2007 = vpack.c.b16 %v1951, %v1949
    %v2008 = vpack.c.b16 %v1954, %v1952
    %v2009 = vpack.c.b16 %v1955, %v1953
    %v2010 = vpack.c.b16 %v1958, %v1956
    %v2011 = vpack.c.b16 %v1959, %v1957
    %v2012 = vpack.c.b16 %v1962, %v1960
    %v2013 = vpack.c.b16 %v1963, %v1961
    %v2014 = vpack.c.b16 %v1966, %v1964
    %v2015 = vpack.c.b16 %v1967, %v1965
    %v2016 = vpack.c.b16 %v1970, %v1968
    %v2017 = vpack.c.b16 %v1971, %v1969
    %v2018 = vpack.c.b16 %v1974, %v1972
    %v2019 = vpack.c.b16 %v1975, %v1973
    %v2020 = vpack.c.b16 %v1978, %v1976
    %v2021 = vpack.c.b16 %v1979, %v1977
    %v2022 = vpack.c.b16 %v1982, %v1980
    %v2023 = vpack.c.b16 %v1983, %v1981
    %v2024 = vpack.c.b16 %v1986, %v1984
    %v2025 = vpack.c.b16 %v1987, %v1985
    %v2026 = vpack.c.b16 %v1990, %v1988
    %v2027 = vpack.c.b16 %v1991, %v1989
    %v2028 = vpack.c.b16 %v1994, %v1992
    %v2029 = vpack.c.b16 %v1995, %v1993
    %v2030 = vpack.c.b16 %v1998, %v1996
    %v2031 = vpack.c.b16 %v1999, %v1997
    %2064 = vmatprep.subr.bf16.mxu0 %v2001
    %2065 = vmatpush1.bf16.msra.mxu0 %v2000
    %2066 = vmatprep.subr.bf16.mxu0 %v2003
    %2067 = vmatpush1.bf16.msra.mxu0 %v2002
    %2068 = vmatprep.subr.bf16.mxu0 %v2005
    %2069 = vmatpush1.bf16.msra.mxu0 %v2004
    %2070 = vmatprep.subr.bf16.mxu0 %v2007
    %2071 = vmatpush1.bf16.msra.mxu0 %v2006
    %2072 = vmatprep.subr.bf16.mxu0 %v2009
    %2073 = vmatpush1.bf16.msra.mxu0 %v2008
    %2074 = vmatprep.subr.bf16.mxu0 %v2011
    %2075 = vmatpush1.bf16.msra.mxu0 %v2010
    %2076 = vmatprep.subr.bf16.mxu0 %v2013
    %2077 = vmatpush1.bf16.msra.mxu0 %v2012
    %2078 = vmatprep.subr.bf16.mxu0 %v2015
    %2079 = vmatpush1.bf16.msra.mxu0 %v2014
    %2080 = vmatprep.subr.bf16.mxu0 %v2017
    %2081 = vmatpush1.bf16.msra.mxu0 %v2016
    %2082 = vmatprep.subr.bf16.mxu0 %v2019
    %2083 = vmatpush1.bf16.msra.mxu0 %v2018
    %2084 = vmatprep.subr.bf16.mxu0 %v2021
    %2085 = vmatpush1.bf16.msra.mxu0 %v2020
    %2086 = vmatprep.subr.bf16.mxu0 %v2023
    %2087 = vmatpush1.bf16.msra.mxu0 %v2022
    %2088 = vmatprep.subr.bf16.mxu0 %v2025
    %2089 = vmatpush1.bf16.msra.mxu0 %v2024
    %2090 = vmatprep.subr.bf16.mxu0 %v2027
    %2091 = vmatpush1.bf16.msra.mxu0 %v2026
    %2092 = vmatprep.subr.bf16.mxu0 %v2029
    %2093 = vmatpush1.bf16.msra.mxu0 %v2028
    %2094 = vmatprep.subr.bf16.mxu0 %v2031
    %2095 = vmatpush1.bf16.msra.mxu0 %v2030
    %2096 = vmatprep.mubr.bf16.mxu0 %v1839
    %2097 = vmatmul.mubr.bf16.gmra.mrb[0].mxu0 %v1838
    %v2098 = vpop.f32.mrb[0].mxu0
    %v2099 = vadd.f32 %v1897, %v2098
    %v2100 = vpop.f32.mrb[0].mxu0
    %v2101 = vadd.f32 %v1901, %v2100
    %v2102 = vpop.f32.mrb[0].mxu0
    %v2103 = vadd.f32 %v1897, %v2102
    %v2104 = vpop.f32.mrb[0].mxu0
    %v2105 = vadd.f32 %v1901, %v2104
    %2106 = vmatprep.mubr.bf16.mxu0 %v1841
    %2107 = vmatmul.mubr.bf16.gmra.mrb[0].mxu0 %v1840
    %v2108 = vpop.f32.mrb[0].mxu0
    %v2109 = vadd.f32 %v1897, %v2108
    %v2110 = vpop.f32.mrb[0].mxu0
    %v2111 = vadd.f32 %v1901, %v2110
    %v2112 = vpop.f32.mrb[0].mxu0
    %v2113 = vadd.f32 %v1897, %v2112
    %v2114 = vpop.f32.mrb[0].mxu0
    %v2115 = vadd.f32 %v1901, %v2114
    %2116 = vmatprep.mubr.bf16.mxu0 %v1843
    %2117 = vmatmul.mubr.bf16.gmra.mrb[0].mxu0 %v1842
    %v2118 = vpop.f32.mrb[0].mxu0
    %v2119 = vadd.f32 %v1897, %v2118
    %v2120 = vpop.f32.mrb[0].mxu0
    %v2121 = vadd.f32 %v1901, %v2120
    %v2122 = vpop.f32.mrb[0].mxu0
    %v2123 = vadd.f32 %v1897, %v2122
    %v2124 = vpop.f32.mrb[0].mxu0
    %v2125 = vadd.f32 %v1901, %v2124
    %2126 = vmatprep.mubr.bf16.mxu0 %v1845
    %2127 = vmatmul.mubr.bf16.gmra.mrb[0].mxu0 %v1844
    %v2128 = vpop.f32.mrb[0].mxu0
    %v2129 = vadd.f32 %v1897, %v2128
    %v2130 = vpop.f32.mrb[0].mxu0
    %v2131 = vadd.f32 %v1901, %v2130
    %v2132 = vpop.f32.mrb[0].mxu0
    %v2133 = vadd.f32 %v1897, %v2132
    %v2134 = vpop.f32.mrb[0].mxu0
    %v2135 = vadd.f32 %v1901, %v2134
    %2136 = vmatprep.mubr.bf16.mxu0 %v1847
    %2137 = vmatmul.mubr.bf16.gmra.mrb[0].mxu0 %v1846
    %v2138 = vpop.f32.mrb[0].mxu0
    %v2139 = vadd.f32 %v1897, %v2138
    %v2140 = vpop.f32.mrb[0].mxu0
    %v2141 = vadd.f32 %v1901, %v2140
    %v2142 = vpop.f32.mrb[0].mxu0
    %v2143 = vadd.f32 %v1897, %v2142
    %v2144 = vpop.f32.mrb[0].mxu0
    %v2145 = vadd.f32 %v1901, %v2144
    %2146 = vmatprep.mubr.bf16.mxu0 %v1849
    %2147 = vmatmul.mubr.bf16.gmra.mrb[0].mxu0 %v1848
    %v2148 = vpop.f32.mrb[0].mxu0
    %v2149 = vadd.f32 %v1897, %v2148
    %v2150 = vpop.f32.mrb[0].mxu0
    %v2151 = vadd.f32 %v1901, %v2150
    %v2152 = vpop.f32.mrb[0].mxu0
    %v2153 = vadd.f32 %v1897, %v2152
    %v2154 = vpop.f32.mrb[0].mxu0
    %v2155 = vadd.f32 %v1901, %v2154
    %2156 = vmatprep.mubr.bf16.mxu0 %v1851
    %2157 = vmatmul.mubr.bf16.gmra.mrb[0].mxu0 %v1850
    %v2158 = vpop.f32.mrb[0].mxu0
    %v2159 = vadd.f32 %v1897, %v2158
    %v2160 = vpop.f32.mrb[0].mxu0
    %v2161 = vadd.f32 %v1901, %v2160
    %v2162 = vpop.f32.mrb[0].mxu0
    %v2163 = vadd.f32 %v1897, %v2162
    %v2164 = vpop.f32.mrb[0].mxu0
    %v2165 = vadd.f32 %v1901, %v2164
    %2166 = vmatprep.mubr.bf16.mxu0 %v1853
    %2167 = vmatmul.mubr.bf16.gmra.mrb[0].mxu0 %v1852
    %v2168 = vpop.f32.mrb[0].mxu0
    %v2169 = vadd.f32 %v1897, %v2168
    %v2170 = vpop.f32.mrb[0].mxu0
    %v2171 = vadd.f32 %v1901, %v2170
    %v2172 = vpop.f32.mrb[0].mxu0
    %v2173 = vadd.f32 %v1897, %v2172
    %v2174 = vpop.f32.mrb[0].mxu0
    %v2175 = vadd.f32 %v1901, %v2174
    %2176 = vdwg.mxu0
    %v2177 = vmax.f32 %v2099, 0.0
    %v2178 = vmax.f32 %v2101, 0.0
    %v2179 = vmax.f32 %v2103, 0.0
    %v2180 = vmax.f32 %v2105, 0.0
    %v2181 = vmax.f32 %v2109, 0.0
    %v2182 = vmax.f32 %v2111, 0.0
    %v2183 = vmax.f32 %v2113, 0.0
    %v2184 = vmax.f32 %v2115, 0.0
    %v2185 = vmax.f32 %v2119, 0.0
    %v2186 = vmax.f32 %v2121, 0.0
    %v2187 = vmax.f32 %v2123, 0.0
    %v2188 = vmax.f32 %v2125, 0.0
    %v2189 = vmax.f32 %v2129, 0.0
    %v2190 = vmax.f32 %v2131, 0.0
    %v2191 = vmax.f32 %v2133, 0.0
    %v2192 = vmax.f32 %v2135, 0.0
    %v2193 = vmax.f32 %v2139, 0.0
    %v2194 = vmax.f32 %v2141, 0.0
    %v2195 = vmax.f32 %v2143, 0.0
    %v2196 = vmax.f32 %v2145, 0.0
    %v2197 = vmax.f32 %v2149, 0.0
    %v2198 = vmax.f32 %v2151, 0.0
    %v2199 = vmax.f32 %v2153, 0.0
    %v2200 = vmax.f32 %v2155, 0.0
    %v2201 = vmax.f32 %v2159, 0.0
    %v2202 = vmax.f32 %v2161, 0.0
    %v2203 = vmax.f32 %v2163, 0.0
    %v2204 = vmax.f32 %v2165, 0.0
    %v2205 = vmax.f32 %v2169, 0.0
    %v2206 = vmax.f32 %v2171, 0.0
    %v2207 = vmax.f32 %v2173, 0.0
    %v2208 = vmax.f32 %v2175, 0.0
    %v2209 = vadd.f32 %v2177, %v2179
    %v2210 = vadd.f32 %v2209, %v2181
    %v2211 = vadd.f32 %v2210, %v2183
    %v2212 = vadd.f32 %v2211, %v2185
    %v2213 = vadd.f32 %v2212, %v2187
    %v2214 = vadd.f32 %v2213, %v2189
    %v2215 = vadd.f32 %v2214, %v2191
    %v2216 = vadd.f32 %v2215, %v2193
    %v2217 = vadd.f32 %v2216, %v2195
    %v2218 = vadd.f32 %v2217, %v2197
    %v2219 = vadd.f32 %v2218, %v2199
    %v2220 = vadd.f32 %v2219, %v2201
    %v2221 = vadd.f32 %v2220, %v2203
    %v2222 = vadd.f32 %v2221, %v2205
    %v2223 = vadd.f32 %v2222, %v2207
    %v2224 = vrot.slane %v2223, 4
    %v2225 = vadd.f32 %v2223, %v2224
    %v2226 = vrot.slane %v2225, 2
    %v2227 = vadd.f32 %v2225, %v2226
    %v2228 = vrot.slane %v2227, 1
    %v2229 = vadd.f32 %v2227, %v2228
    %v2230 = vadd.f32 %v2178, %v2180
    %v2231 = vadd.f32 %v2230, %v2182
    %v2232 = vadd.f32 %v2231, %v2184
    %v2233 = vadd.f32 %v2232, %v2186
    %v2234 = vadd.f32 %v2233, %v2188
    %v2235 = vadd.f32 %v2234, %v2190
    %v2236 = vadd.f32 %v2235, %v2192
    %v2237 = vadd.f32 %v2236, %v2194
    %v2238 = vadd.f32 %v2237, %v2196
    %v2239 = vadd.f32 %v2238, %v2198
    %v2240 = vadd.f32 %v2239, %v2200
    %v2241 = vadd.f32 %v2240, %v2202
    %v2242 = vadd.f32 %v2241, %v2204
    %v2243 = vadd.f32 %v2242, %v2206
    %v2244 = vadd.f32 %v2243, %v2208
    %v2245 = vrot.slane %v2244, 4
    %v2246 = vadd.f32 %v2244, %v2245
    %v2247 = vrot.slane %v2246, 2
    %v2248 = vadd.f32 %v2246, %v2247
    %v2249 = vrot.slane %v2248, 1
    %v2250 = vadd.f32 %v2248, %v2249
    %v2251 = vmul.f32 %v2229, %v371
    %v2252 = vmul.f32 %v2250, %v371
    %v2253 = vmul.f32 %v2177, %v2177
    %v2254 = vmul.f32 %v2178, %v2178
    %v2255 = vmul.f32 %v2179, %v2179
    %v2256 = vmul.f32 %v2180, %v2180
    %v2257 = vmul.f32 %v2181, %v2181
    %v2258 = vmul.f32 %v2182, %v2182
    %v2259 = vmul.f32 %v2183, %v2183
    %v2260 = vmul.f32 %v2184, %v2184
    %v2261 = vmul.f32 %v2185, %v2185
    %v2262 = vmul.f32 %v2186, %v2186
    %v2263 = vmul.f32 %v2187, %v2187
    %v2264 = vmul.f32 %v2188, %v2188
    %v2265 = vmul.f32 %v2189, %v2189
    %v2266 = vmul.f32 %v2190, %v2190
    %v2267 = vmul.f32 %v2191, %v2191
    %v2268 = vmul.f32 %v2192, %v2192
    %v2269 = vmul.f32 %v2193, %v2193
    %v2270 = vmul.f32 %v2194, %v2194
    %v2271 = vmul.f32 %v2195, %v2195
    %v2272 = vmul.f32 %v2196, %v2196
    %v2273 = vmul.f32 %v2197, %v2197
    %v2274 = vmul.f32 %v2198, %v2198
    %v2275 = vmul.f32 %v2199, %v2199
    %v2276 = vmul.f32 %v2200, %v2200
    %v2277 = vmul.f32 %v2201, %v2201
    %v2278 = vmul.f32 %v2202, %v2202
    %v2279 = vmul.f32 %v2203, %v2203
    %v2280 = vmul.f32 %v2204, %v2204
    %v2281 = vmul.f32 %v2205, %v2205
    %v2282 = vmul.f32 %v2206, %v2206
    %v2283 = vmul.f32 %v2207, %v2207
    %v2284 = vmul.f32 %v2208, %v2208
    %v2285 = vadd.f32 %v2253, %v2255
    %v2286 = vadd.f32 %v2285, %v2257
    %v2287 = vadd.f32 %v2286, %v2259
    %v2288 = vadd.f32 %v2287, %v2261
    %v2289 = vadd.f32 %v2288, %v2263
    %v2290 = vadd.f32 %v2289, %v2265
    %v2291 = vadd.f32 %v2290, %v2267
    %v2292 = vadd.f32 %v2291, %v2269
    %v2293 = vadd.f32 %v2292, %v2271
    %v2294 = vadd.f32 %v2293, %v2273
    %v2295 = vadd.f32 %v2294, %v2275
    %v2296 = vadd.f32 %v2295, %v2277
    %v2297 = vadd.f32 %v2296, %v2279
    %v2298 = vadd.f32 %v2297, %v2281
    %v2299 = vadd.f32 %v2298, %v2283
    %v2300 = vrot.slane %v2299, 4
    %v2301 = vadd.f32 %v2299, %v2300
    %v2302 = vrot.slane %v2301, 2
    %v2303 = vadd.f32 %v2301, %v2302
    %v2304 = vrot.slane %v2303, 1
    %v2305 = vadd.f32 %v2303, %v2304
    %v2306 = vadd.f32 %v2254, %v2256
    %v2307 = vadd.f32 %v2306, %v2258
    %v2308 = vadd.f32 %v2307, %v2260
    %v2309 = vadd.f32 %v2308, %v2262
    %v2310 = vadd.f32 %v2309, %v2264
    %v2311 = vadd.f32 %v2310, %v2266
    %v2312 = vadd.f32 %v2311, %v2268
    %v2313 = vadd.f32 %v2312, %v2270
    %v2314 = vadd.f32 %v2313, %v2272
    %v2315 = vadd.f32 %v2314, %v2274
    %v2316 = vadd.f32 %v2315, %v2276
    %v2317 = vadd.f32 %v2316, %v2278
    %v2318 = vadd.f32 %v2317, %v2280
    %v2319 = vadd.f32 %v2318, %v2282
    %v2320 = vadd.f32 %v2319, %v2284
    %v2321 = vrot.slane %v2320, 4
    %v2322 = vadd.f32 %v2320, %v2321
    %v2323 = vrot.slane %v2322, 2
    %v2324 = vadd.f32 %v2322, %v2323
    %v2325 = vrot.slane %v2324, 1
    %v2326 = vadd.f32 %v2324, %v2325
    %v2327 = vmul.f32 %v2305, %v371
    %v2328 = vmul.f32 %v2326, %v371
    %v2329 = vmul.f32 %v2251, %v2251
    %v2330 = vmul.f32 %v2252, %v2252
    %v2331 = vsub.f32 %v2327, %v2329
    %v2332 = vsub.f32 %v2328, %v2330
    %v2333 = vmax.f32 %v2331, 0.0
    %v2334 = vmax.f32 %v2332, 0.0
    %v2335 = vadd.f32 %v2333, 1e-05
    %v2336 = vadd.f32 %v2334, 1e-05
    %v2337 = vrsqrt.pop %v2335
    %v2338 = vrsqrt.pop %v2336
    %v2341 = vcombine.low %v2337, %v2338
    %v2343 = vunpack.c.l.s4 1966171168
    %v2344 = vunpack.c.0.s8 %v2343
    %v2345 = vlaneseq
    %v2346 = vshrl.u32 %v2345, 7
    %v2347 = vsub.s32 %v2344, %v2346
    %v2348 = vrot.slane %v2341, %v2347
    %v2350 = vunpack.c.l.s4 1966171168
    %v2351 = vunpack.c.0.s8 %v2350
    %v2352 = vlaneseq
    %v2353 = vshrl.u32 %v2352, 7
    %v2354 = vsub.s32 %v2351, %v2353
    %v2355 = vrot.slane %v2348, %v2354
    %v2357 = vmul.f32 %v1890, %v2355
    %v2359 = vlaneseq
    %v2360 = vshrl.u32 %v2359, 7
    %v2361 = vsub.s32 0, %v2360
    %v2362 = vrot.slane %v2357, %v2361
    %v2363 = vlaneseq
    %v2364 = vshrl.u32 %v2363, 7
    %v2365 = vsub.s32 1, %v2364
    %v2366 = vrot.slane %v2357, %v2365
    %v2369 = vmul.f32 %v2251, %v2362
    %v2370 = vmul.f32 %v2252, %v2366
    %v2373 = vcombine.low %v2369, %v2370
    %v2375 = vunpack.c.l.s4 1966171168
    %v2376 = vunpack.c.0.s8 %v2375
    %v2377 = vlaneseq
    %v2378 = vshrl.u32 %v2377, 7
    %v2379 = vsub.s32 %v2376, %v2378
    %v2380 = vrot.slane %v2373, %v2379
    %v2382 = vunpack.c.l.s4 1966171168
    %v2383 = vunpack.c.0.s8 %v2382
    %v2384 = vlaneseq
    %v2385 = vshrl.u32 %v2384, 7
    %v2386 = vsub.s32 %v2383, %v2385
    %v2387 = vrot.slane %v2380, %v2386
    %v2389 = vsub.f32 %v1892, %v2387
    %v2390 = vmul.f32 %v2177, %v2362
    %v2391 = vmul.f32 %v2178, %v2366
    %v2392 = vmul.f32 %v2179, %v2362
    %v2393 = vmul.f32 %v2180, %v2366
    %v2394 = vmul.f32 %v2181, %v2362
    %v2395 = vmul.f32 %v2182, %v2366
    %v2396 = vmul.f32 %v2183, %v2362
    %v2397 = vmul.f32 %v2184, %v2366
    %v2398 = vmul.f32 %v2185, %v2362
    %v2399 = vmul.f32 %v2186, %v2366
    %v2400 = vmul.f32 %v2187, %v2362
    %v2401 = vmul.f32 %v2188, %v2366
    %v2402 = vmul.f32 %v2189, %v2362
    %v2403 = vmul.f32 %v2190, %v2366
    %v2404 = vmul.f32 %v2191, %v2362
    %v2405 = vmul.f32 %v2192, %v2366
    %v2406 = vmul.f32 %v2193, %v2362
    %v2407 = vmul.f32 %v2194, %v2366
    %v2408 = vmul.f32 %v2195, %v2362
    %v2409 = vmul.f32 %v2196, %v2366
    %v2410 = vmul.f32 %v2197, %v2362
    %v2411 = vmul.f32 %v2198, %v2366
    %v2412 = vmul.f32 %v2199, %v2362
    %v2413 = vmul.f32 %v2200, %v2366
    %v2414 = vmul.f32 %v2201, %v2362
    %v2415 = vmul.f32 %v2202, %v2366
    %v2416 = vmul.f32 %v2203, %v2362
    %v2417 = vmul.f32 %v2204, %v2366
    %v2418 = vmul.f32 %v2205, %v2362
    %v2419 = vmul.f32 %v2206, %v2366
    %v2420 = vmul.f32 %v2207, %v2362
    %v2421 = vmul.f32 %v2208, %v2366
    %v2423 = vlaneseq
    %v2424 = vshrl.u32 %v2423, 7
    %v2425 = vsub.s32 0, %v2424
    %v2426 = vrot.slane %v2389, %v2425
    %v2427 = vlaneseq
    %v2428 = vshrl.u32 %v2427, 7
    %v2429 = vsub.s32 1, %v2428
    %v2430 = vrot.slane %v2389, %v2429
    %v2433 = vadd.f32 %v2390, %v2426
    %v2434 = vadd.f32 %v2391, %v2430
    %v2435 = vadd.f32 %v2392, %v2426
    %v2436 = vadd.f32 %v2393, %v2430
    %v2437 = vadd.f32 %v2394, %v2426
    %v2438 = vadd.f32 %v2395, %v2430
    %v2439 = vadd.f32 %v2396, %v2426
    %v2440 = vadd.f32 %v2397, %v2430
    %v2441 = vadd.f32 %v2398, %v2426
    %v2442 = vadd.f32 %v2399, %v2430
    %v2443 = vadd.f32 %v2400, %v2426
    %v2444 = vadd.f32 %v2401, %v2430
    %v2445 = vadd.f32 %v2402, %v2426
    %v2446 = vadd.f32 %v2403, %v2430
    %v2447 = vadd.f32 %v2404, %v2426
    %v2448 = vadd.f32 %v2405, %v2430
    %v2449 = vadd.f32 %v2406, %v2426
    %v2450 = vadd.f32 %v2407, %v2430
    %v2451 = vadd.f32 %v2408, %v2426
    %v2452 = vadd.f32 %v2409, %v2430
    %v2453 = vadd.f32 %v2410, %v2426
    %v2454 = vadd.f32 %v2411, %v2430
    %v2455 = vadd.f32 %v2412, %v2426
    %v2456 = vadd.f32 %v2413, %v2430
    %v2457 = vadd.f32 %v2414, %v2426
    %v2458 = vadd.f32 %v2415, %v2430
    %v2459 = vadd.f32 %v2416, %v2426
    %v2460 = vadd.f32 %v2417, %v2430
    %v2461 = vadd.f32 %v2418, %v2426
    %v2462 = vadd.f32 %v2419, %v2430
    %v2463 = vadd.f32 %v2420, %v2426
    %v2464 = vadd.f32 %v2421, %v2430
    %v2465 = vpack.c.bf16 %v2435, %v2433
    %v2466 = vpack.c.bf16 %v2436, %v2434
    %v2467 = vpack.c.bf16 %v2439, %v2437
    %v2468 = vpack.c.bf16 %v2440, %v2438
    %v2469 = vpack.c.bf16 %v2443, %v2441
    %v2470 = vpack.c.bf16 %v2444, %v2442
    %v2471 = vpack.c.bf16 %v2447, %v2445
    %v2472 = vpack.c.bf16 %v2448, %v2446
    %v2473 = vpack.c.bf16 %v2451, %v2449
    %v2474 = vpack.c.bf16 %v2452, %v2450
    %v2475 = vpack.c.bf16 %v2455, %v2453
    %v2476 = vpack.c.bf16 %v2456, %v2454
    %v2477 = vpack.c.bf16 %v2459, %v2457
    %v2478 = vpack.c.bf16 %v2460, %v2458
    %v2479 = vpack.c.bf16 %v2463, %v2461
    %v2480 = vpack.c.bf16 %v2464, %v2462
    %s2481 = scalar_lea.vmem [#allocation2], 768
    %v2482 = vld [vmem:[%s2481] sm:$0xff]
    %v2483 = vld [vmem:[%s2481 + $0x8] sm:$0xff]
    %v2484 = vld [vmem:[%s2481 + $0x10] sm:$0xff]
    %v2485 = vld [vmem:[%s2481 + $0x18] sm:$0xff]
    %v2486 = vld [vmem:[%s2481 + $0x20] sm:$0xff]
    %v2487 = vld [vmem:[%s2481 + $0x28] sm:$0xff]
    %v2488 = vld [vmem:[%s2481 + $0x30] sm:$0xff]
    %v2489 = vld [vmem:[%s2481 + $0x38] sm:$0xff]
    %v2490 = vld [vmem:[%s2481 + $0x40] sm:$0xff]
    %v2491 = vld [vmem:[%s2481 + $0x48] sm:$0xff]
    %v2492 = vld [vmem:[%s2481 + $0x50] sm:$0xff]
    %v2493 = vld [vmem:[%s2481 + $0x58] sm:$0xff]
    %v2494 = vld [vmem:[%s2481 + $0x60] sm:$0xff]
    %v2495 = vld [vmem:[%s2481 + $0x68] sm:$0xff]
    %v2496 = vld [vmem:[%s2481 + $0x70] sm:$0xff]
    %v2497 = vld [vmem:[%s2481 + $0x78] sm:$0xff]
    %v2498 = vld [vmem:[%s2481 + $0x80] sm:$0xff]
    %v2499 = vld [vmem:[%s2481 + $0x88] sm:$0xff]
    %v2500 = vld [vmem:[%s2481 + $0x90] sm:$0xff]
    %v2501 = vld [vmem:[%s2481 + $0x98] sm:$0xff]
    %v2502 = vld [vmem:[%s2481 + $0xa0] sm:$0xff]
    %v2503 = vld [vmem:[%s2481 + $0xa8] sm:$0xff]
    %v2504 = vld [vmem:[%s2481 + $0xb0] sm:$0xff]
    %v2505 = vld [vmem:[%s2481 + $0xb8] sm:$0xff]
    %v2506 = vld [vmem:[%s2481 + $0xc0] sm:$0xff]
    %v2507 = vld [vmem:[%s2481 + $0xc8] sm:$0xff]
    %v2508 = vld [vmem:[%s2481 + $0xd0] sm:$0xff]
    %v2509 = vld [vmem:[%s2481 + $0xd8] sm:$0xff]
    %v2510 = vld [vmem:[%s2481 + $0xe0] sm:$0xff]
    %v2511 = vld [vmem:[%s2481 + $0xe8] sm:$0xff]
    %v2512 = vld [vmem:[%s2481 + $0xf0] sm:$0xff]
    %v2513 = vld [vmem:[%s2481 + $0xf8] sm:$0xff]
    %s2514 = scalar_lea.vmem %s5, 3
    %v2515 = vld [vmem:[%s2514] ss:$4 sm:$0x3]
    %s2516 = scalar_lea.vmem %s6, 4
    %v2517 = vld [vmem:[%s2516] ss:$8 sm:$0x3]
    %s2518 = scalar_lea.vmem %s7, 4
    %v2519 = vld [vmem:[%s2518] ss:$8 sm:$0x3]
    %v2521 = vlaneseq
    %v2522 = vshrl.u32 %v2521, 7
    %v2523 = vsub.s32 0, %v2522
    %v2524 = vrot.slane %v2515, %v2523
    %v2525 = vlaneseq
    %v2526 = vshrl.u32 %v2525, 7
    %v2527 = vsub.s32 1, %v2526
    %v2528 = vrot.slane %v2515, %v2527
    %v2563 = vunpack.c.l.b16 %v2482
    %v2564 = vunpack.c.h.b16 %v2482
    %v2565 = vunpack.c.l.b16 %v2483
    %v2566 = vunpack.c.h.b16 %v2483
    %v2567 = vunpack.c.l.b16 %v2484
    %v2568 = vunpack.c.h.b16 %v2484
    %v2569 = vunpack.c.l.b16 %v2485
    %v2570 = vunpack.c.h.b16 %v2485
    %v2571 = vunpack.c.l.b16 %v2486
    %v2572 = vunpack.c.h.b16 %v2486
    %v2573 = vunpack.c.l.b16 %v2487
    %v2574 = vunpack.c.h.b16 %v2487
    %v2575 = vunpack.c.l.b16 %v2488
    %v2576 = vunpack.c.h.b16 %v2488
    %v2577 = vunpack.c.l.b16 %v2489
    %v2578 = vunpack.c.h.b16 %v2489
    %v2579 = vunpack.c.l.b16 %v2490
    %v2580 = vunpack.c.h.b16 %v2490
    %v2581 = vunpack.c.l.b16 %v2491
    %v2582 = vunpack.c.h.b16 %v2491
    %v2583 = vunpack.c.l.b16 %v2492
    %v2584 = vunpack.c.h.b16 %v2492
    %v2585 = vunpack.c.l.b16 %v2493
    %v2586 = vunpack.c.h.b16 %v2493
    %v2587 = vunpack.c.l.b16 %v2494
    %v2588 = vunpack.c.h.b16 %v2494
    %v2589 = vunpack.c.l.b16 %v2495
    %v2590 = vunpack.c.h.b16 %v2495
    %v2591 = vunpack.c.l.b16 %v2496
    %v2592 = vunpack.c.h.b16 %v2496
    %v2593 = vunpack.c.l.b16 %v2497
    %v2594 = vunpack.c.h.b16 %v2497
    %v2595 = vunpack.c.l.b16 %v2498
    %v2596 = vunpack.c.h.b16 %v2498
    %v2597 = vunpack.c.l.b16 %v2499
    %v2598 = vunpack.c.h.b16 %v2499
    %v2599 = vunpack.c.l.b16 %v2500
    %v2600 = vunpack.c.h.b16 %v2500
    %v2601 = vunpack.c.l.b16 %v2501
    %v2602 = vunpack.c.h.b16 %v2501
    %v2603 = vunpack.c.l.b16 %v2502
    %v2604 = vunpack.c.h.b16 %v2502
    %v2605 = vunpack.c.l.b16 %v2503
    %v2606 = vunpack.c.h.b16 %v2503
    %v2607 = vunpack.c.l.b16 %v2504
    %v2608 = vunpack.c.h.b16 %v2504
    %v2609 = vunpack.c.l.b16 %v2505
    %v2610 = vunpack.c.h.b16 %v2505
    %v2611 = vunpack.c.l.b16 %v2506
    %v2612 = vunpack.c.h.b16 %v2506
    %v2613 = vunpack.c.l.b16 %v2507
    %v2614 = vunpack.c.h.b16 %v2507
    %v2615 = vunpack.c.l.b16 %v2508
    %v2616 = vunpack.c.h.b16 %v2508
    %v2617 = vunpack.c.l.b16 %v2509
    %v2618 = vunpack.c.h.b16 %v2509
    %v2619 = vunpack.c.l.b16 %v2510
    %v2620 = vunpack.c.h.b16 %v2510
    %v2621 = vunpack.c.l.b16 %v2511
    %v2622 = vunpack.c.h.b16 %v2511
    %v2623 = vunpack.c.l.b16 %v2512
    %v2624 = vunpack.c.h.b16 %v2512
    %v2625 = vunpack.c.l.b16 %v2513
    %v2626 = vunpack.c.h.b16 %v2513
    %v2627 = vpack.c.b16 %v2565, %v2563
    %v2628 = vpack.c.b16 %v2566, %v2564
    %v2629 = vpack.c.b16 %v2569, %v2567
    %v2630 = vpack.c.b16 %v2570, %v2568
    %v2631 = vpack.c.b16 %v2573, %v2571
    %v2632 = vpack.c.b16 %v2574, %v2572
    %v2633 = vpack.c.b16 %v2577, %v2575
    %v2634 = vpack.c.b16 %v2578, %v2576
    %v2635 = vpack.c.b16 %v2581, %v2579
    %v2636 = vpack.c.b16 %v2582, %v2580
    %v2637 = vpack.c.b16 %v2585, %v2583
    %v2638 = vpack.c.b16 %v2586, %v2584
    %v2639 = vpack.c.b16 %v2589, %v2587
    %v2640 = vpack.c.b16 %v2590, %v2588
    %v2641 = vpack.c.b16 %v2593, %v2591
    %v2642 = vpack.c.b16 %v2594, %v2592
    %v2643 = vpack.c.b16 %v2597, %v2595
    %v2644 = vpack.c.b16 %v2598, %v2596
    %v2645 = vpack.c.b16 %v2601, %v2599
    %v2646 = vpack.c.b16 %v2602, %v2600
    %v2647 = vpack.c.b16 %v2605, %v2603
    %v2648 = vpack.c.b16 %v2606, %v2604
    %v2649 = vpack.c.b16 %v2609, %v2607
    %v2650 = vpack.c.b16 %v2610, %v2608
    %v2651 = vpack.c.b16 %v2613, %v2611
    %v2652 = vpack.c.b16 %v2614, %v2612
    %v2653 = vpack.c.b16 %v2617, %v2615
    %v2654 = vpack.c.b16 %v2618, %v2616
    %v2655 = vpack.c.b16 %v2621, %v2619
    %v2656 = vpack.c.b16 %v2622, %v2620
    %v2657 = vpack.c.b16 %v2625, %v2623
    %v2658 = vpack.c.b16 %v2626, %v2624
    %2691 = vmatprep.subr.bf16.mxu0 %v2628
    %2692 = vmatpush1.bf16.msra.mxu0 %v2627
    %2693 = vmatprep.subr.bf16.mxu0 %v2630
    %2694 = vmatpush1.bf16.msra.mxu0 %v2629
    %2695 = vmatprep.subr.bf16.mxu0 %v2632
    %2696 = vmatpush1.bf16.msra.mxu0 %v2631
    %2697 = vmatprep.subr.bf16.mxu0 %v2634
    %2698 = vmatpush1.bf16.msra.mxu0 %v2633
    %2699 = vmatprep.subr.bf16.mxu0 %v2636
    %2700 = vmatpush1.bf16.msra.mxu0 %v2635
    %2701 = vmatprep.subr.bf16.mxu0 %v2638
    %2702 = vmatpush1.bf16.msra.mxu0 %v2637
    %2703 = vmatprep.subr.bf16.mxu0 %v2640
    %2704 = vmatpush1.bf16.msra.mxu0 %v2639
    %2705 = vmatprep.subr.bf16.mxu0 %v2642
    %2706 = vmatpush1.bf16.msra.mxu0 %v2641
    %2707 = vmatprep.subr.bf16.mxu0 %v2644
    %2708 = vmatpush1.bf16.msra.mxu0 %v2643
    %2709 = vmatprep.subr.bf16.mxu0 %v2646
    %2710 = vmatpush1.bf16.msra.mxu0 %v2645
    %2711 = vmatprep.subr.bf16.mxu0 %v2648
    %2712 = vmatpush1.bf16.msra.mxu0 %v2647
    %2713 = vmatprep.subr.bf16.mxu0 %v2650
    %2714 = vmatpush1.bf16.msra.mxu0 %v2649
    %2715 = vmatprep.subr.bf16.mxu0 %v2652
    %2716 = vmatpush1.bf16.msra.mxu0 %v2651
    %2717 = vmatprep.subr.bf16.mxu0 %v2654
    %2718 = vmatpush1.bf16.msra.mxu0 %v2653
    %2719 = vmatprep.subr.bf16.mxu0 %v2656
    %2720 = vmatpush1.bf16.msra.mxu0 %v2655
    %2721 = vmatprep.subr.bf16.mxu0 %v2658
    %2722 = vmatpush1.bf16.msra.mxu0 %v2657
    %2723 = vmatprep.mubr.bf16.mxu0 %v2466
    %2724 = vmatmul.mubr.bf16.gmra.mrb[0].mxu0 %v2465
    %v2725 = vpop.f32.mrb[0].mxu0
    %v2726 = vadd.f32 %v2524, %v2725
    %v2727 = vpop.f32.mrb[0].mxu0
    %v2728 = vadd.f32 %v2528, %v2727
    %v2729 = vpop.f32.mrb[0].mxu0
    %v2730 = vadd.f32 %v2524, %v2729
    %v2731 = vpop.f32.mrb[0].mxu0
    %v2732 = vadd.f32 %v2528, %v2731
    %2733 = vmatprep.mubr.bf16.mxu0 %v2468
    %2734 = vmatmul.mubr.bf16.gmra.mrb[0].mxu0 %v2467
    %v2735 = vpop.f32.mrb[0].mxu0
    %v2736 = vadd.f32 %v2524, %v2735
    %v2737 = vpop.f32.mrb[0].mxu0
    %v2738 = vadd.f32 %v2528, %v2737
    %v2739 = vpop.f32.mrb[0].mxu0
    %v2740 = vadd.f32 %v2524, %v2739
    %v2741 = vpop.f32.mrb[0].mxu0
    %v2742 = vadd.f32 %v2528, %v2741
    %2743 = vmatprep.mubr.bf16.mxu0 %v2470
    %2744 = vmatmul.mubr.bf16.gmra.mrb[0].mxu0 %v2469
    %v2745 = vpop.f32.mrb[0].mxu0
    %v2746 = vadd.f32 %v2524, %v2745
    %v2747 = vpop.f32.mrb[0].mxu0
    %v2748 = vadd.f32 %v2528, %v2747
    %v2749 = vpop.f32.mrb[0].mxu0
    %v2750 = vadd.f32 %v2524, %v2749
    %v2751 = vpop.f32.mrb[0].mxu0
    %v2752 = vadd.f32 %v2528, %v2751
    %2753 = vmatprep.mubr.bf16.mxu0 %v2472
    %2754 = vmatmul.mubr.bf16.gmra.mrb[0].mxu0 %v2471
    %v2755 = vpop.f32.mrb[0].mxu0
    %v2756 = vadd.f32 %v2524, %v2755
    %v2757 = vpop.f32.mrb[0].mxu0
    %v2758 = vadd.f32 %v2528, %v2757
    %v2759 = vpop.f32.mrb[0].mxu0
    %v2760 = vadd.f32 %v2524, %v2759
    %v2761 = vpop.f32.mrb[0].mxu0
    %v2762 = vadd.f32 %v2528, %v2761
    %2763 = vmatprep.mubr.bf16.mxu0 %v2474
    %2764 = vmatmul.mubr.bf16.gmra.mrb[0].mxu0 %v2473
    %v2765 = vpop.f32.mrb[0].mxu0
    %v2766 = vadd.f32 %v2524, %v2765
    %v2767 = vpop.f32.mrb[0].mxu0
    %v2768 = vadd.f32 %v2528, %v2767
    %v2769 = vpop.f32.mrb[0].mxu0
    %v2770 = vadd.f32 %v2524, %v2769
    %v2771 = vpop.f32.mrb[0].mxu0
    %v2772 = vadd.f32 %v2528, %v2771
    %2773 = vmatprep.mubr.bf16.mxu0 %v2476
    %2774 = vmatmul.mubr.bf16.gmra.mrb[0].mxu0 %v2475
    %v2775 = vpop.f32.mrb[0].mxu0
    %v2776 = vadd.f32 %v2524, %v2775
    %v2777 = vpop.f32.mrb[0].mxu0
    %v2778 = vadd.f32 %v2528, %v2777
    %v2779 = vpop.f32.mrb[0].mxu0
    %v2780 = vadd.f32 %v2524, %v2779
    %v2781 = vpop.f32.mrb[0].mxu0
    %v2782 = vadd.f32 %v2528, %v2781
    %2783 = vmatprep.mubr.bf16.mxu0 %v2478
    %2784 = vmatmul.mubr.bf16.gmra.mrb[0].mxu0 %v2477
    %v2785 = vpop.f32.mrb[0].mxu0
    %v2786 = vadd.f32 %v2524, %v2785
    %v2787 = vpop.f32.mrb[0].mxu0
    %v2788 = vadd.f32 %v2528, %v2787
    %v2789 = vpop.f32.mrb[0].mxu0
    %v2790 = vadd.f32 %v2524, %v2789
    %v2791 = vpop.f32.mrb[0].mxu0
    %v2792 = vadd.f32 %v2528, %v2791
    %2793 = vmatprep.mubr.bf16.mxu0 %v2480
    %2794 = vmatmul.mubr.bf16.gmra.mrb[0].mxu0 %v2479
    %v2795 = vpop.f32.mrb[0].mxu0
    %v2796 = vadd.f32 %v2524, %v2795
    %v2797 = vpop.f32.mrb[0].mxu0
    %v2798 = vadd.f32 %v2528, %v2797
    %v2799 = vpop.f32.mrb[0].mxu0
    %v2800 = vadd.f32 %v2524, %v2799
    %v2801 = vpop.f32.mrb[0].mxu0
    %v2802 = vadd.f32 %v2528, %v2801
    %2803 = vdwg.mxu0
    %v2804 = vmax.f32 %v2726, 0.0
    %v2805 = vmax.f32 %v2728, 0.0
    %v2806 = vmax.f32 %v2730, 0.0
    %v2807 = vmax.f32 %v2732, 0.0
    %v2808 = vmax.f32 %v2736, 0.0
    %v2809 = vmax.f32 %v2738, 0.0
    %v2810 = vmax.f32 %v2740, 0.0
    %v2811 = vmax.f32 %v2742, 0.0
    %v2812 = vmax.f32 %v2746, 0.0
    %v2813 = vmax.f32 %v2748, 0.0
    %v2814 = vmax.f32 %v2750, 0.0
    %v2815 = vmax.f32 %v2752, 0.0
    %v2816 = vmax.f32 %v2756, 0.0
    %v2817 = vmax.f32 %v2758, 0.0
    %v2818 = vmax.f32 %v2760, 0.0
    %v2819 = vmax.f32 %v2762, 0.0
    %v2820 = vmax.f32 %v2766, 0.0
    %v2821 = vmax.f32 %v2768, 0.0
    %v2822 = vmax.f32 %v2770, 0.0
    %v2823 = vmax.f32 %v2772, 0.0
    %v2824 = vmax.f32 %v2776, 0.0
    %v2825 = vmax.f32 %v2778, 0.0
    %v2826 = vmax.f32 %v2780, 0.0
    %v2827 = vmax.f32 %v2782, 0.0
    %v2828 = vmax.f32 %v2786, 0.0
    %v2829 = vmax.f32 %v2788, 0.0
    %v2830 = vmax.f32 %v2790, 0.0
    %v2831 = vmax.f32 %v2792, 0.0
    %v2832 = vmax.f32 %v2796, 0.0
    %v2833 = vmax.f32 %v2798, 0.0
    %v2834 = vmax.f32 %v2800, 0.0
    %v2835 = vmax.f32 %v2802, 0.0
    %v2836 = vadd.f32 %v2804, %v2806
    %v2837 = vadd.f32 %v2836, %v2808
    %v2838 = vadd.f32 %v2837, %v2810
    %v2839 = vadd.f32 %v2838, %v2812
    %v2840 = vadd.f32 %v2839, %v2814
    %v2841 = vadd.f32 %v2840, %v2816
    %v2842 = vadd.f32 %v2841, %v2818
    %v2843 = vadd.f32 %v2842, %v2820
    %v2844 = vadd.f32 %v2843, %v2822
    %v2845 = vadd.f32 %v2844, %v2824
    %v2846 = vadd.f32 %v2845, %v2826
    %v2847 = vadd.f32 %v2846, %v2828
    %v2848 = vadd.f32 %v2847, %v2830
    %v2849 = vadd.f32 %v2848, %v2832
    %v2850 = vadd.f32 %v2849, %v2834
    %v2851 = vrot.slane %v2850, 4
    %v2852 = vadd.f32 %v2850, %v2851
    %v2853 = vrot.slane %v2852, 2
    %v2854 = vadd.f32 %v2852, %v2853
    %v2855 = vrot.slane %v2854, 1
    %v2856 = vadd.f32 %v2854, %v2855
    %v2857 = vadd.f32 %v2805, %v2807
    %v2858 = vadd.f32 %v2857, %v2809
    %v2859 = vadd.f32 %v2858, %v2811
    %v2860 = vadd.f32 %v2859, %v2813
    %v2861 = vadd.f32 %v2860, %v2815
    %v2862 = vadd.f32 %v2861, %v2817
    %v2863 = vadd.f32 %v2862, %v2819
    %v2864 = vadd.f32 %v2863, %v2821
    %v2865 = vadd.f32 %v2864, %v2823
    %v2866 = vadd.f32 %v2865, %v2825
    %v2867 = vadd.f32 %v2866, %v2827
    %v2868 = vadd.f32 %v2867, %v2829
    %v2869 = vadd.f32 %v2868, %v2831
    %v2870 = vadd.f32 %v2869, %v2833
    %v2871 = vadd.f32 %v2870, %v2835
    %v2872 = vrot.slane %v2871, 4
    %v2873 = vadd.f32 %v2871, %v2872
    %v2874 = vrot.slane %v2873, 2
    %v2875 = vadd.f32 %v2873, %v2874
    %v2876 = vrot.slane %v2875, 1
    %v2877 = vadd.f32 %v2875, %v2876
    %v2878 = vmul.f32 %v2856, %v371
    %v2879 = vmul.f32 %v2877, %v371
    %v2880 = vmul.f32 %v2804, %v2804
    %v2881 = vmul.f32 %v2805, %v2805
    %v2882 = vmul.f32 %v2806, %v2806
    %v2883 = vmul.f32 %v2807, %v2807
    %v2884 = vmul.f32 %v2808, %v2808
    %v2885 = vmul.f32 %v2809, %v2809
    %v2886 = vmul.f32 %v2810, %v2810
    %v2887 = vmul.f32 %v2811, %v2811
    %v2888 = vmul.f32 %v2812, %v2812
    %v2889 = vmul.f32 %v2813, %v2813
    %v2890 = vmul.f32 %v2814, %v2814
    %v2891 = vmul.f32 %v2815, %v2815
    %v2892 = vmul.f32 %v2816, %v2816
    %v2893 = vmul.f32 %v2817, %v2817
    %v2894 = vmul.f32 %v2818, %v2818
    %v2895 = vmul.f32 %v2819, %v2819
    %v2896 = vmul.f32 %v2820, %v2820
    %v2897 = vmul.f32 %v2821, %v2821
    %v2898 = vmul.f32 %v2822, %v2822
    %v2899 = vmul.f32 %v2823, %v2823
    %v2900 = vmul.f32 %v2824, %v2824
    %v2901 = vmul.f32 %v2825, %v2825
    %v2902 = vmul.f32 %v2826, %v2826
    %v2903 = vmul.f32 %v2827, %v2827
    %v2904 = vmul.f32 %v2828, %v2828
    %v2905 = vmul.f32 %v2829, %v2829
    %v2906 = vmul.f32 %v2830, %v2830
    %v2907 = vmul.f32 %v2831, %v2831
    %v2908 = vmul.f32 %v2832, %v2832
    %v2909 = vmul.f32 %v2833, %v2833
    %v2910 = vmul.f32 %v2834, %v2834
    %v2911 = vmul.f32 %v2835, %v2835
    %v2912 = vadd.f32 %v2880, %v2882
    %v2913 = vadd.f32 %v2912, %v2884
    %v2914 = vadd.f32 %v2913, %v2886
    %v2915 = vadd.f32 %v2914, %v2888
    %v2916 = vadd.f32 %v2915, %v2890
    %v2917 = vadd.f32 %v2916, %v2892
    %v2918 = vadd.f32 %v2917, %v2894
    %v2919 = vadd.f32 %v2918, %v2896
    %v2920 = vadd.f32 %v2919, %v2898
    %v2921 = vadd.f32 %v2920, %v2900
    %v2922 = vadd.f32 %v2921, %v2902
    %v2923 = vadd.f32 %v2922, %v2904
    %v2924 = vadd.f32 %v2923, %v2906
    %v2925 = vadd.f32 %v2924, %v2908
    %v2926 = vadd.f32 %v2925, %v2910
    %v2927 = vrot.slane %v2926, 4
    %v2928 = vadd.f32 %v2926, %v2927
    %v2929 = vrot.slane %v2928, 2
    %v2930 = vadd.f32 %v2928, %v2929
    %v2931 = vrot.slane %v2930, 1
    %v2932 = vadd.f32 %v2930, %v2931
    %v2933 = vadd.f32 %v2881, %v2883
    %v2934 = vadd.f32 %v2933, %v2885
    %v2935 = vadd.f32 %v2934, %v2887
    %v2936 = vadd.f32 %v2935, %v2889
    %v2937 = vadd.f32 %v2936, %v2891
    %v2938 = vadd.f32 %v2937, %v2893
    %v2939 = vadd.f32 %v2938, %v2895
    %v2940 = vadd.f32 %v2939, %v2897
    %v2941 = vadd.f32 %v2940, %v2899
    %v2942 = vadd.f32 %v2941, %v2901
    %v2943 = vadd.f32 %v2942, %v2903
    %v2944 = vadd.f32 %v2943, %v2905
    %v2945 = vadd.f32 %v2944, %v2907
    %v2946 = vadd.f32 %v2945, %v2909
    %v2947 = vadd.f32 %v2946, %v2911
    %v2948 = vrot.slane %v2947, 4
    %v2949 = vadd.f32 %v2947, %v2948
    %v2950 = vrot.slane %v2949, 2
    %v2951 = vadd.f32 %v2949, %v2950
    %v2952 = vrot.slane %v2951, 1
    %v2953 = vadd.f32 %v2951, %v2952
    %v2954 = vmul.f32 %v2932, %v371
    %v2955 = vmul.f32 %v2953, %v371
    %v2956 = vmul.f32 %v2878, %v2878
    %v2957 = vmul.f32 %v2879, %v2879
    %v2958 = vsub.f32 %v2954, %v2956
    %v2959 = vsub.f32 %v2955, %v2957
    %v2960 = vmax.f32 %v2958, 0.0
    %v2961 = vmax.f32 %v2959, 0.0
    %v2962 = vadd.f32 %v2960, 1e-05
    %v2963 = vadd.f32 %v2961, 1e-05
    %v2964 = vrsqrt.pop %v2962
    %v2965 = vrsqrt.pop %v2963
    %v2968 = vcombine.low %v2964, %v2965
    %v2970 = vunpack.c.l.s4 1966171168
    %v2971 = vunpack.c.0.s8 %v2970
    %v2972 = vlaneseq
    %v2973 = vshrl.u32 %v2972, 7
    %v2974 = vsub.s32 %v2971, %v2973
    %v2975 = vrot.slane %v2968, %v2974
    %v2977 = vunpack.c.l.s4 1966171168
    %v2978 = vunpack.c.0.s8 %v2977
    %v2979 = vlaneseq
    %v2980 = vshrl.u32 %v2979, 7
    %v2981 = vsub.s32 %v2978, %v2980
    %v2982 = vrot.slane %v2975, %v2981
    %v2984 = vmul.f32 %v2517, %v2982
    %v2986 = vlaneseq
    %v2987 = vshrl.u32 %v2986, 7
    %v2988 = vsub.s32 0, %v2987
    %v2989 = vrot.slane %v2984, %v2988
    %v2990 = vlaneseq
    %v2991 = vshrl.u32 %v2990, 7
    %v2992 = vsub.s32 1, %v2991
    %v2993 = vrot.slane %v2984, %v2992
    %v2996 = vmul.f32 %v2878, %v2989
    %v2997 = vmul.f32 %v2879, %v2993
    %v3000 = vcombine.low %v2996, %v2997
    %v3002 = vunpack.c.l.s4 1966171168
    %v3003 = vunpack.c.0.s8 %v3002
    %v3004 = vlaneseq
    %v3005 = vshrl.u32 %v3004, 7
    %v3006 = vsub.s32 %v3003, %v3005
    %v3007 = vrot.slane %v3000, %v3006
    %v3009 = vunpack.c.l.s4 1966171168
    %v3010 = vunpack.c.0.s8 %v3009
    %v3011 = vlaneseq
    %v3012 = vshrl.u32 %v3011, 7
    %v3013 = vsub.s32 %v3010, %v3012
    %v3014 = vrot.slane %v3007, %v3013
    %v3016 = vsub.f32 %v2519, %v3014
    %v3017 = vmul.f32 %v2804, %v2989
    %v3018 = vmul.f32 %v2805, %v2993
    %v3019 = vmul.f32 %v2806, %v2989
    %v3020 = vmul.f32 %v2807, %v2993
    %v3021 = vmul.f32 %v2808, %v2989
    %v3022 = vmul.f32 %v2809, %v2993
    %v3023 = vmul.f32 %v2810, %v2989
    %v3024 = vmul.f32 %v2811, %v2993
    %v3025 = vmul.f32 %v2812, %v2989
    %v3026 = vmul.f32 %v2813, %v2993
    %v3027 = vmul.f32 %v2814, %v2989
    %v3028 = vmul.f32 %v2815, %v2993
    %v3029 = vmul.f32 %v2816, %v2989
    %v3030 = vmul.f32 %v2817, %v2993
    %v3031 = vmul.f32 %v2818, %v2989
    %v3032 = vmul.f32 %v2819, %v2993
    %v3033 = vmul.f32 %v2820, %v2989
    %v3034 = vmul.f32 %v2821, %v2993
    %v3035 = vmul.f32 %v2822, %v2989
    %v3036 = vmul.f32 %v2823, %v2993
    %v3037 = vmul.f32 %v2824, %v2989
    %v3038 = vmul.f32 %v2825, %v2993
    %v3039 = vmul.f32 %v2826, %v2989
    %v3040 = vmul.f32 %v2827, %v2993
    %v3041 = vmul.f32 %v2828, %v2989
    %v3042 = vmul.f32 %v2829, %v2993
    %v3043 = vmul.f32 %v2830, %v2989
    %v3044 = vmul.f32 %v2831, %v2993
    %v3045 = vmul.f32 %v2832, %v2989
    %v3046 = vmul.f32 %v2833, %v2993
    %v3047 = vmul.f32 %v2834, %v2989
    %v3048 = vmul.f32 %v2835, %v2993
    %v3050 = vlaneseq
    %v3051 = vshrl.u32 %v3050, 7
    %v3052 = vsub.s32 0, %v3051
    %v3053 = vrot.slane %v3016, %v3052
    %v3054 = vlaneseq
    %v3055 = vshrl.u32 %v3054, 7
    %v3056 = vsub.s32 1, %v3055
    %v3057 = vrot.slane %v3016, %v3056
    %v3060 = vadd.f32 %v3017, %v3053
    %v3061 = vadd.f32 %v3018, %v3057
    %v3062 = vadd.f32 %v3019, %v3053
    %v3063 = vadd.f32 %v3020, %v3057
    %v3064 = vadd.f32 %v3021, %v3053
    %v3065 = vadd.f32 %v3022, %v3057
    %v3066 = vadd.f32 %v3023, %v3053
    %v3067 = vadd.f32 %v3024, %v3057
    %v3068 = vadd.f32 %v3025, %v3053
    %v3069 = vadd.f32 %v3026, %v3057
    %v3070 = vadd.f32 %v3027, %v3053
    %v3071 = vadd.f32 %v3028, %v3057
    %v3072 = vadd.f32 %v3029, %v3053
    %v3073 = vadd.f32 %v3030, %v3057
    %v3074 = vadd.f32 %v3031, %v3053
    %v3075 = vadd.f32 %v3032, %v3057
    %v3076 = vadd.f32 %v3033, %v3053
    %v3077 = vadd.f32 %v3034, %v3057
    %v3078 = vadd.f32 %v3035, %v3053
    %v3079 = vadd.f32 %v3036, %v3057
    %v3080 = vadd.f32 %v3037, %v3053
    %v3081 = vadd.f32 %v3038, %v3057
    %v3082 = vadd.f32 %v3039, %v3053
    %v3083 = vadd.f32 %v3040, %v3057
    %v3084 = vadd.f32 %v3041, %v3053
    %v3085 = vadd.f32 %v3042, %v3057
    %v3086 = vadd.f32 %v3043, %v3053
    %v3087 = vadd.f32 %v3044, %v3057
    %v3088 = vadd.f32 %v3045, %v3053
    %v3089 = vadd.f32 %v3046, %v3057
    %v3090 = vadd.f32 %v3047, %v3053
    %v3091 = vadd.f32 %v3048, %v3057
    %v3092 = vpack.c.bf16 %v3062, %v3060
    %v3093 = vpack.c.bf16 %v3063, %v3061
    %v3094 = vpack.c.bf16 %v3066, %v3064
    %v3095 = vpack.c.bf16 %v3067, %v3065
    %v3096 = vpack.c.bf16 %v3070, %v3068
    %v3097 = vpack.c.bf16 %v3071, %v3069
    %v3098 = vpack.c.bf16 %v3074, %v3072
    %v3099 = vpack.c.bf16 %v3075, %v3073
    %v3100 = vpack.c.bf16 %v3078, %v3076
    %v3101 = vpack.c.bf16 %v3079, %v3077
    %v3102 = vpack.c.bf16 %v3082, %v3080
    %v3103 = vpack.c.bf16 %v3083, %v3081
    %v3104 = vpack.c.bf16 %v3086, %v3084
    %v3105 = vpack.c.bf16 %v3087, %v3085
    %v3106 = vpack.c.bf16 %v3090, %v3088
    %v3107 = vpack.c.bf16 %v3091, %v3089
    %v3108 = vld [vmem:[%s8] sm:$0xf]
    %v3109 = vld [vmem:[%s8 + $0x4] sm:$0xf]
    %v3110 = vld [vmem:[%s8 + $0x8] sm:$0xf]
    %v3111 = vld [vmem:[%s8 + $0xc] sm:$0xf]
    %v3112 = vld [vmem:[%s8 + $0x10] sm:$0xf]
    %v3113 = vld [vmem:[%s8 + $0x14] sm:$0xf]
    %v3114 = vld [vmem:[%s8 + $0x18] sm:$0xf]
    %v3115 = vld [vmem:[%s8 + $0x1c] sm:$0xf]
    %v3116 = vld [vmem:[%s8 + $0x20] sm:$0xf]
    %v3117 = vld [vmem:[%s8 + $0x24] sm:$0xf]
    %v3118 = vld [vmem:[%s8 + $0x28] sm:$0xf]
    %v3119 = vld [vmem:[%s8 + $0x2c] sm:$0xf]
    %v3120 = vld [vmem:[%s8 + $0x30] sm:$0xf]
    %v3121 = vld [vmem:[%s8 + $0x34] sm:$0xf]
    %v3122 = vld [vmem:[%s8 + $0x38] sm:$0xf]
    %v3123 = vld [vmem:[%s8 + $0x3c] sm:$0xf]
    %v3124 = vld [vmem:[%s8 + $0x40] sm:$0xf]
    %v3125 = vld [vmem:[%s8 + $0x44] sm:$0xf]
    %v3126 = vld [vmem:[%s8 + $0x48] sm:$0xf]
    %v3127 = vld [vmem:[%s8 + $0x4c] sm:$0xf]
    %v3128 = vld [vmem:[%s8 + $0x50] sm:$0xf]
    %v3129 = vld [vmem:[%s8 + $0x54] sm:$0xf]
    %v3130 = vld [vmem:[%s8 + $0x58] sm:$0xf]
    %v3131 = vld [vmem:[%s8 + $0x5c] sm:$0xf]
    %v3132 = vld [vmem:[%s8 + $0x60] sm:$0xf]
    %v3133 = vld [vmem:[%s8 + $0x64] sm:$0xf]
    %v3134 = vld [vmem:[%s8 + $0x68] sm:$0xf]
    %v3135 = vld [vmem:[%s8 + $0x6c] sm:$0xf]
    %v3136 = vld [vmem:[%s8 + $0x70] sm:$0xf]
    %v3137 = vld [vmem:[%s8 + $0x74] sm:$0xf]
    %v3138 = vld [vmem:[%s8 + $0x78] sm:$0xf]
    %v3139 = vld [vmem:[%s8 + $0x7c] sm:$0xf]
    %v3140 = vld [vmem:[%s9] sm:$0x1]
    %v3142 = vlaneseq
    %v3143 = vshrl.u32 %v3142, 7
    %v3144 = vsub.s32 0, %v3143
    %v3145 = vrot.slane %v3140, %v3144
    %v3179 = vunpack.c.l.b16 %v3108
    %v3180 = vunpack.c.l.b16 %v3109
    %v3181 = vunpack.c.l.b16 %v3110
    %v3182 = vunpack.c.l.b16 %v3111
    %v3183 = vunpack.c.l.b16 %v3112
    %v3184 = vunpack.c.l.b16 %v3113
    %v3185 = vunpack.c.l.b16 %v3114
    %v3186 = vunpack.c.l.b16 %v3115
    %v3187 = vunpack.c.l.b16 %v3116
    %v3188 = vunpack.c.l.b16 %v3117
    %v3189 = vunpack.c.l.b16 %v3118
    %v3190 = vunpack.c.l.b16 %v3119
    %v3191 = vunpack.c.l.b16 %v3120
    %v3192 = vunpack.c.l.b16 %v3121
    %v3193 = vunpack.c.l.b16 %v3122
    %v3194 = vunpack.c.l.b16 %v3123
    %v3195 = vunpack.c.l.b16 %v3124
    %v3196 = vunpack.c.l.b16 %v3125
    %v3197 = vunpack.c.l.b16 %v3126
    %v3198 = vunpack.c.l.b16 %v3127
    %v3199 = vunpack.c.l.b16 %v3128
    %v3200 = vunpack.c.l.b16 %v3129
    %v3201 = vunpack.c.l.b16 %v3130
    %v3202 = vunpack.c.l.b16 %v3131
    %v3203 = vunpack.c.l.b16 %v3132
    %v3204 = vunpack.c.l.b16 %v3133
    %v3205 = vunpack.c.l.b16 %v3134
    %v3206 = vunpack.c.l.b16 %v3135
    %v3207 = vunpack.c.l.b16 %v3136
    %v3208 = vunpack.c.l.b16 %v3137
    %v3209 = vunpack.c.l.b16 %v3138
    %v3210 = vunpack.c.l.b16 %v3139
    %v3211 = vpack.c.b16 %v3180, %v3179
    %v3212 = vpack.c.b16 %v3182, %v3181
    %v3213 = vpack.c.b16 %v3184, %v3183
    %v3214 = vpack.c.b16 %v3186, %v3185
    %v3215 = vpack.c.b16 %v3188, %v3187
    %v3216 = vpack.c.b16 %v3190, %v3189
    %v3217 = vpack.c.b16 %v3192, %v3191
    %v3218 = vpack.c.b16 %v3194, %v3193
    %v3219 = vpack.c.b16 %v3196, %v3195
    %v3220 = vpack.c.b16 %v3198, %v3197
    %v3221 = vpack.c.b16 %v3200, %v3199
    %v3222 = vpack.c.b16 %v3202, %v3201
    %v3223 = vpack.c.b16 %v3204, %v3203
    %v3224 = vpack.c.b16 %v3206, %v3205
    %v3225 = vpack.c.b16 %v3208, %v3207
    %v3226 = vpack.c.b16 %v3210, %v3209
    %3243 = vmatprep.subr.bf16.mxu0 0
    %3244 = vmatpush1.bf16.msra.mxu0 %v3211
    %3245 = vmatprep.subr.bf16.mxu0 0
    %3246 = vmatpush1.bf16.msra.mxu0 %v3212
    %3247 = vmatprep.subr.bf16.mxu0 0
    %3248 = vmatpush1.bf16.msra.mxu0 %v3213
    %3249 = vmatprep.subr.bf16.mxu0 0
    %3250 = vmatpush1.bf16.msra.mxu0 %v3214
    %3251 = vmatprep.subr.bf16.mxu0 0
    %3252 = vmatpush1.bf16.msra.mxu0 %v3215
    %3253 = vmatprep.subr.bf16.mxu0 0
    %3254 = vmatpush1.bf16.msra.mxu0 %v3216
    %3255 = vmatprep.subr.bf16.mxu0 0
    %3256 = vmatpush1.bf16.msra.mxu0 %v3217
    %3257 = vmatprep.subr.bf16.mxu0 0
    %3258 = vmatpush1.bf16.msra.mxu0 %v3218
    %3259 = vmatprep.subr.bf16.mxu0 0
    %3260 = vmatpush1.bf16.msra.mxu0 %v3219
    %3261 = vmatprep.subr.bf16.mxu0 0
    %3262 = vmatpush1.bf16.msra.mxu0 %v3220
    %3263 = vmatprep.subr.bf16.mxu0 0
    %3264 = vmatpush1.bf16.msra.mxu0 %v3221
    %3265 = vmatprep.subr.bf16.mxu0 0
    %3266 = vmatpush1.bf16.msra.mxu0 %v3222
    %3267 = vmatprep.subr.bf16.mxu0 0
    %3268 = vmatpush1.bf16.msra.mxu0 %v3223
    %3269 = vmatprep.subr.bf16.mxu0 0
    %3270 = vmatpush1.bf16.msra.mxu0 %v3224
    %3271 = vmatprep.subr.bf16.mxu0 0
    %3272 = vmatpush1.bf16.msra.mxu0 %v3225
    %3273 = vmatprep.subr.bf16.mxu0 0
    %3274 = vmatpush1.bf16.msra.mxu0 %v3226
    %3275 = vmatprep.mubr.bf16.mxu0 %v3093
    %3276 = vmatmul.mubr.bf16.gmra.mrb[0].mxu0 %v3092
    %v3277 = vpop.f32.mrb[0].mxu0
    %v3278 = vadd.f32 %v3145, %v3277
    %v3279 = vpop.f32.mrb[0].mxu0
    %v3280 = vpop.f32.mrb[0].mxu0
    %v3281 = vadd.f32 %v3145, %v3280
    %v3282 = vpop.f32.mrb[0].mxu0
    %3283 = vmatprep.mubr.bf16.mxu0 %v3095
    %3284 = vmatmul.mubr.bf16.gmra.mrb[0].mxu0 %v3094
    %v3285 = vpop.f32.mrb[0].mxu0
    %v3286 = vadd.f32 %v3145, %v3285
    %v3287 = vpop.f32.mrb[0].mxu0
    %v3288 = vpop.f32.mrb[0].mxu0
    %v3289 = vadd.f32 %v3145, %v3288
    %v3290 = vpop.f32.mrb[0].mxu0
    %3291 = vmatprep.mubr.bf16.mxu0 %v3097
    %3292 = vmatmul.mubr.bf16.gmra.mrb[0].mxu0 %v3096
    %v3293 = vpop.f32.mrb[0].mxu0
    %v3294 = vadd.f32 %v3145, %v3293
    %v3295 = vpop.f32.mrb[0].mxu0
    %v3296 = vpop.f32.mrb[0].mxu0
    %v3297 = vadd.f32 %v3145, %v3296
    %v3298 = vpop.f32.mrb[0].mxu0
    %3299 = vmatprep.mubr.bf16.mxu0 %v3099
    %3300 = vmatmul.mubr.bf16.gmra.mrb[0].mxu0 %v3098
    %v3301 = vpop.f32.mrb[0].mxu0
    %v3302 = vadd.f32 %v3145, %v3301
    %v3303 = vpop.f32.mrb[0].mxu0
    %v3304 = vpop.f32.mrb[0].mxu0
    %v3305 = vadd.f32 %v3145, %v3304
    %v3306 = vpop.f32.mrb[0].mxu0
    %3307 = vmatprep.mubr.bf16.mxu0 %v3101
    %3308 = vmatmul.mubr.bf16.gmra.mrb[0].mxu0 %v3100
    %v3309 = vpop.f32.mrb[0].mxu0
    %v3310 = vadd.f32 %v3145, %v3309
    %v3311 = vpop.f32.mrb[0].mxu0
    %v3312 = vpop.f32.mrb[0].mxu0
    %v3313 = vadd.f32 %v3145, %v3312
    %v3314 = vpop.f32.mrb[0].mxu0
    %3315 = vmatprep.mubr.bf16.mxu0 %v3103
    %3316 = vmatmul.mubr.bf16.gmra.mrb[0].mxu0 %v3102
    %v3317 = vpop.f32.mrb[0].mxu0
    %v3318 = vadd.f32 %v3145, %v3317
    %v3319 = vpop.f32.mrb[0].mxu0
    %v3320 = vpop.f32.mrb[0].mxu0
    %v3321 = vadd.f32 %v3145, %v3320
    %v3322 = vpop.f32.mrb[0].mxu0
    %3323 = vmatprep.mubr.bf16.mxu0 %v3105
    %3324 = vmatmul.mubr.bf16.gmra.mrb[0].mxu0 %v3104
    %v3325 = vpop.f32.mrb[0].mxu0
    %v3326 = vadd.f32 %v3145, %v3325
    %v3327 = vpop.f32.mrb[0].mxu0
    %v3328 = vpop.f32.mrb[0].mxu0
    %v3329 = vadd.f32 %v3145, %v3328
    %v3330 = vpop.f32.mrb[0].mxu0
    %3331 = vmatprep.mubr.bf16.mxu0 %v3107
    %3332 = vmatmul.mubr.bf16.gmra.mrb[0].mxu0 %v3106
    %v3333 = vpop.f32.mrb[0].mxu0
    %v3334 = vadd.f32 %v3145, %v3333
    %v3335 = vpop.f32.mrb[0].mxu0
    %v3336 = vpop.f32.mrb[0].mxu0
    %v3337 = vadd.f32 %v3145, %v3336
    %v3338 = vpop.f32.mrb[0].mxu0
    %3339 = vdwg.mxu0
    %v3340 = vld [vmem:[%s10] sm:$0xf]
    %v3341 = vld [vmem:[%s10 + $0x4] sm:$0xf]
    %v3342 = vld [vmem:[%s10 + $0x8] sm:$0xf]
    %v3343 = vld [vmem:[%s10 + $0xc] sm:$0xf]
    %v3344 = vld [vmem:[%s10 + $0x10] sm:$0xf]
    %v3345 = vld [vmem:[%s10 + $0x14] sm:$0xf]
    %v3346 = vld [vmem:[%s10 + $0x18] sm:$0xf]
    %v3347 = vld [vmem:[%s10 + $0x1c] sm:$0xf]
    %v3348 = vld [vmem:[%s10 + $0x20] sm:$0xf]
    %v3349 = vld [vmem:[%s10 + $0x24] sm:$0xf]
    %v3350 = vld [vmem:[%s10 + $0x28] sm:$0xf]
    %v3351 = vld [vmem:[%s10 + $0x2c] sm:$0xf]
    %v3352 = vld [vmem:[%s10 + $0x30] sm:$0xf]
    %v3353 = vld [vmem:[%s10 + $0x34] sm:$0xf]
    %v3354 = vld [vmem:[%s10 + $0x38] sm:$0xf]
    %v3355 = vld [vmem:[%s10 + $0x3c] sm:$0xf]
    %v3356 = vld [vmem:[%s10 + $0x40] sm:$0xf]
    %v3357 = vld [vmem:[%s10 + $0x44] sm:$0xf]
    %v3358 = vld [vmem:[%s10 + $0x48] sm:$0xf]
    %v3359 = vld [vmem:[%s10 + $0x4c] sm:$0xf]
    %v3360 = vld [vmem:[%s10 + $0x50] sm:$0xf]
    %v3361 = vld [vmem:[%s10 + $0x54] sm:$0xf]
    %v3362 = vld [vmem:[%s10 + $0x58] sm:$0xf]
    %v3363 = vld [vmem:[%s10 + $0x5c] sm:$0xf]
    %v3364 = vld [vmem:[%s10 + $0x60] sm:$0xf]
    %v3365 = vld [vmem:[%s10 + $0x64] sm:$0xf]
    %v3366 = vld [vmem:[%s10 + $0x68] sm:$0xf]
    %v3367 = vld [vmem:[%s10 + $0x6c] sm:$0xf]
    %v3368 = vld [vmem:[%s10 + $0x70] sm:$0xf]
    %v3369 = vld [vmem:[%s10 + $0x74] sm:$0xf]
    %v3370 = vld [vmem:[%s10 + $0x78] sm:$0xf]
    %v3371 = vld [vmem:[%s10 + $0x7c] sm:$0xf]
    %v3372 = vld [vmem:[%s11] sm:$0x1]
    %v3374 = vlaneseq
    %v3375 = vshrl.u32 %v3374, 7
    %v3376 = vsub.s32 0, %v3375
    %v3377 = vrot.slane %v3372, %v3376
    %v3411 = vunpack.c.l.b16 %v3340
    %v3412 = vunpack.c.l.b16 %v3341
    %v3413 = vunpack.c.l.b16 %v3342
    %v3414 = vunpack.c.l.b16 %v3343
    %v3415 = vunpack.c.l.b16 %v3344
    %v3416 = vunpack.c.l.b16 %v3345
    %v3417 = vunpack.c.l.b16 %v3346
    %v3418 = vunpack.c.l.b16 %v3347
    %v3419 = vunpack.c.l.b16 %v3348
    %v3420 = vunpack.c.l.b16 %v3349
    %v3421 = vunpack.c.l.b16 %v3350
    %v3422 = vunpack.c.l.b16 %v3351
    %v3423 = vunpack.c.l.b16 %v3352
    %v3424 = vunpack.c.l.b16 %v3353
    %v3425 = vunpack.c.l.b16 %v3354
    %v3426 = vunpack.c.l.b16 %v3355
    %v3427 = vunpack.c.l.b16 %v3356
    %v3428 = vunpack.c.l.b16 %v3357
    %v3429 = vunpack.c.l.b16 %v3358
    %v3430 = vunpack.c.l.b16 %v3359
    %v3431 = vunpack.c.l.b16 %v3360
    %v3432 = vunpack.c.l.b16 %v3361
    %v3433 = vunpack.c.l.b16 %v3362
    %v3434 = vunpack.c.l.b16 %v3363
    %v3435 = vunpack.c.l.b16 %v3364
    %v3436 = vunpack.c.l.b16 %v3365
    %v3437 = vunpack.c.l.b16 %v3366
    %v3438 = vunpack.c.l.b16 %v3367
    %v3439 = vunpack.c.l.b16 %v3368
    %v3440 = vunpack.c.l.b16 %v3369
    %v3441 = vunpack.c.l.b16 %v3370
    %v3442 = vunpack.c.l.b16 %v3371
    %v3443 = vpack.c.b16 %v3412, %v3411
    %v3444 = vpack.c.b16 %v3414, %v3413
    %v3445 = vpack.c.b16 %v3416, %v3415
    %v3446 = vpack.c.b16 %v3418, %v3417
    %v3447 = vpack.c.b16 %v3420, %v3419
    %v3448 = vpack.c.b16 %v3422, %v3421
    %v3449 = vpack.c.b16 %v3424, %v3423
    %v3450 = vpack.c.b16 %v3426, %v3425
    %v3451 = vpack.c.b16 %v3428, %v3427
    %v3452 = vpack.c.b16 %v3430, %v3429
    %v3453 = vpack.c.b16 %v3432, %v3431
    %v3454 = vpack.c.b16 %v3434, %v3433
    %v3455 = vpack.c.b16 %v3436, %v3435
    %v3456 = vpack.c.b16 %v3438, %v3437
    %v3457 = vpack.c.b16 %v3440, %v3439
    %v3458 = vpack.c.b16 %v3442, %v3441
    %3475 = vmatprep.subr.bf16.mxu0 0
    %3476 = vmatpush1.bf16.msra.mxu0 %v3443
    %3477 = vmatprep.subr.bf16.mxu0 0
    %3478 = vmatpush1.bf16.msra.mxu0 %v3444
    %3479 = vmatprep.subr.bf16.mxu0 0
    %3480 = vmatpush1.bf16.msra.mxu0 %v3445
    %3481 = vmatprep.subr.bf16.mxu0 0
    %3482 = vmatpush1.bf16.msra.mxu0 %v3446
    %3483 = vmatprep.subr.bf16.mxu0 0
    %3484 = vmatpush1.bf16.msra.mxu0 %v3447
    %3485 = vmatprep.subr.bf16.mxu0 0
    %3486 = vmatpush1.bf16.msra.mxu0 %v3448
    %3487 = vmatprep.subr.bf16.mxu0 0
    %3488 = vmatpush1.bf16.msra.mxu0 %v3449
    %3489 = vmatprep.subr.bf16.mxu0 0
    %3490 = vmatpush1.bf16.msra.mxu0 %v3450
    %3491 = vmatprep.subr.bf16.mxu0 0
    %3492 = vmatpush1.bf16.msra.mxu0 %v3451
    %3493 = vmatprep.subr.bf16.mxu0 0
    %3494 = vmatpush1.bf16.msra.mxu0 %v3452
    %3495 = vmatprep.subr.bf16.mxu0 0
    %3496 = vmatpush1.bf16.msra.mxu0 %v3453
    %3497 = vmatprep.subr.bf16.mxu0 0
    %3498 = vmatpush1.bf16.msra.mxu0 %v3454
    %3499 = vmatprep.subr.bf16.mxu0 0
    %3500 = vmatpush1.bf16.msra.mxu0 %v3455
    %3501 = vmatprep.subr.bf16.mxu0 0
    %3502 = vmatpush1.bf16.msra.mxu0 %v3456
    %3503 = vmatprep.subr.bf16.mxu0 0
    %3504 = vmatpush1.bf16.msra.mxu0 %v3457
    %3505 = vmatprep.subr.bf16.mxu0 0
    %3506 = vmatpush1.bf16.msra.mxu0 %v3458
    %3507 = vmatprep.mubr.bf16.mxu0 %v3093
    %3508 = vmatmul.mubr.bf16.gmra.mrb[0].mxu0 %v3092
    %v3509 = vpop.f32.mrb[0].mxu0
    %v3510 = vadd.f32 %v3377, %v3509
    %v3511 = vpop.f32.mrb[0].mxu0
    %v3512 = vpop.f32.mrb[0].mxu0
    %v3513 = vadd.f32 %v3377, %v3512
    %v3514 = vpop.f32.mrb[0].mxu0
    %3515 = vmatprep.mubr.bf16.mxu0 %v3095
    %3516 = vmatmul.mubr.bf16.gmra.mrb[0].mxu0 %v3094
    %v3517 = vpop.f32.mrb[0].mxu0
    %v3518 = vadd.f32 %v3377, %v3517
    %v3519 = vpop.f32.mrb[0].mxu0
    %v3520 = vpop.f32.mrb[0].mxu0
    %v3521 = vadd.f32 %v3377, %v3520
    %v3522 = vpop.f32.mrb[0].mxu0
    %3523 = vmatprep.mubr.bf16.mxu0 %v3097
    %3524 = vmatmul.mubr.bf16.gmra.mrb[0].mxu0 %v3096
    %v3525 = vpop.f32.mrb[0].mxu0
    %v3526 = vadd.f32 %v3377, %v3525
    %v3527 = vpop.f32.mrb[0].mxu0
    %v3528 = vpop.f32.mrb[0].mxu0
    %v3529 = vadd.f32 %v3377, %v3528
    %v3530 = vpop.f32.mrb[0].mxu0
    %3531 = vmatprep.mubr.bf16.mxu0 %v3099
    %3532 = vmatmul.mubr.bf16.gmra.mrb[0].mxu0 %v3098
    %v3533 = vpop.f32.mrb[0].mxu0
    %v3534 = vadd.f32 %v3377, %v3533
    %v3535 = vpop.f32.mrb[0].mxu0
    %v3536 = vpop.f32.mrb[0].mxu0
    %v3537 = vadd.f32 %v3377, %v3536
    %v3538 = vpop.f32.mrb[0].mxu0
    %3539 = vmatprep.mubr.bf16.mxu0 %v3101
    %3540 = vmatmul.mubr.bf16.gmra.mrb[0].mxu0 %v3100
    %v3541 = vpop.f32.mrb[0].mxu0
    %v3542 = vadd.f32 %v3377, %v3541
    %v3543 = vpop.f32.mrb[0].mxu0
    %v3544 = vpop.f32.mrb[0].mxu0
    %v3545 = vadd.f32 %v3377, %v3544
    %v3546 = vpop.f32.mrb[0].mxu0
    %3547 = vmatprep.mubr.bf16.mxu0 %v3103
    %3548 = vmatmul.mubr.bf16.gmra.mrb[0].mxu0 %v3102
    %v3549 = vpop.f32.mrb[0].mxu0
    %v3550 = vadd.f32 %v3377, %v3549
    %v3551 = vpop.f32.mrb[0].mxu0
    %v3552 = vpop.f32.mrb[0].mxu0
    %v3553 = vadd.f32 %v3377, %v3552
    %v3554 = vpop.f32.mrb[0].mxu0
    %3555 = vmatprep.mubr.bf16.mxu0 %v3105
    %3556 = vmatmul.mubr.bf16.gmra.mrb[0].mxu0 %v3104
    %v3557 = vpop.f32.mrb[0].mxu0
    %v3558 = vadd.f32 %v3377, %v3557
    %v3559 = vpop.f32.mrb[0].mxu0
    %v3560 = vpop.f32.mrb[0].mxu0
    %v3561 = vadd.f32 %v3377, %v3560
    %v3562 = vpop.f32.mrb[0].mxu0
    %3563 = vmatprep.mubr.bf16.mxu0 %v3107
    %3564 = vmatmul.mubr.bf16.gmra.mrb[0].mxu0 %v3106
    %v3565 = vpop.f32.mrb[0].mxu0
    %v3566 = vadd.f32 %v3377, %v3565
    %v3567 = vpop.f32.mrb[0].mxu0
    %v3568 = vpop.f32.mrb[0].mxu0
    %v3569 = vadd.f32 %v3377, %v3568
    %v3570 = vpop.f32.mrb[0].mxu0
    %3571 = vdwg.mxu0
    %v3572 = vmul.f32 %v3510, 0.5
    %v3573 = vmul.f32 %v3513, 0.5
    %v3574 = vmul.f32 %v3518, 0.5
    %v3575 = vmul.f32 %v3521, 0.5
    %v3576 = vmul.f32 %v3526, 0.5
    %v3577 = vmul.f32 %v3529, 0.5
    %v3578 = vmul.f32 %v3534, 0.5
    %v3579 = vmul.f32 %v3537, 0.5
    %v3580 = vmul.f32 %v3542, 0.5
    %v3581 = vmul.f32 %v3545, 0.5
    %v3582 = vmul.f32 %v3550, 0.5
    %v3583 = vmul.f32 %v3553, 0.5
    %v3584 = vmul.f32 %v3558, 0.5
    %v3585 = vmul.f32 %v3561, 0.5
    %v3586 = vmul.f32 %v3566, 0.5
    %v3587 = vmul.f32 %v3569, 0.5
    %v3588 = vmul.f32 %v3572, 1.442695
    %v3589 = vpow.pop %v3588
    %v3590 = vmul.f32 %v3573, 1.442695
    %v3591 = vpow.pop %v3590
    %v3592 = vmul.f32 %v3574, 1.442695
    %v3593 = vpow.pop %v3592
    %v3594 = vmul.f32 %v3575, 1.442695
    %v3595 = vpow.pop %v3594
    %v3596 = vmul.f32 %v3576, 1.442695
    %v3597 = vpow.pop %v3596
    %v3598 = vmul.f32 %v3577, 1.442695
    %v3599 = vpow.pop %v3598
    %v3600 = vmul.f32 %v3578, 1.442695
    %v3601 = vpow.pop %v3600
    %v3602 = vmul.f32 %v3579, 1.442695
    %v3603 = vpow.pop %v3602
    %v3604 = vmul.f32 %v3580, 1.442695
    %v3605 = vpow.pop %v3604
    %v3606 = vmul.f32 %v3581, 1.442695
    %v3607 = vpow.pop %v3606
    %v3608 = vmul.f32 %v3582, 1.442695
    %v3609 = vpow.pop %v3608
    %v3610 = vmul.f32 %v3583, 1.442695
    %v3611 = vpow.pop %v3610
    %v3612 = vmul.f32 %v3584, 1.442695
    %v3613 = vpow.pop %v3612
    %v3614 = vmul.f32 %v3585, 1.442695
    %v3615 = vpow.pop %v3614
    %v3616 = vmul.f32 %v3586, 1.442695
    %v3617 = vpow.pop %v3616
    %v3618 = vmul.f32 %v3587, 1.442695
    %v3619 = vpow.pop %v3618
    %v3620 = vld [vmem:[%s1] sm:$0xff]
    %v3621 = vld [vmem:[%s1 + $0x8] sm:$0xff]
    %v3622 = vld [vmem:[%s1 + $0x10] sm:$0xff]
    %v3623 = vld [vmem:[%s1 + $0x18] sm:$0xff]
    %v3624 = vld [vmem:[%s1 + $0x20] sm:$0xff]
    %v3625 = vld [vmem:[%s1 + $0x28] sm:$0xff]
    %v3626 = vld [vmem:[%s1 + $0x30] sm:$0xff]
    %v3627 = vld [vmem:[%s1 + $0x38] sm:$0xff]
    %v3628 = vld [vmem:[%s1 + $0x40] sm:$0xff]
    %v3629 = vld [vmem:[%s1 + $0x48] sm:$0xff]
    %v3630 = vld [vmem:[%s1 + $0x50] sm:$0xff]
    %v3631 = vld [vmem:[%s1 + $0x58] sm:$0xff]
    %v3632 = vld [vmem:[%s1 + $0x60] sm:$0xff]
    %v3633 = vld [vmem:[%s1 + $0x68] sm:$0xff]
    %v3634 = vld [vmem:[%s1 + $0x70] sm:$0xff]
    %v3635 = vld [vmem:[%s1 + $0x78] sm:$0xff]
    %v3636 = vmul.f32 %v3620, %v3589
    %v3637 = vmul.f32 %v3621, %v3591
    %v3638 = vmul.f32 %v3622, %v3593
    %v3639 = vmul.f32 %v3623, %v3595
    %v3640 = vmul.f32 %v3624, %v3597
    %v3641 = vmul.f32 %v3625, %v3599
    %v3642 = vmul.f32 %v3626, %v3601
    %v3643 = vmul.f32 %v3627, %v3603
    %v3644 = vmul.f32 %v3628, %v3605
    %v3645 = vmul.f32 %v3629, %v3607
    %v3646 = vmul.f32 %v3630, %v3609
    %v3647 = vmul.f32 %v3631, %v3611
    %v3648 = vmul.f32 %v3632, %v3613
    %v3649 = vmul.f32 %v3633, %v3615
    %v3650 = vmul.f32 %v3634, %v3617
    %v3651 = vmul.f32 %v3635, %v3619
    %v3652 = vadd.f32 %v3278, %v3636
    %v3653 = vadd.f32 %v3281, %v3637
    %v3654 = vadd.f32 %v3286, %v3638
    %v3655 = vadd.f32 %v3289, %v3639
    %v3656 = vadd.f32 %v3294, %v3640
    %v3657 = vadd.f32 %v3297, %v3641
    %v3658 = vadd.f32 %v3302, %v3642
    %v3659 = vadd.f32 %v3305, %v3643
    %v3660 = vadd.f32 %v3310, %v3644
    %v3661 = vadd.f32 %v3313, %v3645
    %v3662 = vadd.f32 %v3318, %v3646
    %v3663 = vadd.f32 %v3321, %v3647
    %v3664 = vadd.f32 %v3326, %v3648
    %v3665 = vadd.f32 %v3329, %v3649
    %v3666 = vadd.f32 %v3334, %v3650
    %v3667 = vadd.f32 %v3337, %v3651
    %v3668 = vpack.c.bf16 %v3653, %v3652
    %v3669 = vpack.c.bf16 %v3655, %v3654
    %v3670 = vpack.c.bf16 %v3657, %v3656
    %v3671 = vpack.c.bf16 %v3659, %v3658
    %v3672 = vpack.c.bf16 %v3661, %v3660
    %v3673 = vpack.c.bf16 %v3663, %v3662
    %v3674 = vpack.c.bf16 %v3665, %v3664
    %v3675 = vpack.c.bf16 %v3667, %v3666
    %v3676 = vld [vmem:[%s12] sm:$0xff]
    %v3677 = vld [vmem:[%s13] sm:$0x3]
    %v3678 = vld [vmem:[%s16] ss:$8 sm:$0x3]
    %v3679 = vld [vmem:[%s17] ss:$8 sm:$0x3]
    %v3681 = vlaneseq
    %v3682 = vshrl.u32 %v3681, 7
    %v3683 = vsub.s32 0, %v3682
    %v3684 = vrot.slane %v3677, %v3683
    %v3685 = vlaneseq
    %v3686 = vshrl.u32 %v3685, 7
    %v3687 = vsub.s32 1, %v3686
    %v3688 = vrot.slane %v3677, %v3687
    %v3692 = vunpack.c.l.b16 %v3676
    %v3693 = vunpack.c.h.b16 %v3676
    %v3694 = vpack.c.b16 %v3692, %v3692
    %v3695 = vpack.c.b16 %v3693, %v3693
    %vm3696 = vcmask 64512
    %v3698 = vsel %vm3696, %v3668, 0
    %v3701 = vsel %vm3696, %v3669, 0
    %v3704 = vsel %vm3696, %v3670, 0
    %v3707 = vsel %vm3696, %v3671, 0
    %v3710 = vsel %vm3696, %v3672, 0
    %v3713 = vsel %vm3696, %v3673, 0
    %v3716 = vsel %vm3696, %v3674, 0
    %v3719 = vsel %vm3696, %v3675, 0
    %vm3721 = vcmask 1043456
    %v3723 = vsel %vm3721, %v3694, 0
    %v3726 = vsel %vm3721, %v3695, 0
    %3728 = vmatprep.subr.bf16.mxu0 %v3726
    %3729 = vmatpush1.bf16.msra.mxu0 %v3723
    %3730 = vmatprep.subr.bf16.mxu0 0
    %3731 = vmatpush1.bf16.msra.mxu0 0
    %3732 = vmatprep.subr.bf16.mxu0 0
    %3733 = vmatpush1.bf16.msra.mxu0 0
    %3734 = vmatprep.subr.bf16.mxu0 0
    %3735 = vmatpush1.bf16.msra.mxu0 0
    %3736 = vmatprep.subr.bf16.mxu0 0
    %3737 = vmatpush1.bf16.msra.mxu0 0
    %3738 = vmatprep.subr.bf16.mxu0 0
    %3739 = vmatpush1.bf16.msra.mxu0 0
    %3740 = vmatprep.subr.bf16.mxu0 0
    %3741 = vmatpush1.bf16.msra.mxu0 0
    %3742 = vmatprep.subr.bf16.mxu0 0
    %3743 = vmatpush1.bf16.msra.mxu0 0
    %3744 = vmatprep.subr.bf16.mxu0 0
    %3745 = vmatpush1.bf16.msra.mxu0 0
    %3746 = vmatprep.subr.bf16.mxu0 0
    %3747 = vmatpush1.bf16.msra.mxu0 0
    %3748 = vmatprep.subr.bf16.mxu0 0
    %3749 = vmatpush1.bf16.msra.mxu0 0
    %3750 = vmatprep.subr.bf16.mxu0 0
    %3751 = vmatpush1.bf16.msra.mxu0 0
    %3752 = vmatprep.subr.bf16.mxu0 0
    %3753 = vmatpush1.bf16.msra.mxu0 0
    %3754 = vmatprep.subr.bf16.mxu0 0
    %3755 = vmatpush1.bf16.msra.mxu0 0
    %3756 = vmatprep.subr.bf16.mxu0 0
    %3757 = vmatpush1.bf16.msra.mxu0 0
    %3758 = vmatprep.subr.bf16.mxu0 0
    %3759 = vmatpush1.bf16.msra.mxu0 0
    %3760 = vmatprep.mubr.bf16.mxu0 0
    %3761 = vmatmul.mubr.bf16.gmra.mrb[0].mxu0 %v3698
    %v3762 = vpop.f32.mrb[0].mxu0
    %v3763 = vadd.f32 %v3684, %v3762
    %v3764 = vpop.f32.mrb[0].mxu0
    %v3765 = vadd.f32 %v3688, %v3764
    %v3766 = vpop.f32.mrb[0].mxu0
    %v3767 = vadd.f32 %v3684, %v3766
    %v3768 = vpop.f32.mrb[0].mxu0
    %v3769 = vadd.f32 %v3688, %v3768
    %3770 = vmatprep.mubr.bf16.mxu0 0
    %3771 = vmatmul.mubr.bf16.gmra.mrb[0].mxu0 %v3701
    %v3772 = vpop.f32.mrb[0].mxu0
    %v3773 = vadd.f32 %v3684, %v3772
    %v3774 = vpop.f32.mrb[0].mxu0
    %v3775 = vadd.f32 %v3688, %v3774
    %v3776 = vpop.f32.mrb[0].mxu0
    %v3777 = vadd.f32 %v3684, %v3776
    %v3778 = vpop.f32.mrb[0].mxu0
    %v3779 = vadd.f32 %v3688, %v3778
    %3780 = vmatprep.mubr.bf16.mxu0 0
    %3781 = vmatmul.mubr.bf16.gmra.mrb[0].mxu0 %v3704
    %v3782 = vpop.f32.mrb[0].mxu0
    %v3783 = vadd.f32 %v3684, %v3782
    %v3784 = vpop.f32.mrb[0].mxu0
    %v3785 = vadd.f32 %v3688, %v3784
    %v3786 = vpop.f32.mrb[0].mxu0
    %v3787 = vadd.f32 %v3684, %v3786
    %v3788 = vpop.f32.mrb[0].mxu0
    %v3789 = vadd.f32 %v3688, %v3788
    %3790 = vmatprep.mubr.bf16.mxu0 0
    %3791 = vmatmul.mubr.bf16.gmra.mrb[0].mxu0 %v3707
    %v3792 = vpop.f32.mrb[0].mxu0
    %v3793 = vadd.f32 %v3684, %v3792
    %v3794 = vpop.f32.mrb[0].mxu0
    %v3795 = vadd.f32 %v3688, %v3794
    %v3796 = vpop.f32.mrb[0].mxu0
    %v3797 = vadd.f32 %v3684, %v3796
    %v3798 = vpop.f32.mrb[0].mxu0
    %v3799 = vadd.f32 %v3688, %v3798
    %3800 = vmatprep.mubr.bf16.mxu0 0
    %3801 = vmatmul.mubr.bf16.gmra.mrb[0].mxu0 %v3710
    %v3802 = vpop.f32.mrb[0].mxu0
    %v3803 = vadd.f32 %v3684, %v3802
    %v3804 = vpop.f32.mrb[0].mxu0
    %v3805 = vadd.f32 %v3688, %v3804
    %v3806 = vpop.f32.mrb[0].mxu0
    %v3807 = vadd.f32 %v3684, %v3806
    %v3808 = vpop.f32.mrb[0].mxu0
    %v3809 = vadd.f32 %v3688, %v3808
    %3810 = vmatprep.mubr.bf16.mxu0 0
    %3811 = vmatmul.mubr.bf16.gmra.mrb[0].mxu0 %v3713
    %v3812 = vpop.f32.mrb[0].mxu0
    %v3813 = vadd.f32 %v3684, %v3812
    %v3814 = vpop.f32.mrb[0].mxu0
    %v3815 = vadd.f32 %v3688, %v3814
    %v3816 = vpop.f32.mrb[0].mxu0
    %v3817 = vadd.f32 %v3684, %v3816
    %v3818 = vpop.f32.mrb[0].mxu0
    %v3819 = vadd.f32 %v3688, %v3818
    %3820 = vmatprep.mubr.bf16.mxu0 0
    %3821 = vmatmul.mubr.bf16.gmra.mrb[0].mxu0 %v3716
    %v3822 = vpop.f32.mrb[0].mxu0
    %v3823 = vadd.f32 %v3684, %v3822
    %v3824 = vpop.f32.mrb[0].mxu0
    %v3825 = vadd.f32 %v3688, %v3824
    %v3826 = vpop.f32.mrb[0].mxu0
    %v3827 = vadd.f32 %v3684, %v3826
    %v3828 = vpop.f32.mrb[0].mxu0
    %v3829 = vadd.f32 %v3688, %v3828
    %3830 = vmatprep.mubr.bf16.mxu0 0
    %3831 = vmatmul.mubr.bf16.gmra.mrb[0].mxu0 %v3719
    %v3832 = vpop.f32.mrb[0].mxu0
    %v3833 = vadd.f32 %v3684, %v3832
    %v3834 = vpop.f32.mrb[0].mxu0
    %v3835 = vadd.f32 %v3688, %v3834
    %v3836 = vpop.f32.mrb[0].mxu0
    %v3837 = vadd.f32 %v3684, %v3836
    %v3838 = vpop.f32.mrb[0].mxu0
    %v3839 = vadd.f32 %v3688, %v3838
    %3840 = vdwg.mxu0
    %v3841 = vmax.f32 %v3763, 0.0
    %v3842 = vmax.f32 %v3765, 0.0
    %v3843 = vmax.f32 %v3767, 0.0
    %v3844 = vmax.f32 %v3769, 0.0
    %v3845 = vmax.f32 %v3773, 0.0
    %v3846 = vmax.f32 %v3775, 0.0
    %v3847 = vmax.f32 %v3777, 0.0
    %v3848 = vmax.f32 %v3779, 0.0
    %v3849 = vmax.f32 %v3783, 0.0
    %v3850 = vmax.f32 %v3785, 0.0
    %v3851 = vmax.f32 %v3787, 0.0
    %v3852 = vmax.f32 %v3789, 0.0
    %v3853 = vmax.f32 %v3793, 0.0
    %v3854 = vmax.f32 %v3795, 0.0
    %v3855 = vmax.f32 %v3797, 0.0
    %v3856 = vmax.f32 %v3799, 0.0
    %v3857 = vmax.f32 %v3803, 0.0
    %v3858 = vmax.f32 %v3805, 0.0
    %v3859 = vmax.f32 %v3807, 0.0
    %v3860 = vmax.f32 %v3809, 0.0
    %v3861 = vmax.f32 %v3813, 0.0
    %v3862 = vmax.f32 %v3815, 0.0
    %v3863 = vmax.f32 %v3817, 0.0
    %v3864 = vmax.f32 %v3819, 0.0
    %v3865 = vmax.f32 %v3823, 0.0
    %v3866 = vmax.f32 %v3825, 0.0
    %v3867 = vmax.f32 %v3827, 0.0
    %v3868 = vmax.f32 %v3829, 0.0
    %v3869 = vmax.f32 %v3833, 0.0
    %v3870 = vmax.f32 %v3835, 0.0
    %v3871 = vmax.f32 %v3837, 0.0
    %v3872 = vmax.f32 %v3839, 0.0
    %v3873 = vadd.f32 %v3841, %v3843
    %v3874 = vadd.f32 %v3873, %v3845
    %v3875 = vadd.f32 %v3874, %v3847
    %v3876 = vadd.f32 %v3875, %v3849
    %v3877 = vadd.f32 %v3876, %v3851
    %v3878 = vadd.f32 %v3877, %v3853
    %v3879 = vadd.f32 %v3878, %v3855
    %v3880 = vadd.f32 %v3879, %v3857
    %v3881 = vadd.f32 %v3880, %v3859
    %v3882 = vadd.f32 %v3881, %v3861
    %v3883 = vadd.f32 %v3882, %v3863
    %v3884 = vadd.f32 %v3883, %v3865
    %v3885 = vadd.f32 %v3884, %v3867
    %v3886 = vadd.f32 %v3885, %v3869
    %v3887 = vadd.f32 %v3886, %v3871
    %v3888 = vrot.slane %v3887, 4
    %v3889 = vadd.f32 %v3887, %v3888
    %v3890 = vrot.slane %v3889, 2
    %v3891 = vadd.f32 %v3889, %v3890
    %v3892 = vrot.slane %v3891, 1
    %v3893 = vadd.f32 %v3891, %v3892
    %v3894 = vadd.f32 %v3842, %v3844
    %v3895 = vadd.f32 %v3894, %v3846
    %v3896 = vadd.f32 %v3895, %v3848
    %v3897 = vadd.f32 %v3896, %v3850
    %v3898 = vadd.f32 %v3897, %v3852
    %v3899 = vadd.f32 %v3898, %v3854
    %v3900 = vadd.f32 %v3899, %v3856
    %v3901 = vadd.f32 %v3900, %v3858
    %v3902 = vadd.f32 %v3901, %v3860
    %v3903 = vadd.f32 %v3902, %v3862
    %v3904 = vadd.f32 %v3903, %v3864
    %v3905 = vadd.f32 %v3904, %v3866
    %v3906 = vadd.f32 %v3905, %v3868
    %v3907 = vadd.f32 %v3906, %v3870
    %v3908 = vadd.f32 %v3907, %v3872
    %v3909 = vrot.slane %v3908, 4
    %v3910 = vadd.f32 %v3908, %v3909
    %v3911 = vrot.slane %v3910, 2
    %v3912 = vadd.f32 %v3910, %v3911
    %v3913 = vrot.slane %v3912, 1
    %v3914 = vadd.f32 %v3912, %v3913
    %v3915 = vmul.f32 %v3893, %v371
    %v3916 = vmul.f32 %v3914, %v371
    %v3917 = vmul.f32 %v3841, %v3841
    %v3918 = vmul.f32 %v3842, %v3842
    %v3919 = vmul.f32 %v3843, %v3843
    %v3920 = vmul.f32 %v3844, %v3844
    %v3921 = vmul.f32 %v3845, %v3845
    %v3922 = vmul.f32 %v3846, %v3846
    %v3923 = vmul.f32 %v3847, %v3847
    %v3924 = vmul.f32 %v3848, %v3848
    %v3925 = vmul.f32 %v3849, %v3849
    %v3926 = vmul.f32 %v3850, %v3850
    %v3927 = vmul.f32 %v3851, %v3851
    %v3928 = vmul.f32 %v3852, %v3852
    %v3929 = vmul.f32 %v3853, %v3853
    %v3930 = vmul.f32 %v3854, %v3854
    %v3931 = vmul.f32 %v3855, %v3855
    %v3932 = vmul.f32 %v3856, %v3856
    %v3933 = vmul.f32 %v3857, %v3857
    %v3934 = vmul.f32 %v3858, %v3858
    %v3935 = vmul.f32 %v3859, %v3859
    %v3936 = vmul.f32 %v3860, %v3860
    %v3937 = vmul.f32 %v3861, %v3861
    %v3938 = vmul.f32 %v3862, %v3862
    %v3939 = vmul.f32 %v3863, %v3863
    %v3940 = vmul.f32 %v3864, %v3864
    %v3941 = vmul.f32 %v3865, %v3865
    %v3942 = vmul.f32 %v3866, %v3866
    %v3943 = vmul.f32 %v3867, %v3867
    %v3944 = vmul.f32 %v3868, %v3868
    %v3945 = vmul.f32 %v3869, %v3869
    %v3946 = vmul.f32 %v3870, %v3870
    %v3947 = vmul.f32 %v3871, %v3871
    %v3948 = vmul.f32 %v3872, %v3872
    %v3949 = vadd.f32 %v3917, %v3919
    %v3950 = vadd.f32 %v3949, %v3921
    %v3951 = vadd.f32 %v3950, %v3923
    %v3952 = vadd.f32 %v3951, %v3925
    %v3953 = vadd.f32 %v3952, %v3927
    %v3954 = vadd.f32 %v3953, %v3929
    %v3955 = vadd.f32 %v3954, %v3931
    %v3956 = vadd.f32 %v3955, %v3933
    %v3957 = vadd.f32 %v3956, %v3935
    %v3958 = vadd.f32 %v3957, %v3937
    %v3959 = vadd.f32 %v3958, %v3939
    %v3960 = vadd.f32 %v3959, %v3941
    %v3961 = vadd.f32 %v3960, %v3943
    %v3962 = vadd.f32 %v3961, %v3945
    %v3963 = vadd.f32 %v3962, %v3947
    %v3964 = vrot.slane %v3963, 4
    %v3965 = vadd.f32 %v3963, %v3964
    %v3966 = vrot.slane %v3965, 2
    %v3967 = vadd.f32 %v3965, %v3966
    %v3968 = vrot.slane %v3967, 1
    %v3969 = vadd.f32 %v3967, %v3968
    %v3970 = vadd.f32 %v3918, %v3920
    %v3971 = vadd.f32 %v3970, %v3922
    %v3972 = vadd.f32 %v3971, %v3924
    %v3973 = vadd.f32 %v3972, %v3926
    %v3974 = vadd.f32 %v3973, %v3928
    %v3975 = vadd.f32 %v3974, %v3930
    %v3976 = vadd.f32 %v3975, %v3932
    %v3977 = vadd.f32 %v3976, %v3934
    %v3978 = vadd.f32 %v3977, %v3936
    %v3979 = vadd.f32 %v3978, %v3938
    %v3980 = vadd.f32 %v3979, %v3940
    %v3981 = vadd.f32 %v3980, %v3942
    %v3982 = vadd.f32 %v3981, %v3944
    %v3983 = vadd.f32 %v3982, %v3946
    %v3984 = vadd.f32 %v3983, %v3948
    %v3985 = vrot.slane %v3984, 4
    %v3986 = vadd.f32 %v3984, %v3985
    %v3987 = vrot.slane %v3986, 2
    %v3988 = vadd.f32 %v3986, %v3987
    %v3989 = vrot.slane %v3988, 1
    %v3990 = vadd.f32 %v3988, %v3989
    %v3991 = vmul.f32 %v3969, %v371
    %v3992 = vmul.f32 %v3990, %v371
    %v3993 = vmul.f32 %v3915, %v3915
    %v3994 = vmul.f32 %v3916, %v3916
    %v3995 = vsub.f32 %v3991, %v3993
    %v3996 = vsub.f32 %v3992, %v3994
    %v3997 = vmax.f32 %v3995, 0.0
    %v3998 = vmax.f32 %v3996, 0.0
    %v3999 = vadd.f32 %v3997, 1e-05
    %v4000 = vadd.f32 %v3998, 1e-05
    %v4001 = vrsqrt.pop %v3999
    %v4002 = vrsqrt.pop %v4000
    %v4005 = vcombine.low %v4001, %v4002
    %v4007 = vunpack.c.l.s4 1966171168
    %v4008 = vunpack.c.0.s8 %v4007
    %v4009 = vlaneseq
    %v4010 = vshrl.u32 %v4009, 7
    %v4011 = vsub.s32 %v4008, %v4010
    %v4012 = vrot.slane %v4005, %v4011
    %v4014 = vunpack.c.l.s4 1966171168
    %v4015 = vunpack.c.0.s8 %v4014
    %v4016 = vlaneseq
    %v4017 = vshrl.u32 %v4016, 7
    %v4018 = vsub.s32 %v4015, %v4017
    %v4019 = vrot.slane %v4012, %v4018
    %v4021 = vmul.f32 %v3678, %v4019
    %v4023 = vlaneseq
    %v4024 = vshrl.u32 %v4023, 7
    %v4025 = vsub.s32 0, %v4024
    %v4026 = vrot.slane %v4021, %v4025
    %v4027 = vlaneseq
    %v4028 = vshrl.u32 %v4027, 7
    %v4029 = vsub.s32 1, %v4028
    %v4030 = vrot.slane %v4021, %v4029
    %v4033 = vmul.f32 %v3915, %v4026
    %v4034 = vmul.f32 %v3916, %v4030
    %v4037 = vcombine.low %v4033, %v4034
    %v4039 = vunpack.c.l.s4 1966171168
    %v4040 = vunpack.c.0.s8 %v4039
    %v4041 = vlaneseq
    %v4042 = vshrl.u32 %v4041, 7
    %v4043 = vsub.s32 %v4040, %v4042
    %v4044 = vrot.slane %v4037, %v4043
    %v4046 = vunpack.c.l.s4 1966171168
    %v4047 = vunpack.c.0.s8 %v4046
    %v4048 = vlaneseq
    %v4049 = vshrl.u32 %v4048, 7
    %v4050 = vsub.s32 %v4047, %v4049
    %v4051 = vrot.slane %v4044, %v4050
    %v4053 = vsub.f32 %v3679, %v4051
    %v4054 = vmul.f32 %v3841, %v4026
    %v4055 = vmul.f32 %v3842, %v4030
    %v4056 = vmul.f32 %v3843, %v4026
    %v4057 = vmul.f32 %v3844, %v4030
    %v4058 = vmul.f32 %v3845, %v4026
    %v4059 = vmul.f32 %v3846, %v4030
    %v4060 = vmul.f32 %v3847, %v4026
    %v4061 = vmul.f32 %v3848, %v4030
    %v4062 = vmul.f32 %v3849, %v4026
    %v4063 = vmul.f32 %v3850, %v4030
    %v4064 = vmul.f32 %v3851, %v4026
    %v4065 = vmul.f32 %v3852, %v4030
    %v4066 = vmul.f32 %v3853, %v4026
    %v4067 = vmul.f32 %v3854, %v4030
    %v4068 = vmul.f32 %v3855, %v4026
    %v4069 = vmul.f32 %v3856, %v4030
    %v4070 = vmul.f32 %v3857, %v4026
    %v4071 = vmul.f32 %v3858, %v4030
    %v4072 = vmul.f32 %v3859, %v4026
    %v4073 = vmul.f32 %v3860, %v4030
    %v4074 = vmul.f32 %v3861, %v4026
    %v4075 = vmul.f32 %v3862, %v4030
    %v4076 = vmul.f32 %v3863, %v4026
    %v4077 = vmul.f32 %v3864, %v4030
    %v4078 = vmul.f32 %v3865, %v4026
    %v4079 = vmul.f32 %v3866, %v4030
    %v4080 = vmul.f32 %v3867, %v4026
    %v4081 = vmul.f32 %v3868, %v4030
    %v4082 = vmul.f32 %v3869, %v4026
    %v4083 = vmul.f32 %v3870, %v4030
    %v4084 = vmul.f32 %v3871, %v4026
    %v4085 = vmul.f32 %v3872, %v4030
    %v4087 = vlaneseq
    %v4088 = vshrl.u32 %v4087, 7
    %v4089 = vsub.s32 0, %v4088
    %v4090 = vrot.slane %v4053, %v4089
    %v4091 = vlaneseq
    %v4092 = vshrl.u32 %v4091, 7
    %v4093 = vsub.s32 1, %v4092
    %v4094 = vrot.slane %v4053, %v4093
    %v4097 = vadd.f32 %v4054, %v4090
    %v4098 = vadd.f32 %v4055, %v4094
    %v4099 = vadd.f32 %v4056, %v4090
    %v4100 = vadd.f32 %v4057, %v4094
    %v4101 = vadd.f32 %v4058, %v4090
    %v4102 = vadd.f32 %v4059, %v4094
    %v4103 = vadd.f32 %v4060, %v4090
    %v4104 = vadd.f32 %v4061, %v4094
    %v4105 = vadd.f32 %v4062, %v4090
    %v4106 = vadd.f32 %v4063, %v4094
    %v4107 = vadd.f32 %v4064, %v4090
    %v4108 = vadd.f32 %v4065, %v4094
    %v4109 = vadd.f32 %v4066, %v4090
    %v4110 = vadd.f32 %v4067, %v4094
    %v4111 = vadd.f32 %v4068, %v4090
    %v4112 = vadd.f32 %v4069, %v4094
    %v4113 = vadd.f32 %v4070, %v4090
    %v4114 = vadd.f32 %v4071, %v4094
    %v4115 = vadd.f32 %v4072, %v4090
    %v4116 = vadd.f32 %v4073, %v4094
    %v4117 = vadd.f32 %v4074, %v4090
    %v4118 = vadd.f32 %v4075, %v4094
    %v4119 = vadd.f32 %v4076, %v4090
    %v4120 = vadd.f32 %v4077, %v4094
    %v4121 = vadd.f32 %v4078, %v4090
    %v4122 = vadd.f32 %v4079, %v4094
    %v4123 = vadd.f32 %v4080, %v4090
    %v4124 = vadd.f32 %v4081, %v4094
    %v4125 = vadd.f32 %v4082, %v4090
    %v4126 = vadd.f32 %v4083, %v4094
    %v4127 = vadd.f32 %v4084, %v4090
    %v4128 = vadd.f32 %v4085, %v4094
    %v4129 = vpack.c.bf16 %v4099, %v4097
    %v4130 = vpack.c.bf16 %v4100, %v4098
    %v4131 = vpack.c.bf16 %v4103, %v4101
    %v4132 = vpack.c.bf16 %v4104, %v4102
    %v4133 = vpack.c.bf16 %v4107, %v4105
    %v4134 = vpack.c.bf16 %v4108, %v4106
    %v4135 = vpack.c.bf16 %v4111, %v4109
    %v4136 = vpack.c.bf16 %v4112, %v4110
    %v4137 = vpack.c.bf16 %v4115, %v4113
    %v4138 = vpack.c.bf16 %v4116, %v4114
    %v4139 = vpack.c.bf16 %v4119, %v4117
    %v4140 = vpack.c.bf16 %v4120, %v4118
    %v4141 = vpack.c.bf16 %v4123, %v4121
    %v4142 = vpack.c.bf16 %v4124, %v4122
    %v4143 = vpack.c.bf16 %v4127, %v4125
    %v4144 = vpack.c.bf16 %v4128, %v4126
    %v4145 = vld [vmem:[#allocation4] sm:$0xff]
    %v4146 = vld [vmem:[#allocation4 + $0x8] sm:$0xff]
    %v4147 = vld [vmem:[#allocation4 + $0x10] sm:$0xff]
    %v4148 = vld [vmem:[#allocation4 + $0x18] sm:$0xff]
    %v4149 = vld [vmem:[#allocation4 + $0x20] sm:$0xff]
    %v4150 = vld [vmem:[#allocation4 + $0x28] sm:$0xff]
    %v4151 = vld [vmem:[#allocation4 + $0x30] sm:$0xff]
    %v4152 = vld [vmem:[#allocation4 + $0x38] sm:$0xff]
    %v4153 = vld [vmem:[#allocation4 + $0x40] sm:$0xff]
    %v4154 = vld [vmem:[#allocation4 + $0x48] sm:$0xff]
    %v4155 = vld [vmem:[#allocation4 + $0x50] sm:$0xff]
    %v4156 = vld [vmem:[#allocation4 + $0x58] sm:$0xff]
    %v4157 = vld [vmem:[#allocation4 + $0x60] sm:$0xff]
    %v4158 = vld [vmem:[#allocation4 + $0x68] sm:$0xff]
    %v4159 = vld [vmem:[#allocation4 + $0x70] sm:$0xff]
    %v4160 = vld [vmem:[#allocation4 + $0x78] sm:$0xff]
    %v4161 = vld [vmem:[#allocation4 + $0x80] sm:$0xff]
    %v4162 = vld [vmem:[#allocation4 + $0x88] sm:$0xff]
    %v4163 = vld [vmem:[#allocation4 + $0x90] sm:$0xff]
    %v4164 = vld [vmem:[#allocation4 + $0x98] sm:$0xff]
    %v4165 = vld [vmem:[#allocation4 + $0xa0] sm:$0xff]
    %v4166 = vld [vmem:[#allocation4 + $0xa8] sm:$0xff]
    %v4167 = vld [vmem:[#allocation4 + $0xb0] sm:$0xff]
    %v4168 = vld [vmem:[#allocation4 + $0xb8] sm:$0xff]
    %v4169 = vld [vmem:[#allocation4 + $0xc0] sm:$0xff]
    %v4170 = vld [vmem:[#allocation4 + $0xc8] sm:$0xff]
    %v4171 = vld [vmem:[#allocation4 + $0xd0] sm:$0xff]
    %v4172 = vld [vmem:[#allocation4 + $0xd8] sm:$0xff]
    %v4173 = vld [vmem:[#allocation4 + $0xe0] sm:$0xff]
    %v4174 = vld [vmem:[#allocation4 + $0xe8] sm:$0xff]
    %v4175 = vld [vmem:[#allocation4 + $0xf0] sm:$0xff]
    %v4176 = vld [vmem:[#allocation4 + $0xf8] sm:$0xff]
    %v4177 = vld [vmem:[%s15] ss:$4 sm:$0x3]
    %s4178 = scalar_lea.vmem %s16, 1
    %v4179 = vld [vmem:[%s4178] ss:$8 sm:$0x3]
    %s4180 = scalar_lea.vmem %s17, 1
    %v4181 = vld [vmem:[%s4180] ss:$8 sm:$0x3]
    %v4183 = vlaneseq
    %v4184 = vshrl.u32 %v4183, 7
    %v4185 = vsub.s32 0, %v4184
    %v4186 = vrot.slane %v4177, %v4185
    %v4187 = vlaneseq
    %v4188 = vshrl.u32 %v4187, 7
    %v4189 = vsub.s32 1, %v4188
    %v4190 = vrot.slane %v4177, %v4189
    %v4225 = vunpack.c.l.b16 %v4145
    %v4226 = vunpack.c.h.b16 %v4145
    %v4227 = vunpack.c.l.b16 %v4146
    %v4228 = vunpack.c.h.b16 %v4146
    %v4229 = vunpack.c.l.b16 %v4147
    %v4230 = vunpack.c.h.b16 %v4147
    %v4231 = vunpack.c.l.b16 %v4148
    %v4232 = vunpack.c.h.b16 %v4148
    %v4233 = vunpack.c.l.b16 %v4149
    %v4234 = vunpack.c.h.b16 %v4149
    %v4235 = vunpack.c.l.b16 %v4150
    %v4236 = vunpack.c.h.b16 %v4150
    %v4237 = vunpack.c.l.b16 %v4151
    %v4238 = vunpack.c.h.b16 %v4151
    %v4239 = vunpack.c.l.b16 %v4152
    %v4240 = vunpack.c.h.b16 %v4152
    %v4241 = vunpack.c.l.b16 %v4153
    %v4242 = vunpack.c.h.b16 %v4153
    %v4243 = vunpack.c.l.b16 %v4154
    %v4244 = vunpack.c.h.b16 %v4154
    %v4245 = vunpack.c.l.b16 %v4155
    %v4246 = vunpack.c.h.b16 %v4155
    %v4247 = vunpack.c.l.b16 %v4156
    %v4248 = vunpack.c.h.b16 %v4156
    %v4249 = vunpack.c.l.b16 %v4157
    %v4250 = vunpack.c.h.b16 %v4157
    %v4251 = vunpack.c.l.b16 %v4158
    %v4252 = vunpack.c.h.b16 %v4158
    %v4253 = vunpack.c.l.b16 %v4159
    %v4254 = vunpack.c.h.b16 %v4159
    %v4255 = vunpack.c.l.b16 %v4160
    %v4256 = vunpack.c.h.b16 %v4160
    %v4257 = vunpack.c.l.b16 %v4161
    %v4258 = vunpack.c.h.b16 %v4161
    %v4259 = vunpack.c.l.b16 %v4162
    %v4260 = vunpack.c.h.b16 %v4162
    %v4261 = vunpack.c.l.b16 %v4163
    %v4262 = vunpack.c.h.b16 %v4163
    %v4263 = vunpack.c.l.b16 %v4164
    %v4264 = vunpack.c.h.b16 %v4164
    %v4265 = vunpack.c.l.b16 %v4165
    %v4266 = vunpack.c.h.b16 %v4165
    %v4267 = vunpack.c.l.b16 %v4166
    %v4268 = vunpack.c.h.b16 %v4166
    %v4269 = vunpack.c.l.b16 %v4167
    %v4270 = vunpack.c.h.b16 %v4167
    %v4271 = vunpack.c.l.b16 %v4168
    %v4272 = vunpack.c.h.b16 %v4168
    %v4273 = vunpack.c.l.b16 %v4169
    %v4274 = vunpack.c.h.b16 %v4169
    %v4275 = vunpack.c.l.b16 %v4170
    %v4276 = vunpack.c.h.b16 %v4170
    %v4277 = vunpack.c.l.b16 %v4171
    %v4278 = vunpack.c.h.b16 %v4171
    %v4279 = vunpack.c.l.b16 %v4172
    %v4280 = vunpack.c.h.b16 %v4172
    %v4281 = vunpack.c.l.b16 %v4173
    %v4282 = vunpack.c.h.b16 %v4173
    %v4283 = vunpack.c.l.b16 %v4174
    %v4284 = vunpack.c.h.b16 %v4174
    %v4285 = vunpack.c.l.b16 %v4175
    %v4286 = vunpack.c.h.b16 %v4175
    %v4287 = vunpack.c.l.b16 %v4176
    %v4288 = vunpack.c.h.b16 %v4176
    %v4289 = vpack.c.b16 %v4227, %v4225
    %v4290 = vpack.c.b16 %v4228, %v4226
    %v4291 = vpack.c.b16 %v4231, %v4229
    %v4292 = vpack.c.b16 %v4232, %v4230
    %v4293 = vpack.c.b16 %v4235, %v4233
    %v4294 = vpack.c.b16 %v4236, %v4234
    %v4295 = vpack.c.b16 %v4239, %v4237
    %v4296 = vpack.c.b16 %v4240, %v4238
    %v4297 = vpack.c.b16 %v4243, %v4241
    %v4298 = vpack.c.b16 %v4244, %v4242
    %v4299 = vpack.c.b16 %v4247, %v4245
    %v4300 = vpack.c.b16 %v4248, %v4246
    %v4301 = vpack.c.b16 %v4251, %v4249
    %v4302 = vpack.c.b16 %v4252, %v4250
    %v4303 = vpack.c.b16 %v4255, %v4253
    %v4304 = vpack.c.b16 %v4256, %v4254
    %v4305 = vpack.c.b16 %v4259, %v4257
    %v4306 = vpack.c.b16 %v4260, %v4258
    %v4307 = vpack.c.b16 %v4263, %v4261
    %v4308 = vpack.c.b16 %v4264, %v4262
    %v4309 = vpack.c.b16 %v4267, %v4265
    %v4310 = vpack.c.b16 %v4268, %v4266
    %v4311 = vpack.c.b16 %v4271, %v4269
    %v4312 = vpack.c.b16 %v4272, %v4270
    %v4313 = vpack.c.b16 %v4275, %v4273
    %v4314 = vpack.c.b16 %v4276, %v4274
    %v4315 = vpack.c.b16 %v4279, %v4277
    %v4316 = vpack.c.b16 %v4280, %v4278
    %v4317 = vpack.c.b16 %v4283, %v4281
    %v4318 = vpack.c.b16 %v4284, %v4282
    %v4319 = vpack.c.b16 %v4287, %v4285
    %v4320 = vpack.c.b16 %v4288, %v4286
    %4353 = vmatprep.subr.bf16.mxu0 %v4290
    %4354 = vmatpush1.bf16.msra.mxu0 %v4289
    %4355 = vmatprep.subr.bf16.mxu0 %v4292
    %4356 = vmatpush1.bf16.msra.mxu0 %v4291
    %4357 = vmatprep.subr.bf16.mxu0 %v4294
    %4358 = vmatpush1.bf16.msra.mxu0 %v4293
    %4359 = vmatprep.subr.bf16.mxu0 %v4296
    %4360 = vmatpush1.bf16.msra.mxu0 %v4295
    %4361 = vmatprep.subr.bf16.mxu0 %v4298
    %4362 = vmatpush1.bf16.msra.mxu0 %v4297
    %4363 = vmatprep.subr.bf16.mxu0 %v4300
    %4364 = vmatpush1.bf16.msra.mxu0 %v4299
    %4365 = vmatprep.subr.bf16.mxu0 %v4302
    %4366 = vmatpush1.bf16.msra.mxu0 %v4301
    %4367 = vmatprep.subr.bf16.mxu0 %v4304
    %4368 = vmatpush1.bf16.msra.mxu0 %v4303
    %4369 = vmatprep.subr.bf16.mxu0 %v4306
    %4370 = vmatpush1.bf16.msra.mxu0 %v4305
    %4371 = vmatprep.subr.bf16.mxu0 %v4308
    %4372 = vmatpush1.bf16.msra.mxu0 %v4307
    %4373 = vmatprep.subr.bf16.mxu0 %v4310
    %4374 = vmatpush1.bf16.msra.mxu0 %v4309
    %4375 = vmatprep.subr.bf16.mxu0 %v4312
    %4376 = vmatpush1.bf16.msra.mxu0 %v4311
    %4377 = vmatprep.subr.bf16.mxu0 %v4314
    %4378 = vmatpush1.bf16.msra.mxu0 %v4313
    %4379 = vmatprep.subr.bf16.mxu0 %v4316
    %4380 = vmatpush1.bf16.msra.mxu0 %v4315
    %4381 = vmatprep.subr.bf16.mxu0 %v4318
    %4382 = vmatpush1.bf16.msra.mxu0 %v4317
    %4383 = vmatprep.subr.bf16.mxu0 %v4320
    %4384 = vmatpush1.bf16.msra.mxu0 %v4319
    %4385 = vmatprep.mubr.bf16.mxu0 %v4130
    %4386 = vmatmul.mubr.bf16.gmra.mrb[0].mxu0 %v4129
    %v4387 = vpop.f32.mrb[0].mxu0
    %v4388 = vadd.f32 %v4186, %v4387
    %v4389 = vpop.f32.mrb[0].mxu0
    %v4390 = vadd.f32 %v4190, %v4389
    %v4391 = vpop.f32.mrb[0].mxu0
    %v4392 = vadd.f32 %v4186, %v4391
    %v4393 = vpop.f32.mrb[0].mxu0
    %v4394 = vadd.f32 %v4190, %v4393
    %4395 = vmatprep.mubr.bf16.mxu0 %v4132
    %4396 = vmatmul.mubr.bf16.gmra.mrb[0].mxu0 %v4131
    %v4397 = vpop.f32.mrb[0].mxu0
    %v4398 = vadd.f32 %v4186, %v4397
    %v4399 = vpop.f32.mrb[0].mxu0
    %v4400 = vadd.f32 %v4190, %v4399
    %v4401 = vpop.f32.mrb[0].mxu0
    %v4402 = vadd.f32 %v4186, %v4401
    %v4403 = vpop.f32.mrb[0].mxu0
    %v4404 = vadd.f32 %v4190, %v4403
    %4405 = vmatprep.mubr.bf16.mxu0 %v4134
    %4406 = vmatmul.mubr.bf16.gmra.mrb[0].mxu0 %v4133
    %v4407 = vpop.f32.mrb[0].mxu0
    %v4408 = vadd.f32 %v4186, %v4407
    %v4409 = vpop.f32.mrb[0].mxu0
    %v4410 = vadd.f32 %v4190, %v4409
    %v4411 = vpop.f32.mrb[0].mxu0
    %v4412 = vadd.f32 %v4186, %v4411
    %v4413 = vpop.f32.mrb[0].mxu0
    %v4414 = vadd.f32 %v4190, %v4413
    %4415 = vmatprep.mubr.bf16.mxu0 %v4136
    %4416 = vmatmul.mubr.bf16.gmra.mrb[0].mxu0 %v4135
    %v4417 = vpop.f32.mrb[0].mxu0
    %v4418 = vadd.f32 %v4186, %v4417
    %v4419 = vpop.f32.mrb[0].mxu0
    %v4420 = vadd.f32 %v4190, %v4419
    %v4421 = vpop.f32.mrb[0].mxu0
    %v4422 = vadd.f32 %v4186, %v4421
    %v4423 = vpop.f32.mrb[0].mxu0
    %v4424 = vadd.f32 %v4190, %v4423
    %4425 = vmatprep.mubr.bf16.mxu0 %v4138
    %4426 = vmatmul.mubr.bf16.gmra.mrb[0].mxu0 %v4137
    %v4427 = vpop.f32.mrb[0].mxu0
    %v4428 = vadd.f32 %v4186, %v4427
    %v4429 = vpop.f32.mrb[0].mxu0
    %v4430 = vadd.f32 %v4190, %v4429
    %v4431 = vpop.f32.mrb[0].mxu0
    %v4432 = vadd.f32 %v4186, %v4431
    %v4433 = vpop.f32.mrb[0].mxu0
    %v4434 = vadd.f32 %v4190, %v4433
    %4435 = vmatprep.mubr.bf16.mxu0 %v4140
    %4436 = vmatmul.mubr.bf16.gmra.mrb[0].mxu0 %v4139
    %v4437 = vpop.f32.mrb[0].mxu0
    %v4438 = vadd.f32 %v4186, %v4437
    %v4439 = vpop.f32.mrb[0].mxu0
    %v4440 = vadd.f32 %v4190, %v4439
    %v4441 = vpop.f32.mrb[0].mxu0
    %v4442 = vadd.f32 %v4186, %v4441
    %v4443 = vpop.f32.mrb[0].mxu0
    %v4444 = vadd.f32 %v4190, %v4443
    %4445 = vmatprep.mubr.bf16.mxu0 %v4142
    %4446 = vmatmul.mubr.bf16.gmra.mrb[0].mxu0 %v4141
    %v4447 = vpop.f32.mrb[0].mxu0
    %v4448 = vadd.f32 %v4186, %v4447
    %v4449 = vpop.f32.mrb[0].mxu0
    %v4450 = vadd.f32 %v4190, %v4449
    %v4451 = vpop.f32.mrb[0].mxu0
    %v4452 = vadd.f32 %v4186, %v4451
    %v4453 = vpop.f32.mrb[0].mxu0
    %v4454 = vadd.f32 %v4190, %v4453
    %4455 = vmatprep.mubr.bf16.mxu0 %v4144
    %4456 = vmatmul.mubr.bf16.gmra.mrb[0].mxu0 %v4143
    %v4457 = vpop.f32.mrb[0].mxu0
    %v4458 = vadd.f32 %v4186, %v4457
    %v4459 = vpop.f32.mrb[0].mxu0
    %v4460 = vadd.f32 %v4190, %v4459
    %v4461 = vpop.f32.mrb[0].mxu0
    %v4462 = vadd.f32 %v4186, %v4461
    %v4463 = vpop.f32.mrb[0].mxu0
    %v4464 = vadd.f32 %v4190, %v4463
    %4465 = vdwg.mxu0
    %v4466 = vmax.f32 %v4388, 0.0
    %v4467 = vmax.f32 %v4390, 0.0
    %v4468 = vmax.f32 %v4392, 0.0
    %v4469 = vmax.f32 %v4394, 0.0
    %v4470 = vmax.f32 %v4398, 0.0
    %v4471 = vmax.f32 %v4400, 0.0
    %v4472 = vmax.f32 %v4402, 0.0
    %v4473 = vmax.f32 %v4404, 0.0
    %v4474 = vmax.f32 %v4408, 0.0
    %v4475 = vmax.f32 %v4410, 0.0
    %v4476 = vmax.f32 %v4412, 0.0
    %v4477 = vmax.f32 %v4414, 0.0
    %v4478 = vmax.f32 %v4418, 0.0
    %v4479 = vmax.f32 %v4420, 0.0
    %v4480 = vmax.f32 %v4422, 0.0
    %v4481 = vmax.f32 %v4424, 0.0
    %v4482 = vmax.f32 %v4428, 0.0
    %v4483 = vmax.f32 %v4430, 0.0
    %v4484 = vmax.f32 %v4432, 0.0
    %v4485 = vmax.f32 %v4434, 0.0
    %v4486 = vmax.f32 %v4438, 0.0
    %v4487 = vmax.f32 %v4440, 0.0
    %v4488 = vmax.f32 %v4442, 0.0
    %v4489 = vmax.f32 %v4444, 0.0
    %v4490 = vmax.f32 %v4448, 0.0
    %v4491 = vmax.f32 %v4450, 0.0
    %v4492 = vmax.f32 %v4452, 0.0
    %v4493 = vmax.f32 %v4454, 0.0
    %v4494 = vmax.f32 %v4458, 0.0
    %v4495 = vmax.f32 %v4460, 0.0
    %v4496 = vmax.f32 %v4462, 0.0
    %v4497 = vmax.f32 %v4464, 0.0
    %v4498 = vadd.f32 %v4466, %v4468
    %v4499 = vadd.f32 %v4498, %v4470
    %v4500 = vadd.f32 %v4499, %v4472
    %v4501 = vadd.f32 %v4500, %v4474
    %v4502 = vadd.f32 %v4501, %v4476
    %v4503 = vadd.f32 %v4502, %v4478
    %v4504 = vadd.f32 %v4503, %v4480
    %v4505 = vadd.f32 %v4504, %v4482
    %v4506 = vadd.f32 %v4505, %v4484
    %v4507 = vadd.f32 %v4506, %v4486
    %v4508 = vadd.f32 %v4507, %v4488
    %v4509 = vadd.f32 %v4508, %v4490
    %v4510 = vadd.f32 %v4509, %v4492
    %v4511 = vadd.f32 %v4510, %v4494
    %v4512 = vadd.f32 %v4511, %v4496
    %v4513 = vrot.slane %v4512, 4
    %v4514 = vadd.f32 %v4512, %v4513
    %v4515 = vrot.slane %v4514, 2
    %v4516 = vadd.f32 %v4514, %v4515
    %v4517 = vrot.slane %v4516, 1
    %v4518 = vadd.f32 %v4516, %v4517
    %v4519 = vadd.f32 %v4467, %v4469
    %v4520 = vadd.f32 %v4519, %v4471
    %v4521 = vadd.f32 %v4520, %v4473
    %v4522 = vadd.f32 %v4521, %v4475
    %v4523 = vadd.f32 %v4522, %v4477
    %v4524 = vadd.f32 %v4523, %v4479
    %v4525 = vadd.f32 %v4524, %v4481
    %v4526 = vadd.f32 %v4525, %v4483
    %v4527 = vadd.f32 %v4526, %v4485
    %v4528 = vadd.f32 %v4527, %v4487
    %v4529 = vadd.f32 %v4528, %v4489
    %v4530 = vadd.f32 %v4529, %v4491
    %v4531 = vadd.f32 %v4530, %v4493
    %v4532 = vadd.f32 %v4531, %v4495
    %v4533 = vadd.f32 %v4532, %v4497
    %v4534 = vrot.slane %v4533, 4
    %v4535 = vadd.f32 %v4533, %v4534
    %v4536 = vrot.slane %v4535, 2
    %v4537 = vadd.f32 %v4535, %v4536
    %v4538 = vrot.slane %v4537, 1
    %v4539 = vadd.f32 %v4537, %v4538
    %v4540 = vmul.f32 %v4518, %v371
    %v4541 = vmul.f32 %v4539, %v371
    %v4542 = vmul.f32 %v4466, %v4466
    %v4543 = vmul.f32 %v4467, %v4467
    %v4544 = vmul.f32 %v4468, %v4468
    %v4545 = vmul.f32 %v4469, %v4469
    %v4546 = vmul.f32 %v4470, %v4470
    %v4547 = vmul.f32 %v4471, %v4471
    %v4548 = vmul.f32 %v4472, %v4472
    %v4549 = vmul.f32 %v4473, %v4473
    %v4550 = vmul.f32 %v4474, %v4474
    %v4551 = vmul.f32 %v4475, %v4475
    %v4552 = vmul.f32 %v4476, %v4476
    %v4553 = vmul.f32 %v4477, %v4477
    %v4554 = vmul.f32 %v4478, %v4478
    %v4555 = vmul.f32 %v4479, %v4479
    %v4556 = vmul.f32 %v4480, %v4480
    %v4557 = vmul.f32 %v4481, %v4481
    %v4558 = vmul.f32 %v4482, %v4482
    %v4559 = vmul.f32 %v4483, %v4483
    %v4560 = vmul.f32 %v4484, %v4484
    %v4561 = vmul.f32 %v4485, %v4485
    %v4562 = vmul.f32 %v4486, %v4486
    %v4563 = vmul.f32 %v4487, %v4487
    %v4564 = vmul.f32 %v4488, %v4488
    %v4565 = vmul.f32 %v4489, %v4489
    %v4566 = vmul.f32 %v4490, %v4490
    %v4567 = vmul.f32 %v4491, %v4491
    %v4568 = vmul.f32 %v4492, %v4492
    %v4569 = vmul.f32 %v4493, %v4493
    %v4570 = vmul.f32 %v4494, %v4494
    %v4571 = vmul.f32 %v4495, %v4495
    %v4572 = vmul.f32 %v4496, %v4496
    %v4573 = vmul.f32 %v4497, %v4497
    %v4574 = vadd.f32 %v4542, %v4544
    %v4575 = vadd.f32 %v4574, %v4546
    %v4576 = vadd.f32 %v4575, %v4548
    %v4577 = vadd.f32 %v4576, %v4550
    %v4578 = vadd.f32 %v4577, %v4552
    %v4579 = vadd.f32 %v4578, %v4554
    %v4580 = vadd.f32 %v4579, %v4556
    %v4581 = vadd.f32 %v4580, %v4558
    %v4582 = vadd.f32 %v4581, %v4560
    %v4583 = vadd.f32 %v4582, %v4562
    %v4584 = vadd.f32 %v4583, %v4564
    %v4585 = vadd.f32 %v4584, %v4566
    %v4586 = vadd.f32 %v4585, %v4568
    %v4587 = vadd.f32 %v4586, %v4570
    %v4588 = vadd.f32 %v4587, %v4572
    %v4589 = vrot.slane %v4588, 4
    %v4590 = vadd.f32 %v4588, %v4589
    %v4591 = vrot.slane %v4590, 2
    %v4592 = vadd.f32 %v4590, %v4591
    %v4593 = vrot.slane %v4592, 1
    %v4594 = vadd.f32 %v4592, %v4593
    %v4595 = vadd.f32 %v4543, %v4545
    %v4596 = vadd.f32 %v4595, %v4547
    %v4597 = vadd.f32 %v4596, %v4549
    %v4598 = vadd.f32 %v4597, %v4551
    %v4599 = vadd.f32 %v4598, %v4553
    %v4600 = vadd.f32 %v4599, %v4555
    %v4601 = vadd.f32 %v4600, %v4557
    %v4602 = vadd.f32 %v4601, %v4559
    %v4603 = vadd.f32 %v4602, %v4561
    %v4604 = vadd.f32 %v4603, %v4563
    %v4605 = vadd.f32 %v4604, %v4565
    %v4606 = vadd.f32 %v4605, %v4567
    %v4607 = vadd.f32 %v4606, %v4569
    %v4608 = vadd.f32 %v4607, %v4571
    %v4609 = vadd.f32 %v4608, %v4573
    %v4610 = vrot.slane %v4609, 4
    %v4611 = vadd.f32 %v4609, %v4610
    %v4612 = vrot.slane %v4611, 2
    %v4613 = vadd.f32 %v4611, %v4612
    %v4614 = vrot.slane %v4613, 1
    %v4615 = vadd.f32 %v4613, %v4614
    %v4616 = vmul.f32 %v4594, %v371
    %v4617 = vmul.f32 %v4615, %v371
    %v4618 = vmul.f32 %v4540, %v4540
    %v4619 = vmul.f32 %v4541, %v4541
    %v4620 = vsub.f32 %v4616, %v4618
    %v4621 = vsub.f32 %v4617, %v4619
    %v4622 = vmax.f32 %v4620, 0.0
    %v4623 = vmax.f32 %v4621, 0.0
    %v4624 = vadd.f32 %v4622, 1e-05
    %v4625 = vadd.f32 %v4623, 1e-05
    %v4626 = vrsqrt.pop %v4624
    %v4627 = vrsqrt.pop %v4625
    %v4630 = vcombine.low %v4626, %v4627
    %v4632 = vunpack.c.l.s4 1966171168
    %v4633 = vunpack.c.0.s8 %v4632
    %v4634 = vlaneseq
    %v4635 = vshrl.u32 %v4634, 7
    %v4636 = vsub.s32 %v4633, %v4635
    %v4637 = vrot.slane %v4630, %v4636
    %v4639 = vunpack.c.l.s4 1966171168
    %v4640 = vunpack.c.0.s8 %v4639
    %v4641 = vlaneseq
    %v4642 = vshrl.u32 %v4641, 7
    %v4643 = vsub.s32 %v4640, %v4642
    %v4644 = vrot.slane %v4637, %v4643
    %v4646 = vmul.f32 %v4179, %v4644
    %v4648 = vlaneseq
    %v4649 = vshrl.u32 %v4648, 7
    %v4650 = vsub.s32 0, %v4649
    %v4651 = vrot.slane %v4646, %v4650
    %v4652 = vlaneseq
    %v4653 = vshrl.u32 %v4652, 7
    %v4654 = vsub.s32 1, %v4653
    %v4655 = vrot.slane %v4646, %v4654
    %v4658 = vmul.f32 %v4540, %v4651
    %v4659 = vmul.f32 %v4541, %v4655
    %v4662 = vcombine.low %v4658, %v4659
    %v4664 = vunpack.c.l.s4 1966171168
    %v4665 = vunpack.c.0.s8 %v4664
    %v4666 = vlaneseq
    %v4667 = vshrl.u32 %v4666, 7
    %v4668 = vsub.s32 %v4665, %v4667
    %v4669 = vrot.slane %v4662, %v4668
    %v4671 = vunpack.c.l.s4 1966171168
    %v4672 = vunpack.c.0.s8 %v4671
    %v4673 = vlaneseq
    %v4674 = vshrl.u32 %v4673, 7
    %v4675 = vsub.s32 %v4672, %v4674
    %v4676 = vrot.slane %v4669, %v4675
    %v4678 = vsub.f32 %v4181, %v4676
    %v4679 = vmul.f32 %v4466, %v4651
    %v4680 = vmul.f32 %v4467, %v4655
    %v4681 = vmul.f32 %v4468, %v4651
    %v4682 = vmul.f32 %v4469, %v4655
    %v4683 = vmul.f32 %v4470, %v4651
    %v4684 = vmul.f32 %v4471, %v4655
    %v4685 = vmul.f32 %v4472, %v4651
    %v4686 = vmul.f32 %v4473, %v4655
    %v4687 = vmul.f32 %v4474, %v4651
    %v4688 = vmul.f32 %v4475, %v4655
    %v4689 = vmul.f32 %v4476, %v4651
    %v4690 = vmul.f32 %v4477, %v4655
    %v4691 = vmul.f32 %v4478, %v4651
    %v4692 = vmul.f32 %v4479, %v4655
    %v4693 = vmul.f32 %v4480, %v4651
    %v4694 = vmul.f32 %v4481, %v4655
    %v4695 = vmul.f32 %v4482, %v4651
    %v4696 = vmul.f32 %v4483, %v4655
    %v4697 = vmul.f32 %v4484, %v4651
    %v4698 = vmul.f32 %v4485, %v4655
    %v4699 = vmul.f32 %v4486, %v4651
    %v4700 = vmul.f32 %v4487, %v4655
    %v4701 = vmul.f32 %v4488, %v4651
    %v4702 = vmul.f32 %v4489, %v4655
    %v4703 = vmul.f32 %v4490, %v4651
    %v4704 = vmul.f32 %v4491, %v4655
    %v4705 = vmul.f32 %v4492, %v4651
    %v4706 = vmul.f32 %v4493, %v4655
    %v4707 = vmul.f32 %v4494, %v4651
    %v4708 = vmul.f32 %v4495, %v4655
    %v4709 = vmul.f32 %v4496, %v4651
    %v4710 = vmul.f32 %v4497, %v4655
    %v4712 = vlaneseq
    %v4713 = vshrl.u32 %v4712, 7
    %v4714 = vsub.s32 0, %v4713
    %v4715 = vrot.slane %v4678, %v4714
    %v4716 = vlaneseq
    %v4717 = vshrl.u32 %v4716, 7
    %v4718 = vsub.s32 1, %v4717
    %v4719 = vrot.slane %v4678, %v4718
    %v4722 = vadd.f32 %v4679, %v4715
    %v4723 = vadd.f32 %v4680, %v4719
    %v4724 = vadd.f32 %v4681, %v4715
    %v4725 = vadd.f32 %v4682, %v4719
    %v4726 = vadd.f32 %v4683, %v4715
    %v4727 = vadd.f32 %v4684, %v4719
    %v4728 = vadd.f32 %v4685, %v4715
    %v4729 = vadd.f32 %v4686, %v4719
    %v4730 = vadd.f32 %v4687, %v4715
    %v4731 = vadd.f32 %v4688, %v4719
    %v4732 = vadd.f32 %v4689, %v4715
    %v4733 = vadd.f32 %v4690, %v4719
    %v4734 = vadd.f32 %v4691, %v4715
    %v4735 = vadd.f32 %v4692, %v4719
    %v4736 = vadd.f32 %v4693, %v4715
    %v4737 = vadd.f32 %v4694, %v4719
    %v4738 = vadd.f32 %v4695, %v4715
    %v4739 = vadd.f32 %v4696, %v4719
    %v4740 = vadd.f32 %v4697, %v4715
    %v4741 = vadd.f32 %v4698, %v4719
    %v4742 = vadd.f32 %v4699, %v4715
    %v4743 = vadd.f32 %v4700, %v4719
    %v4744 = vadd.f32 %v4701, %v4715
    %v4745 = vadd.f32 %v4702, %v4719
    %v4746 = vadd.f32 %v4703, %v4715
    %v4747 = vadd.f32 %v4704, %v4719
    %v4748 = vadd.f32 %v4705, %v4715
    %v4749 = vadd.f32 %v4706, %v4719
    %v4750 = vadd.f32 %v4707, %v4715
    %v4751 = vadd.f32 %v4708, %v4719
    %v4752 = vadd.f32 %v4709, %v4715
    %v4753 = vadd.f32 %v4710, %v4719
    %v4754 = vpack.c.bf16 %v4724, %v4722
    %v4755 = vpack.c.bf16 %v4725, %v4723
    %v4756 = vpack.c.bf16 %v4728, %v4726
    %v4757 = vpack.c.bf16 %v4729, %v4727
    %v4758 = vpack.c.bf16 %v4732, %v4730
    %v4759 = vpack.c.bf16 %v4733, %v4731
    %v4760 = vpack.c.bf16 %v4736, %v4734
    %v4761 = vpack.c.bf16 %v4737, %v4735
    %v4762 = vpack.c.bf16 %v4740, %v4738
    %v4763 = vpack.c.bf16 %v4741, %v4739
    %v4764 = vpack.c.bf16 %v4744, %v4742
    %v4765 = vpack.c.bf16 %v4745, %v4743
    %v4766 = vpack.c.bf16 %v4748, %v4746
    %v4767 = vpack.c.bf16 %v4749, %v4747
    %v4768 = vpack.c.bf16 %v4752, %v4750
    %v4769 = vpack.c.bf16 %v4753, %v4751
    %s4770 = scalar_lea.vmem [#allocation4], 256
    %v4771 = vld [vmem:[%s4770] sm:$0xff]
    %v4772 = vld [vmem:[%s4770 + $0x8] sm:$0xff]
    %v4773 = vld [vmem:[%s4770 + $0x10] sm:$0xff]
    %v4774 = vld [vmem:[%s4770 + $0x18] sm:$0xff]
    %v4775 = vld [vmem:[%s4770 + $0x20] sm:$0xff]
    %v4776 = vld [vmem:[%s4770 + $0x28] sm:$0xff]
    %v4777 = vld [vmem:[%s4770 + $0x30] sm:$0xff]
    %v4778 = vld [vmem:[%s4770 + $0x38] sm:$0xff]
    %v4779 = vld [vmem:[%s4770 + $0x40] sm:$0xff]
    %v4780 = vld [vmem:[%s4770 + $0x48] sm:$0xff]
    %v4781 = vld [vmem:[%s4770 + $0x50] sm:$0xff]
    %v4782 = vld [vmem:[%s4770 + $0x58] sm:$0xff]
    %v4783 = vld [vmem:[%s4770 + $0x60] sm:$0xff]
    %v4784 = vld [vmem:[%s4770 + $0x68] sm:$0xff]
    %v4785 = vld [vmem:[%s4770 + $0x70] sm:$0xff]
    %v4786 = vld [vmem:[%s4770 + $0x78] sm:$0xff]
    %v4787 = vld [vmem:[%s4770 + $0x80] sm:$0xff]
    %v4788 = vld [vmem:[%s4770 + $0x88] sm:$0xff]
    %v4789 = vld [vmem:[%s4770 + $0x90] sm:$0xff]
    %v4790 = vld [vmem:[%s4770 + $0x98] sm:$0xff]
    %v4791 = vld [vmem:[%s4770 + $0xa0] sm:$0xff]
    %v4792 = vld [vmem:[%s4770 + $0xa8] sm:$0xff]
    %v4793 = vld [vmem:[%s4770 + $0xb0] sm:$0xff]
    %v4794 = vld [vmem:[%s4770 + $0xb8] sm:$0xff]
    %v4795 = vld [vmem:[%s4770 + $0xc0] sm:$0xff]
    %v4796 = vld [vmem:[%s4770 + $0xc8] sm:$0xff]
    %v4797 = vld [vmem:[%s4770 + $0xd0] sm:$0xff]
    %v4798 = vld [vmem:[%s4770 + $0xd8] sm:$0xff]
    %v4799 = vld [vmem:[%s4770 + $0xe0] sm:$0xff]
    %v4800 = vld [vmem:[%s4770 + $0xe8] sm:$0xff]
    %v4801 = vld [vmem:[%s4770 + $0xf0] sm:$0xff]
    %v4802 = vld [vmem:[%s4770 + $0xf8] sm:$0xff]
    %s4803 = scalar_lea.vmem %s15, 1
    %v4804 = vld [vmem:[%s4803] ss:$4 sm:$0x3]
    %s4805 = scalar_lea.vmem %s16, 2
    %v4806 = vld [vmem:[%s4805] ss:$8 sm:$0x3]
    %s4807 = scalar_lea.vmem %s17, 2
    %v4808 = vld [vmem:[%s4807] ss:$8 sm:$0x3]
    %v4810 = vlaneseq
    %v4811 = vshrl.u32 %v4810, 7
    %v4812 = vsub.s32 0, %v4811
    %v4813 = vrot.slane %v4804, %v4812
    %v4814 = vlaneseq
    %v4815 = vshrl.u32 %v4814, 7
    %v4816 = vsub.s32 1, %v4815
    %v4817 = vrot.slane %v4804, %v4816
    %v4852 = vunpack.c.l.b16 %v4771
    %v4853 = vunpack.c.h.b16 %v4771
    %v4854 = vunpack.c.l.b16 %v4772
    %v4855 = vunpack.c.h.b16 %v4772
    %v4856 = vunpack.c.l.b16 %v4773
    %v4857 = vunpack.c.h.b16 %v4773
    %v4858 = vunpack.c.l.b16 %v4774
    %v4859 = vunpack.c.h.b16 %v4774
    %v4860 = vunpack.c.l.b16 %v4775
    %v4861 = vunpack.c.h.b16 %v4775
    %v4862 = vunpack.c.l.b16 %v4776
    %v4863 = vunpack.c.h.b16 %v4776
    %v4864 = vunpack.c.l.b16 %v4777
    %v4865 = vunpack.c.h.b16 %v4777
    %v4866 = vunpack.c.l.b16 %v4778
    %v4867 = vunpack.c.h.b16 %v4778
    %v4868 = vunpack.c.l.b16 %v4779
    %v4869 = vunpack.c.h.b16 %v4779
    %v4870 = vunpack.c.l.b16 %v4780
    %v4871 = vunpack.c.h.b16 %v4780
    %v4872 = vunpack.c.l.b16 %v4781
    %v4873 = vunpack.c.h.b16 %v4781
    %v4874 = vunpack.c.l.b16 %v4782
    %v4875 = vunpack.c.h.b16 %v4782
    %v4876 = vunpack.c.l.b16 %v4783
    %v4877 = vunpack.c.h.b16 %v4783
    %v4878 = vunpack.c.l.b16 %v4784
    %v4879 = vunpack.c.h.b16 %v4784
    %v4880 = vunpack.c.l.b16 %v4785
    %v4881 = vunpack.c.h.b16 %v4785
    %v4882 = vunpack.c.l.b16 %v4786
    %v4883 = vunpack.c.h.b16 %v4786
    %v4884 = vunpack.c.l.b16 %v4787
    %v4885 = vunpack.c.h.b16 %v4787
    %v4886 = vunpack.c.l.b16 %v4788
    %v4887 = vunpack.c.h.b16 %v4788
    %v4888 = vunpack.c.l.b16 %v4789
    %v4889 = vunpack.c.h.b16 %v4789
    %v4890 = vunpack.c.l.b16 %v4790
    %v4891 = vunpack.c.h.b16 %v4790
    %v4892 = vunpack.c.l.b16 %v4791
    %v4893 = vunpack.c.h.b16 %v4791
    %v4894 = vunpack.c.l.b16 %v4792
    %v4895 = vunpack.c.h.b16 %v4792
    %v4896 = vunpack.c.l.b16 %v4793
    %v4897 = vunpack.c.h.b16 %v4793
    %v4898 = vunpack.c.l.b16 %v4794
    %v4899 = vunpack.c.h.b16 %v4794
    %v4900 = vunpack.c.l.b16 %v4795
    %v4901 = vunpack.c.h.b16 %v4795
    %v4902 = vunpack.c.l.b16 %v4796
    %v4903 = vunpack.c.h.b16 %v4796
    %v4904 = vunpack.c.l.b16 %v4797
    %v4905 = vunpack.c.h.b16 %v4797
    %v4906 = vunpack.c.l.b16 %v4798
    %v4907 = vunpack.c.h.b16 %v4798
    %v4908 = vunpack.c.l.b16 %v4799
    %v4909 = vunpack.c.h.b16 %v4799
    %v4910 = vunpack.c.l.b16 %v4800
    %v4911 = vunpack.c.h.b16 %v4800
    %v4912 = vunpack.c.l.b16 %v4801
    %v4913 = vunpack.c.h.b16 %v4801
    %v4914 = vunpack.c.l.b16 %v4802
    %v4915 = vunpack.c.h.b16 %v4802
    %v4916 = vpack.c.b16 %v4854, %v4852
    %v4917 = vpack.c.b16 %v4855, %v4853
    %v4918 = vpack.c.b16 %v4858, %v4856
    %v4919 = vpack.c.b16 %v4859, %v4857
    %v4920 = vpack.c.b16 %v4862, %v4860
    %v4921 = vpack.c.b16 %v4863, %v4861
    %v4922 = vpack.c.b16 %v4866, %v4864
    %v4923 = vpack.c.b16 %v4867, %v4865
    %v4924 = vpack.c.b16 %v4870, %v4868
    %v4925 = vpack.c.b16 %v4871, %v4869
    %v4926 = vpack.c.b16 %v4874, %v4872
    %v4927 = vpack.c.b16 %v4875, %v4873
    %v4928 = vpack.c.b16 %v4878, %v4876
    %v4929 = vpack.c.b16 %v4879, %v4877
    %v4930 = vpack.c.b16 %v4882, %v4880
    %v4931 = vpack.c.b16 %v4883, %v4881
    %v4932 = vpack.c.b16 %v4886, %v4884
    %v4933 = vpack.c.b16 %v4887, %v4885
    %v4934 = vpack.c.b16 %v4890, %v4888
    %v4935 = vpack.c.b16 %v4891, %v4889
    %v4936 = vpack.c.b16 %v4894, %v4892
    %v4937 = vpack.c.b16 %v4895, %v4893
    %v4938 = vpack.c.b16 %v4898, %v4896
    %v4939 = vpack.c.b16 %v4899, %v4897
    %v4940 = vpack.c.b16 %v4902, %v4900
    %v4941 = vpack.c.b16 %v4903, %v4901
    %v4942 = vpack.c.b16 %v4906, %v4904
    %v4943 = vpack.c.b16 %v4907, %v4905
    %v4944 = vpack.c.b16 %v4910, %v4908
    %v4945 = vpack.c.b16 %v4911, %v4909
    %v4946 = vpack.c.b16 %v4914, %v4912
    %v4947 = vpack.c.b16 %v4915, %v4913
    %4980 = vmatprep.subr.bf16.mxu0 %v4917
    %4981 = vmatpush1.bf16.msra.mxu0 %v4916
    %4982 = vmatprep.subr.bf16.mxu0 %v4919
    %4983 = vmatpush1.bf16.msra.mxu0 %v4918
    %4984 = vmatprep.subr.bf16.mxu0 %v4921
    %4985 = vmatpush1.bf16.msra.mxu0 %v4920
    %4986 = vmatprep.subr.bf16.mxu0 %v4923
    %4987 = vmatpush1.bf16.msra.mxu0 %v4922
    %4988 = vmatprep.subr.bf16.mxu0 %v4925
    %4989 = vmatpush1.bf16.msra.mxu0 %v4924
    %4990 = vmatprep.subr.bf16.mxu0 %v4927
    %4991 = vmatpush1.bf16.msra.mxu0 %v4926
    %4992 = vmatprep.subr.bf16.mxu0 %v4929
    %4993 = vmatpush1.bf16.msra.mxu0 %v4928
    %4994 = vmatprep.subr.bf16.mxu0 %v4931
    %4995 = vmatpush1.bf16.msra.mxu0 %v4930
    %4996 = vmatprep.subr.bf16.mxu0 %v4933
    %4997 = vmatpush1.bf16.msra.mxu0 %v4932
    %4998 = vmatprep.subr.bf16.mxu0 %v4935
    %4999 = vmatpush1.bf16.msra.mxu0 %v4934
    %5000 = vmatprep.subr.bf16.mxu0 %v4937
    %5001 = vmatpush1.bf16.msra.mxu0 %v4936
    %5002 = vmatprep.subr.bf16.mxu0 %v4939
    %5003 = vmatpush1.bf16.msra.mxu0 %v4938
    %5004 = vmatprep.subr.bf16.mxu0 %v4941
    %5005 = vmatpush1.bf16.msra.mxu0 %v4940
    %5006 = vmatprep.subr.bf16.mxu0 %v4943
    %5007 = vmatpush1.bf16.msra.mxu0 %v4942
    %5008 = vmatprep.subr.bf16.mxu0 %v4945
    %5009 = vmatpush1.bf16.msra.mxu0 %v4944
    %5010 = vmatprep.subr.bf16.mxu0 %v4947
    %5011 = vmatpush1.bf16.msra.mxu0 %v4946
    %5012 = vmatprep.mubr.bf16.mxu0 %v4755
    %5013 = vmatmul.mubr.bf16.gmra.mrb[0].mxu0 %v4754
    %v5014 = vpop.f32.mrb[0].mxu0
    %v5015 = vadd.f32 %v4813, %v5014
    %v5016 = vpop.f32.mrb[0].mxu0
    %v5017 = vadd.f32 %v4817, %v5016
    %v5018 = vpop.f32.mrb[0].mxu0
    %v5019 = vadd.f32 %v4813, %v5018
    %v5020 = vpop.f32.mrb[0].mxu0
    %v5021 = vadd.f32 %v4817, %v5020
    %5022 = vmatprep.mubr.bf16.mxu0 %v4757
    %5023 = vmatmul.mubr.bf16.gmra.mrb[0].mxu0 %v4756
    %v5024 = vpop.f32.mrb[0].mxu0
    %v5025 = vadd.f32 %v4813, %v5024
    %v5026 = vpop.f32.mrb[0].mxu0
    %v5027 = vadd.f32 %v4817, %v5026
    %v5028 = vpop.f32.mrb[0].mxu0
    %v5029 = vadd.f32 %v4813, %v5028
    %v5030 = vpop.f32.mrb[0].mxu0
    %v5031 = vadd.f32 %v4817, %v5030
    %5032 = vmatprep.mubr.bf16.mxu0 %v4759
    %5033 = vmatmul.mubr.bf16.gmra.mrb[0].mxu0 %v4758
    %v5034 = vpop.f32.mrb[0].mxu0
    %v5035 = vadd.f32 %v4813, %v5034
    %v5036 = vpop.f32.mrb[0].mxu0
    %v5037 = vadd.f32 %v4817, %v5036
    %v5038 = vpop.f32.mrb[0].mxu0
    %v5039 = vadd.f32 %v4813, %v5038
    %v5040 = vpop.f32.mrb[0].mxu0
    %v5041 = vadd.f32 %v4817, %v5040
    %5042 = vmatprep.mubr.bf16.mxu0 %v4761
    %5043 = vmatmul.mubr.bf16.gmra.mrb[0].mxu0 %v4760
    %v5044 = vpop.f32.mrb[0].mxu0
    %v5045 = vadd.f32 %v4813, %v5044
    %v5046 = vpop.f32.mrb[0].mxu0
    %v5047 = vadd.f32 %v4817, %v5046
    %v5048 = vpop.f32.mrb[0].mxu0
    %v5049 = vadd.f32 %v4813, %v5048
    %v5050 = vpop.f32.mrb[0].mxu0
    %v5051 = vadd.f32 %v4817, %v5050
    %5052 = vmatprep.mubr.bf16.mxu0 %v4763
    %5053 = vmatmul.mubr.bf16.gmra.mrb[0].mxu0 %v4762
    %v5054 = vpop.f32.mrb[0].mxu0
    %v5055 = vadd.f32 %v4813, %v5054
    %v5056 = vpop.f32.mrb[0].mxu0
    %v5057 = vadd.f32 %v4817, %v5056
    %v5058 = vpop.f32.mrb[0].mxu0
    %v5059 = vadd.f32 %v4813, %v5058
    %v5060 = vpop.f32.mrb[0].mxu0
    %v5061 = vadd.f32 %v4817, %v5060
    %5062 = vmatprep.mubr.bf16.mxu0 %v4765
    %5063 = vmatmul.mubr.bf16.gmra.mrb[0].mxu0 %v4764
    %v5064 = vpop.f32.mrb[0].mxu0
    %v5065 = vadd.f32 %v4813, %v5064
    %v5066 = vpop.f32.mrb[0].mxu0
    %v5067 = vadd.f32 %v4817, %v5066
    %v5068 = vpop.f32.mrb[0].mxu0
    %v5069 = vadd.f32 %v4813, %v5068
    %v5070 = vpop.f32.mrb[0].mxu0
    %v5071 = vadd.f32 %v4817, %v5070
    %5072 = vmatprep.mubr.bf16.mxu0 %v4767
    %5073 = vmatmul.mubr.bf16.gmra.mrb[0].mxu0 %v4766
    %v5074 = vpop.f32.mrb[0].mxu0
    %v5075 = vadd.f32 %v4813, %v5074
    %v5076 = vpop.f32.mrb[0].mxu0
    %v5077 = vadd.f32 %v4817, %v5076
    %v5078 = vpop.f32.mrb[0].mxu0
    %v5079 = vadd.f32 %v4813, %v5078
    %v5080 = vpop.f32.mrb[0].mxu0
    %v5081 = vadd.f32 %v4817, %v5080
    %5082 = vmatprep.mubr.bf16.mxu0 %v4769
    %5083 = vmatmul.mubr.bf16.gmra.mrb[0].mxu0 %v4768
    %v5084 = vpop.f32.mrb[0].mxu0
    %v5085 = vadd.f32 %v4813, %v5084
    %v5086 = vpop.f32.mrb[0].mxu0
    %v5087 = vadd.f32 %v4817, %v5086
    %v5088 = vpop.f32.mrb[0].mxu0
    %v5089 = vadd.f32 %v4813, %v5088
    %v5090 = vpop.f32.mrb[0].mxu0
    %v5091 = vadd.f32 %v4817, %v5090
    %5092 = vdwg.mxu0
    %v5093 = vmax.f32 %v5015, 0.0
    %v5094 = vmax.f32 %v5017, 0.0
    %v5095 = vmax.f32 %v5019, 0.0
    %v5096 = vmax.f32 %v5021, 0.0
    %v5097 = vmax.f32 %v5025, 0.0
    %v5098 = vmax.f32 %v5027, 0.0
    %v5099 = vmax.f32 %v5029, 0.0
    %v5100 = vmax.f32 %v5031, 0.0
    %v5101 = vmax.f32 %v5035, 0.0
    %v5102 = vmax.f32 %v5037, 0.0
    %v5103 = vmax.f32 %v5039, 0.0
    %v5104 = vmax.f32 %v5041, 0.0
    %v5105 = vmax.f32 %v5045, 0.0
    %v5106 = vmax.f32 %v5047, 0.0
    %v5107 = vmax.f32 %v5049, 0.0
    %v5108 = vmax.f32 %v5051, 0.0
    %v5109 = vmax.f32 %v5055, 0.0
    %v5110 = vmax.f32 %v5057, 0.0
    %v5111 = vmax.f32 %v5059, 0.0
    %v5112 = vmax.f32 %v5061, 0.0
    %v5113 = vmax.f32 %v5065, 0.0
    %v5114 = vmax.f32 %v5067, 0.0
    %v5115 = vmax.f32 %v5069, 0.0
    %v5116 = vmax.f32 %v5071, 0.0
    %v5117 = vmax.f32 %v5075, 0.0
    %v5118 = vmax.f32 %v5077, 0.0
    %v5119 = vmax.f32 %v5079, 0.0
    %v5120 = vmax.f32 %v5081, 0.0
    %v5121 = vmax.f32 %v5085, 0.0
    %v5122 = vmax.f32 %v5087, 0.0
    %v5123 = vmax.f32 %v5089, 0.0
    %v5124 = vmax.f32 %v5091, 0.0
    %v5125 = vadd.f32 %v5093, %v5095
    %v5126 = vadd.f32 %v5125, %v5097
    %v5127 = vadd.f32 %v5126, %v5099
    %v5128 = vadd.f32 %v5127, %v5101
    %v5129 = vadd.f32 %v5128, %v5103
    %v5130 = vadd.f32 %v5129, %v5105
    %v5131 = vadd.f32 %v5130, %v5107
    %v5132 = vadd.f32 %v5131, %v5109
    %v5133 = vadd.f32 %v5132, %v5111
    %v5134 = vadd.f32 %v5133, %v5113
    %v5135 = vadd.f32 %v5134, %v5115
    %v5136 = vadd.f32 %v5135, %v5117
    %v5137 = vadd.f32 %v5136, %v5119
    %v5138 = vadd.f32 %v5137, %v5121
    %v5139 = vadd.f32 %v5138, %v5123
    %v5140 = vrot.slane %v5139, 4
    %v5141 = vadd.f32 %v5139, %v5140
    %v5142 = vrot.slane %v5141, 2
    %v5143 = vadd.f32 %v5141, %v5142
    %v5144 = vrot.slane %v5143, 1
    %v5145 = vadd.f32 %v5143, %v5144
    %v5146 = vadd.f32 %v5094, %v5096
    %v5147 = vadd.f32 %v5146, %v5098
    %v5148 = vadd.f32 %v5147, %v5100
    %v5149 = vadd.f32 %v5148, %v5102
    %v5150 = vadd.f32 %v5149, %v5104
    %v5151 = vadd.f32 %v5150, %v5106
    %v5152 = vadd.f32 %v5151, %v5108
    %v5153 = vadd.f32 %v5152, %v5110
    %v5154 = vadd.f32 %v5153, %v5112
    %v5155 = vadd.f32 %v5154, %v5114
    %v5156 = vadd.f32 %v5155, %v5116
    %v5157 = vadd.f32 %v5156, %v5118
    %v5158 = vadd.f32 %v5157, %v5120
    %v5159 = vadd.f32 %v5158, %v5122
    %v5160 = vadd.f32 %v5159, %v5124
    %v5161 = vrot.slane %v5160, 4
    %v5162 = vadd.f32 %v5160, %v5161
    %v5163 = vrot.slane %v5162, 2
    %v5164 = vadd.f32 %v5162, %v5163
    %v5165 = vrot.slane %v5164, 1
    %v5166 = vadd.f32 %v5164, %v5165
    %v5167 = vmul.f32 %v5145, %v371
    %v5168 = vmul.f32 %v5166, %v371
    %v5169 = vmul.f32 %v5093, %v5093
    %v5170 = vmul.f32 %v5094, %v5094
    %v5171 = vmul.f32 %v5095, %v5095
    %v5172 = vmul.f32 %v5096, %v5096
    %v5173 = vmul.f32 %v5097, %v5097
    %v5174 = vmul.f32 %v5098, %v5098
    %v5175 = vmul.f32 %v5099, %v5099
    %v5176 = vmul.f32 %v5100, %v5100
    %v5177 = vmul.f32 %v5101, %v5101
    %v5178 = vmul.f32 %v5102, %v5102
    %v5179 = vmul.f32 %v5103, %v5103
    %v5180 = vmul.f32 %v5104, %v5104
    %v5181 = vmul.f32 %v5105, %v5105
    %v5182 = vmul.f32 %v5106, %v5106
    %v5183 = vmul.f32 %v5107, %v5107
    %v5184 = vmul.f32 %v5108, %v5108
    %v5185 = vmul.f32 %v5109, %v5109
    %v5186 = vmul.f32 %v5110, %v5110
    %v5187 = vmul.f32 %v5111, %v5111
    %v5188 = vmul.f32 %v5112, %v5112
    %v5189 = vmul.f32 %v5113, %v5113
    %v5190 = vmul.f32 %v5114, %v5114
    %v5191 = vmul.f32 %v5115, %v5115
    %v5192 = vmul.f32 %v5116, %v5116
    %v5193 = vmul.f32 %v5117, %v5117
    %v5194 = vmul.f32 %v5118, %v5118
    %v5195 = vmul.f32 %v5119, %v5119
    %v5196 = vmul.f32 %v5120, %v5120
    %v5197 = vmul.f32 %v5121, %v5121
    %v5198 = vmul.f32 %v5122, %v5122
    %v5199 = vmul.f32 %v5123, %v5123
    %v5200 = vmul.f32 %v5124, %v5124
    %v5201 = vadd.f32 %v5169, %v5171
    %v5202 = vadd.f32 %v5201, %v5173
    %v5203 = vadd.f32 %v5202, %v5175
    %v5204 = vadd.f32 %v5203, %v5177
    %v5205 = vadd.f32 %v5204, %v5179
    %v5206 = vadd.f32 %v5205, %v5181
    %v5207 = vadd.f32 %v5206, %v5183
    %v5208 = vadd.f32 %v5207, %v5185
    %v5209 = vadd.f32 %v5208, %v5187
    %v5210 = vadd.f32 %v5209, %v5189
    %v5211 = vadd.f32 %v5210, %v5191
    %v5212 = vadd.f32 %v5211, %v5193
    %v5213 = vadd.f32 %v5212, %v5195
    %v5214 = vadd.f32 %v5213, %v5197
    %v5215 = vadd.f32 %v5214, %v5199
    %v5216 = vrot.slane %v5215, 4
    %v5217 = vadd.f32 %v5215, %v5216
    %v5218 = vrot.slane %v5217, 2
    %v5219 = vadd.f32 %v5217, %v5218
    %v5220 = vrot.slane %v5219, 1
    %v5221 = vadd.f32 %v5219, %v5220
    %v5222 = vadd.f32 %v5170, %v5172
    %v5223 = vadd.f32 %v5222, %v5174
    %v5224 = vadd.f32 %v5223, %v5176
    %v5225 = vadd.f32 %v5224, %v5178
    %v5226 = vadd.f32 %v5225, %v5180
    %v5227 = vadd.f32 %v5226, %v5182
    %v5228 = vadd.f32 %v5227, %v5184
    %v5229 = vadd.f32 %v5228, %v5186
    %v5230 = vadd.f32 %v5229, %v5188
    %v5231 = vadd.f32 %v5230, %v5190
    %v5232 = vadd.f32 %v5231, %v5192
    %v5233 = vadd.f32 %v5232, %v5194
    %v5234 = vadd.f32 %v5233, %v5196
    %v5235 = vadd.f32 %v5234, %v5198
    %v5236 = vadd.f32 %v5235, %v5200
    %v5237 = vrot.slane %v5236, 4
    %v5238 = vadd.f32 %v5236, %v5237
    %v5239 = vrot.slane %v5238, 2
    %v5240 = vadd.f32 %v5238, %v5239
    %v5241 = vrot.slane %v5240, 1
    %v5242 = vadd.f32 %v5240, %v5241
    %v5243 = vmul.f32 %v5221, %v371
    %v5244 = vmul.f32 %v5242, %v371
    %v5245 = vmul.f32 %v5167, %v5167
    %v5246 = vmul.f32 %v5168, %v5168
    %v5247 = vsub.f32 %v5243, %v5245
    %v5248 = vsub.f32 %v5244, %v5246
    %v5249 = vmax.f32 %v5247, 0.0
    %v5250 = vmax.f32 %v5248, 0.0
    %v5251 = vadd.f32 %v5249, 1e-05
    %v5252 = vadd.f32 %v5250, 1e-05
    %v5253 = vrsqrt.pop %v5251
    %v5254 = vrsqrt.pop %v5252
    %v5257 = vcombine.low %v5253, %v5254
    %v5259 = vunpack.c.l.s4 1966171168
    %v5260 = vunpack.c.0.s8 %v5259
    %v5261 = vlaneseq
    %v5262 = vshrl.u32 %v5261, 7
    %v5263 = vsub.s32 %v5260, %v5262
    %v5264 = vrot.slane %v5257, %v5263
    %v5266 = vunpack.c.l.s4 1966171168
    %v5267 = vunpack.c.0.s8 %v5266
    %v5268 = vlaneseq
    %v5269 = vshrl.u32 %v5268, 7
    %v5270 = vsub.s32 %v5267, %v5269
    %v5271 = vrot.slane %v5264, %v5270
    %v5273 = vmul.f32 %v4806, %v5271
    %v5275 = vlaneseq
    %v5276 = vshrl.u32 %v5275, 7
    %v5277 = vsub.s32 0, %v5276
    %v5278 = vrot.slane %v5273, %v5277
    %v5279 = vlaneseq
    %v5280 = vshrl.u32 %v5279, 7
    %v5281 = vsub.s32 1, %v5280
    %v5282 = vrot.slane %v5273, %v5281
    %v5285 = vmul.f32 %v5167, %v5278
    %v5286 = vmul.f32 %v5168, %v5282
    %v5289 = vcombine.low %v5285, %v5286
    %v5291 = vunpack.c.l.s4 1966171168
    %v5292 = vunpack.c.0.s8 %v5291
    %v5293 = vlaneseq
    %v5294 = vshrl.u32 %v5293, 7
    %v5295 = vsub.s32 %v5292, %v5294
    %v5296 = vrot.slane %v5289, %v5295
    %v5298 = vunpack.c.l.s4 1966171168
    %v5299 = vunpack.c.0.s8 %v5298
    %v5300 = vlaneseq
    %v5301 = vshrl.u32 %v5300, 7
    %v5302 = vsub.s32 %v5299, %v5301
    %v5303 = vrot.slane %v5296, %v5302
    %v5305 = vsub.f32 %v4808, %v5303
    %v5306 = vmul.f32 %v5093, %v5278
    %v5307 = vmul.f32 %v5094, %v5282
    %v5308 = vmul.f32 %v5095, %v5278
    %v5309 = vmul.f32 %v5096, %v5282
    %v5310 = vmul.f32 %v5097, %v5278
    %v5311 = vmul.f32 %v5098, %v5282
    %v5312 = vmul.f32 %v5099, %v5278
    %v5313 = vmul.f32 %v5100, %v5282
    %v5314 = vmul.f32 %v5101, %v5278
    %v5315 = vmul.f32 %v5102, %v5282
    %v5316 = vmul.f32 %v5103, %v5278
    %v5317 = vmul.f32 %v5104, %v5282
    %v5318 = vmul.f32 %v5105, %v5278
    %v5319 = vmul.f32 %v5106, %v5282
    %v5320 = vmul.f32 %v5107, %v5278
    %v5321 = vmul.f32 %v5108, %v5282
    %v5322 = vmul.f32 %v5109, %v5278
    %v5323 = vmul.f32 %v5110, %v5282
    %v5324 = vmul.f32 %v5111, %v5278
    %v5325 = vmul.f32 %v5112, %v5282
    %v5326 = vmul.f32 %v5113, %v5278
    %v5327 = vmul.f32 %v5114, %v5282
    %v5328 = vmul.f32 %v5115, %v5278
    %v5329 = vmul.f32 %v5116, %v5282
    %v5330 = vmul.f32 %v5117, %v5278
    %v5331 = vmul.f32 %v5118, %v5282
    %v5332 = vmul.f32 %v5119, %v5278
    %v5333 = vmul.f32 %v5120, %v5282
    %v5334 = vmul.f32 %v5121, %v5278
    %v5335 = vmul.f32 %v5122, %v5282
    %v5336 = vmul.f32 %v5123, %v5278
    %v5337 = vmul.f32 %v5124, %v5282
    %v5339 = vlaneseq
    %v5340 = vshrl.u32 %v5339, 7
    %v5341 = vsub.s32 0, %v5340
    %v5342 = vrot.slane %v5305, %v5341
    %v5343 = vlaneseq
    %v5344 = vshrl.u32 %v5343, 7
    %v5345 = vsub.s32 1, %v5344
    %v5346 = vrot.slane %v5305, %v5345
    %v5349 = vadd.f32 %v5306, %v5342
    %v5350 = vadd.f32 %v5307, %v5346
    %v5351 = vadd.f32 %v5308, %v5342
    %v5352 = vadd.f32 %v5309, %v5346
    %v5353 = vadd.f32 %v5310, %v5342
    %v5354 = vadd.f32 %v5311, %v5346
    %v5355 = vadd.f32 %v5312, %v5342
    %v5356 = vadd.f32 %v5313, %v5346
    %v5357 = vadd.f32 %v5314, %v5342
    %v5358 = vadd.f32 %v5315, %v5346
    %v5359 = vadd.f32 %v5316, %v5342
    %v5360 = vadd.f32 %v5317, %v5346
    %v5361 = vadd.f32 %v5318, %v5342
    %v5362 = vadd.f32 %v5319, %v5346
    %v5363 = vadd.f32 %v5320, %v5342
    %v5364 = vadd.f32 %v5321, %v5346
    %v5365 = vadd.f32 %v5322, %v5342
    %v5366 = vadd.f32 %v5323, %v5346
    %v5367 = vadd.f32 %v5324, %v5342
    %v5368 = vadd.f32 %v5325, %v5346
    %v5369 = vadd.f32 %v5326, %v5342
    %v5370 = vadd.f32 %v5327, %v5346
    %v5371 = vadd.f32 %v5328, %v5342
    %v5372 = vadd.f32 %v5329, %v5346
    %v5373 = vadd.f32 %v5330, %v5342
    %v5374 = vadd.f32 %v5331, %v5346
    %v5375 = vadd.f32 %v5332, %v5342
    %v5376 = vadd.f32 %v5333, %v5346
    %v5377 = vadd.f32 %v5334, %v5342
    %v5378 = vadd.f32 %v5335, %v5346
    %v5379 = vadd.f32 %v5336, %v5342
    %v5380 = vadd.f32 %v5337, %v5346
    %v5381 = vpack.c.bf16 %v5351, %v5349
    %v5382 = vpack.c.bf16 %v5352, %v5350
    %v5383 = vpack.c.bf16 %v5355, %v5353
    %v5384 = vpack.c.bf16 %v5356, %v5354
    %v5385 = vpack.c.bf16 %v5359, %v5357
    %v5386 = vpack.c.bf16 %v5360, %v5358
    %v5387 = vpack.c.bf16 %v5363, %v5361
    %v5388 = vpack.c.bf16 %v5364, %v5362
    %v5389 = vpack.c.bf16 %v5367, %v5365
    %v5390 = vpack.c.bf16 %v5368, %v5366
    %v5391 = vpack.c.bf16 %v5371, %v5369
    %v5392 = vpack.c.bf16 %v5372, %v5370
    %v5393 = vpack.c.bf16 %v5375, %v5373
    %v5394 = vpack.c.bf16 %v5376, %v5374
    %v5395 = vpack.c.bf16 %v5379, %v5377
    %v5396 = vpack.c.bf16 %v5380, %v5378
    %s5397 = scalar_lea.vmem [#allocation4], 512
    %v5398 = vld [vmem:[%s5397] sm:$0xff]
    %v5399 = vld [vmem:[%s5397 + $0x8] sm:$0xff]
    %v5400 = vld [vmem:[%s5397 + $0x10] sm:$0xff]
    %v5401 = vld [vmem:[%s5397 + $0x18] sm:$0xff]
    %v5402 = vld [vmem:[%s5397 + $0x20] sm:$0xff]
    %v5403 = vld [vmem:[%s5397 + $0x28] sm:$0xff]
    %v5404 = vld [vmem:[%s5397 + $0x30] sm:$0xff]
    %v5405 = vld [vmem:[%s5397 + $0x38] sm:$0xff]
    %v5406 = vld [vmem:[%s5397 + $0x40] sm:$0xff]
    %v5407 = vld [vmem:[%s5397 + $0x48] sm:$0xff]
    %v5408 = vld [vmem:[%s5397 + $0x50] sm:$0xff]
    %v5409 = vld [vmem:[%s5397 + $0x58] sm:$0xff]
    %v5410 = vld [vmem:[%s5397 + $0x60] sm:$0xff]
    %v5411 = vld [vmem:[%s5397 + $0x68] sm:$0xff]
    %v5412 = vld [vmem:[%s5397 + $0x70] sm:$0xff]
    %v5413 = vld [vmem:[%s5397 + $0x78] sm:$0xff]
    %v5414 = vld [vmem:[%s5397 + $0x80] sm:$0xff]
    %v5415 = vld [vmem:[%s5397 + $0x88] sm:$0xff]
    %v5416 = vld [vmem:[%s5397 + $0x90] sm:$0xff]
    %v5417 = vld [vmem:[%s5397 + $0x98] sm:$0xff]
    %v5418 = vld [vmem:[%s5397 + $0xa0] sm:$0xff]
    %v5419 = vld [vmem:[%s5397 + $0xa8] sm:$0xff]
    %v5420 = vld [vmem:[%s5397 + $0xb0] sm:$0xff]
    %v5421 = vld [vmem:[%s5397 + $0xb8] sm:$0xff]
    %v5422 = vld [vmem:[%s5397 + $0xc0] sm:$0xff]
    %v5423 = vld [vmem:[%s5397 + $0xc8] sm:$0xff]
    %v5424 = vld [vmem:[%s5397 + $0xd0] sm:$0xff]
    %v5425 = vld [vmem:[%s5397 + $0xd8] sm:$0xff]
    %v5426 = vld [vmem:[%s5397 + $0xe0] sm:$0xff]
    %v5427 = vld [vmem:[%s5397 + $0xe8] sm:$0xff]
    %v5428 = vld [vmem:[%s5397 + $0xf0] sm:$0xff]
    %v5429 = vld [vmem:[%s5397 + $0xf8] sm:$0xff]
    %s5430 = scalar_lea.vmem %s15, 2
    %v5431 = vld [vmem:[%s5430] ss:$4 sm:$0x3]
    %s5432 = scalar_lea.vmem %s16, 3
    %v5433 = vld [vmem:[%s5432] ss:$8 sm:$0x3]
    %s5434 = scalar_lea.vmem %s17, 3
    %v5435 = vld [vmem:[%s5434] ss:$8 sm:$0x3]
    %v5437 = vlaneseq
    %v5438 = vshrl.u32 %v5437, 7
    %v5439 = vsub.s32 0, %v5438
    %v5440 = vrot.slane %v5431, %v5439
    %v5441 = vlaneseq
    %v5442 = vshrl.u32 %v5441, 7
    %v5443 = vsub.s32 1, %v5442
    %v5444 = vrot.slane %v5431, %v5443
    %v5479 = vunpack.c.l.b16 %v5398
    %v5480 = vunpack.c.h.b16 %v5398
    %v5481 = vunpack.c.l.b16 %v5399
    %v5482 = vunpack.c.h.b16 %v5399
    %v5483 = vunpack.c.l.b16 %v5400
    %v5484 = vunpack.c.h.b16 %v5400
    %v5485 = vunpack.c.l.b16 %v5401
    %v5486 = vunpack.c.h.b16 %v5401
    %v5487 = vunpack.c.l.b16 %v5402
    %v5488 = vunpack.c.h.b16 %v5402
    %v5489 = vunpack.c.l.b16 %v5403
    %v5490 = vunpack.c.h.b16 %v5403
    %v5491 = vunpack.c.l.b16 %v5404
    %v5492 = vunpack.c.h.b16 %v5404
    %v5493 = vunpack.c.l.b16 %v5405
    %v5494 = vunpack.c.h.b16 %v5405
    %v5495 = vunpack.c.l.b16 %v5406
    %v5496 = vunpack.c.h.b16 %v5406
    %v5497 = vunpack.c.l.b16 %v5407
    %v5498 = vunpack.c.h.b16 %v5407
    %v5499 = vunpack.c.l.b16 %v5408
    %v5500 = vunpack.c.h.b16 %v5408
    %v5501 = vunpack.c.l.b16 %v5409
    %v5502 = vunpack.c.h.b16 %v5409
    %v5503 = vunpack.c.l.b16 %v5410
    %v5504 = vunpack.c.h.b16 %v5410
    %v5505 = vunpack.c.l.b16 %v5411
    %v5506 = vunpack.c.h.b16 %v5411
    %v5507 = vunpack.c.l.b16 %v5412
    %v5508 = vunpack.c.h.b16 %v5412
    %v5509 = vunpack.c.l.b16 %v5413
    %v5510 = vunpack.c.h.b16 %v5413
    %v5511 = vunpack.c.l.b16 %v5414
    %v5512 = vunpack.c.h.b16 %v5414
    %v5513 = vunpack.c.l.b16 %v5415
    %v5514 = vunpack.c.h.b16 %v5415
    %v5515 = vunpack.c.l.b16 %v5416
    %v5516 = vunpack.c.h.b16 %v5416
    %v5517 = vunpack.c.l.b16 %v5417
    %v5518 = vunpack.c.h.b16 %v5417
    %v5519 = vunpack.c.l.b16 %v5418
    %v5520 = vunpack.c.h.b16 %v5418
    %v5521 = vunpack.c.l.b16 %v5419
    %v5522 = vunpack.c.h.b16 %v5419
    %v5523 = vunpack.c.l.b16 %v5420
    %v5524 = vunpack.c.h.b16 %v5420
    %v5525 = vunpack.c.l.b16 %v5421
    %v5526 = vunpack.c.h.b16 %v5421
    %v5527 = vunpack.c.l.b16 %v5422
    %v5528 = vunpack.c.h.b16 %v5422
    %v5529 = vunpack.c.l.b16 %v5423
    %v5530 = vunpack.c.h.b16 %v5423
    %v5531 = vunpack.c.l.b16 %v5424
    %v5532 = vunpack.c.h.b16 %v5424
    %v5533 = vunpack.c.l.b16 %v5425
    %v5534 = vunpack.c.h.b16 %v5425
    %v5535 = vunpack.c.l.b16 %v5426
    %v5536 = vunpack.c.h.b16 %v5426
    %v5537 = vunpack.c.l.b16 %v5427
    %v5538 = vunpack.c.h.b16 %v5427
    %v5539 = vunpack.c.l.b16 %v5428
    %v5540 = vunpack.c.h.b16 %v5428
    %v5541 = vunpack.c.l.b16 %v5429
    %v5542 = vunpack.c.h.b16 %v5429
    %v5543 = vpack.c.b16 %v5481, %v5479
    %v5544 = vpack.c.b16 %v5482, %v5480
    %v5545 = vpack.c.b16 %v5485, %v5483
    %v5546 = vpack.c.b16 %v5486, %v5484
    %v5547 = vpack.c.b16 %v5489, %v5487
    %v5548 = vpack.c.b16 %v5490, %v5488
    %v5549 = vpack.c.b16 %v5493, %v5491
    %v5550 = vpack.c.b16 %v5494, %v5492
    %v5551 = vpack.c.b16 %v5497, %v5495
    %v5552 = vpack.c.b16 %v5498, %v5496
    %v5553 = vpack.c.b16 %v5501, %v5499
    %v5554 = vpack.c.b16 %v5502, %v5500
    %v5555 = vpack.c.b16 %v5505, %v5503
    %v5556 = vpack.c.b16 %v5506, %v5504
    %v5557 = vpack.c.b16 %v5509, %v5507
    %v5558 = vpack.c.b16 %v5510, %v5508
    %v5559 = vpack.c.b16 %v5513, %v5511
    %v5560 = vpack.c.b16 %v5514, %v5512
    %v5561 = vpack.c.b16 %v5517, %v5515
    %v5562 = vpack.c.b16 %v5518, %v5516
    %v5563 = vpack.c.b16 %v5521, %v5519
    %v5564 = vpack.c.b16 %v5522, %v5520
    %v5565 = vpack.c.b16 %v5525, %v5523
    %v5566 = vpack.c.b16 %v5526, %v5524
    %v5567 = vpack.c.b16 %v5529, %v5527
    %v5568 = vpack.c.b16 %v5530, %v5528
    %v5569 = vpack.c.b16 %v5533, %v5531
    %v5570 = vpack.c.b16 %v5534, %v5532
    %v5571 = vpack.c.b16 %v5537, %v5535
    %v5572 = vpack.c.b16 %v5538, %v5536
    %v5573 = vpack.c.b16 %v5541, %v5539
    %v5574 = vpack.c.b16 %v5542, %v5540
    %5607 = vmatprep.subr.bf16.mxu0 %v5544
    %5608 = vmatpush1.bf16.msra.mxu0 %v5543
    %5609 = vmatprep.subr.bf16.mxu0 %v5546
    %5610 = vmatpush1.bf16.msra.mxu0 %v5545
    %5611 = vmatprep.subr.bf16.mxu0 %v5548
    %5612 = vmatpush1.bf16.msra.mxu0 %v5547
    %5613 = vmatprep.subr.bf16.mxu0 %v5550
    %5614 = vmatpush1.bf16.msra.mxu0 %v5549
    %5615 = vmatprep.subr.bf16.mxu0 %v5552
    %5616 = vmatpush1.bf16.msra.mxu0 %v5551
    %5617 = vmatprep.subr.bf16.mxu0 %v5554
    %5618 = vmatpush1.bf16.msra.mxu0 %v5553
    %5619 = vmatprep.subr.bf16.mxu0 %v5556
    %5620 = vmatpush1.bf16.msra.mxu0 %v5555
    %5621 = vmatprep.subr.bf16.mxu0 %v5558
    %5622 = vmatpush1.bf16.msra.mxu0 %v5557
    %5623 = vmatprep.subr.bf16.mxu0 %v5560
    %5624 = vmatpush1.bf16.msra.mxu0 %v5559
    %5625 = vmatprep.subr.bf16.mxu0 %v5562
    %5626 = vmatpush1.bf16.msra.mxu0 %v5561
    %5627 = vmatprep.subr.bf16.mxu0 %v5564
    %5628 = vmatpush1.bf16.msra.mxu0 %v5563
    %5629 = vmatprep.subr.bf16.mxu0 %v5566
    %5630 = vmatpush1.bf16.msra.mxu0 %v5565
    %5631 = vmatprep.subr.bf16.mxu0 %v5568
    %5632 = vmatpush1.bf16.msra.mxu0 %v5567
    %5633 = vmatprep.subr.bf16.mxu0 %v5570
    %5634 = vmatpush1.bf16.msra.mxu0 %v5569
    %5635 = vmatprep.subr.bf16.mxu0 %v5572
    %5636 = vmatpush1.bf16.msra.mxu0 %v5571
    %5637 = vmatprep.subr.bf16.mxu0 %v5574
    %5638 = vmatpush1.bf16.msra.mxu0 %v5573
    %5639 = vmatprep.mubr.bf16.mxu0 %v5382
    %5640 = vmatmul.mubr.bf16.gmra.mrb[0].mxu0 %v5381
    %v5641 = vpop.f32.mrb[0].mxu0
    %v5642 = vadd.f32 %v5440, %v5641
    %v5643 = vpop.f32.mrb[0].mxu0
    %v5644 = vadd.f32 %v5444, %v5643
    %v5645 = vpop.f32.mrb[0].mxu0
    %v5646 = vadd.f32 %v5440, %v5645
    %v5647 = vpop.f32.mrb[0].mxu0
    %v5648 = vadd.f32 %v5444, %v5647
    %5649 = vmatprep.mubr.bf16.mxu0 %v5384
    %5650 = vmatmul.mubr.bf16.gmra.mrb[0].mxu0 %v5383
    %v5651 = vpop.f32.mrb[0].mxu0
    %v5652 = vadd.f32 %v5440, %v5651
    %v5653 = vpop.f32.mrb[0].mxu0
    %v5654 = vadd.f32 %v5444, %v5653
    %v5655 = vpop.f32.mrb[0].mxu0
    %v5656 = vadd.f32 %v5440, %v5655
    %v5657 = vpop.f32.mrb[0].mxu0
    %v5658 = vadd.f32 %v5444, %v5657
    %5659 = vmatprep.mubr.bf16.mxu0 %v5386
    %5660 = vmatmul.mubr.bf16.gmra.mrb[0].mxu0 %v5385
    %v5661 = vpop.f32.mrb[0].mxu0
    %v5662 = vadd.f32 %v5440, %v5661
    %v5663 = vpop.f32.mrb[0].mxu0
    %v5664 = vadd.f32 %v5444, %v5663
    %v5665 = vpop.f32.mrb[0].mxu0
    %v5666 = vadd.f32 %v5440, %v5665
    %v5667 = vpop.f32.mrb[0].mxu0
    %v5668 = vadd.f32 %v5444, %v5667
    %5669 = vmatprep.mubr.bf16.mxu0 %v5388
    %5670 = vmatmul.mubr.bf16.gmra.mrb[0].mxu0 %v5387
    %v5671 = vpop.f32.mrb[0].mxu0
    %v5672 = vadd.f32 %v5440, %v5671
    %v5673 = vpop.f32.mrb[0].mxu0
    %v5674 = vadd.f32 %v5444, %v5673
    %v5675 = vpop.f32.mrb[0].mxu0
    %v5676 = vadd.f32 %v5440, %v5675
    %v5677 = vpop.f32.mrb[0].mxu0
    %v5678 = vadd.f32 %v5444, %v5677
    %5679 = vmatprep.mubr.bf16.mxu0 %v5390
    %5680 = vmatmul.mubr.bf16.gmra.mrb[0].mxu0 %v5389
    %v5681 = vpop.f32.mrb[0].mxu0
    %v5682 = vadd.f32 %v5440, %v5681
    %v5683 = vpop.f32.mrb[0].mxu0
    %v5684 = vadd.f32 %v5444, %v5683
    %v5685 = vpop.f32.mrb[0].mxu0
    %v5686 = vadd.f32 %v5440, %v5685
    %v5687 = vpop.f32.mrb[0].mxu0
    %v5688 = vadd.f32 %v5444, %v5687
    %5689 = vmatprep.mubr.bf16.mxu0 %v5392
    %5690 = vmatmul.mubr.bf16.gmra.mrb[0].mxu0 %v5391
    %v5691 = vpop.f32.mrb[0].mxu0
    %v5692 = vadd.f32 %v5440, %v5691
    %v5693 = vpop.f32.mrb[0].mxu0
    %v5694 = vadd.f32 %v5444, %v5693
    %v5695 = vpop.f32.mrb[0].mxu0
    %v5696 = vadd.f32 %v5440, %v5695
    %v5697 = vpop.f32.mrb[0].mxu0
    %v5698 = vadd.f32 %v5444, %v5697
    %5699 = vmatprep.mubr.bf16.mxu0 %v5394
    %5700 = vmatmul.mubr.bf16.gmra.mrb[0].mxu0 %v5393
    %v5701 = vpop.f32.mrb[0].mxu0
    %v5702 = vadd.f32 %v5440, %v5701
    %v5703 = vpop.f32.mrb[0].mxu0
    %v5704 = vadd.f32 %v5444, %v5703
    %v5705 = vpop.f32.mrb[0].mxu0
    %v5706 = vadd.f32 %v5440, %v5705
    %v5707 = vpop.f32.mrb[0].mxu0
    %v5708 = vadd.f32 %v5444, %v5707
    %5709 = vmatprep.mubr.bf16.mxu0 %v5396
    %5710 = vmatmul.mubr.bf16.gmra.mrb[0].mxu0 %v5395
    %v5711 = vpop.f32.mrb[0].mxu0
    %v5712 = vadd.f32 %v5440, %v5711
    %v5713 = vpop.f32.mrb[0].mxu0
    %v5714 = vadd.f32 %v5444, %v5713
    %v5715 = vpop.f32.mrb[0].mxu0
    %v5716 = vadd.f32 %v5440, %v5715
    %v5717 = vpop.f32.mrb[0].mxu0
    %v5718 = vadd.f32 %v5444, %v5717
    %5719 = vdwg.mxu0
    %v5720 = vmax.f32 %v5642, 0.0
    %v5721 = vmax.f32 %v5644, 0.0
    %v5722 = vmax.f32 %v5646, 0.0
    %v5723 = vmax.f32 %v5648, 0.0
    %v5724 = vmax.f32 %v5652, 0.0
    %v5725 = vmax.f32 %v5654, 0.0
    %v5726 = vmax.f32 %v5656, 0.0
    %v5727 = vmax.f32 %v5658, 0.0
    %v5728 = vmax.f32 %v5662, 0.0
    %v5729 = vmax.f32 %v5664, 0.0
    %v5730 = vmax.f32 %v5666, 0.0
    %v5731 = vmax.f32 %v5668, 0.0
    %v5732 = vmax.f32 %v5672, 0.0
    %v5733 = vmax.f32 %v5674, 0.0
    %v5734 = vmax.f32 %v5676, 0.0
    %v5735 = vmax.f32 %v5678, 0.0
    %v5736 = vmax.f32 %v5682, 0.0
    %v5737 = vmax.f32 %v5684, 0.0
    %v5738 = vmax.f32 %v5686, 0.0
    %v5739 = vmax.f32 %v5688, 0.0
    %v5740 = vmax.f32 %v5692, 0.0
    %v5741 = vmax.f32 %v5694, 0.0
    %v5742 = vmax.f32 %v5696, 0.0
    %v5743 = vmax.f32 %v5698, 0.0
    %v5744 = vmax.f32 %v5702, 0.0
    %v5745 = vmax.f32 %v5704, 0.0
    %v5746 = vmax.f32 %v5706, 0.0
    %v5747 = vmax.f32 %v5708, 0.0
    %v5748 = vmax.f32 %v5712, 0.0
    %v5749 = vmax.f32 %v5714, 0.0
    %v5750 = vmax.f32 %v5716, 0.0
    %v5751 = vmax.f32 %v5718, 0.0
    %v5752 = vadd.f32 %v5720, %v5722
    %v5753 = vadd.f32 %v5752, %v5724
    %v5754 = vadd.f32 %v5753, %v5726
    %v5755 = vadd.f32 %v5754, %v5728
    %v5756 = vadd.f32 %v5755, %v5730
    %v5757 = vadd.f32 %v5756, %v5732
    %v5758 = vadd.f32 %v5757, %v5734
    %v5759 = vadd.f32 %v5758, %v5736
    %v5760 = vadd.f32 %v5759, %v5738
    %v5761 = vadd.f32 %v5760, %v5740
    %v5762 = vadd.f32 %v5761, %v5742
    %v5763 = vadd.f32 %v5762, %v5744
    %v5764 = vadd.f32 %v5763, %v5746
    %v5765 = vadd.f32 %v5764, %v5748
    %v5766 = vadd.f32 %v5765, %v5750
    %v5767 = vrot.slane %v5766, 4
    %v5768 = vadd.f32 %v5766, %v5767
    %v5769 = vrot.slane %v5768, 2
    %v5770 = vadd.f32 %v5768, %v5769
    %v5771 = vrot.slane %v5770, 1
    %v5772 = vadd.f32 %v5770, %v5771
    %v5773 = vadd.f32 %v5721, %v5723
    %v5774 = vadd.f32 %v5773, %v5725
    %v5775 = vadd.f32 %v5774, %v5727
    %v5776 = vadd.f32 %v5775, %v5729
    %v5777 = vadd.f32 %v5776, %v5731
    %v5778 = vadd.f32 %v5777, %v5733
    %v5779 = vadd.f32 %v5778, %v5735
    %v5780 = vadd.f32 %v5779, %v5737
    %v5781 = vadd.f32 %v5780, %v5739
    %v5782 = vadd.f32 %v5781, %v5741
    %v5783 = vadd.f32 %v5782, %v5743
    %v5784 = vadd.f32 %v5783, %v5745
    %v5785 = vadd.f32 %v5784, %v5747
    %v5786 = vadd.f32 %v5785, %v5749
    %v5787 = vadd.f32 %v5786, %v5751
    %v5788 = vrot.slane %v5787, 4
    %v5789 = vadd.f32 %v5787, %v5788
    %v5790 = vrot.slane %v5789, 2
    %v5791 = vadd.f32 %v5789, %v5790
    %v5792 = vrot.slane %v5791, 1
    %v5793 = vadd.f32 %v5791, %v5792
    %v5794 = vmul.f32 %v5772, %v371
    %v5795 = vmul.f32 %v5793, %v371
    %v5796 = vmul.f32 %v5720, %v5720
    %v5797 = vmul.f32 %v5721, %v5721
    %v5798 = vmul.f32 %v5722, %v5722
    %v5799 = vmul.f32 %v5723, %v5723
    %v5800 = vmul.f32 %v5724, %v5724
    %v5801 = vmul.f32 %v5725, %v5725
    %v5802 = vmul.f32 %v5726, %v5726
    %v5803 = vmul.f32 %v5727, %v5727
    %v5804 = vmul.f32 %v5728, %v5728
    %v5805 = vmul.f32 %v5729, %v5729
    %v5806 = vmul.f32 %v5730, %v5730
    %v5807 = vmul.f32 %v5731, %v5731
    %v5808 = vmul.f32 %v5732, %v5732
    %v5809 = vmul.f32 %v5733, %v5733
    %v5810 = vmul.f32 %v5734, %v5734
    %v5811 = vmul.f32 %v5735, %v5735
    %v5812 = vmul.f32 %v5736, %v5736
    %v5813 = vmul.f32 %v5737, %v5737
    %v5814 = vmul.f32 %v5738, %v5738
    %v5815 = vmul.f32 %v5739, %v5739
    %v5816 = vmul.f32 %v5740, %v5740
    %v5817 = vmul.f32 %v5741, %v5741
    %v5818 = vmul.f32 %v5742, %v5742
    %v5819 = vmul.f32 %v5743, %v5743
    %v5820 = vmul.f32 %v5744, %v5744
    %v5821 = vmul.f32 %v5745, %v5745
    %v5822 = vmul.f32 %v5746, %v5746
    %v5823 = vmul.f32 %v5747, %v5747
    %v5824 = vmul.f32 %v5748, %v5748
    %v5825 = vmul.f32 %v5749, %v5749
    %v5826 = vmul.f32 %v5750, %v5750
    %v5827 = vmul.f32 %v5751, %v5751
    %v5828 = vadd.f32 %v5796, %v5798
    %v5829 = vadd.f32 %v5828, %v5800
    %v5830 = vadd.f32 %v5829, %v5802
    %v5831 = vadd.f32 %v5830, %v5804
    %v5832 = vadd.f32 %v5831, %v5806
    %v5833 = vadd.f32 %v5832, %v5808
    %v5834 = vadd.f32 %v5833, %v5810
    %v5835 = vadd.f32 %v5834, %v5812
    %v5836 = vadd.f32 %v5835, %v5814
    %v5837 = vadd.f32 %v5836, %v5816
    %v5838 = vadd.f32 %v5837, %v5818
    %v5839 = vadd.f32 %v5838, %v5820
    %v5840 = vadd.f32 %v5839, %v5822
    %v5841 = vadd.f32 %v5840, %v5824
    %v5842 = vadd.f32 %v5841, %v5826
    %v5843 = vrot.slane %v5842, 4
    %v5844 = vadd.f32 %v5842, %v5843
    %v5845 = vrot.slane %v5844, 2
    %v5846 = vadd.f32 %v5844, %v5845
    %v5847 = vrot.slane %v5846, 1
    %v5848 = vadd.f32 %v5846, %v5847
    %v5849 = vadd.f32 %v5797, %v5799
    %v5850 = vadd.f32 %v5849, %v5801
    %v5851 = vadd.f32 %v5850, %v5803
    %v5852 = vadd.f32 %v5851, %v5805
    %v5853 = vadd.f32 %v5852, %v5807
    %v5854 = vadd.f32 %v5853, %v5809
    %v5855 = vadd.f32 %v5854, %v5811
    %v5856 = vadd.f32 %v5855, %v5813
    %v5857 = vadd.f32 %v5856, %v5815
    %v5858 = vadd.f32 %v5857, %v5817
    %v5859 = vadd.f32 %v5858, %v5819
    %v5860 = vadd.f32 %v5859, %v5821
    %v5861 = vadd.f32 %v5860, %v5823
    %v5862 = vadd.f32 %v5861, %v5825
    %v5863 = vadd.f32 %v5862, %v5827
    %v5864 = vrot.slane %v5863, 4
    %v5865 = vadd.f32 %v5863, %v5864
    %v5866 = vrot.slane %v5865, 2
    %v5867 = vadd.f32 %v5865, %v5866
    %v5868 = vrot.slane %v5867, 1
    %v5869 = vadd.f32 %v5867, %v5868
    %v5870 = vmul.f32 %v5848, %v371
    %v5871 = vmul.f32 %v5869, %v371
    %v5872 = vmul.f32 %v5794, %v5794
    %v5873 = vmul.f32 %v5795, %v5795
    %v5874 = vsub.f32 %v5870, %v5872
    %v5875 = vsub.f32 %v5871, %v5873
    %v5876 = vmax.f32 %v5874, 0.0
    %v5877 = vmax.f32 %v5875, 0.0
    %v5878 = vadd.f32 %v5876, 1e-05
    %v5879 = vadd.f32 %v5877, 1e-05
    %v5880 = vrsqrt.pop %v5878
    %v5881 = vrsqrt.pop %v5879
    %v5884 = vcombine.low %v5880, %v5881
    %v5886 = vunpack.c.l.s4 1966171168
    %v5887 = vunpack.c.0.s8 %v5886
    %v5888 = vlaneseq
    %v5889 = vshrl.u32 %v5888, 7
    %v5890 = vsub.s32 %v5887, %v5889
    %v5891 = vrot.slane %v5884, %v5890
    %v5893 = vunpack.c.l.s4 1966171168
    %v5894 = vunpack.c.0.s8 %v5893
    %v5895 = vlaneseq
    %v5896 = vshrl.u32 %v5895, 7
    %v5897 = vsub.s32 %v5894, %v5896
    %v5898 = vrot.slane %v5891, %v5897
    %v5900 = vmul.f32 %v5433, %v5898
    %v5902 = vlaneseq
    %v5903 = vshrl.u32 %v5902, 7
    %v5904 = vsub.s32 0, %v5903
    %v5905 = vrot.slane %v5900, %v5904
    %v5906 = vlaneseq
    %v5907 = vshrl.u32 %v5906, 7
    %v5908 = vsub.s32 1, %v5907
    %v5909 = vrot.slane %v5900, %v5908
    %v5912 = vmul.f32 %v5794, %v5905
    %v5913 = vmul.f32 %v5795, %v5909
    %v5916 = vcombine.low %v5912, %v5913
    %v5918 = vunpack.c.l.s4 1966171168
    %v5919 = vunpack.c.0.s8 %v5918
    %v5920 = vlaneseq
    %v5921 = vshrl.u32 %v5920, 7
    %v5922 = vsub.s32 %v5919, %v5921
    %v5923 = vrot.slane %v5916, %v5922
    %v5925 = vunpack.c.l.s4 1966171168
    %v5926 = vunpack.c.0.s8 %v5925
    %v5927 = vlaneseq
    %v5928 = vshrl.u32 %v5927, 7
    %v5929 = vsub.s32 %v5926, %v5928
    %v5930 = vrot.slane %v5923, %v5929
    %v5932 = vsub.f32 %v5435, %v5930
    %v5933 = vmul.f32 %v5720, %v5905
    %v5934 = vmul.f32 %v5721, %v5909
    %v5935 = vmul.f32 %v5722, %v5905
    %v5936 = vmul.f32 %v5723, %v5909
    %v5937 = vmul.f32 %v5724, %v5905
    %v5938 = vmul.f32 %v5725, %v5909
    %v5939 = vmul.f32 %v5726, %v5905
    %v5940 = vmul.f32 %v5727, %v5909
    %v5941 = vmul.f32 %v5728, %v5905
    %v5942 = vmul.f32 %v5729, %v5909
    %v5943 = vmul.f32 %v5730, %v5905
    %v5944 = vmul.f32 %v5731, %v5909
    %v5945 = vmul.f32 %v5732, %v5905
    %v5946 = vmul.f32 %v5733, %v5909
    %v5947 = vmul.f32 %v5734, %v5905
    %v5948 = vmul.f32 %v5735, %v5909
    %v5949 = vmul.f32 %v5736, %v5905
    %v5950 = vmul.f32 %v5737, %v5909
    %v5951 = vmul.f32 %v5738, %v5905
    %v5952 = vmul.f32 %v5739, %v5909
    %v5953 = vmul.f32 %v5740, %v5905
    %v5954 = vmul.f32 %v5741, %v5909
    %v5955 = vmul.f32 %v5742, %v5905
    %v5956 = vmul.f32 %v5743, %v5909
    %v5957 = vmul.f32 %v5744, %v5905
    %v5958 = vmul.f32 %v5745, %v5909
    %v5959 = vmul.f32 %v5746, %v5905
    %v5960 = vmul.f32 %v5747, %v5909
    %v5961 = vmul.f32 %v5748, %v5905
    %v5962 = vmul.f32 %v5749, %v5909
    %v5963 = vmul.f32 %v5750, %v5905
    %v5964 = vmul.f32 %v5751, %v5909
    %v5966 = vlaneseq
    %v5967 = vshrl.u32 %v5966, 7
    %v5968 = vsub.s32 0, %v5967
    %v5969 = vrot.slane %v5932, %v5968
    %v5970 = vlaneseq
    %v5971 = vshrl.u32 %v5970, 7
    %v5972 = vsub.s32 1, %v5971
    %v5973 = vrot.slane %v5932, %v5972
    %v5976 = vadd.f32 %v5933, %v5969
    %v5977 = vadd.f32 %v5934, %v5973
    %v5978 = vadd.f32 %v5935, %v5969
    %v5979 = vadd.f32 %v5936, %v5973
    %v5980 = vadd.f32 %v5937, %v5969
    %v5981 = vadd.f32 %v5938, %v5973
    %v5982 = vadd.f32 %v5939, %v5969
    %v5983 = vadd.f32 %v5940, %v5973
    %v5984 = vadd.f32 %v5941, %v5969
    %v5985 = vadd.f32 %v5942, %v5973
    %v5986 = vadd.f32 %v5943, %v5969
    %v5987 = vadd.f32 %v5944, %v5973
    %v5988 = vadd.f32 %v5945, %v5969
    %v5989 = vadd.f32 %v5946, %v5973
    %v5990 = vadd.f32 %v5947, %v5969
    %v5991 = vadd.f32 %v5948, %v5973
    %v5992 = vadd.f32 %v5949, %v5969
    %v5993 = vadd.f32 %v5950, %v5973
    %v5994 = vadd.f32 %v5951, %v5969
    %v5995 = vadd.f32 %v5952, %v5973
    %v5996 = vadd.f32 %v5953, %v5969
    %v5997 = vadd.f32 %v5954, %v5973
    %v5998 = vadd.f32 %v5955, %v5969
    %v5999 = vadd.f32 %v5956, %v5973
    %v6000 = vadd.f32 %v5957, %v5969
    %v6001 = vadd.f32 %v5958, %v5973
    %v6002 = vadd.f32 %v5959, %v5969
    %v6003 = vadd.f32 %v5960, %v5973
    %v6004 = vadd.f32 %v5961, %v5969
    %v6005 = vadd.f32 %v5962, %v5973
    %v6006 = vadd.f32 %v5963, %v5969
    %v6007 = vadd.f32 %v5964, %v5973
    %v6008 = vpack.c.bf16 %v5978, %v5976
    %v6009 = vpack.c.bf16 %v5979, %v5977
    %v6010 = vpack.c.bf16 %v5982, %v5980
    %v6011 = vpack.c.bf16 %v5983, %v5981
    %v6012 = vpack.c.bf16 %v5986, %v5984
    %v6013 = vpack.c.bf16 %v5987, %v5985
    %v6014 = vpack.c.bf16 %v5990, %v5988
    %v6015 = vpack.c.bf16 %v5991, %v5989
    %v6016 = vpack.c.bf16 %v5994, %v5992
    %v6017 = vpack.c.bf16 %v5995, %v5993
    %v6018 = vpack.c.bf16 %v5998, %v5996
    %v6019 = vpack.c.bf16 %v5999, %v5997
    %v6020 = vpack.c.bf16 %v6002, %v6000
    %v6021 = vpack.c.bf16 %v6003, %v6001
    %v6022 = vpack.c.bf16 %v6006, %v6004
    %v6023 = vpack.c.bf16 %v6007, %v6005
    %s6024 = scalar_lea.vmem [#allocation4], 768
    %v6025 = vld [vmem:[%s6024] sm:$0xff]
    %v6026 = vld [vmem:[%s6024 + $0x8] sm:$0xff]
    %v6027 = vld [vmem:[%s6024 + $0x10] sm:$0xff]
    %v6028 = vld [vmem:[%s6024 + $0x18] sm:$0xff]
    %v6029 = vld [vmem:[%s6024 + $0x20] sm:$0xff]
    %v6030 = vld [vmem:[%s6024 + $0x28] sm:$0xff]
    %v6031 = vld [vmem:[%s6024 + $0x30] sm:$0xff]
    %v6032 = vld [vmem:[%s6024 + $0x38] sm:$0xff]
    %v6033 = vld [vmem:[%s6024 + $0x40] sm:$0xff]
    %v6034 = vld [vmem:[%s6024 + $0x48] sm:$0xff]
    %v6035 = vld [vmem:[%s6024 + $0x50] sm:$0xff]
    %v6036 = vld [vmem:[%s6024 + $0x58] sm:$0xff]
    %v6037 = vld [vmem:[%s6024 + $0x60] sm:$0xff]
    %v6038 = vld [vmem:[%s6024 + $0x68] sm:$0xff]
    %v6039 = vld [vmem:[%s6024 + $0x70] sm:$0xff]
    %v6040 = vld [vmem:[%s6024 + $0x78] sm:$0xff]
    %v6041 = vld [vmem:[%s6024 + $0x80] sm:$0xff]
    %v6042 = vld [vmem:[%s6024 + $0x88] sm:$0xff]
    %v6043 = vld [vmem:[%s6024 + $0x90] sm:$0xff]
    %v6044 = vld [vmem:[%s6024 + $0x98] sm:$0xff]
    %v6045 = vld [vmem:[%s6024 + $0xa0] sm:$0xff]
    %v6046 = vld [vmem:[%s6024 + $0xa8] sm:$0xff]
    %v6047 = vld [vmem:[%s6024 + $0xb0] sm:$0xff]
    %v6048 = vld [vmem:[%s6024 + $0xb8] sm:$0xff]
    %v6049 = vld [vmem:[%s6024 + $0xc0] sm:$0xff]
    %v6050 = vld [vmem:[%s6024 + $0xc8] sm:$0xff]
    %v6051 = vld [vmem:[%s6024 + $0xd0] sm:$0xff]
    %v6052 = vld [vmem:[%s6024 + $0xd8] sm:$0xff]
    %v6053 = vld [vmem:[%s6024 + $0xe0] sm:$0xff]
    %v6054 = vld [vmem:[%s6024 + $0xe8] sm:$0xff]
    %v6055 = vld [vmem:[%s6024 + $0xf0] sm:$0xff]
    %v6056 = vld [vmem:[%s6024 + $0xf8] sm:$0xff]
    %s6057 = scalar_lea.vmem %s15, 3
    %v6058 = vld [vmem:[%s6057] ss:$4 sm:$0x3]
    %s6059 = scalar_lea.vmem %s16, 4
    %v6060 = vld [vmem:[%s6059] ss:$8 sm:$0x3]
    %s6061 = scalar_lea.vmem %s17, 4
    %v6062 = vld [vmem:[%s6061] ss:$8 sm:$0x3]
    %v6064 = vlaneseq
    %v6065 = vshrl.u32 %v6064, 7
    %v6066 = vsub.s32 0, %v6065
    %v6067 = vrot.slane %v6058, %v6066
    %v6068 = vlaneseq
    %v6069 = vshrl.u32 %v6068, 7
    %v6070 = vsub.s32 1, %v6069
    %v6071 = vrot.slane %v6058, %v6070
    %v6106 = vunpack.c.l.b16 %v6025
    %v6107 = vunpack.c.h.b16 %v6025
    %v6108 = vunpack.c.l.b16 %v6026
    %v6109 = vunpack.c.h.b16 %v6026
    %v6110 = vunpack.c.l.b16 %v6027
    %v6111 = vunpack.c.h.b16 %v6027
    %v6112 = vunpack.c.l.b16 %v6028
    %v6113 = vunpack.c.h.b16 %v6028
    %v6114 = vunpack.c.l.b16 %v6029
    %v6115 = vunpack.c.h.b16 %v6029
    %v6116 = vunpack.c.l.b16 %v6030
    %v6117 = vunpack.c.h.b16 %v6030
    %v6118 = vunpack.c.l.b16 %v6031
    %v6119 = vunpack.c.h.b16 %v6031
    %v6120 = vunpack.c.l.b16 %v6032
    %v6121 = vunpack.c.h.b16 %v6032
    %v6122 = vunpack.c.l.b16 %v6033
    %v6123 = vunpack.c.h.b16 %v6033
    %v6124 = vunpack.c.l.b16 %v6034
    %v6125 = vunpack.c.h.b16 %v6034
    %v6126 = vunpack.c.l.b16 %v6035
    %v6127 = vunpack.c.h.b16 %v6035
    %v6128 = vunpack.c.l.b16 %v6036
    %v6129 = vunpack.c.h.b16 %v6036
    %v6130 = vunpack.c.l.b16 %v6037
    %v6131 = vunpack.c.h.b16 %v6037
    %v6132 = vunpack.c.l.b16 %v6038
    %v6133 = vunpack.c.h.b16 %v6038
    %v6134 = vunpack.c.l.b16 %v6039
    %v6135 = vunpack.c.h.b16 %v6039
    %v6136 = vunpack.c.l.b16 %v6040
    %v6137 = vunpack.c.h.b16 %v6040
    %v6138 = vunpack.c.l.b16 %v6041
    %v6139 = vunpack.c.h.b16 %v6041
    %v6140 = vunpack.c.l.b16 %v6042
    %v6141 = vunpack.c.h.b16 %v6042
    %v6142 = vunpack.c.l.b16 %v6043
    %v6143 = vunpack.c.h.b16 %v6043
    %v6144 = vunpack.c.l.b16 %v6044
    %v6145 = vunpack.c.h.b16 %v6044
    %v6146 = vunpack.c.l.b16 %v6045
    %v6147 = vunpack.c.h.b16 %v6045
    %v6148 = vunpack.c.l.b16 %v6046
    %v6149 = vunpack.c.h.b16 %v6046
    %v6150 = vunpack.c.l.b16 %v6047
    %v6151 = vunpack.c.h.b16 %v6047
    %v6152 = vunpack.c.l.b16 %v6048
    %v6153 = vunpack.c.h.b16 %v6048
    %v6154 = vunpack.c.l.b16 %v6049
    %v6155 = vunpack.c.h.b16 %v6049
    %v6156 = vunpack.c.l.b16 %v6050
    %v6157 = vunpack.c.h.b16 %v6050
    %v6158 = vunpack.c.l.b16 %v6051
    %v6159 = vunpack.c.h.b16 %v6051
    %v6160 = vunpack.c.l.b16 %v6052
    %v6161 = vunpack.c.h.b16 %v6052
    %v6162 = vunpack.c.l.b16 %v6053
    %v6163 = vunpack.c.h.b16 %v6053
    %v6164 = vunpack.c.l.b16 %v6054
    %v6165 = vunpack.c.h.b16 %v6054
    %v6166 = vunpack.c.l.b16 %v6055
    %v6167 = vunpack.c.h.b16 %v6055
    %v6168 = vunpack.c.l.b16 %v6056
    %v6169 = vunpack.c.h.b16 %v6056
    %v6170 = vpack.c.b16 %v6108, %v6106
    %v6171 = vpack.c.b16 %v6109, %v6107
    %v6172 = vpack.c.b16 %v6112, %v6110
    %v6173 = vpack.c.b16 %v6113, %v6111
    %v6174 = vpack.c.b16 %v6116, %v6114
    %v6175 = vpack.c.b16 %v6117, %v6115
    %v6176 = vpack.c.b16 %v6120, %v6118
    %v6177 = vpack.c.b16 %v6121, %v6119
    %v6178 = vpack.c.b16 %v6124, %v6122
    %v6179 = vpack.c.b16 %v6125, %v6123
    %v6180 = vpack.c.b16 %v6128, %v6126
    %v6181 = vpack.c.b16 %v6129, %v6127
    %v6182 = vpack.c.b16 %v6132, %v6130
    %v6183 = vpack.c.b16 %v6133, %v6131
    %v6184 = vpack.c.b16 %v6136, %v6134
    %v6185 = vpack.c.b16 %v6137, %v6135
    %v6186 = vpack.c.b16 %v6140, %v6138
    %v6187 = vpack.c.b16 %v6141, %v6139
    %v6188 = vpack.c.b16 %v6144, %v6142
    %v6189 = vpack.c.b16 %v6145, %v6143
    %v6190 = vpack.c.b16 %v6148, %v6146
    %v6191 = vpack.c.b16 %v6149, %v6147
    %v6192 = vpack.c.b16 %v6152, %v6150
    %v6193 = vpack.c.b16 %v6153, %v6151
    %v6194 = vpack.c.b16 %v6156, %v6154
    %v6195 = vpack.c.b16 %v6157, %v6155
    %v6196 = vpack.c.b16 %v6160, %v6158
    %v6197 = vpack.c.b16 %v6161, %v6159
    %v6198 = vpack.c.b16 %v6164, %v6162
    %v6199 = vpack.c.b16 %v6165, %v6163
    %v6200 = vpack.c.b16 %v6168, %v6166
    %v6201 = vpack.c.b16 %v6169, %v6167
    %6234 = vmatprep.subr.bf16.mxu0 %v6171
    %6235 = vmatpush1.bf16.msra.mxu0 %v6170
    %6236 = vmatprep.subr.bf16.mxu0 %v6173
    %6237 = vmatpush1.bf16.msra.mxu0 %v6172
    %6238 = vmatprep.subr.bf16.mxu0 %v6175
    %6239 = vmatpush1.bf16.msra.mxu0 %v6174
    %6240 = vmatprep.subr.bf16.mxu0 %v6177
    %6241 = vmatpush1.bf16.msra.mxu0 %v6176
    %6242 = vmatprep.subr.bf16.mxu0 %v6179
    %6243 = vmatpush1.bf16.msra.mxu0 %v6178
    %6244 = vmatprep.subr.bf16.mxu0 %v6181
    %6245 = vmatpush1.bf16.msra.mxu0 %v6180
    %6246 = vmatprep.subr.bf16.mxu0 %v6183
    %6247 = vmatpush1.bf16.msra.mxu0 %v6182
    %6248 = vmatprep.subr.bf16.mxu0 %v6185
    %6249 = vmatpush1.bf16.msra.mxu0 %v6184
    %6250 = vmatprep.subr.bf16.mxu0 %v6187
    %6251 = vmatpush1.bf16.msra.mxu0 %v6186
    %6252 = vmatprep.subr.bf16.mxu0 %v6189
    %6253 = vmatpush1.bf16.msra.mxu0 %v6188
    %6254 = vmatprep.subr.bf16.mxu0 %v6191
    %6255 = vmatpush1.bf16.msra.mxu0 %v6190
    %6256 = vmatprep.subr.bf16.mxu0 %v6193
    %6257 = vmatpush1.bf16.msra.mxu0 %v6192
    %6258 = vmatprep.subr.bf16.mxu0 %v6195
    %6259 = vmatpush1.bf16.msra.mxu0 %v6194
    %6260 = vmatprep.subr.bf16.mxu0 %v6197
    %6261 = vmatpush1.bf16.msra.mxu0 %v6196
    %6262 = vmatprep.subr.bf16.mxu0 %v6199
    %6263 = vmatpush1.bf16.msra.mxu0 %v6198
    %6264 = vmatprep.subr.bf16.mxu0 %v6201
    %6265 = vmatpush1.bf16.msra.mxu0 %v6200
    %6266 = vmatprep.mubr.bf16.mxu0 %v6009
    %6267 = vmatmul.mubr.bf16.gmra.mrb[0].mxu0 %v6008
    %v6268 = vpop.f32.mrb[0].mxu0
    %v6269 = vadd.f32 %v6067, %v6268
    %v6270 = vpop.f32.mrb[0].mxu0
    %v6271 = vadd.f32 %v6071, %v6270
    %v6272 = vpop.f32.mrb[0].mxu0
    %v6273 = vadd.f32 %v6067, %v6272
    %v6274 = vpop.f32.mrb[0].mxu0
    %v6275 = vadd.f32 %v6071, %v6274
    %6276 = vmatprep.mubr.bf16.mxu0 %v6011
    %6277 = vmatmul.mubr.bf16.gmra.mrb[0].mxu0 %v6010
    %v6278 = vpop.f32.mrb[0].mxu0
    %v6279 = vadd.f32 %v6067, %v6278
    %v6280 = vpop.f32.mrb[0].mxu0
    %v6281 = vadd.f32 %v6071, %v6280
    %v6282 = vpop.f32.mrb[0].mxu0
    %v6283 = vadd.f32 %v6067, %v6282
    %v6284 = vpop.f32.mrb[0].mxu0
    %v6285 = vadd.f32 %v6071, %v6284
    %6286 = vmatprep.mubr.bf16.mxu0 %v6013
    %6287 = vmatmul.mubr.bf16.gmra.mrb[0].mxu0 %v6012
    %v6288 = vpop.f32.mrb[0].mxu0
    %v6289 = vadd.f32 %v6067, %v6288
    %v6290 = vpop.f32.mrb[0].mxu0
    %v6291 = vadd.f32 %v6071, %v6290
    %v6292 = vpop.f32.mrb[0].mxu0
    %v6293 = vadd.f32 %v6067, %v6292
    %v6294 = vpop.f32.mrb[0].mxu0
    %v6295 = vadd.f32 %v6071, %v6294
    %6296 = vmatprep.mubr.bf16.mxu0 %v6015
    %6297 = vmatmul.mubr.bf16.gmra.mrb[0].mxu0 %v6014
    %v6298 = vpop.f32.mrb[0].mxu0
    %v6299 = vadd.f32 %v6067, %v6298
    %v6300 = vpop.f32.mrb[0].mxu0
    %v6301 = vadd.f32 %v6071, %v6300
    %v6302 = vpop.f32.mrb[0].mxu0
    %v6303 = vadd.f32 %v6067, %v6302
    %v6304 = vpop.f32.mrb[0].mxu0
    %v6305 = vadd.f32 %v6071, %v6304
    %6306 = vmatprep.mubr.bf16.mxu0 %v6017
    %6307 = vmatmul.mubr.bf16.gmra.mrb[0].mxu0 %v6016
    %v6308 = vpop.f32.mrb[0].mxu0
    %v6309 = vadd.f32 %v6067, %v6308
    %v6310 = vpop.f32.mrb[0].mxu0
    %v6311 = vadd.f32 %v6071, %v6310
    %v6312 = vpop.f32.mrb[0].mxu0
    %v6313 = vadd.f32 %v6067, %v6312
    %v6314 = vpop.f32.mrb[0].mxu0
    %v6315 = vadd.f32 %v6071, %v6314
    %6316 = vmatprep.mubr.bf16.mxu0 %v6019
    %6317 = vmatmul.mubr.bf16.gmra.mrb[0].mxu0 %v6018
    %v6318 = vpop.f32.mrb[0].mxu0
    %v6319 = vadd.f32 %v6067, %v6318
    %v6320 = vpop.f32.mrb[0].mxu0
    %v6321 = vadd.f32 %v6071, %v6320
    %v6322 = vpop.f32.mrb[0].mxu0
    %v6323 = vadd.f32 %v6067, %v6322
    %v6324 = vpop.f32.mrb[0].mxu0
    %v6325 = vadd.f32 %v6071, %v6324
    %6326 = vmatprep.mubr.bf16.mxu0 %v6021
    %6327 = vmatmul.mubr.bf16.gmra.mrb[0].mxu0 %v6020
    %v6328 = vpop.f32.mrb[0].mxu0
    %v6329 = vadd.f32 %v6067, %v6328
    %v6330 = vpop.f32.mrb[0].mxu0
    %v6331 = vadd.f32 %v6071, %v6330
    %v6332 = vpop.f32.mrb[0].mxu0
    %v6333 = vadd.f32 %v6067, %v6332
    %v6334 = vpop.f32.mrb[0].mxu0
    %v6335 = vadd.f32 %v6071, %v6334
    %6336 = vmatprep.mubr.bf16.mxu0 %v6023
    %6337 = vmatmul.mubr.bf16.gmra.mrb[0].mxu0 %v6022
    %v6338 = vpop.f32.mrb[0].mxu0
    %v6339 = vadd.f32 %v6067, %v6338
    %v6340 = vpop.f32.mrb[0].mxu0
    %v6341 = vadd.f32 %v6071, %v6340
    %v6342 = vpop.f32.mrb[0].mxu0
    %v6343 = vadd.f32 %v6067, %v6342
    %v6344 = vpop.f32.mrb[0].mxu0
    %v6345 = vadd.f32 %v6071, %v6344
    %6346 = vdwg.mxu0
    %v6347 = vmax.f32 %v6269, 0.0
    %v6348 = vmax.f32 %v6271, 0.0
    %v6349 = vmax.f32 %v6273, 0.0
    %v6350 = vmax.f32 %v6275, 0.0
    %v6351 = vmax.f32 %v6279, 0.0
    %v6352 = vmax.f32 %v6281, 0.0
    %v6353 = vmax.f32 %v6283, 0.0
    %v6354 = vmax.f32 %v6285, 0.0
    %v6355 = vmax.f32 %v6289, 0.0
    %v6356 = vmax.f32 %v6291, 0.0
    %v6357 = vmax.f32 %v6293, 0.0
    %v6358 = vmax.f32 %v6295, 0.0
    %v6359 = vmax.f32 %v6299, 0.0
    %v6360 = vmax.f32 %v6301, 0.0
    %v6361 = vmax.f32 %v6303, 0.0
    %v6362 = vmax.f32 %v6305, 0.0
    %v6363 = vmax.f32 %v6309, 0.0
    %v6364 = vmax.f32 %v6311, 0.0
    %v6365 = vmax.f32 %v6313, 0.0
    %v6366 = vmax.f32 %v6315, 0.0
    %v6367 = vmax.f32 %v6319, 0.0
    %v6368 = vmax.f32 %v6321, 0.0
    %v6369 = vmax.f32 %v6323, 0.0
    %v6370 = vmax.f32 %v6325, 0.0
    %v6371 = vmax.f32 %v6329, 0.0
    %v6372 = vmax.f32 %v6331, 0.0
    %v6373 = vmax.f32 %v6333, 0.0
    %v6374 = vmax.f32 %v6335, 0.0
    %v6375 = vmax.f32 %v6339, 0.0
    %v6376 = vmax.f32 %v6341, 0.0
    %v6377 = vmax.f32 %v6343, 0.0
    %v6378 = vmax.f32 %v6345, 0.0
    %v6379 = vadd.f32 %v6347, %v6349
    %v6380 = vadd.f32 %v6379, %v6351
    %v6381 = vadd.f32 %v6380, %v6353
    %v6382 = vadd.f32 %v6381, %v6355
    %v6383 = vadd.f32 %v6382, %v6357
    %v6384 = vadd.f32 %v6383, %v6359
    %v6385 = vadd.f32 %v6384, %v6361
    %v6386 = vadd.f32 %v6385, %v6363
    %v6387 = vadd.f32 %v6386, %v6365
    %v6388 = vadd.f32 %v6387, %v6367
    %v6389 = vadd.f32 %v6388, %v6369
    %v6390 = vadd.f32 %v6389, %v6371
    %v6391 = vadd.f32 %v6390, %v6373
    %v6392 = vadd.f32 %v6391, %v6375
    %v6393 = vadd.f32 %v6392, %v6377
    %v6394 = vrot.slane %v6393, 4
    %v6395 = vadd.f32 %v6393, %v6394
    %v6396 = vrot.slane %v6395, 2
    %v6397 = vadd.f32 %v6395, %v6396
    %v6398 = vrot.slane %v6397, 1
    %v6399 = vadd.f32 %v6397, %v6398
    %v6400 = vadd.f32 %v6348, %v6350
    %v6401 = vadd.f32 %v6400, %v6352
    %v6402 = vadd.f32 %v6401, %v6354
    %v6403 = vadd.f32 %v6402, %v6356
    %v6404 = vadd.f32 %v6403, %v6358
    %v6405 = vadd.f32 %v6404, %v6360
    %v6406 = vadd.f32 %v6405, %v6362
    %v6407 = vadd.f32 %v6406, %v6364
    %v6408 = vadd.f32 %v6407, %v6366
    %v6409 = vadd.f32 %v6408, %v6368
    %v6410 = vadd.f32 %v6409, %v6370
    %v6411 = vadd.f32 %v6410, %v6372
    %v6412 = vadd.f32 %v6411, %v6374
    %v6413 = vadd.f32 %v6412, %v6376
    %v6414 = vadd.f32 %v6413, %v6378
    %v6415 = vrot.slane %v6414, 4
    %v6416 = vadd.f32 %v6414, %v6415
    %v6417 = vrot.slane %v6416, 2
    %v6418 = vadd.f32 %v6416, %v6417
    %v6419 = vrot.slane %v6418, 1
    %v6420 = vadd.f32 %v6418, %v6419
    %v6421 = vmul.f32 %v6399, %v371
    %v6422 = vmul.f32 %v6420, %v371
    %v6423 = vmul.f32 %v6347, %v6347
    %v6424 = vmul.f32 %v6348, %v6348
    %v6425 = vmul.f32 %v6349, %v6349
    %v6426 = vmul.f32 %v6350, %v6350
    %v6427 = vmul.f32 %v6351, %v6351
    %v6428 = vmul.f32 %v6352, %v6352
    %v6429 = vmul.f32 %v6353, %v6353
    %v6430 = vmul.f32 %v6354, %v6354
    %v6431 = vmul.f32 %v6355, %v6355
    %v6432 = vmul.f32 %v6356, %v6356
    %v6433 = vmul.f32 %v6357, %v6357
    %v6434 = vmul.f32 %v6358, %v6358
    %v6435 = vmul.f32 %v6359, %v6359
    %v6436 = vmul.f32 %v6360, %v6360
    %v6437 = vmul.f32 %v6361, %v6361
    %v6438 = vmul.f32 %v6362, %v6362
    %v6439 = vmul.f32 %v6363, %v6363
    %v6440 = vmul.f32 %v6364, %v6364
    %v6441 = vmul.f32 %v6365, %v6365
    %v6442 = vmul.f32 %v6366, %v6366
    %v6443 = vmul.f32 %v6367, %v6367
    %v6444 = vmul.f32 %v6368, %v6368
    %v6445 = vmul.f32 %v6369, %v6369
    %v6446 = vmul.f32 %v6370, %v6370
    %v6447 = vmul.f32 %v6371, %v6371
    %v6448 = vmul.f32 %v6372, %v6372
    %v6449 = vmul.f32 %v6373, %v6373
    %v6450 = vmul.f32 %v6374, %v6374
    %v6451 = vmul.f32 %v6375, %v6375
    %v6452 = vmul.f32 %v6376, %v6376
    %v6453 = vmul.f32 %v6377, %v6377
    %v6454 = vmul.f32 %v6378, %v6378
    %v6455 = vadd.f32 %v6423, %v6425
    %v6456 = vadd.f32 %v6455, %v6427
    %v6457 = vadd.f32 %v6456, %v6429
    %v6458 = vadd.f32 %v6457, %v6431
    %v6459 = vadd.f32 %v6458, %v6433
    %v6460 = vadd.f32 %v6459, %v6435
    %v6461 = vadd.f32 %v6460, %v6437
    %v6462 = vadd.f32 %v6461, %v6439
    %v6463 = vadd.f32 %v6462, %v6441
    %v6464 = vadd.f32 %v6463, %v6443
    %v6465 = vadd.f32 %v6464, %v6445
    %v6466 = vadd.f32 %v6465, %v6447
    %v6467 = vadd.f32 %v6466, %v6449
    %v6468 = vadd.f32 %v6467, %v6451
    %v6469 = vadd.f32 %v6468, %v6453
    %v6470 = vrot.slane %v6469, 4
    %v6471 = vadd.f32 %v6469, %v6470
    %v6472 = vrot.slane %v6471, 2
    %v6473 = vadd.f32 %v6471, %v6472
    %v6474 = vrot.slane %v6473, 1
    %v6475 = vadd.f32 %v6473, %v6474
    %v6476 = vadd.f32 %v6424, %v6426
    %v6477 = vadd.f32 %v6476, %v6428
    %v6478 = vadd.f32 %v6477, %v6430
    %v6479 = vadd.f32 %v6478, %v6432
    %v6480 = vadd.f32 %v6479, %v6434
    %v6481 = vadd.f32 %v6480, %v6436
    %v6482 = vadd.f32 %v6481, %v6438
    %v6483 = vadd.f32 %v6482, %v6440
    %v6484 = vadd.f32 %v6483, %v6442
    %v6485 = vadd.f32 %v6484, %v6444
    %v6486 = vadd.f32 %v6485, %v6446
    %v6487 = vadd.f32 %v6486, %v6448
    %v6488 = vadd.f32 %v6487, %v6450
    %v6489 = vadd.f32 %v6488, %v6452
    %v6490 = vadd.f32 %v6489, %v6454
    %v6491 = vrot.slane %v6490, 4
    %v6492 = vadd.f32 %v6490, %v6491
    %v6493 = vrot.slane %v6492, 2
    %v6494 = vadd.f32 %v6492, %v6493
    %v6495 = vrot.slane %v6494, 1
    %v6496 = vadd.f32 %v6494, %v6495
    %v6497 = vmul.f32 %v6475, %v371
    %v6498 = vmul.f32 %v6496, %v371
    %v6499 = vmul.f32 %v6421, %v6421
    %v6500 = vmul.f32 %v6422, %v6422
    %v6501 = vsub.f32 %v6497, %v6499
    %v6502 = vsub.f32 %v6498, %v6500
    %v6503 = vmax.f32 %v6501, 0.0
    %v6504 = vmax.f32 %v6502, 0.0
    %v6505 = vadd.f32 %v6503, 1e-05
    %v6506 = vadd.f32 %v6504, 1e-05
    %v6507 = vrsqrt.pop %v6505
    %v6508 = vrsqrt.pop %v6506
    %v6511 = vcombine.low %v6507, %v6508
    %v6513 = vunpack.c.l.s4 1966171168
    %v6514 = vunpack.c.0.s8 %v6513
    %v6515 = vlaneseq
    %v6516 = vshrl.u32 %v6515, 7
    %v6517 = vsub.s32 %v6514, %v6516
    %v6518 = vrot.slane %v6511, %v6517
    %v6520 = vunpack.c.l.s4 1966171168
    %v6521 = vunpack.c.0.s8 %v6520
    %v6522 = vlaneseq
    %v6523 = vshrl.u32 %v6522, 7
    %v6524 = vsub.s32 %v6521, %v6523
    %v6525 = vrot.slane %v6518, %v6524
    %v6527 = vmul.f32 %v6060, %v6525
    %v6529 = vlaneseq
    %v6530 = vshrl.u32 %v6529, 7
    %v6531 = vsub.s32 0, %v6530
    %v6532 = vrot.slane %v6527, %v6531
    %v6533 = vlaneseq
    %v6534 = vshrl.u32 %v6533, 7
    %v6535 = vsub.s32 1, %v6534
    %v6536 = vrot.slane %v6527, %v6535
    %v6539 = vmul.f32 %v6421, %v6532
    %v6540 = vmul.f32 %v6422, %v6536
    %v6543 = vcombine.low %v6539, %v6540
    %v6545 = vunpack.c.l.s4 1966171168
    %v6546 = vunpack.c.0.s8 %v6545
    %v6547 = vlaneseq
    %v6548 = vshrl.u32 %v6547, 7
    %v6549 = vsub.s32 %v6546, %v6548
    %v6550 = vrot.slane %v6543, %v6549
    %v6552 = vunpack.c.l.s4 1966171168
    %v6553 = vunpack.c.0.s8 %v6552
    %v6554 = vlaneseq
    %v6555 = vshrl.u32 %v6554, 7
    %v6556 = vsub.s32 %v6553, %v6555
    %v6557 = vrot.slane %v6550, %v6556
    %v6559 = vsub.f32 %v6062, %v6557
    %v6560 = vmul.f32 %v6347, %v6532
    %v6561 = vmul.f32 %v6348, %v6536
    %v6562 = vmul.f32 %v6349, %v6532
    %v6563 = vmul.f32 %v6350, %v6536
    %v6564 = vmul.f32 %v6351, %v6532
    %v6565 = vmul.f32 %v6352, %v6536
    %v6566 = vmul.f32 %v6353, %v6532
    %v6567 = vmul.f32 %v6354, %v6536
    %v6568 = vmul.f32 %v6355, %v6532
    %v6569 = vmul.f32 %v6356, %v6536
    %v6570 = vmul.f32 %v6357, %v6532
    %v6571 = vmul.f32 %v6358, %v6536
    %v6572 = vmul.f32 %v6359, %v6532
    %v6573 = vmul.f32 %v6360, %v6536
    %v6574 = vmul.f32 %v6361, %v6532
    %v6575 = vmul.f32 %v6362, %v6536
    %v6576 = vmul.f32 %v6363, %v6532
    %v6577 = vmul.f32 %v6364, %v6536
    %v6578 = vmul.f32 %v6365, %v6532
    %v6579 = vmul.f32 %v6366, %v6536
    %v6580 = vmul.f32 %v6367, %v6532
    %v6581 = vmul.f32 %v6368, %v6536
    %v6582 = vmul.f32 %v6369, %v6532
    %v6583 = vmul.f32 %v6370, %v6536
    %v6584 = vmul.f32 %v6371, %v6532
    %v6585 = vmul.f32 %v6372, %v6536
    %v6586 = vmul.f32 %v6373, %v6532
    %v6587 = vmul.f32 %v6374, %v6536
    %v6588 = vmul.f32 %v6375, %v6532
    %v6589 = vmul.f32 %v6376, %v6536
    %v6590 = vmul.f32 %v6377, %v6532
    %v6591 = vmul.f32 %v6378, %v6536
    %v6593 = vlaneseq
    %v6594 = vshrl.u32 %v6593, 7
    %v6595 = vsub.s32 0, %v6594
    %v6596 = vrot.slane %v6559, %v6595
    %v6597 = vlaneseq
    %v6598 = vshrl.u32 %v6597, 7
    %v6599 = vsub.s32 1, %v6598
    %v6600 = vrot.slane %v6559, %v6599
    %v6603 = vadd.f32 %v6560, %v6596
    %v6604 = vadd.f32 %v6561, %v6600
    %v6605 = vadd.f32 %v6562, %v6596
    %v6606 = vadd.f32 %v6563, %v6600
    %v6607 = vadd.f32 %v6564, %v6596
    %v6608 = vadd.f32 %v6565, %v6600
    %v6609 = vadd.f32 %v6566, %v6596
    %v6610 = vadd.f32 %v6567, %v6600
    %v6611 = vadd.f32 %v6568, %v6596
    %v6612 = vadd.f32 %v6569, %v6600
    %v6613 = vadd.f32 %v6570, %v6596
    %v6614 = vadd.f32 %v6571, %v6600
    %v6615 = vadd.f32 %v6572, %v6596
    %v6616 = vadd.f32 %v6573, %v6600
    %v6617 = vadd.f32 %v6574, %v6596
    %v6618 = vadd.f32 %v6575, %v6600
    %v6619 = vadd.f32 %v6576, %v6596
    %v6620 = vadd.f32 %v6577, %v6600
    %v6621 = vadd.f32 %v6578, %v6596
    %v6622 = vadd.f32 %v6579, %v6600
    %v6623 = vadd.f32 %v6580, %v6596
    %v6624 = vadd.f32 %v6581, %v6600
    %v6625 = vadd.f32 %v6582, %v6596
    %v6626 = vadd.f32 %v6583, %v6600
    %v6627 = vadd.f32 %v6584, %v6596
    %v6628 = vadd.f32 %v6585, %v6600
    %v6629 = vadd.f32 %v6586, %v6596
    %v6630 = vadd.f32 %v6587, %v6600
    %v6631 = vadd.f32 %v6588, %v6596
    %v6632 = vadd.f32 %v6589, %v6600
    %v6633 = vadd.f32 %v6590, %v6596
    %v6634 = vadd.f32 %v6591, %v6600
    %v6635 = vpack.c.bf16 %v6605, %v6603
    %v6636 = vpack.c.bf16 %v6606, %v6604
    %v6637 = vpack.c.bf16 %v6609, %v6607
    %v6638 = vpack.c.bf16 %v6610, %v6608
    %v6639 = vpack.c.bf16 %v6613, %v6611
    %v6640 = vpack.c.bf16 %v6614, %v6612
    %v6641 = vpack.c.bf16 %v6617, %v6615
    %v6642 = vpack.c.bf16 %v6618, %v6616
    %v6643 = vpack.c.bf16 %v6621, %v6619
    %v6644 = vpack.c.bf16 %v6622, %v6620
    %v6645 = vpack.c.bf16 %v6625, %v6623
    %v6646 = vpack.c.bf16 %v6626, %v6624
    %v6647 = vpack.c.bf16 %v6629, %v6627
    %v6648 = vpack.c.bf16 %v6630, %v6628
    %v6649 = vpack.c.bf16 %v6633, %v6631
    %v6650 = vpack.c.bf16 %v6634, %v6632
    %v6651 = vld [vmem:[%s18] sm:$0xf]
    %v6652 = vld [vmem:[%s18 + $0x4] sm:$0xf]
    %v6653 = vld [vmem:[%s18 + $0x8] sm:$0xf]
    %v6654 = vld [vmem:[%s18 + $0xc] sm:$0xf]
    %v6655 = vld [vmem:[%s18 + $0x10] sm:$0xf]
    %v6656 = vld [vmem:[%s18 + $0x14] sm:$0xf]
    %v6657 = vld [vmem:[%s18 + $0x18] sm:$0xf]
    %v6658 = vld [vmem:[%s18 + $0x1c] sm:$0xf]
    %v6659 = vld [vmem:[%s18 + $0x20] sm:$0xf]
    %v6660 = vld [vmem:[%s18 + $0x24] sm:$0xf]
    %v6661 = vld [vmem:[%s18 + $0x28] sm:$0xf]
    %v6662 = vld [vmem:[%s18 + $0x2c] sm:$0xf]
    %v6663 = vld [vmem:[%s18 + $0x30] sm:$0xf]
    %v6664 = vld [vmem:[%s18 + $0x34] sm:$0xf]
    %v6665 = vld [vmem:[%s18 + $0x38] sm:$0xf]
    %v6666 = vld [vmem:[%s18 + $0x3c] sm:$0xf]
    %v6667 = vld [vmem:[%s18 + $0x40] sm:$0xf]
    %v6668 = vld [vmem:[%s18 + $0x44] sm:$0xf]
    %v6669 = vld [vmem:[%s18 + $0x48] sm:$0xf]
    %v6670 = vld [vmem:[%s18 + $0x4c] sm:$0xf]
    %v6671 = vld [vmem:[%s18 + $0x50] sm:$0xf]
    %v6672 = vld [vmem:[%s18 + $0x54] sm:$0xf]
    %v6673 = vld [vmem:[%s18 + $0x58] sm:$0xf]
    %v6674 = vld [vmem:[%s18 + $0x5c] sm:$0xf]
    %v6675 = vld [vmem:[%s18 + $0x60] sm:$0xf]
    %v6676 = vld [vmem:[%s18 + $0x64] sm:$0xf]
    %v6677 = vld [vmem:[%s18 + $0x68] sm:$0xf]
    %v6678 = vld [vmem:[%s18 + $0x6c] sm:$0xf]
    %v6679 = vld [vmem:[%s18 + $0x70] sm:$0xf]
    %v6680 = vld [vmem:[%s18 + $0x74] sm:$0xf]
    %v6681 = vld [vmem:[%s18 + $0x78] sm:$0xf]
    %v6682 = vld [vmem:[%s18 + $0x7c] sm:$0xf]
    %v6683 = vld [vmem:[%s19] sm:$0x1]
    %v6685 = vlaneseq
    %v6686 = vshrl.u32 %v6685, 7
    %v6687 = vsub.s32 0, %v6686
    %v6688 = vrot.slane %v6683, %v6687
    %v6722 = vunpack.c.l.b16 %v6651
    %v6723 = vunpack.c.l.b16 %v6652
    %v6724 = vunpack.c.l.b16 %v6653
    %v6725 = vunpack.c.l.b16 %v6654
    %v6726 = vunpack.c.l.b16 %v6655
    %v6727 = vunpack.c.l.b16 %v6656
    %v6728 = vunpack.c.l.b16 %v6657
    %v6729 = vunpack.c.l.b16 %v6658
    %v6730 = vunpack.c.l.b16 %v6659
    %v6731 = vunpack.c.l.b16 %v6660
    %v6732 = vunpack.c.l.b16 %v6661
    %v6733 = vunpack.c.l.b16 %v6662
    %v6734 = vunpack.c.l.b16 %v6663
    %v6735 = vunpack.c.l.b16 %v6664
    %v6736 = vunpack.c.l.b16 %v6665
    %v6737 = vunpack.c.l.b16 %v6666
    %v6738 = vunpack.c.l.b16 %v6667
    %v6739 = vunpack.c.l.b16 %v6668
    %v6740 = vunpack.c.l.b16 %v6669
    %v6741 = vunpack.c.l.b16 %v6670
    %v6742 = vunpack.c.l.b16 %v6671
    %v6743 = vunpack.c.l.b16 %v6672
    %v6744 = vunpack.c.l.b16 %v6673
    %v6745 = vunpack.c.l.b16 %v6674
    %v6746 = vunpack.c.l.b16 %v6675
    %v6747 = vunpack.c.l.b16 %v6676
    %v6748 = vunpack.c.l.b16 %v6677
    %v6749 = vunpack.c.l.b16 %v6678
    %v6750 = vunpack.c.l.b16 %v6679
    %v6751 = vunpack.c.l.b16 %v6680
    %v6752 = vunpack.c.l.b16 %v6681
    %v6753 = vunpack.c.l.b16 %v6682
    %v6754 = vpack.c.b16 %v6723, %v6722
    %v6755 = vpack.c.b16 %v6725, %v6724
    %v6756 = vpack.c.b16 %v6727, %v6726
    %v6757 = vpack.c.b16 %v6729, %v6728
    %v6758 = vpack.c.b16 %v6731, %v6730
    %v6759 = vpack.c.b16 %v6733, %v6732
    %v6760 = vpack.c.b16 %v6735, %v6734
    %v6761 = vpack.c.b16 %v6737, %v6736
    %v6762 = vpack.c.b16 %v6739, %v6738
    %v6763 = vpack.c.b16 %v6741, %v6740
    %v6764 = vpack.c.b16 %v6743, %v6742
    %v6765 = vpack.c.b16 %v6745, %v6744
    %v6766 = vpack.c.b16 %v6747, %v6746
    %v6767 = vpack.c.b16 %v6749, %v6748
    %v6768 = vpack.c.b16 %v6751, %v6750
    %v6769 = vpack.c.b16 %v6753, %v6752
    %6786 = vmatprep.subr.bf16.mxu0 0
    %6787 = vmatpush1.bf16.msra.mxu0 %v6754
    %6788 = vmatprep.subr.bf16.mxu0 0
    %6789 = vmatpush1.bf16.msra.mxu0 %v6755
    %6790 = vmatprep.subr.bf16.mxu0 0
    %6791 = vmatpush1.bf16.msra.mxu0 %v6756
    %6792 = vmatprep.subr.bf16.mxu0 0
    %6793 = vmatpush1.bf16.msra.mxu0 %v6757
    %6794 = vmatprep.subr.bf16.mxu0 0
    %6795 = vmatpush1.bf16.msra.mxu0 %v6758
    %6796 = vmatprep.subr.bf16.mxu0 0
    %6797 = vmatpush1.bf16.msra.mxu0 %v6759
    %6798 = vmatprep.subr.bf16.mxu0 0
    %6799 = vmatpush1.bf16.msra.mxu0 %v6760
    %6800 = vmatprep.subr.bf16.mxu0 0
    %6801 = vmatpush1.bf16.msra.mxu0 %v6761
    %6802 = vmatprep.subr.bf16.mxu0 0
    %6803 = vmatpush1.bf16.msra.mxu0 %v6762
    %6804 = vmatprep.subr.bf16.mxu0 0
    %6805 = vmatpush1.bf16.msra.mxu0 %v6763
    %6806 = vmatprep.subr.bf16.mxu0 0
    %6807 = vmatpush1.bf16.msra.mxu0 %v6764
    %6808 = vmatprep.subr.bf16.mxu0 0
    %6809 = vmatpush1.bf16.msra.mxu0 %v6765
    %6810 = vmatprep.subr.bf16.mxu0 0
    %6811 = vmatpush1.bf16.msra.mxu0 %v6766
    %6812 = vmatprep.subr.bf16.mxu0 0
    %6813 = vmatpush1.bf16.msra.mxu0 %v6767
    %6814 = vmatprep.subr.bf16.mxu0 0
    %6815 = vmatpush1.bf16.msra.mxu0 %v6768
    %6816 = vmatprep.subr.bf16.mxu0 0
    %6817 = vmatpush1.bf16.msra.mxu0 %v6769
    %6818 = vmatprep.mubr.bf16.mxu0 %v6636
    %6819 = vmatmul.mubr.bf16.gmra.mrb[0].mxu0 %v6635
    %v6820 = vpop.f32.mrb[0].mxu0
    %v6821 = vadd.f32 %v6688, %v6820
    %v6822 = vpop.f32.mrb[0].mxu0
    %v6823 = vpop.f32.mrb[0].mxu0
    %v6824 = vadd.f32 %v6688, %v6823
    %v6825 = vpop.f32.mrb[0].mxu0
    %6826 = vmatprep.mubr.bf16.mxu0 %v6638
    %6827 = vmatmul.mubr.bf16.gmra.mrb[0].mxu0 %v6637
    %v6828 = vpop.f32.mrb[0].mxu0
    %v6829 = vadd.f32 %v6688, %v6828
    %v6830 = vpop.f32.mrb[0].mxu0
    %v6831 = vpop.f32.mrb[0].mxu0
    %v6832 = vadd.f32 %v6688, %v6831
    %v6833 = vpop.f32.mrb[0].mxu0
    %6834 = vmatprep.mubr.bf16.mxu0 %v6640
    %6835 = vmatmul.mubr.bf16.gmra.mrb[0].mxu0 %v6639
    %v6836 = vpop.f32.mrb[0].mxu0
    %v6837 = vadd.f32 %v6688, %v6836
    %v6838 = vpop.f32.mrb[0].mxu0
    %v6839 = vpop.f32.mrb[0].mxu0
    %v6840 = vadd.f32 %v6688, %v6839
    %v6841 = vpop.f32.mrb[0].mxu0
    %6842 = vmatprep.mubr.bf16.mxu0 %v6642
    %6843 = vmatmul.mubr.bf16.gmra.mrb[0].mxu0 %v6641
    %v6844 = vpop.f32.mrb[0].mxu0
    %v6845 = vadd.f32 %v6688, %v6844
    %v6846 = vpop.f32.mrb[0].mxu0
    %v6847 = vpop.f32.mrb[0].mxu0
    %v6848 = vadd.f32 %v6688, %v6847
    %v6849 = vpop.f32.mrb[0].mxu0
    %6850 = vmatprep.mubr.bf16.mxu0 %v6644
    %6851 = vmatmul.mubr.bf16.gmra.mrb[0].mxu0 %v6643
    %v6852 = vpop.f32.mrb[0].mxu0
    %v6853 = vadd.f32 %v6688, %v6852
    %v6854 = vpop.f32.mrb[0].mxu0
    %v6855 = vpop.f32.mrb[0].mxu0
    %v6856 = vadd.f32 %v6688, %v6855
    %v6857 = vpop.f32.mrb[0].mxu0
    %6858 = vmatprep.mubr.bf16.mxu0 %v6646
    %6859 = vmatmul.mubr.bf16.gmra.mrb[0].mxu0 %v6645
    %v6860 = vpop.f32.mrb[0].mxu0
    %v6861 = vadd.f32 %v6688, %v6860
    %v6862 = vpop.f32.mrb[0].mxu0
    %v6863 = vpop.f32.mrb[0].mxu0
    %v6864 = vadd.f32 %v6688, %v6863
    %v6865 = vpop.f32.mrb[0].mxu0
    %6866 = vmatprep.mubr.bf16.mxu0 %v6648
    %6867 = vmatmul.mubr.bf16.gmra.mrb[0].mxu0 %v6647
    %v6868 = vpop.f32.mrb[0].mxu0
    %v6869 = vadd.f32 %v6688, %v6868
    %v6870 = vpop.f32.mrb[0].mxu0
    %v6871 = vpop.f32.mrb[0].mxu0
    %v6872 = vadd.f32 %v6688, %v6871
    %v6873 = vpop.f32.mrb[0].mxu0
    %6874 = vmatprep.mubr.bf16.mxu0 %v6650
    %6875 = vmatmul.mubr.bf16.gmra.mrb[0].mxu0 %v6649
    %v6876 = vpop.f32.mrb[0].mxu0
    %v6877 = vadd.f32 %v6688, %v6876
    %v6878 = vpop.f32.mrb[0].mxu0
    %v6879 = vpop.f32.mrb[0].mxu0
    %v6880 = vadd.f32 %v6688, %v6879
    %v6881 = vpop.f32.mrb[0].mxu0
    %6882 = vdwg.mxu0
    %6883 = vst.msk [vmem:[%s20] sm:$0xff] %vm159, %v6821
    %6884 = vst.msk [vmem:[%s20 + $0x8] sm:$0xff] %vm159, %v6824
    %6885 = vst.msk [vmem:[%s20 + $0x10] sm:$0xff] %vm159, %v6829
    %6886 = vst.msk [vmem:[%s20 + $0x18] sm:$0xff] %vm159, %v6832
    %6887 = vst.msk [vmem:[%s20 + $0x20] sm:$0xff] %vm159, %v6837
    %6888 = vst.msk [vmem:[%s20 + $0x28] sm:$0xff] %vm159, %v6840
    %6889 = vst.msk [vmem:[%s20 + $0x30] sm:$0xff] %vm159, %v6845
    %6890 = vst.msk [vmem:[%s20 + $0x38] sm:$0xff] %vm159, %v6848
    %6891 = vst.msk [vmem:[%s20 + $0x40] sm:$0xff] %vm159, %v6853
    %6892 = vst.msk [vmem:[%s20 + $0x48] sm:$0xff] %vm159, %v6856
    %6893 = vst.msk [vmem:[%s20 + $0x50] sm:$0xff] %vm159, %v6861
    %6894 = vst.msk [vmem:[%s20 + $0x58] sm:$0xff] %vm159, %v6864
    %6895 = vst.msk [vmem:[%s20 + $0x60] sm:$0xff] %vm159, %v6869
    %6896 = vst.msk [vmem:[%s20 + $0x68] sm:$0xff] %vm159, %v6872
    %6897 = vst.msk [vmem:[%s20 + $0x70] sm:$0xff] %vm159, %v6877
    %6898 = vst.msk [vmem:[%s20 + $0x78] sm:$0xff] %vm159, %v6880
    %6899 = vst.msk [vmem:[%s21] sm:$0xff] %vm3696, %v3278
    %6900 = vst.msk [vmem:[%s21 + $0x8] sm:$0xff] %vm3696, %v3281
    %6901 = vst.msk [vmem:[%s21 + $0x10] sm:$0xff] %vm3696, %v3286
    %6902 = vst.msk [vmem:[%s21 + $0x18] sm:$0xff] %vm3696, %v3289
    %6903 = vst.msk [vmem:[%s21 + $0x20] sm:$0xff] %vm3696, %v3294
    %6904 = vst.msk [vmem:[%s21 + $0x28] sm:$0xff] %vm3696, %v3297
    %6905 = vst.msk [vmem:[%s21 + $0x30] sm:$0xff] %vm3696, %v3302
    %6906 = vst.msk [vmem:[%s21 + $0x38] sm:$0xff] %vm3696, %v3305
    %6907 = vst.msk [vmem:[%s21 + $0x40] sm:$0xff] %vm3696, %v3310
    %6908 = vst.msk [vmem:[%s21 + $0x48] sm:$0xff] %vm3696, %v3313
    %6909 = vst.msk [vmem:[%s21 + $0x50] sm:$0xff] %vm3696, %v3318
    %6910 = vst.msk [vmem:[%s21 + $0x58] sm:$0xff] %vm3696, %v3321
    %6911 = vst.msk [vmem:[%s21 + $0x60] sm:$0xff] %vm3696, %v3326
    %6912 = vst.msk [vmem:[%s21 + $0x68] sm:$0xff] %vm3696, %v3329
    %6913 = vst.msk [vmem:[%s21 + $0x70] sm:$0xff] %vm3696, %v3334
    %6914 = vst.msk [vmem:[%s21 + $0x78] sm:$0xff] %vm3696, %v3337
    %6915 = vst.msk [vmem:[%s22] sm:$0xff] %vm3696, %v3510
    %6916 = vst.msk [vmem:[%s22 + $0x8] sm:$0xff] %vm3696, %v3513
    %6917 = vst.msk [vmem:[%s22 + $0x10] sm:$0xff] %vm3696, %v3518
    %6918 = vst.msk [vmem:[%s22 + $0x18] sm:$0xff] %vm3696, %v3521
    %6919 = vst.msk [vmem:[%s22 + $0x20] sm:$0xff] %vm3696, %v3526
    %6920 = vst.msk [vmem:[%s22 + $0x28] sm:$0xff] %vm3696, %v3529
    %6921 = vst.msk [vmem:[%s22 + $0x30] sm:$0xff] %vm3696, %v3534
    %6922 = vst.msk [vmem:[%s22 + $0x38] sm:$0xff] %vm3696, %v3537
    %6923 = vst.msk [vmem:[%s22 + $0x40] sm:$0xff] %vm3696, %v3542
    %6924 = vst.msk [vmem:[%s22 + $0x48] sm:$0xff] %vm3696, %v3545
    %6925 = vst.msk [vmem:[%s22 + $0x50] sm:$0xff] %vm3696, %v3550
    %6926 = vst.msk [vmem:[%s22 + $0x58] sm:$0xff] %vm3696, %v3553
    %6927 = vst.msk [vmem:[%s22 + $0x60] sm:$0xff] %vm3696, %v3558
    %6928 = vst.msk [vmem:[%s22 + $0x68] sm:$0xff] %vm3696, %v3561
    %6929 = vst.msk [vmem:[%s22 + $0x70] sm:$0xff] %vm3696, %v3566
    %6930 = vst.msk [vmem:[%s22 + $0x78] sm:$0xff] %vm3696, %v3569
    // Predicated region
    $region90: #{vae_forward.1} parent=1 // pred_check
      _
    $region91: #{vae_forward.1} parent=1 // pred_check_branch
      %6932 = sbr.rel (0) target = $region93
    $region92: #{vae_forward.1} parent=1 // pred_region
      _
    $region93: #{vae_forward.1} parent=1 // pred_fallthru
      _
    // Predicated region
    $region94: #{vae_forward.1} parent=1 // pred_check
      _
    $region95: #{vae_forward.1} parent=1 // pred_check_branch
      %6934 = sbr.rel (0) target = $region97
    $region96: #{vae_forward.1} parent=1 // pred_region
      _
    $region97: #{vae_forward.1} parent=1 // pred_fallthru
      _
    // Predicated region
    $region98: #{vae_forward.1} parent=1 // pred_check
      _
    $region99: #{vae_forward.1} parent=1 // pred_check_branch
      %6936 = sbr.rel (0) target = $region101
    $region100: #{vae_forward.1} parent=1 // pred_region
      _
    $region101: #{vae_forward.1} parent=1 // pred_fallthru
      _
    // Predicated region
    $region102: #{vae_forward.1} parent=1 // pred_check
      _
    $region103: #{vae_forward.1} parent=1 // pred_check_branch
      %6938 = sbr.rel (0) target = $region105
    $region104: #{vae_forward.1} parent=1 // pred_region
      _
    $region105: #{vae_forward.1} parent=1 // pred_fallthru
      _
    // Predicated region
    $region106: #{vae_forward.1} parent=1 // pred_check
      _
    $region107: #{vae_forward.1} parent=1 // pred_check_branch
      %6940 = sbr.rel (0) target = $region109
    $region108: #{vae_forward.1} parent=1 // pred_region
      _
    $region109: #{vae_forward.1} parent=1 // pred_fallthru
      _
    // Predicated region
    $region110: #{vae_forward.1} parent=1 // pred_check
      _
    $region111: #{vae_forward.1} parent=1 // pred_check_branch
      %6942 = sbr.rel (0) target = $region113
    $region112: #{vae_forward.1} parent=1 // pred_region
      _
    $region113: #{vae_forward.1} parent=1 // pred_fallthru
      _
    %6943 = vsyncpa [#allocation3], 1
    %6944 = vsyncpa [#allocation5], 1

</llo_original>
